<compile_context>
chip_gen: v6e
topology: v6e:2x2x1
jax: 0.10.0
libtpu: 0.0.40
codegen_flags: <defaults>
</compile_context>

<pallas_src>
import functools

import jax
import jax.numpy as jnp
from jax.experimental import pallas as pl
from jax.experimental.pallas import tpu as pltpu

EPS = 1e-5


# ------------------------------- Pallas kernels -------------------------------

def _tower_kernel(*refs, has_proj, H, W, C):
    """Entire residual tower for one batch element (one grid step).

    refs = [x_ref,
            (w1, b1, w2, b2[, ws, bs]) per residual block,
            out_ref, pad_scratch_ref]
    """
    HW = H * W
    x_ref = refs[0]
    idx = 1
    blocks = []
    for proj in has_proj:
        n = 6 if proj else 4
        blocks.append(refs[idx:idx + n])
        idx += n
    out_ref = refs[idx]
    pad_ref = refs[idx + 1]                       # (H+2, W+2, C) f32 VMEM scratch

    # Zero once per grid step: the halo stays zero, the interior is rewritten
    # before every conv.
    pad_ref[...] = jnp.zeros(pad_ref.shape, pad_ref.dtype)

    def conv3x3(act_hwc, w_ref, b_ref):
        # 3x3 "same" conv as 9 shifted MXU matmuls accumulated in f32.
        # act_hwc: (H, W, C) f32; w_ref: (9, C, C) bf16 (BN scale folded in);
        # b_ref: (1, C) f32 folded BN bias.
        pad_ref[1:H + 1, 1:W + 1, :] = act_hwc
        acc = jnp.zeros((HW, C), jnp.float32)
        for kh in range(3):
            for kw in range(3):
                tap = pad_ref[kh:kh + H, kw:kw + W, :].reshape(HW, C)
                acc = acc + jnp.dot(tap.astype(jnp.bfloat16),
                                    w_ref[kh * 3 + kw],
                                    preferred_element_type=jnp.float32)
        return acc + b_ref[...]                   # (HW, C) f32

    act = x_ref[0]                                # (H, W, C) f32
    for proj, blk in zip(has_proj, blocks):
        if proj:
            w1, b1, w2, b2, ws, bs = blk
        else:
            w1, b1, w2, b2 = blk
        h1 = jnp.maximum(conv3x3(act, w1, b1), 0.0).reshape(H, W, C)
        h2 = conv3x3(h1, w2, b2)                  # (HW, C)
        if proj:                                  # 1x1 projection skip + BN
            skip = jnp.dot(act.reshape(HW, C).astype(jnp.bfloat16), ws[...],
                           preferred_element_type=jnp.float32) + bs[...]
        else:                                     # identity skip
            skip = act.reshape(HW, C)
        act = jnp.maximum(h2 + skip, 0.0).reshape(H, W, C)

    out_ref[0] = act.reshape(HW, C).astype(jnp.bfloat16)


def _heads_kernel(t_ref, wh_ref, bh_ref, wl0_ref, wl1_ref, bl_ref,
                  wv1_ref, bv1_ref, wv2_ref, bv2_ref,
                  act_ref, val_ref, logit_sc, *, B, HW):
    """Policy + value heads, fully fused (single invocation, no grid)."""
    for b in range(B):                            # B is tiny and static
        xb = t_ref[b]                             # (HW, C) bf16
        # merged policy(2ch) + value(1ch) 1x1 conv, BN folded, ReLU epilogue
        rb = jnp.dot(xb, wh_ref[...], preferred_element_type=jnp.float32)
        rb = jnp.maximum(rb + bh_ref[...], 0.0)   # (HW, 3) f32
        p0, p1, vc = rb[:, 0:1], rb[:, 1:2], rb[:, 2:3]
        # policy Linear with the NCHW channel-major flatten folded into the
        # per-channel, transposed weight blocks wl0 / wl1 (no transpose needed).
        logit_sc[b:b + 1, :] = (
            jnp.sum(p0 * wl0_ref[...] + p1 * wl1_ref[...],
                    axis=0, keepdims=True) + bl_ref[...])
        # value MLP: Linear(HW,256) + ReLU, Linear(256,1) + Tanh
        hv = jnp.maximum(
            jnp.sum(vc * wv1_ref[...], axis=0, keepdims=True) + bv1_ref[...],
            0.0)                                  # (1, 256)
        val_ref[b:b + 1, :] = jnp.tanh(
            jnp.sum(hv * wv2_ref[...], axis=1, keepdims=True) + bv2_ref[...])

    logits = logit_sc[...]                        # (B, n_moves) f32
    # F.softmax(out.squeeze(), dim=0): over the batch axis when B > 1,
    # over the move axis when B == 1 (squeeze drops the batch dim).
    axis = 1 if B == 1 else 0
    m = jnp.max(logits, axis=axis, keepdims=True)
    e = jnp.exp(logits - m)
    act_ref[...] = e / jnp.sum(e, axis=axis, keepdims=True)


# ------------------------------- parameter init --------------------------------

def _bn_fold(key, c):
    # eval-mode BatchNorm folded to per-channel (scale, bias)
    k1, k2, k3, k4 = jax.random.split(key, 4)
    gamma = 1.0 + 0.1 * jax.random.normal(k1, (c,), jnp.float32)
    beta = 0.1 * jax.random.normal(k2, (c,), jnp.float32)
    mean = 0.1 * jax.random.normal(k3, (c,), jnp.float32)
    var = 1.0 + 0.1 * jax.random.uniform(k4, (c,), jnp.float32)
    scale = gamma * jax.lax.rsqrt(var + EPS)
    return scale, beta - mean * scale


def _conv3x3_folded(kw, kbn, cin, cout, cin_pad):
    # PyTorch (cout, cin, 3, 3) -> per-tap (9, cin_pad, cout), BN scale folded in.
    w = jax.random.normal(kw, (cout, cin, 3, 3), jnp.float32) / jnp.sqrt(9.0 * cin)
    scale, bias = _bn_fold(kbn, cout)
    wt = jnp.transpose(w, (2, 3, 1, 0)).reshape(9, cin, cout) * scale
    if cin_pad > cin:
        wt = jnp.pad(wt, ((0, 0), (0, cin_pad - cin), (0, 0)))
    return wt.astype(jnp.bfloat16), bias.reshape(1, cout)


def _conv1x1_folded(kw, kbn, cin, cout, cin_pad=None):
    w = jax.random.normal(kw, (cout, cin), jnp.float32) / jnp.sqrt(float(cin))
    scale, bias = _bn_fold(kbn, cout)
    wt = w.T * scale                              # (cin, cout), BN scale folded
    if cin_pad is not None and cin_pad > cin:
        wt = jnp.pad(wt, ((0, cin_pad - cin), (0, 0)))
    return wt.astype(jnp.bfloat16), bias.reshape(1, cout)


def _resblock_params(key, cin, cout):
    ks = jax.random.split(key, 6)
    w1, b1 = _conv3x3_folded(ks[0], ks[1], cin, cout, cout)
    w2, b2 = _conv3x3_folded(ks[2], ks[3], cout, cout, cout)
    p = {"w1": w1, "b1": b1, "w2": w2, "b2": b2}
    if cin != cout:                               # 1x1 projection skip
        ws, bs = _conv1x1_folded(ks[4], ks[5], cin, cout, cin_pad=cout)
        p["ws"] = ws
        p["bs"] = bs
    return p


def _heads_params(key, planes, n_moves, board):
    HW = board * board
    ks = jax.random.split(key, 9)
    wp, bp = _conv1x1_folded(ks[0], ks[1], planes, 2)   # policy conv + BN
    wv, bv = _conv1x1_folded(ks[2], ks[3], planes, 1)   # value conv + BN
    wh = jnp.concatenate([wp, wv], axis=1)              # (planes, 3) bf16
    bh = jnp.concatenate([bp, bv], axis=1)              # (1, 3) f32
    # policy Linear(2*HW -> n_moves); channel-major flatten folded into rows.
    wl = jax.random.normal(ks[4], (n_moves, 2 * HW), jnp.float32) / jnp.sqrt(2.0 * HW)
    bl = 0.01 * jax.random.normal(ks[5], (n_moves,), jnp.float32)
    wl0 = wl[:, :HW].T                                  # (HW, n_moves) channel 0
    wl1 = wl[:, HW:].T                                  # (HW, n_moves) channel 1
    # value MLP: Linear(HW -> 256) + ReLU, Linear(256 -> 1) + Tanh
    w1 = jax.random.normal(ks[6], (256, HW), jnp.float32) / jnp.sqrt(float(HW))
    b1 = 0.01 * jax.random.normal(ks[7], (256,), jnp.float32)
    kw2, kb2 = jax.random.split(ks[8])
    w2 = jax.random.normal(kw2, (1, 256), jnp.float32) / jnp.sqrt(256.0)
    b2 = 0.01 * jax.random.normal(kb2, (1,), jnp.float32)
    return {"wh": wh, "bh": bh,
            "wl0": wl0, "wl1": wl1, "bl": bl.reshape(1, n_moves),
            "wv1": w1.T, "bv1": b1.reshape(1, 256),
            "wv2": w2, "bv2": b2.reshape(1, 1)}


def init_params(key, in_planes, planes, height, n_moves, board):
    assert in_planes <= planes, "input planes are zero-padded up to `planes`"
    keys = jax.random.split(key, height + 1)
    tower = [_resblock_params(keys[0], in_planes, planes)]
    for i in range(1, height):
        tower.append(_resblock_params(keys[i], planes, planes))
    heads = _heads_params(keys[height], planes, n_moves, board)
    return {"tower": tower, "heads": heads}


# --------------------------------- forward pass --------------------------------

def _const_index_map(ndim):
    zeros = (0,) * ndim
    return lambda b: zeros


def alphazero_forward(x_nchw, params):
    B, cin, H, W = x_nchw.shape
    tower = params["tower"]
    heads = params["heads"]
    C = tower[0]["w1"].shape[2]        # tower width (planes)
    HW = H * W
    n_moves = heads["bl"].shape[1]

    # NCHW -> NHWC; zero-pad channels up to the tower width so every block sees
    # a uniform (H, W, C) activation (block-0 weight rows are zero-padded too).
    x = jnp.transpose(x_nchw, (0, 2, 3, 1)).astype(jnp.float32)
    if cin < C:
        x = jnp.pad(x, ((0, 0), (0, 0), (0, 0), (0, C - cin)))

    # ---- kernel 1: fused residual tower, grid over batch (megacore-parallel) ----
    t_inputs = [x]
    t_specs = [pl.BlockSpec((1, H, W, C), lambda b: (b, 0, 0, 0))]
    has_proj = []
    for blk in tower:
        proj = "ws" in blk
        has_proj.append(proj)
        for name in ("w1", "b1", "w2", "b2") + (("ws", "bs") if proj else ()):
            arr = blk[name]
            t_inputs.append(arr)
            t_specs.append(pl.BlockSpec(arr.shape, _const_index_map(arr.ndim)))

    conv_flops = 2 * HW * (9 * C) * C
    tower_flops = B * (len(tower) * 2 * conv_flops
                       + sum(2 * HW * C * C for p in has_proj if p))
    tower_bytes = (int(x.size) * 4
                   + sum(int(a.size) * a.dtype.itemsize for a in t_inputs[1:])
                   + B * HW * C * 2)

    t_out = pl.pallas_call(
        functools.partial(_tower_kernel, has_proj=tuple(has_proj),
                          H=H, W=W, C=C),
        out_shape=jax.ShapeDtypeStruct((B, HW, C), jnp.bfloat16),
        grid_spec=pltpu.PrefetchScalarGridSpec(
            num_scalar_prefetch=0,
            grid=(B,),
            in_specs=t_specs,
            out_specs=pl.BlockSpec((1, HW, C), lambda b: (b, 0, 0)),
            scratch_shapes=[pltpu.VMEM((H + 2, W + 2, C), jnp.float32)]),
        compiler_params=pltpu.CompilerParams(
            dimension_semantics=("parallel",),
            vmem_limit_bytes=32 * 1024 * 1024),
        cost_estimate=pl.CostEstimate(flops=int(tower_flops),
                                      transcendentals=0,
                                      bytes_accessed=int(tower_bytes)),
    )(*t_inputs)

    # ---- kernel 2: fused policy + value heads (single invocation) ----
    vmem = pl.BlockSpec(memory_space=pltpu.MemorySpace.VMEM)
    head_flops = B * (2 * HW * C * 3 + 4 * HW * n_moves + 2 * HW * 256 + 2 * 256)
    head_bytes = (int(t_out.size) * 2
                  + sum(int(heads[k].size) * heads[k].dtype.itemsize for k in heads)
                  + B * (n_moves + 1) * 4)
    actions, value = pl.pallas_call(
        functools.partial(_heads_kernel, B=B, HW=HW),
        out_shape=(jax.ShapeDtypeStruct((B, n_moves), jnp.float32),
                   jax.ShapeDtypeStruct((B, 1), jnp.float32)),
        in_specs=[vmem] * 10,
        out_specs=(vmem, vmem),
        scratch_shapes=[pltpu.VMEM((B, n_moves), jnp.float32)],
        compiler_params=pltpu.CompilerParams(
            vmem_limit_bytes=32 * 1024 * 1024),
        cost_estimate=pl.CostEstimate(flops=int(head_flops),
                                      transcendentals=int(B * (n_moves + 1)),
                                      bytes_accessed=int(head_bytes)),
    )(t_out, heads["wh"], heads["bh"], heads["wl0"], heads["wl1"], heads["bl"],
      heads["wv1"], heads["bv1"], heads["wv2"], heads["bv2"])
    return actions, value


# ------------------------------------ main --------------------------------------

if __name__ == "__main__":
    # Small config consistent with the module (board fixed at 8 by the heads).
    B, BOARD, IN_PLANES, PLANES, HEIGHT, N_MOVES = 2, 8, 4, 32, 3, 64

    root = jax.random.PRNGKey(0)
    k_params, k_input = jax.random.split(root)
    params = init_params(k_params, IN_PLANES, PLANES, HEIGHT, N_MOVES, BOARD)
    x = jax.random.normal(k_input, (B, IN_PLANES, BOARD, BOARD), jnp.float32)  # NCHW

    fwd = jax.jit(alphazero_forward)
    actions, value = fwd(x, params)
    actions, value = jax.block_until_ready((actions, value))

    assert actions.shape == (B, N_MOVES)
    assert value.shape == (B, 1)
    assert bool(jnp.all(jnp.isfinite(actions))) and bool(jnp.all(jnp.isfinite(value)))
    # softmax over dim 0 (batch, since B > 1): each column of `actions` sums to 1
    assert bool(jnp.allclose(jnp.sum(actions, axis=0), 1.0, atol=1e-5))
    # value head is tanh-bounded
    assert bool(jnp.all(jnp.abs(value) <= 1.0 + 1e-6))

    # TODO(synk): AlphaZero.get_action (Categorical sampling) is not part of
    # forward() and is left out.

    print("KERNEL_OK")
</pallas_src>

<mosaic_0001>
module attributes {stable_mosaic.version = 11 : i64} {
  func.func @_tower_kernel(%arg0: i32, %arg1: memref<1x8x8x32xf32, #tpu.memory_space<vmem>>, %arg2: memref<9x32x32xbf16, #tpu.memory_space<vmem>>, %arg3: memref<1x32xf32, #tpu.memory_space<vmem>>, %arg4: memref<9x32x32xbf16, #tpu.memory_space<vmem>>, %arg5: memref<1x32xf32, #tpu.memory_space<vmem>>, %arg6: memref<32x32xbf16, #tpu.memory_space<vmem>>, %arg7: memref<1x32xf32, #tpu.memory_space<vmem>>, %arg8: memref<9x32x32xbf16, #tpu.memory_space<vmem>>, %arg9: memref<1x32xf32, #tpu.memory_space<vmem>>, %arg10: memref<9x32x32xbf16, #tpu.memory_space<vmem>>, %arg11: memref<1x32xf32, #tpu.memory_space<vmem>>, %arg12: memref<9x32x32xbf16, #tpu.memory_space<vmem>>, %arg13: memref<1x32xf32, #tpu.memory_space<vmem>>, %arg14: memref<9x32x32xbf16, #tpu.memory_space<vmem>>, %arg15: memref<1x32xf32, #tpu.memory_space<vmem>>, %arg16: memref<1x64x32xbf16, #tpu.memory_space<vmem>>, %arg17: memref<10x10x32xf32, #tpu.memory_space<vmem>>) attributes {dimension_semantics = [#tpu.dimension_semantics<parallel>], iteration_bounds = array<i64: 2>, scalar_prefetch = 0 : i64, scratch_operands = 1 : i64, tpu.core_type = #tpu.core_type<tc>, window_params = [{transform_indices = @transform_0, window_bounds = array<i64: 1, 8, 8, 32>}, {pipeline_mode = #tpu.pipeline_mode<synchronous>, transform_indices = @transform_1, window_bounds = array<i64: 9, 32, 32>}, {pipeline_mode = #tpu.pipeline_mode<synchronous>, transform_indices = @transform_2, window_bounds = array<i64: 1, 32>}, {pipeline_mode = #tpu.pipeline_mode<synchronous>, transform_indices = @transform_3, window_bounds = array<i64: 9, 32, 32>}, {pipeline_mode = #tpu.pipeline_mode<synchronous>, transform_indices = @transform_4, window_bounds = array<i64: 1, 32>}, {pipeline_mode = #tpu.pipeline_mode<synchronous>, transform_indices = @transform_5, window_bounds = array<i64: 32, 32>}, {pipeline_mode = #tpu.pipeline_mode<synchronous>, transform_indices = @transform_6, window_bounds = array<i64: 1, 32>}, {pipeline_mode = #tpu.pipeline_mode<synchronous>, transform_indices = @transform_7, window_bounds = array<i64: 9, 32, 32>}, {pipeline_mode = #tpu.pipeline_mode<synchronous>, transform_indices = @transform_8, window_bounds = array<i64: 1, 32>}, {pipeline_mode = #tpu.pipeline_mode<synchronous>, transform_indices = @transform_9, window_bounds = array<i64: 9, 32, 32>}, {pipeline_mode = #tpu.pipeline_mode<synchronous>, transform_indices = @transform_10, window_bounds = array<i64: 1, 32>}, {pipeline_mode = #tpu.pipeline_mode<synchronous>, transform_indices = @transform_11, window_bounds = array<i64: 9, 32, 32>}, {pipeline_mode = #tpu.pipeline_mode<synchronous>, transform_indices = @transform_12, window_bounds = array<i64: 1, 32>}, {pipeline_mode = #tpu.pipeline_mode<synchronous>, transform_indices = @transform_13, window_bounds = array<i64: 9, 32, 32>}, {pipeline_mode = #tpu.pipeline_mode<synchronous>, transform_indices = @transform_14, window_bounds = array<i64: 1, 32>}, {transform_indices = @transform_15, window_bounds = array<i64: 1, 64, 32>}]} {
    %cst = arith.constant 0.000000e+00 : f32
    %0 = vector.broadcast %cst : f32 to vector<10x10x32xf32>
    %c0 = arith.constant 0 : index
    %c0_0 = arith.constant 0 : index
    %c0_1 = arith.constant 0 : index
    %1 = vector.load %arg17[%c0, %c0_0, %c0_1] : memref<10x10x32xf32, #tpu.memory_space<vmem>>, vector<10x10x32xf32>
    tpu.vector_store %arg17[%c0, %c0_0, %c0_1], %0 {strides = array<i32>} : memref<10x10x32xf32, #tpu.memory_space<vmem>>, vector<10x10x32xf32>,
    %c0_2 = arith.constant 0 : index
    %c0_3 = arith.constant 0 : index
    %c0_4 = arith.constant 0 : index
    %c0_5 = arith.constant 0 : index
    %2 = vector.load %arg1[%c0_2, %c0_3, %c0_4, %c0_5] : memref<1x8x8x32xf32, #tpu.memory_space<vmem>>, vector<1x8x8x32xf32>
    %3 = vector.shape_cast %2 : vector<1x8x8x32xf32> to vector<8x8x32xf32>
    %c1 = arith.constant 1 : index
    %c1_6 = arith.constant 1 : index
    %c0_7 = arith.constant 0 : index
    %4 = vector.load %arg17[%c1, %c1_6, %c0_7] : memref<10x10x32xf32, #tpu.memory_space<vmem>>, vector<8x8x32xf32>
    tpu.vector_store %arg17[%c1, %c1_6, %c0_7], %3 {strides = array<i32>} : memref<10x10x32xf32, #tpu.memory_space<vmem>>, vector<8x8x32xf32>,
    %cst_8 = arith.constant 0.000000e+00 : f32
    %5 = vector.broadcast %cst_8 : f32 to vector<64x32xf32>
    %c0_9 = arith.constant 0 : index
    %c0_10 = arith.constant 0 : index
    %c0_11 = arith.constant 0 : index
    %6 = vector.load %arg17[%c0_9, %c0_10, %c0_11] : memref<10x10x32xf32, #tpu.memory_space<vmem>>, vector<8x8x32xf32>
    %7 = vector.shape_cast %6 : vector<8x8x32xf32> to vector<64x32xf32>
    %8 = arith.truncf %7 : vector<64x32xf32> to vector<64x32xbf16>
    %c0_12 = arith.constant 0 : index
    %c0_13 = arith.constant 0 : index
    %c0_14 = arith.constant 0 : index
    %9 = vector.load %arg2[%c0_12, %c0_13, %c0_14] : memref<9x32x32xbf16, #tpu.memory_space<vmem>>, vector<1x32x32xbf16>
    %10 = vector.shape_cast %9 : vector<1x32x32xbf16> to vector<32x32xbf16>
    %cst_15 = arith.constant dense<0.000000e+00> : vector<64x32xf32>
    %11 = tpu.matmul %8, %10, %cst_15 {dimension_numbers = #tpu.dot_dimension_numbers<[1], [0], [0], [1], [0, 0, 1, 1], [], []>} : vector<64x32xbf16>, vector<32x32xbf16>, vector<64x32xf32> -> vector<64x32xf32>
    %12 = arith.addf %5, %11 : vector<64x32xf32>
    %c0_16 = arith.constant 0 : index
    %c1_17 = arith.constant 1 : index
    %c0_18 = arith.constant 0 : index
    %13 = vector.load %arg17[%c0_16, %c1_17, %c0_18] : memref<10x10x32xf32, #tpu.memory_space<vmem>>, vector<8x8x32xf32>
    %14 = vector.shape_cast %13 : vector<8x8x32xf32> to vector<64x32xf32>
    %15 = arith.truncf %14 : vector<64x32xf32> to vector<64x32xbf16>
    %c1_19 = arith.constant 1 : index
    %c0_20 = arith.constant 0 : index
    %c0_21 = arith.constant 0 : index
    %16 = vector.load %arg2[%c1_19, %c0_20, %c0_21] : memref<9x32x32xbf16, #tpu.memory_space<vmem>>, vector<1x32x32xbf16>
    %17 = vector.shape_cast %16 : vector<1x32x32xbf16> to vector<32x32xbf16>
    %cst_22 = arith.constant dense<0.000000e+00> : vector<64x32xf32>
    %18 = tpu.matmul %15, %17, %cst_22 {dimension_numbers = #tpu.dot_dimension_numbers<[1], [0], [0], [1], [0, 0, 1, 1], [], []>} : vector<64x32xbf16>, vector<32x32xbf16>, vector<64x32xf32> -> vector<64x32xf32>
    %19 = arith.addf %12, %18 : vector<64x32xf32>
    %c0_23 = arith.constant 0 : index
    %c2 = arith.constant 2 : index
    %c0_24 = arith.constant 0 : index
    %20 = vector.load %arg17[%c0_23, %c2, %c0_24] : memref<10x10x32xf32, #tpu.memory_space<vmem>>, vector<8x8x32xf32>
    %21 = vector.shape_cast %20 : vector<8x8x32xf32> to vector<64x32xf32>
    %22 = arith.truncf %21 : vector<64x32xf32> to vector<64x32xbf16>
    %c2_25 = arith.constant 2 : index
    %c0_26 = arith.constant 0 : index
    %c0_27 = arith.constant 0 : index
    %23 = vector.load %arg2[%c2_25, %c0_26, %c0_27] : memref<9x32x32xbf16, #tpu.memory_space<vmem>>, vector<1x32x32xbf16>
    %24 = vector.shape_cast %23 : vector<1x32x32xbf16> to vector<32x32xbf16>
    %cst_28 = arith.constant dense<0.000000e+00> : vector<64x32xf32>
    %25 = tpu.matmul %22, %24, %cst_28 {dimension_numbers = #tpu.dot_dimension_numbers<[1], [0], [0], [1], [0, 0, 1, 1], [], []>} : vector<64x32xbf16>, vector<32x32xbf16>, vector<64x32xf32> -> vector<64x32xf32>
    %26 = arith.addf %19, %25 : vector<64x32xf32>
    %c1_29 = arith.constant 1 : index
    %c0_30 = arith.constant 0 : index
    %c0_31 = arith.constant 0 : index
    %27 = vector.load %arg17[%c1_29, %c0_30, %c0_31] : memref<10x10x32xf32, #tpu.memory_space<vmem>>, vector<8x8x32xf32>
    %28 = vector.shape_cast %27 : vector<8x8x32xf32> to vector<64x32xf32>
    %29 = arith.truncf %28 : vector<64x32xf32> to vector<64x32xbf16>
    %c3 = arith.constant 3 : index
    %c0_32 = arith.constant 0 : index
    %c0_33 = arith.constant 0 : index
    %30 = vector.load %arg2[%c3, %c0_32, %c0_33] : memref<9x32x32xbf16, #tpu.memory_space<vmem>>, vector<1x32x32xbf16>
    %31 = vector.shape_cast %30 : vector<1x32x32xbf16> to vector<32x32xbf16>
    %cst_34 = arith.constant dense<0.000000e+00> : vector<64x32xf32>
    %32 = tpu.matmul %29, %31, %cst_34 {dimension_numbers = #tpu.dot_dimension_numbers<[1], [0], [0], [1], [0, 0, 1, 1], [], []>} : vector<64x32xbf16>, vector<32x32xbf16>, vector<64x32xf32> -> vector<64x32xf32>
    %33 = arith.addf %26, %32 : vector<64x32xf32>
    %c1_35 = arith.constant 1 : index
    %c1_36 = arith.constant 1 : index
    %c0_37 = arith.constant 0 : index
    %34 = vector.load %arg17[%c1_35, %c1_36, %c0_37] : memref<10x10x32xf32, #tpu.memory_space<vmem>>, vector<8x8x32xf32>
    %35 = vector.shape_cast %34 : vector<8x8x32xf32> to vector<64x32xf32>
    %36 = arith.truncf %35 : vector<64x32xf32> to vector<64x32xbf16>
    %c4 = arith.constant 4 : index
    %c0_38 = arith.constant 0 : index
    %c0_39 = arith.constant 0 : index
    %37 = vector.load %arg2[%c4, %c0_38, %c0_39] : memref<9x32x32xbf16, #tpu.memory_space<vmem>>, vector<1x32x32xbf16>
    %38 = vector.shape_cast %37 : vector<1x32x32xbf16> to vector<32x32xbf16>
    %cst_40 = arith.constant dense<0.000000e+00> : vector<64x32xf32>
    %39 = tpu.matmul %36, %38, %cst_40 {dimension_numbers = #tpu.dot_dimension_numbers<[1], [0], [0], [1], [0, 0, 1, 1], [], []>} : vector<64x32xbf16>, vector<32x32xbf16>, vector<64x32xf32> -> vector<64x32xf32>
    %40 = arith.addf %33, %39 : vector<64x32xf32>
    %c1_41 = arith.constant 1 : index
    %c2_42 = arith.constant 2 : index
    %c0_43 = arith.constant 0 : index
    %41 = vector.load %arg17[%c1_41, %c2_42, %c0_43] : memref<10x10x32xf32, #tpu.memory_space<vmem>>, vector<8x8x32xf32>
    %42 = vector.shape_cast %41 : vector<8x8x32xf32> to vector<64x32xf32>
    %43 = arith.truncf %42 : vector<64x32xf32> to vector<64x32xbf16>
    %c5 = arith.constant 5 : index
    %c0_44 = arith.constant 0 : index
    %c0_45 = arith.constant 0 : index
    %44 = vector.load %arg2[%c5, %c0_44, %c0_45] : memref<9x32x32xbf16, #tpu.memory_space<vmem>>, vector<1x32x32xbf16>
    %45 = vector.shape_cast %44 : vector<1x32x32xbf16> to vector<32x32xbf16>
    %cst_46 = arith.constant dense<0.000000e+00> : vector<64x32xf32>
    %46 = tpu.matmul %43, %45, %cst_46 {dimension_numbers = #tpu.dot_dimension_numbers<[1], [0], [0], [1], [0, 0, 1, 1], [], []>} : vector<64x32xbf16>, vector<32x32xbf16>, vector<64x32xf32> -> vector<64x32xf32>
    %47 = arith.addf %40, %46 : vector<64x32xf32>
    %c2_47 = arith.constant 2 : index
    %c0_48 = arith.constant 0 : index
    %c0_49 = arith.constant 0 : index
    %48 = vector.load %arg17[%c2_47, %c0_48, %c0_49] : memref<10x10x32xf32, #tpu.memory_space<vmem>>, vector<8x8x32xf32>
    %49 = vector.shape_cast %48 : vector<8x8x32xf32> to vector<64x32xf32>
    %50 = arith.truncf %49 : vector<64x32xf32> to vector<64x32xbf16>
    %c6 = arith.constant 6 : index
    %c0_50 = arith.constant 0 : index
    %c0_51 = arith.constant 0 : index
    %51 = vector.load %arg2[%c6, %c0_50, %c0_51] : memref<9x32x32xbf16, #tpu.memory_space<vmem>>, vector<1x32x32xbf16>
    %52 = vector.shape_cast %51 : vector<1x32x32xbf16> to vector<32x32xbf16>
    %cst_52 = arith.constant dense<0.000000e+00> : vector<64x32xf32>
    %53 = tpu.matmul %50, %52, %cst_52 {dimension_numbers = #tpu.dot_dimension_numbers<[1], [0], [0], [1], [0, 0, 1, 1], [], []>} : vector<64x32xbf16>, vector<32x32xbf16>, vector<64x32xf32> -> vector<64x32xf32>
    %54 = arith.addf %47, %53 : vector<64x32xf32>
    %c2_53 = arith.constant 2 : index
    %c1_54 = arith.constant 1 : index
    %c0_55 = arith.constant 0 : index
    %55 = vector.load %arg17[%c2_53, %c1_54, %c0_55] : memref<10x10x32xf32, #tpu.memory_space<vmem>>, vector<8x8x32xf32>
    %56 = vector.shape_cast %55 : vector<8x8x32xf32> to vector<64x32xf32>
    %57 = arith.truncf %56 : vector<64x32xf32> to vector<64x32xbf16>
    %c7 = arith.constant 7 : index
    %c0_56 = arith.constant 0 : index
    %c0_57 = arith.constant 0 : index
    %58 = vector.load %arg2[%c7, %c0_56, %c0_57] : memref<9x32x32xbf16, #tpu.memory_space<vmem>>, vector<1x32x32xbf16>
    %59 = vector.shape_cast %58 : vector<1x32x32xbf16> to vector<32x32xbf16>
    %cst_58 = arith.constant dense<0.000000e+00> : vector<64x32xf32>
    %60 = tpu.matmul %57, %59, %cst_58 {dimension_numbers = #tpu.dot_dimension_numbers<[1], [0], [0], [1], [0, 0, 1, 1], [], []>} : vector<64x32xbf16>, vector<32x32xbf16>, vector<64x32xf32> -> vector<64x32xf32>
    %61 = arith.addf %54, %60 : vector<64x32xf32>
    %c2_59 = arith.constant 2 : index
    %c2_60 = arith.constant 2 : index
    %c0_61 = arith.constant 0 : index
    %62 = vector.load %arg17[%c2_59, %c2_60, %c0_61] : memref<10x10x32xf32, #tpu.memory_space<vmem>>, vector<8x8x32xf32>
    %63 = vector.shape_cast %62 : vector<8x8x32xf32> to vector<64x32xf32>
    %64 = arith.truncf %63 : vector<64x32xf32> to vector<64x32xbf16>
    %c8 = arith.constant 8 : index
    %c0_62 = arith.constant 0 : index
    %c0_63 = arith.constant 0 : index
    %65 = vector.load %arg2[%c8, %c0_62, %c0_63] : memref<9x32x32xbf16, #tpu.memory_space<vmem>>, vector<1x32x32xbf16>
    %66 = vector.shape_cast %65 : vector<1x32x32xbf16> to vector<32x32xbf16>
    %cst_64 = arith.constant dense<0.000000e+00> : vector<64x32xf32>
    %67 = tpu.matmul %64, %66, %cst_64 {dimension_numbers = #tpu.dot_dimension_numbers<[1], [0], [0], [1], [0, 0, 1, 1], [], []>} : vector<64x32xbf16>, vector<32x32xbf16>, vector<64x32xf32> -> vector<64x32xf32>
    %68 = arith.addf %61, %67 : vector<64x32xf32>
    %c0_65 = arith.constant 0 : index
    %c0_66 = arith.constant 0 : index
    %69 = vector.load %arg3[%c0_65, %c0_66] : memref<1x32xf32, #tpu.memory_space<vmem>>, vector<1x32xf32>
    %70 = vector.broadcast %69 : vector<1x32xf32> to vector<64x32xf32>
    %71 = arith.addf %68, %70 : vector<64x32xf32>
    %cst_67 = arith.constant 0.000000e+00 : f32
    %72 = vector.broadcast %cst_67 : f32 to vector<64x32xf32>
    %73 = arith.maximumf %71, %72 : vector<64x32xf32>
    %74 = vector.shape_cast %73 : vector<64x32xf32> to vector<8x8x32xf32>
    %c1_68 = arith.constant 1 : index
    %c1_69 = arith.constant 1 : index
    %c0_70 = arith.constant 0 : index
    %75 = vector.load %arg17[%c1_68, %c1_69, %c0_70] : memref<10x10x32xf32, #tpu.memory_space<vmem>>, vector<8x8x32xf32>
    tpu.vector_store %arg17[%c1_68, %c1_69, %c0_70], %74 {strides = array<i32>} : memref<10x10x32xf32, #tpu.memory_space<vmem>>, vector<8x8x32xf32>,
    %cst_71 = arith.constant 0.000000e+00 : f32
    %76 = vector.broadcast %cst_71 : f32 to vector<64x32xf32>
    %c0_72 = arith.constant 0 : index
    %c0_73 = arith.constant 0 : index
    %c0_74 = arith.constant 0 : index
    %77 = vector.load %arg17[%c0_72, %c0_73, %c0_74] : memref<10x10x32xf32, #tpu.memory_space<vmem>>, vector<8x8x32xf32>
    %78 = vector.shape_cast %77 : vector<8x8x32xf32> to vector<64x32xf32>
    %79 = arith.truncf %78 : vector<64x32xf32> to vector<64x32xbf16>
    %c0_75 = arith.constant 0 : index
    %c0_76 = arith.constant 0 : index
    %c0_77 = arith.constant 0 : index
    %80 = vector.load %arg4[%c0_75, %c0_76, %c0_77] : memref<9x32x32xbf16, #tpu.memory_space<vmem>>, vector<1x32x32xbf16>
    %81 = vector.shape_cast %80 : vector<1x32x32xbf16> to vector<32x32xbf16>
    %cst_78 = arith.constant dense<0.000000e+00> : vector<64x32xf32>
    %82 = tpu.matmul %79, %81, %cst_78 {dimension_numbers = #tpu.dot_dimension_numbers<[1], [0], [0], [1], [0, 0, 1, 1], [], []>} : vector<64x32xbf16>, vector<32x32xbf16>, vector<64x32xf32> -> vector<64x32xf32>
    %83 = arith.addf %76, %82 : vector<64x32xf32>
    %c0_79 = arith.constant 0 : index
    %c1_80 = arith.constant 1 : index
    %c0_81 = arith.constant 0 : index
    %84 = vector.load %arg17[%c0_79, %c1_80, %c0_81] : memref<10x10x32xf32, #tpu.memory_space<vmem>>, vector<8x8x32xf32>
    %85 = vector.shape_cast %84 : vector<8x8x32xf32> to vector<64x32xf32>
    %86 = arith.truncf %85 : vector<64x32xf32> to vector<64x32xbf16>
    %c1_82 = arith.constant 1 : index
    %c0_83 = arith.constant 0 : index
    %c0_84 = arith.constant 0 : index
    %87 = vector.load %arg4[%c1_82, %c0_83, %c0_84] : memref<9x32x32xbf16, #tpu.memory_space<vmem>>, vector<1x32x32xbf16>
    %88 = vector.shape_cast %87 : vector<1x32x32xbf16> to vector<32x32xbf16>
    %cst_85 = arith.constant dense<0.000000e+00> : vector<64x32xf32>
    %89 = tpu.matmul %86, %88, %cst_85 {dimension_numbers = #tpu.dot_dimension_numbers<[1], [0], [0], [1], [0, 0, 1, 1], [], []>} : vector<64x32xbf16>, vector<32x32xbf16>, vector<64x32xf32> -> vector<64x32xf32>
    %90 = arith.addf %83, %89 : vector<64x32xf32>
    %c0_86 = arith.constant 0 : index
    %c2_87 = arith.constant 2 : index
    %c0_88 = arith.constant 0 : index
    %91 = vector.load %arg17[%c0_86, %c2_87, %c0_88] : memref<10x10x32xf32, #tpu.memory_space<vmem>>, vector<8x8x32xf32>
    %92 = vector.shape_cast %91 : vector<8x8x32xf32> to vector<64x32xf32>
    %93 = arith.truncf %92 : vector<64x32xf32> to vector<64x32xbf16>
    %c2_89 = arith.constant 2 : index
    %c0_90 = arith.constant 0 : index
    %c0_91 = arith.constant 0 : index
    %94 = vector.load %arg4[%c2_89, %c0_90, %c0_91] : memref<9x32x32xbf16, #tpu.memory_space<vmem>>, vector<1x32x32xbf16>
    %95 = vector.shape_cast %94 : vector<1x32x32xbf16> to vector<32x32xbf16>
    %cst_92 = arith.constant dense<0.000000e+00> : vector<64x32xf32>
    %96 = tpu.matmul %93, %95, %cst_92 {dimension_numbers = #tpu.dot_dimension_numbers<[1], [0], [0], [1], [0, 0, 1, 1], [], []>} : vector<64x32xbf16>, vector<32x32xbf16>, vector<64x32xf32> -> vector<64x32xf32>
    %97 = arith.addf %90, %96 : vector<64x32xf32>
    %c1_93 = arith.constant 1 : index
    %c0_94 = arith.constant 0 : index
    %c0_95 = arith.constant 0 : index
    %98 = vector.load %arg17[%c1_93, %c0_94, %c0_95] : memref<10x10x32xf32, #tpu.memory_space<vmem>>, vector<8x8x32xf32>
    %99 = vector.shape_cast %98 : vector<8x8x32xf32> to vector<64x32xf32>
    %100 = arith.truncf %99 : vector<64x32xf32> to vector<64x32xbf16>
    %c3_96 = arith.constant 3 : index
    %c0_97 = arith.constant 0 : index
    %c0_98 = arith.constant 0 : index
    %101 = vector.load %arg4[%c3_96, %c0_97, %c0_98] : memref<9x32x32xbf16, #tpu.memory_space<vmem>>, vector<1x32x32xbf16>
    %102 = vector.shape_cast %101 : vector<1x32x32xbf16> to vector<32x32xbf16>
    %cst_99 = arith.constant dense<0.000000e+00> : vector<64x32xf32>
    %103 = tpu.matmul %100, %102, %cst_99 {dimension_numbers = #tpu.dot_dimension_numbers<[1], [0], [0], [1], [0, 0, 1, 1], [], []>} : vector<64x32xbf16>, vector<32x32xbf16>, vector<64x32xf32> -> vector<64x32xf32>
    %104 = arith.addf %97, %103 : vector<64x32xf32>
    %c1_100 = arith.constant 1 : index
    %c1_101 = arith.constant 1 : index
    %c0_102 = arith.constant 0 : index
    %105 = vector.load %arg17[%c1_100, %c1_101, %c0_102] : memref<10x10x32xf32, #tpu.memory_space<vmem>>, vector<8x8x32xf32>
    %106 = vector.shape_cast %105 : vector<8x8x32xf32> to vector<64x32xf32>
    %107 = arith.truncf %106 : vector<64x32xf32> to vector<64x32xbf16>
    %c4_103 = arith.constant 4 : index
    %c0_104 = arith.constant 0 : index
    %c0_105 = arith.constant 0 : index
    %108 = vector.load %arg4[%c4_103, %c0_104, %c0_105] : memref<9x32x32xbf16, #tpu.memory_space<vmem>>, vector<1x32x32xbf16>
    %109 = vector.shape_cast %108 : vector<1x32x32xbf16> to vector<32x32xbf16>
    %cst_106 = arith.constant dense<0.000000e+00> : vector<64x32xf32>
    %110 = tpu.matmul %107, %109, %cst_106 {dimension_numbers = #tpu.dot_dimension_numbers<[1], [0], [0], [1], [0, 0, 1, 1], [], []>} : vector<64x32xbf16>, vector<32x32xbf16>, vector<64x32xf32> -> vector<64x32xf32>
    %111 = arith.addf %104, %110 : vector<64x32xf32>
    %c1_107 = arith.constant 1 : index
    %c2_108 = arith.constant 2 : index
    %c0_109 = arith.constant 0 : index
    %112 = vector.load %arg17[%c1_107, %c2_108, %c0_109] : memref<10x10x32xf32, #tpu.memory_space<vmem>>, vector<8x8x32xf32>
    %113 = vector.shape_cast %112 : vector<8x8x32xf32> to vector<64x32xf32>
    %114 = arith.truncf %113 : vector<64x32xf32> to vector<64x32xbf16>
    %c5_110 = arith.constant 5 : index
    %c0_111 = arith.constant 0 : index
    %c0_112 = arith.constant 0 : index
    %115 = vector.load %arg4[%c5_110, %c0_111, %c0_112] : memref<9x32x32xbf16, #tpu.memory_space<vmem>>, vector<1x32x32xbf16>
    %116 = vector.shape_cast %115 : vector<1x32x32xbf16> to vector<32x32xbf16>
    %cst_113 = arith.constant dense<0.000000e+00> : vector<64x32xf32>
    %117 = tpu.matmul %114, %116, %cst_113 {dimension_numbers = #tpu.dot_dimension_numbers<[1], [0], [0], [1], [0, 0, 1, 1], [], []>} : vector<64x32xbf16>, vector<32x32xbf16>, vector<64x32xf32> -> vector<64x32xf32>
    %118 = arith.addf %111, %117 : vector<64x32xf32>
    %c2_114 = arith.constant 2 : index
    %c0_115 = arith.constant 0 : index
    %c0_116 = arith.constant 0 : index
    %119 = vector.load %arg17[%c2_114, %c0_115, %c0_116] : memref<10x10x32xf32, #tpu.memory_space<vmem>>, vector<8x8x32xf32>
    %120 = vector.shape_cast %119 : vector<8x8x32xf32> to vector<64x32xf32>
    %121 = arith.truncf %120 : vector<64x32xf32> to vector<64x32xbf16>
    %c6_117 = arith.constant 6 : index
    %c0_118 = arith.constant 0 : index
    %c0_119 = arith.constant 0 : index
    %122 = vector.load %arg4[%c6_117, %c0_118, %c0_119] : memref<9x32x32xbf16, #tpu.memory_space<vmem>>, vector<1x32x32xbf16>
    %123 = vector.shape_cast %122 : vector<1x32x32xbf16> to vector<32x32xbf16>
    %cst_120 = arith.constant dense<0.000000e+00> : vector<64x32xf32>
    %124 = tpu.matmul %121, %123, %cst_120 {dimension_numbers = #tpu.dot_dimension_numbers<[1], [0], [0], [1], [0, 0, 1, 1], [], []>} : vector<64x32xbf16>, vector<32x32xbf16>, vector<64x32xf32> -> vector<64x32xf32>
    %125 = arith.addf %118, %124 : vector<64x32xf32>
    %c2_121 = arith.constant 2 : index
    %c1_122 = arith.constant 1 : index
    %c0_123 = arith.constant 0 : index
    %126 = vector.load %arg17[%c2_121, %c1_122, %c0_123] : memref<10x10x32xf32, #tpu.memory_space<vmem>>, vector<8x8x32xf32>
    %127 = vector.shape_cast %126 : vector<8x8x32xf32> to vector<64x32xf32>
    %128 = arith.truncf %127 : vector<64x32xf32> to vector<64x32xbf16>
    %c7_124 = arith.constant 7 : index
    %c0_125 = arith.constant 0 : index
    %c0_126 = arith.constant 0 : index
    %129 = vector.load %arg4[%c7_124, %c0_125, %c0_126] : memref<9x32x32xbf16, #tpu.memory_space<vmem>>, vector<1x32x32xbf16>
    %130 = vector.shape_cast %129 : vector<1x32x32xbf16> to vector<32x32xbf16>
    %cst_127 = arith.constant dense<0.000000e+00> : vector<64x32xf32>
    %131 = tpu.matmul %128, %130, %cst_127 {dimension_numbers = #tpu.dot_dimension_numbers<[1], [0], [0], [1], [0, 0, 1, 1], [], []>} : vector<64x32xbf16>, vector<32x32xbf16>, vector<64x32xf32> -> vector<64x32xf32>
    %132 = arith.addf %125, %131 : vector<64x32xf32>
    %c2_128 = arith.constant 2 : index
    %c2_129 = arith.constant 2 : index
    %c0_130 = arith.constant 0 : index
    %133 = vector.load %arg17[%c2_128, %c2_129, %c0_130] : memref<10x10x32xf32, #tpu.memory_space<vmem>>, vector<8x8x32xf32>
    %134 = vector.shape_cast %133 : vector<8x8x32xf32> to vector<64x32xf32>
    %135 = arith.truncf %134 : vector<64x32xf32> to vector<64x32xbf16>
    %c8_131 = arith.constant 8 : index
    %c0_132 = arith.constant 0 : index
    %c0_133 = arith.constant 0 : index
    %136 = vector.load %arg4[%c8_131, %c0_132, %c0_133] : memref<9x32x32xbf16, #tpu.memory_space<vmem>>, vector<1x32x32xbf16>
    %137 = vector.shape_cast %136 : vector<1x32x32xbf16> to vector<32x32xbf16>
    %cst_134 = arith.constant dense<0.000000e+00> : vector<64x32xf32>
    %138 = tpu.matmul %135, %137, %cst_134 {dimension_numbers = #tpu.dot_dimension_numbers<[1], [0], [0], [1], [0, 0, 1, 1], [], []>} : vector<64x32xbf16>, vector<32x32xbf16>, vector<64x32xf32> -> vector<64x32xf32>
    %139 = arith.addf %132, %138 : vector<64x32xf32>
    %c0_135 = arith.constant 0 : index
    %c0_136 = arith.constant 0 : index
    %140 = vector.load %arg5[%c0_135, %c0_136] : memref<1x32xf32, #tpu.memory_space<vmem>>, vector<1x32xf32>
    %141 = vector.broadcast %140 : vector<1x32xf32> to vector<64x32xf32>
    %142 = arith.addf %139, %141 : vector<64x32xf32>
    %143 = vector.shape_cast %3 : vector<8x8x32xf32> to vector<64x32xf32>
    %144 = arith.truncf %143 : vector<64x32xf32> to vector<64x32xbf16>
    %c0_137 = arith.constant 0 : index
    %c0_138 = arith.constant 0 : index
    %145 = vector.load %arg6[%c0_137, %c0_138] : memref<32x32xbf16, #tpu.memory_space<vmem>>, vector<32x32xbf16>
    %cst_139 = arith.constant dense<0.000000e+00> : vector<64x32xf32>
    %146 = tpu.matmul %144, %145, %cst_139 {dimension_numbers = #tpu.dot_dimension_numbers<[1], [0], [0], [1], [0, 0, 1, 1], [], []>} : vector<64x32xbf16>, vector<32x32xbf16>, vector<64x32xf32> -> vector<64x32xf32>
    %c0_140 = arith.constant 0 : index
    %c0_141 = arith.constant 0 : index
    %147 = vector.load %arg7[%c0_140, %c0_141] : memref<1x32xf32, #tpu.memory_space<vmem>>, vector<1x32xf32>
    %148 = vector.broadcast %147 : vector<1x32xf32> to vector<64x32xf32>
    %149 = arith.addf %146, %148 : vector<64x32xf32>
    %150 = arith.addf %142, %149 : vector<64x32xf32>
    %cst_142 = arith.constant 0.000000e+00 : f32
    %151 = vector.broadcast %cst_142 : f32 to vector<64x32xf32>
    %152 = arith.maximumf %150, %151 : vector<64x32xf32>
    %153 = vector.shape_cast %152 : vector<64x32xf32> to vector<8x8x32xf32>
    %c1_143 = arith.constant 1 : index
    %c1_144 = arith.constant 1 : index
    %c0_145 = arith.constant 0 : index
    %154 = vector.load %arg17[%c1_143, %c1_144, %c0_145] : memref<10x10x32xf32, #tpu.memory_space<vmem>>, vector<8x8x32xf32>
    tpu.vector_store %arg17[%c1_143, %c1_144, %c0_145], %153 {strides = array<i32>} : memref<10x10x32xf32, #tpu.memory_space<vmem>>, vector<8x8x32xf32>,
    %cst_146 = arith.constant 0.000000e+00 : f32
    %155 = vector.broadcast %cst_146 : f32 to vector<64x32xf32>
    %c0_147 = arith.constant 0 : index
    %c0_148 = arith.constant 0 : index
    %c0_149 = arith.constant 0 : index
    %156 = vector.load %arg17[%c0_147, %c0_148, %c0_149] : memref<10x10x32xf32, #tpu.memory_space<vmem>>, vector<8x8x32xf32>
    %157 = vector.shape_cast %156 : vector<8x8x32xf32> to vector<64x32xf32>
    %158 = arith.truncf %157 : vector<64x32xf32> to vector<64x32xbf16>
    %c0_150 = arith.constant 0 : index
    %c0_151 = arith.constant 0 : index
    %c0_152 = arith.constant 0 : index
    %159 = vector.load %arg8[%c0_150, %c0_151, %c0_152] : memref<9x32x32xbf16, #tpu.memory_space<vmem>>, vector<1x32x32xbf16>
    %160 = vector.shape_cast %159 : vector<1x32x32xbf16> to vector<32x32xbf16>
    %cst_153 = arith.constant dense<0.000000e+00> : vector<64x32xf32>
    %161 = tpu.matmul %158, %160, %cst_153 {dimension_numbers = #tpu.dot_dimension_numbers<[1], [0], [0], [1], [0, 0, 1, 1], [], []>} : vector<64x32xbf16>, vector<32x32xbf16>, vector<64x32xf32> -> vector<64x32xf32>
    %162 = arith.addf %155, %161 : vector<64x32xf32>
    %c0_154 = arith.constant 0 : index
    %c1_155 = arith.constant 1 : index
    %c0_156 = arith.constant 0 : index
    %163 = vector.load %arg17[%c0_154, %c1_155, %c0_156] : memref<10x10x32xf32, #tpu.memory_space<vmem>>, vector<8x8x32xf32>
    %164 = vector.shape_cast %163 : vector<8x8x32xf32> to vector<64x32xf32>
    %165 = arith.truncf %164 : vector<64x32xf32> to vector<64x32xbf16>
    %c1_157 = arith.constant 1 : index
    %c0_158 = arith.constant 0 : index
    %c0_159 = arith.constant 0 : index
    %166 = vector.load %arg8[%c1_157, %c0_158, %c0_159] : memref<9x32x32xbf16, #tpu.memory_space<vmem>>, vector<1x32x32xbf16>
    %167 = vector.shape_cast %166 : vector<1x32x32xbf16> to vector<32x32xbf16>
    %cst_160 = arith.constant dense<0.000000e+00> : vector<64x32xf32>
    %168 = tpu.matmul %165, %167, %cst_160 {dimension_numbers = #tpu.dot_dimension_numbers<[1], [0], [0], [1], [0, 0, 1, 1], [], []>} : vector<64x32xbf16>, vector<32x32xbf16>, vector<64x32xf32> -> vector<64x32xf32>
    %169 = arith.addf %162, %168 : vector<64x32xf32>
    %c0_161 = arith.constant 0 : index
    %c2_162 = arith.constant 2 : index
    %c0_163 = arith.constant 0 : index
    %170 = vector.load %arg17[%c0_161, %c2_162, %c0_163] : memref<10x10x32xf32, #tpu.memory_space<vmem>>, vector<8x8x32xf32>
    %171 = vector.shape_cast %170 : vector<8x8x32xf32> to vector<64x32xf32>
    %172 = arith.truncf %171 : vector<64x32xf32> to vector<64x32xbf16>
    %c2_164 = arith.constant 2 : index
    %c0_165 = arith.constant 0 : index
    %c0_166 = arith.constant 0 : index
    %173 = vector.load %arg8[%c2_164, %c0_165, %c0_166] : memref<9x32x32xbf16, #tpu.memory_space<vmem>>, vector<1x32x32xbf16>
    %174 = vector.shape_cast %173 : vector<1x32x32xbf16> to vector<32x32xbf16>
    %cst_167 = arith.constant dense<0.000000e+00> : vector<64x32xf32>
    %175 = tpu.matmul %172, %174, %cst_167 {dimension_numbers = #tpu.dot_dimension_numbers<[1], [0], [0], [1], [0, 0, 1, 1], [], []>} : vector<64x32xbf16>, vector<32x32xbf16>, vector<64x32xf32> -> vector<64x32xf32>
    %176 = arith.addf %169, %175 : vector<64x32xf32>
    %c1_168 = arith.constant 1 : index
    %c0_169 = arith.constant 0 : index
    %c0_170 = arith.constant 0 : index
    %177 = vector.load %arg17[%c1_168, %c0_169, %c0_170] : memref<10x10x32xf32, #tpu.memory_space<vmem>>, vector<8x8x32xf32>
    %178 = vector.shape_cast %177 : vector<8x8x32xf32> to vector<64x32xf32>
    %179 = arith.truncf %178 : vector<64x32xf32> to vector<64x32xbf16>
    %c3_171 = arith.constant 3 : index
    %c0_172 = arith.constant 0 : index
    %c0_173 = arith.constant 0 : index
    %180 = vector.load %arg8[%c3_171, %c0_172, %c0_173] : memref<9x32x32xbf16, #tpu.memory_space<vmem>>, vector<1x32x32xbf16>
    %181 = vector.shape_cast %180 : vector<1x32x32xbf16> to vector<32x32xbf16>
    %cst_174 = arith.constant dense<0.000000e+00> : vector<64x32xf32>
    %182 = tpu.matmul %179, %181, %cst_174 {dimension_numbers = #tpu.dot_dimension_numbers<[1], [0], [0], [1], [0, 0, 1, 1], [], []>} : vector<64x32xbf16>, vector<32x32xbf16>, vector<64x32xf32> -> vector<64x32xf32>
    %183 = arith.addf %176, %182 : vector<64x32xf32>
    %c1_175 = arith.constant 1 : index
    %c1_176 = arith.constant 1 : index
    %c0_177 = arith.constant 0 : index
    %184 = vector.load %arg17[%c1_175, %c1_176, %c0_177] : memref<10x10x32xf32, #tpu.memory_space<vmem>>, vector<8x8x32xf32>
    %185 = vector.shape_cast %184 : vector<8x8x32xf32> to vector<64x32xf32>
    %186 = arith.truncf %185 : vector<64x32xf32> to vector<64x32xbf16>
    %c4_178 = arith.constant 4 : index
    %c0_179 = arith.constant 0 : index
    %c0_180 = arith.constant 0 : index
    %187 = vector.load %arg8[%c4_178, %c0_179, %c0_180] : memref<9x32x32xbf16, #tpu.memory_space<vmem>>, vector<1x32x32xbf16>
    %188 = vector.shape_cast %187 : vector<1x32x32xbf16> to vector<32x32xbf16>
    %cst_181 = arith.constant dense<0.000000e+00> : vector<64x32xf32>
    %189 = tpu.matmul %186, %188, %cst_181 {dimension_numbers = #tpu.dot_dimension_numbers<[1], [0], [0], [1], [0, 0, 1, 1], [], []>} : vector<64x32xbf16>, vector<32x32xbf16>, vector<64x32xf32> -> vector<64x32xf32>
    %190 = arith.addf %183, %189 : vector<64x32xf32>
    %c1_182 = arith.constant 1 : index
    %c2_183 = arith.constant 2 : index
    %c0_184 = arith.constant 0 : index
    %191 = vector.load %arg17[%c1_182, %c2_183, %c0_184] : memref<10x10x32xf32, #tpu.memory_space<vmem>>, vector<8x8x32xf32>
    %192 = vector.shape_cast %191 : vector<8x8x32xf32> to vector<64x32xf32>
    %193 = arith.truncf %192 : vector<64x32xf32> to vector<64x32xbf16>
    %c5_185 = arith.constant 5 : index
    %c0_186 = arith.constant 0 : index
    %c0_187 = arith.constant 0 : index
    %194 = vector.load %arg8[%c5_185, %c0_186, %c0_187] : memref<9x32x32xbf16, #tpu.memory_space<vmem>>, vector<1x32x32xbf16>
    %195 = vector.shape_cast %194 : vector<1x32x32xbf16> to vector<32x32xbf16>
    %cst_188 = arith.constant dense<0.000000e+00> : vector<64x32xf32>
    %196 = tpu.matmul %193, %195, %cst_188 {dimension_numbers = #tpu.dot_dimension_numbers<[1], [0], [0], [1], [0, 0, 1, 1], [], []>} : vector<64x32xbf16>, vector<32x32xbf16>, vector<64x32xf32> -> vector<64x32xf32>
    %197 = arith.addf %190, %196 : vector<64x32xf32>
    %c2_189 = arith.constant 2 : index
    %c0_190 = arith.constant 0 : index
    %c0_191 = arith.constant 0 : index
    %198 = vector.load %arg17[%c2_189, %c0_190, %c0_191] : memref<10x10x32xf32, #tpu.memory_space<vmem>>, vector<8x8x32xf32>
    %199 = vector.shape_cast %198 : vector<8x8x32xf32> to vector<64x32xf32>
    %200 = arith.truncf %199 : vector<64x32xf32> to vector<64x32xbf16>
    %c6_192 = arith.constant 6 : index
    %c0_193 = arith.constant 0 : index
    %c0_194 = arith.constant 0 : index
    %201 = vector.load %arg8[%c6_192, %c0_193, %c0_194] : memref<9x32x32xbf16, #tpu.memory_space<vmem>>, vector<1x32x32xbf16>
    %202 = vector.shape_cast %201 : vector<1x32x32xbf16> to vector<32x32xbf16>
    %cst_195 = arith.constant dense<0.000000e+00> : vector<64x32xf32>
    %203 = tpu.matmul %200, %202, %cst_195 {dimension_numbers = #tpu.dot_dimension_numbers<[1], [0], [0], [1], [0, 0, 1, 1], [], []>} : vector<64x32xbf16>, vector<32x32xbf16>, vector<64x32xf32> -> vector<64x32xf32>
    %204 = arith.addf %197, %203 : vector<64x32xf32>
    %c2_196 = arith.constant 2 : index
    %c1_197 = arith.constant 1 : index
    %c0_198 = arith.constant 0 : index
    %205 = vector.load %arg17[%c2_196, %c1_197, %c0_198] : memref<10x10x32xf32, #tpu.memory_space<vmem>>, vector<8x8x32xf32>
    %206 = vector.shape_cast %205 : vector<8x8x32xf32> to vector<64x32xf32>
    %207 = arith.truncf %206 : vector<64x32xf32> to vector<64x32xbf16>
    %c7_199 = arith.constant 7 : index
    %c0_200 = arith.constant 0 : index
    %c0_201 = arith.constant 0 : index
    %208 = vector.load %arg8[%c7_199, %c0_200, %c0_201] : memref<9x32x32xbf16, #tpu.memory_space<vmem>>, vector<1x32x32xbf16>
    %209 = vector.shape_cast %208 : vector<1x32x32xbf16> to vector<32x32xbf16>
    %cst_202 = arith.constant dense<0.000000e+00> : vector<64x32xf32>
    %210 = tpu.matmul %207, %209, %cst_202 {dimension_numbers = #tpu.dot_dimension_numbers<[1], [0], [0], [1], [0, 0, 1, 1], [], []>} : vector<64x32xbf16>, vector<32x32xbf16>, vector<64x32xf32> -> vector<64x32xf32>
    %211 = arith.addf %204, %210 : vector<64x32xf32>
    %c2_203 = arith.constant 2 : index
    %c2_204 = arith.constant 2 : index
    %c0_205 = arith.constant 0 : index
    %212 = vector.load %arg17[%c2_203, %c2_204, %c0_205] : memref<10x10x32xf32, #tpu.memory_space<vmem>>, vector<8x8x32xf32>
    %213 = vector.shape_cast %212 : vector<8x8x32xf32> to vector<64x32xf32>
    %214 = arith.truncf %213 : vector<64x32xf32> to vector<64x32xbf16>
    %c8_206 = arith.constant 8 : index
    %c0_207 = arith.constant 0 : index
    %c0_208 = arith.constant 0 : index
    %215 = vector.load %arg8[%c8_206, %c0_207, %c0_208] : memref<9x32x32xbf16, #tpu.memory_space<vmem>>, vector<1x32x32xbf16>
    %216 = vector.shape_cast %215 : vector<1x32x32xbf16> to vector<32x32xbf16>
    %cst_209 = arith.constant dense<0.000000e+00> : vector<64x32xf32>
    %217 = tpu.matmul %214, %216, %cst_209 {dimension_numbers = #tpu.dot_dimension_numbers<[1], [0], [0], [1], [0, 0, 1, 1], [], []>} : vector<64x32xbf16>, vector<32x32xbf16>, vector<64x32xf32> -> vector<64x32xf32>
    %218 = arith.addf %211, %217 : vector<64x32xf32>
    %c0_210 = arith.constant 0 : index
    %c0_211 = arith.constant 0 : index
    %219 = vector.load %arg9[%c0_210, %c0_211] : memref<1x32xf32, #tpu.memory_space<vmem>>, vector<1x32xf32>
    %220 = vector.broadcast %219 : vector<1x32xf32> to vector<64x32xf32>
    %221 = arith.addf %218, %220 : vector<64x32xf32>
    %cst_212 = arith.constant 0.000000e+00 : f32
    %222 = vector.broadcast %cst_212 : f32 to vector<64x32xf32>
    %223 = arith.maximumf %221, %222 : vector<64x32xf32>
    %224 = vector.shape_cast %223 : vector<64x32xf32> to vector<8x8x32xf32>
    %c1_213 = arith.constant 1 : index
    %c1_214 = arith.constant 1 : index
    %c0_215 = arith.constant 0 : index
    %225 = vector.load %arg17[%c1_213, %c1_214, %c0_215] : memref<10x10x32xf32, #tpu.memory_space<vmem>>, vector<8x8x32xf32>
    tpu.vector_store %arg17[%c1_213, %c1_214, %c0_215], %224 {strides = array<i32>} : memref<10x10x32xf32, #tpu.memory_space<vmem>>, vector<8x8x32xf32>,
    %cst_216 = arith.constant 0.000000e+00 : f32
    %226 = vector.broadcast %cst_216 : f32 to vector<64x32xf32>
    %c0_217 = arith.constant 0 : index
    %c0_218 = arith.constant 0 : index
    %c0_219 = arith.constant 0 : index
    %227 = vector.load %arg17[%c0_217, %c0_218, %c0_219] : memref<10x10x32xf32, #tpu.memory_space<vmem>>, vector<8x8x32xf32>
    %228 = vector.shape_cast %227 : vector<8x8x32xf32> to vector<64x32xf32>
    %229 = arith.truncf %228 : vector<64x32xf32> to vector<64x32xbf16>
    %c0_220 = arith.constant 0 : index
    %c0_221 = arith.constant 0 : index
    %c0_222 = arith.constant 0 : index
    %230 = vector.load %arg10[%c0_220, %c0_221, %c0_222] : memref<9x32x32xbf16, #tpu.memory_space<vmem>>, vector<1x32x32xbf16>
    %231 = vector.shape_cast %230 : vector<1x32x32xbf16> to vector<32x32xbf16>
    %cst_223 = arith.constant dense<0.000000e+00> : vector<64x32xf32>
    %232 = tpu.matmul %229, %231, %cst_223 {dimension_numbers = #tpu.dot_dimension_numbers<[1], [0], [0], [1], [0, 0, 1, 1], [], []>} : vector<64x32xbf16>, vector<32x32xbf16>, vector<64x32xf32> -> vector<64x32xf32>
    %233 = arith.addf %226, %232 : vector<64x32xf32>
    %c0_224 = arith.constant 0 : index
    %c1_225 = arith.constant 1 : index
    %c0_226 = arith.constant 0 : index
    %234 = vector.load %arg17[%c0_224, %c1_225, %c0_226] : memref<10x10x32xf32, #tpu.memory_space<vmem>>, vector<8x8x32xf32>
    %235 = vector.shape_cast %234 : vector<8x8x32xf32> to vector<64x32xf32>
    %236 = arith.truncf %235 : vector<64x32xf32> to vector<64x32xbf16>
    %c1_227 = arith.constant 1 : index
    %c0_228 = arith.constant 0 : index
    %c0_229 = arith.constant 0 : index
    %237 = vector.load %arg10[%c1_227, %c0_228, %c0_229] : memref<9x32x32xbf16, #tpu.memory_space<vmem>>, vector<1x32x32xbf16>
    %238 = vector.shape_cast %237 : vector<1x32x32xbf16> to vector<32x32xbf16>
    %cst_230 = arith.constant dense<0.000000e+00> : vector<64x32xf32>
    %239 = tpu.matmul %236, %238, %cst_230 {dimension_numbers = #tpu.dot_dimension_numbers<[1], [0], [0], [1], [0, 0, 1, 1], [], []>} : vector<64x32xbf16>, vector<32x32xbf16>, vector<64x32xf32> -> vector<64x32xf32>
    %240 = arith.addf %233, %239 : vector<64x32xf32>
    %c0_231 = arith.constant 0 : index
    %c2_232 = arith.constant 2 : index
    %c0_233 = arith.constant 0 : index
    %241 = vector.load %arg17[%c0_231, %c2_232, %c0_233] : memref<10x10x32xf32, #tpu.memory_space<vmem>>, vector<8x8x32xf32>
    %242 = vector.shape_cast %241 : vector<8x8x32xf32> to vector<64x32xf32>
    %243 = arith.truncf %242 : vector<64x32xf32> to vector<64x32xbf16>
    %c2_234 = arith.constant 2 : index
    %c0_235 = arith.constant 0 : index
    %c0_236 = arith.constant 0 : index
    %244 = vector.load %arg10[%c2_234, %c0_235, %c0_236] : memref<9x32x32xbf16, #tpu.memory_space<vmem>>, vector<1x32x32xbf16>
    %245 = vector.shape_cast %244 : vector<1x32x32xbf16> to vector<32x32xbf16>
    %cst_237 = arith.constant dense<0.000000e+00> : vector<64x32xf32>
    %246 = tpu.matmul %243, %245, %cst_237 {dimension_numbers = #tpu.dot_dimension_numbers<[1], [0], [0], [1], [0, 0, 1, 1], [], []>} : vector<64x32xbf16>, vector<32x32xbf16>, vector<64x32xf32> -> vector<64x32xf32>
    %247 = arith.addf %240, %246 : vector<64x32xf32>
    %c1_238 = arith.constant 1 : index
    %c0_239 = arith.constant 0 : index
    %c0_240 = arith.constant 0 : index
    %248 = vector.load %arg17[%c1_238, %c0_239, %c0_240] : memref<10x10x32xf32, #tpu.memory_space<vmem>>, vector<8x8x32xf32>
    %249 = vector.shape_cast %248 : vector<8x8x32xf32> to vector<64x32xf32>
    %250 = arith.truncf %249 : vector<64x32xf32> to vector<64x32xbf16>
    %c3_241 = arith.constant 3 : index
    %c0_242 = arith.constant 0 : index
    %c0_243 = arith.constant 0 : index
    %251 = vector.load %arg10[%c3_241, %c0_242, %c0_243] : memref<9x32x32xbf16, #tpu.memory_space<vmem>>, vector<1x32x32xbf16>
    %252 = vector.shape_cast %251 : vector<1x32x32xbf16> to vector<32x32xbf16>
    %cst_244 = arith.constant dense<0.000000e+00> : vector<64x32xf32>
    %253 = tpu.matmul %250, %252, %cst_244 {dimension_numbers = #tpu.dot_dimension_numbers<[1], [0], [0], [1], [0, 0, 1, 1], [], []>} : vector<64x32xbf16>, vector<32x32xbf16>, vector<64x32xf32> -> vector<64x32xf32>
    %254 = arith.addf %247, %253 : vector<64x32xf32>
    %c1_245 = arith.constant 1 : index
    %c1_246 = arith.constant 1 : index
    %c0_247 = arith.constant 0 : index
    %255 = vector.load %arg17[%c1_245, %c1_246, %c0_247] : memref<10x10x32xf32, #tpu.memory_space<vmem>>, vector<8x8x32xf32>
    %256 = vector.shape_cast %255 : vector<8x8x32xf32> to vector<64x32xf32>
    %257 = arith.truncf %256 : vector<64x32xf32> to vector<64x32xbf16>
    %c4_248 = arith.constant 4 : index
    %c0_249 = arith.constant 0 : index
    %c0_250 = arith.constant 0 : index
    %258 = vector.load %arg10[%c4_248, %c0_249, %c0_250] : memref<9x32x32xbf16, #tpu.memory_space<vmem>>, vector<1x32x32xbf16>
    %259 = vector.shape_cast %258 : vector<1x32x32xbf16> to vector<32x32xbf16>
    %cst_251 = arith.constant dense<0.000000e+00> : vector<64x32xf32>
    %260 = tpu.matmul %257, %259, %cst_251 {dimension_numbers = #tpu.dot_dimension_numbers<[1], [0], [0], [1], [0, 0, 1, 1], [], []>} : vector<64x32xbf16>, vector<32x32xbf16>, vector<64x32xf32> -> vector<64x32xf32>
    %261 = arith.addf %254, %260 : vector<64x32xf32>
    %c1_252 = arith.constant 1 : index
    %c2_253 = arith.constant 2 : index
    %c0_254 = arith.constant 0 : index
    %262 = vector.load %arg17[%c1_252, %c2_253, %c0_254] : memref<10x10x32xf32, #tpu.memory_space<vmem>>, vector<8x8x32xf32>
    %263 = vector.shape_cast %262 : vector<8x8x32xf32> to vector<64x32xf32>
    %264 = arith.truncf %263 : vector<64x32xf32> to vector<64x32xbf16>
    %c5_255 = arith.constant 5 : index
    %c0_256 = arith.constant 0 : index
    %c0_257 = arith.constant 0 : index
    %265 = vector.load %arg10[%c5_255, %c0_256, %c0_257] : memref<9x32x32xbf16, #tpu.memory_space<vmem>>, vector<1x32x32xbf16>
    %266 = vector.shape_cast %265 : vector<1x32x32xbf16> to vector<32x32xbf16>
    %cst_258 = arith.constant dense<0.000000e+00> : vector<64x32xf32>
    %267 = tpu.matmul %264, %266, %cst_258 {dimension_numbers = #tpu.dot_dimension_numbers<[1], [0], [0], [1], [0, 0, 1, 1], [], []>} : vector<64x32xbf16>, vector<32x32xbf16>, vector<64x32xf32> -> vector<64x32xf32>
    %268 = arith.addf %261, %267 : vector<64x32xf32>
    %c2_259 = arith.constant 2 : index
    %c0_260 = arith.constant 0 : index
    %c0_261 = arith.constant 0 : index
    %269 = vector.load %arg17[%c2_259, %c0_260, %c0_261] : memref<10x10x32xf32, #tpu.memory_space<vmem>>, vector<8x8x32xf32>
    %270 = vector.shape_cast %269 : vector<8x8x32xf32> to vector<64x32xf32>
    %271 = arith.truncf %270 : vector<64x32xf32> to vector<64x32xbf16>
    %c6_262 = arith.constant 6 : index
    %c0_263 = arith.constant 0 : index
    %c0_264 = arith.constant 0 : index
    %272 = vector.load %arg10[%c6_262, %c0_263, %c0_264] : memref<9x32x32xbf16, #tpu.memory_space<vmem>>, vector<1x32x32xbf16>
    %273 = vector.shape_cast %272 : vector<1x32x32xbf16> to vector<32x32xbf16>
    %cst_265 = arith.constant dense<0.000000e+00> : vector<64x32xf32>
    %274 = tpu.matmul %271, %273, %cst_265 {dimension_numbers = #tpu.dot_dimension_numbers<[1], [0], [0], [1], [0, 0, 1, 1], [], []>} : vector<64x32xbf16>, vector<32x32xbf16>, vector<64x32xf32> -> vector<64x32xf32>
    %275 = arith.addf %268, %274 : vector<64x32xf32>
    %c2_266 = arith.constant 2 : index
    %c1_267 = arith.constant 1 : index
    %c0_268 = arith.constant 0 : index
    %276 = vector.load %arg17[%c2_266, %c1_267, %c0_268] : memref<10x10x32xf32, #tpu.memory_space<vmem>>, vector<8x8x32xf32>
    %277 = vector.shape_cast %276 : vector<8x8x32xf32> to vector<64x32xf32>
    %278 = arith.truncf %277 : vector<64x32xf32> to vector<64x32xbf16>
    %c7_269 = arith.constant 7 : index
    %c0_270 = arith.constant 0 : index
    %c0_271 = arith.constant 0 : index
    %279 = vector.load %arg10[%c7_269, %c0_270, %c0_271] : memref<9x32x32xbf16, #tpu.memory_space<vmem>>, vector<1x32x32xbf16>
    %280 = vector.shape_cast %279 : vector<1x32x32xbf16> to vector<32x32xbf16>
    %cst_272 = arith.constant dense<0.000000e+00> : vector<64x32xf32>
    %281 = tpu.matmul %278, %280, %cst_272 {dimension_numbers = #tpu.dot_dimension_numbers<[1], [0], [0], [1], [0, 0, 1, 1], [], []>} : vector<64x32xbf16>, vector<32x32xbf16>, vector<64x32xf32> -> vector<64x32xf32>
    %282 = arith.addf %275, %281 : vector<64x32xf32>
    %c2_273 = arith.constant 2 : index
    %c2_274 = arith.constant 2 : index
    %c0_275 = arith.constant 0 : index
    %283 = vector.load %arg17[%c2_273, %c2_274, %c0_275] : memref<10x10x32xf32, #tpu.memory_space<vmem>>, vector<8x8x32xf32>
    %284 = vector.shape_cast %283 : vector<8x8x32xf32> to vector<64x32xf32>
    %285 = arith.truncf %284 : vector<64x32xf32> to vector<64x32xbf16>
    %c8_276 = arith.constant 8 : index
    %c0_277 = arith.constant 0 : index
    %c0_278 = arith.constant 0 : index
    %286 = vector.load %arg10[%c8_276, %c0_277, %c0_278] : memref<9x32x32xbf16, #tpu.memory_space<vmem>>, vector<1x32x32xbf16>
    %287 = vector.shape_cast %286 : vector<1x32x32xbf16> to vector<32x32xbf16>
    %cst_279 = arith.constant dense<0.000000e+00> : vector<64x32xf32>
    %288 = tpu.matmul %285, %287, %cst_279 {dimension_numbers = #tpu.dot_dimension_numbers<[1], [0], [0], [1], [0, 0, 1, 1], [], []>} : vector<64x32xbf16>, vector<32x32xbf16>, vector<64x32xf32> -> vector<64x32xf32>
    %289 = arith.addf %282, %288 : vector<64x32xf32>
    %c0_280 = arith.constant 0 : index
    %c0_281 = arith.constant 0 : index
    %290 = vector.load %arg11[%c0_280, %c0_281] : memref<1x32xf32, #tpu.memory_space<vmem>>, vector<1x32xf32>
    %291 = vector.broadcast %290 : vector<1x32xf32> to vector<64x32xf32>
    %292 = arith.addf %289, %291 : vector<64x32xf32>
    %293 = vector.shape_cast %153 : vector<8x8x32xf32> to vector<64x32xf32>
    %294 = arith.addf %292, %293 : vector<64x32xf32>
    %cst_282 = arith.constant 0.000000e+00 : f32
    %295 = vector.broadcast %cst_282 : f32 to vector<64x32xf32>
    %296 = arith.maximumf %294, %295 : vector<64x32xf32>
    %297 = vector.shape_cast %296 : vector<64x32xf32> to vector<8x8x32xf32>
    %c1_283 = arith.constant 1 : index
    %c1_284 = arith.constant 1 : index
    %c0_285 = arith.constant 0 : index
    %298 = vector.load %arg17[%c1_283, %c1_284, %c0_285] : memref<10x10x32xf32, #tpu.memory_space<vmem>>, vector<8x8x32xf32>
    tpu.vector_store %arg17[%c1_283, %c1_284, %c0_285], %297 {strides = array<i32>} : memref<10x10x32xf32, #tpu.memory_space<vmem>>, vector<8x8x32xf32>,
    %cst_286 = arith.constant 0.000000e+00 : f32
    %299 = vector.broadcast %cst_286 : f32 to vector<64x32xf32>
    %c0_287 = arith.constant 0 : index
    %c0_288 = arith.constant 0 : index
    %c0_289 = arith.constant 0 : index
    %300 = vector.load %arg17[%c0_287, %c0_288, %c0_289] : memref<10x10x32xf32, #tpu.memory_space<vmem>>, vector<8x8x32xf32>
    %301 = vector.shape_cast %300 : vector<8x8x32xf32> to vector<64x32xf32>
    %302 = arith.truncf %301 : vector<64x32xf32> to vector<64x32xbf16>
    %c0_290 = arith.constant 0 : index
    %c0_291 = arith.constant 0 : index
    %c0_292 = arith.constant 0 : index
    %303 = vector.load %arg12[%c0_290, %c0_291, %c0_292] : memref<9x32x32xbf16, #tpu.memory_space<vmem>>, vector<1x32x32xbf16>
    %304 = vector.shape_cast %303 : vector<1x32x32xbf16> to vector<32x32xbf16>
    %cst_293 = arith.constant dense<0.000000e+00> : vector<64x32xf32>
    %305 = tpu.matmul %302, %304, %cst_293 {dimension_numbers = #tpu.dot_dimension_numbers<[1], [0], [0], [1], [0, 0, 1, 1], [], []>} : vector<64x32xbf16>, vector<32x32xbf16>, vector<64x32xf32> -> vector<64x32xf32>
    %306 = arith.addf %299, %305 : vector<64x32xf32>
    %c0_294 = arith.constant 0 : index
    %c1_295 = arith.constant 1 : index
    %c0_296 = arith.constant 0 : index
    %307 = vector.load %arg17[%c0_294, %c1_295, %c0_296] : memref<10x10x32xf32, #tpu.memory_space<vmem>>, vector<8x8x32xf32>
    %308 = vector.shape_cast %307 : vector<8x8x32xf32> to vector<64x32xf32>
    %309 = arith.truncf %308 : vector<64x32xf32> to vector<64x32xbf16>
    %c1_297 = arith.constant 1 : index
    %c0_298 = arith.constant 0 : index
    %c0_299 = arith.constant 0 : index
    %310 = vector.load %arg12[%c1_297, %c0_298, %c0_299] : memref<9x32x32xbf16, #tpu.memory_space<vmem>>, vector<1x32x32xbf16>
    %311 = vector.shape_cast %310 : vector<1x32x32xbf16> to vector<32x32xbf16>
    %cst_300 = arith.constant dense<0.000000e+00> : vector<64x32xf32>
    %312 = tpu.matmul %309, %311, %cst_300 {dimension_numbers = #tpu.dot_dimension_numbers<[1], [0], [0], [1], [0, 0, 1, 1], [], []>} : vector<64x32xbf16>, vector<32x32xbf16>, vector<64x32xf32> -> vector<64x32xf32>
    %313 = arith.addf %306, %312 : vector<64x32xf32>
    %c0_301 = arith.constant 0 : index
    %c2_302 = arith.constant 2 : index
    %c0_303 = arith.constant 0 : index
    %314 = vector.load %arg17[%c0_301, %c2_302, %c0_303] : memref<10x10x32xf32, #tpu.memory_space<vmem>>, vector<8x8x32xf32>
    %315 = vector.shape_cast %314 : vector<8x8x32xf32> to vector<64x32xf32>
    %316 = arith.truncf %315 : vector<64x32xf32> to vector<64x32xbf16>
    %c2_304 = arith.constant 2 : index
    %c0_305 = arith.constant 0 : index
    %c0_306 = arith.constant 0 : index
    %317 = vector.load %arg12[%c2_304, %c0_305, %c0_306] : memref<9x32x32xbf16, #tpu.memory_space<vmem>>, vector<1x32x32xbf16>
    %318 = vector.shape_cast %317 : vector<1x32x32xbf16> to vector<32x32xbf16>
    %cst_307 = arith.constant dense<0.000000e+00> : vector<64x32xf32>
    %319 = tpu.matmul %316, %318, %cst_307 {dimension_numbers = #tpu.dot_dimension_numbers<[1], [0], [0], [1], [0, 0, 1, 1], [], []>} : vector<64x32xbf16>, vector<32x32xbf16>, vector<64x32xf32> -> vector<64x32xf32>
    %320 = arith.addf %313, %319 : vector<64x32xf32>
    %c1_308 = arith.constant 1 : index
    %c0_309 = arith.constant 0 : index
    %c0_310 = arith.constant 0 : index
    %321 = vector.load %arg17[%c1_308, %c0_309, %c0_310] : memref<10x10x32xf32, #tpu.memory_space<vmem>>, vector<8x8x32xf32>
    %322 = vector.shape_cast %321 : vector<8x8x32xf32> to vector<64x32xf32>
    %323 = arith.truncf %322 : vector<64x32xf32> to vector<64x32xbf16>
    %c3_311 = arith.constant 3 : index
    %c0_312 = arith.constant 0 : index
    %c0_313 = arith.constant 0 : index
    %324 = vector.load %arg12[%c3_311, %c0_312, %c0_313] : memref<9x32x32xbf16, #tpu.memory_space<vmem>>, vector<1x32x32xbf16>
    %325 = vector.shape_cast %324 : vector<1x32x32xbf16> to vector<32x32xbf16>
    %cst_314 = arith.constant dense<0.000000e+00> : vector<64x32xf32>
    %326 = tpu.matmul %323, %325, %cst_314 {dimension_numbers = #tpu.dot_dimension_numbers<[1], [0], [0], [1], [0, 0, 1, 1], [], []>} : vector<64x32xbf16>, vector<32x32xbf16>, vector<64x32xf32> -> vector<64x32xf32>
    %327 = arith.addf %320, %326 : vector<64x32xf32>
    %c1_315 = arith.constant 1 : index
    %c1_316 = arith.constant 1 : index
    %c0_317 = arith.constant 0 : index
    %328 = vector.load %arg17[%c1_315, %c1_316, %c0_317] : memref<10x10x32xf32, #tpu.memory_space<vmem>>, vector<8x8x32xf32>
    %329 = vector.shape_cast %328 : vector<8x8x32xf32> to vector<64x32xf32>
    %330 = arith.truncf %329 : vector<64x32xf32> to vector<64x32xbf16>
    %c4_318 = arith.constant 4 : index
    %c0_319 = arith.constant 0 : index
    %c0_320 = arith.constant 0 : index
    %331 = vector.load %arg12[%c4_318, %c0_319, %c0_320] : memref<9x32x32xbf16, #tpu.memory_space<vmem>>, vector<1x32x32xbf16>
    %332 = vector.shape_cast %331 : vector<1x32x32xbf16> to vector<32x32xbf16>
    %cst_321 = arith.constant dense<0.000000e+00> : vector<64x32xf32>
    %333 = tpu.matmul %330, %332, %cst_321 {dimension_numbers = #tpu.dot_dimension_numbers<[1], [0], [0], [1], [0, 0, 1, 1], [], []>} : vector<64x32xbf16>, vector<32x32xbf16>, vector<64x32xf32> -> vector<64x32xf32>
    %334 = arith.addf %327, %333 : vector<64x32xf32>
    %c1_322 = arith.constant 1 : index
    %c2_323 = arith.constant 2 : index
    %c0_324 = arith.constant 0 : index
    %335 = vector.load %arg17[%c1_322, %c2_323, %c0_324] : memref<10x10x32xf32, #tpu.memory_space<vmem>>, vector<8x8x32xf32>
    %336 = vector.shape_cast %335 : vector<8x8x32xf32> to vector<64x32xf32>
    %337 = arith.truncf %336 : vector<64x32xf32> to vector<64x32xbf16>
    %c5_325 = arith.constant 5 : index
    %c0_326 = arith.constant 0 : index
    %c0_327 = arith.constant 0 : index
    %338 = vector.load %arg12[%c5_325, %c0_326, %c0_327] : memref<9x32x32xbf16, #tpu.memory_space<vmem>>, vector<1x32x32xbf16>
    %339 = vector.shape_cast %338 : vector<1x32x32xbf16> to vector<32x32xbf16>
    %cst_328 = arith.constant dense<0.000000e+00> : vector<64x32xf32>
    %340 = tpu.matmul %337, %339, %cst_328 {dimension_numbers = #tpu.dot_dimension_numbers<[1], [0], [0], [1], [0, 0, 1, 1], [], []>} : vector<64x32xbf16>, vector<32x32xbf16>, vector<64x32xf32> -> vector<64x32xf32>
    %341 = arith.addf %334, %340 : vector<64x32xf32>
    %c2_329 = arith.constant 2 : index
    %c0_330 = arith.constant 0 : index
    %c0_331 = arith.constant 0 : index
    %342 = vector.load %arg17[%c2_329, %c0_330, %c0_331] : memref<10x10x32xf32, #tpu.memory_space<vmem>>, vector<8x8x32xf32>
    %343 = vector.shape_cast %342 : vector<8x8x32xf32> to vector<64x32xf32>
    %344 = arith.truncf %343 : vector<64x32xf32> to vector<64x32xbf16>
    %c6_332 = arith.constant 6 : index
    %c0_333 = arith.constant 0 : index
    %c0_334 = arith.constant 0 : index
    %345 = vector.load %arg12[%c6_332, %c0_333, %c0_334] : memref<9x32x32xbf16, #tpu.memory_space<vmem>>, vector<1x32x32xbf16>
    %346 = vector.shape_cast %345 : vector<1x32x32xbf16> to vector<32x32xbf16>
    %cst_335 = arith.constant dense<0.000000e+00> : vector<64x32xf32>
    %347 = tpu.matmul %344, %346, %cst_335 {dimension_numbers = #tpu.dot_dimension_numbers<[1], [0], [0], [1], [0, 0, 1, 1], [], []>} : vector<64x32xbf16>, vector<32x32xbf16>, vector<64x32xf32> -> vector<64x32xf32>
    %348 = arith.addf %341, %347 : vector<64x32xf32>
    %c2_336 = arith.constant 2 : index
    %c1_337 = arith.constant 1 : index
    %c0_338 = arith.constant 0 : index
    %349 = vector.load %arg17[%c2_336, %c1_337, %c0_338] : memref<10x10x32xf32, #tpu.memory_space<vmem>>, vector<8x8x32xf32>
    %350 = vector.shape_cast %349 : vector<8x8x32xf32> to vector<64x32xf32>
    %351 = arith.truncf %350 : vector<64x32xf32> to vector<64x32xbf16>
    %c7_339 = arith.constant 7 : index
    %c0_340 = arith.constant 0 : index
    %c0_341 = arith.constant 0 : index
    %352 = vector.load %arg12[%c7_339, %c0_340, %c0_341] : memref<9x32x32xbf16, #tpu.memory_space<vmem>>, vector<1x32x32xbf16>
    %353 = vector.shape_cast %352 : vector<1x32x32xbf16> to vector<32x32xbf16>
    %cst_342 = arith.constant dense<0.000000e+00> : vector<64x32xf32>
    %354 = tpu.matmul %351, %353, %cst_342 {dimension_numbers = #tpu.dot_dimension_numbers<[1], [0], [0], [1], [0, 0, 1, 1], [], []>} : vector<64x32xbf16>, vector<32x32xbf16>, vector<64x32xf32> -> vector<64x32xf32>
    %355 = arith.addf %348, %354 : vector<64x32xf32>
    %c2_343 = arith.constant 2 : index
    %c2_344 = arith.constant 2 : index
    %c0_345 = arith.constant 0 : index
    %356 = vector.load %arg17[%c2_343, %c2_344, %c0_345] : memref<10x10x32xf32, #tpu.memory_space<vmem>>, vector<8x8x32xf32>
    %357 = vector.shape_cast %356 : vector<8x8x32xf32> to vector<64x32xf32>
    %358 = arith.truncf %357 : vector<64x32xf32> to vector<64x32xbf16>
    %c8_346 = arith.constant 8 : index
    %c0_347 = arith.constant 0 : index
    %c0_348 = arith.constant 0 : index
    %359 = vector.load %arg12[%c8_346, %c0_347, %c0_348] : memref<9x32x32xbf16, #tpu.memory_space<vmem>>, vector<1x32x32xbf16>
    %360 = vector.shape_cast %359 : vector<1x32x32xbf16> to vector<32x32xbf16>
    %cst_349 = arith.constant dense<0.000000e+00> : vector<64x32xf32>
    %361 = tpu.matmul %358, %360, %cst_349 {dimension_numbers = #tpu.dot_dimension_numbers<[1], [0], [0], [1], [0, 0, 1, 1], [], []>} : vector<64x32xbf16>, vector<32x32xbf16>, vector<64x32xf32> -> vector<64x32xf32>
    %362 = arith.addf %355, %361 : vector<64x32xf32>
    %c0_350 = arith.constant 0 : index
    %c0_351 = arith.constant 0 : index
    %363 = vector.load %arg13[%c0_350, %c0_351] : memref<1x32xf32, #tpu.memory_space<vmem>>, vector<1x32xf32>
    %364 = vector.broadcast %363 : vector<1x32xf32> to vector<64x32xf32>
    %365 = arith.addf %362, %364 : vector<64x32xf32>
    %cst_352 = arith.constant 0.000000e+00 : f32
    %366 = vector.broadcast %cst_352 : f32 to vector<64x32xf32>
    %367 = arith.maximumf %365, %366 : vector<64x32xf32>
    %368 = vector.shape_cast %367 : vector<64x32xf32> to vector<8x8x32xf32>
    %c1_353 = arith.constant 1 : index
    %c1_354 = arith.constant 1 : index
    %c0_355 = arith.constant 0 : index
    %369 = vector.load %arg17[%c1_353, %c1_354, %c0_355] : memref<10x10x32xf32, #tpu.memory_space<vmem>>, vector<8x8x32xf32>
    tpu.vector_store %arg17[%c1_353, %c1_354, %c0_355], %368 {strides = array<i32>} : memref<10x10x32xf32, #tpu.memory_space<vmem>>, vector<8x8x32xf32>,
    %cst_356 = arith.constant 0.000000e+00 : f32
    %370 = vector.broadcast %cst_356 : f32 to vector<64x32xf32>
    %c0_357 = arith.constant 0 : index
    %c0_358 = arith.constant 0 : index
    %c0_359 = arith.constant 0 : index
    %371 = vector.load %arg17[%c0_357, %c0_358, %c0_359] : memref<10x10x32xf32, #tpu.memory_space<vmem>>, vector<8x8x32xf32>
    %372 = vector.shape_cast %371 : vector<8x8x32xf32> to vector<64x32xf32>
    %373 = arith.truncf %372 : vector<64x32xf32> to vector<64x32xbf16>
    %c0_360 = arith.constant 0 : index
    %c0_361 = arith.constant 0 : index
    %c0_362 = arith.constant 0 : index
    %374 = vector.load %arg14[%c0_360, %c0_361, %c0_362] : memref<9x32x32xbf16, #tpu.memory_space<vmem>>, vector<1x32x32xbf16>
    %375 = vector.shape_cast %374 : vector<1x32x32xbf16> to vector<32x32xbf16>
    %cst_363 = arith.constant dense<0.000000e+00> : vector<64x32xf32>
    %376 = tpu.matmul %373, %375, %cst_363 {dimension_numbers = #tpu.dot_dimension_numbers<[1], [0], [0], [1], [0, 0, 1, 1], [], []>} : vector<64x32xbf16>, vector<32x32xbf16>, vector<64x32xf32> -> vector<64x32xf32>
    %377 = arith.addf %370, %376 : vector<64x32xf32>
    %c0_364 = arith.constant 0 : index
    %c1_365 = arith.constant 1 : index
    %c0_366 = arith.constant 0 : index
    %378 = vector.load %arg17[%c0_364, %c1_365, %c0_366] : memref<10x10x32xf32, #tpu.memory_space<vmem>>, vector<8x8x32xf32>
    %379 = vector.shape_cast %378 : vector<8x8x32xf32> to vector<64x32xf32>
    %380 = arith.truncf %379 : vector<64x32xf32> to vector<64x32xbf16>
    %c1_367 = arith.constant 1 : index
    %c0_368 = arith.constant 0 : index
    %c0_369 = arith.constant 0 : index
    %381 = vector.load %arg14[%c1_367, %c0_368, %c0_369] : memref<9x32x32xbf16, #tpu.memory_space<vmem>>, vector<1x32x32xbf16>
    %382 = vector.shape_cast %381 : vector<1x32x32xbf16> to vector<32x32xbf16>
    %cst_370 = arith.constant dense<0.000000e+00> : vector<64x32xf32>
    %383 = tpu.matmul %380, %382, %cst_370 {dimension_numbers = #tpu.dot_dimension_numbers<[1], [0], [0], [1], [0, 0, 1, 1], [], []>} : vector<64x32xbf16>, vector<32x32xbf16>, vector<64x32xf32> -> vector<64x32xf32>
    %384 = arith.addf %377, %383 : vector<64x32xf32>
    %c0_371 = arith.constant 0 : index
    %c2_372 = arith.constant 2 : index
    %c0_373 = arith.constant 0 : index
    %385 = vector.load %arg17[%c0_371, %c2_372, %c0_373] : memref<10x10x32xf32, #tpu.memory_space<vmem>>, vector<8x8x32xf32>
    %386 = vector.shape_cast %385 : vector<8x8x32xf32> to vector<64x32xf32>
    %387 = arith.truncf %386 : vector<64x32xf32> to vector<64x32xbf16>
    %c2_374 = arith.constant 2 : index
    %c0_375 = arith.constant 0 : index
    %c0_376 = arith.constant 0 : index
    %388 = vector.load %arg14[%c2_374, %c0_375, %c0_376] : memref<9x32x32xbf16, #tpu.memory_space<vmem>>, vector<1x32x32xbf16>
    %389 = vector.shape_cast %388 : vector<1x32x32xbf16> to vector<32x32xbf16>
    %cst_377 = arith.constant dense<0.000000e+00> : vector<64x32xf32>
    %390 = tpu.matmul %387, %389, %cst_377 {dimension_numbers = #tpu.dot_dimension_numbers<[1], [0], [0], [1], [0, 0, 1, 1], [], []>} : vector<64x32xbf16>, vector<32x32xbf16>, vector<64x32xf32> -> vector<64x32xf32>
    %391 = arith.addf %384, %390 : vector<64x32xf32>
    %c1_378 = arith.constant 1 : index
    %c0_379 = arith.constant 0 : index
    %c0_380 = arith.constant 0 : index
    %392 = vector.load %arg17[%c1_378, %c0_379, %c0_380] : memref<10x10x32xf32, #tpu.memory_space<vmem>>, vector<8x8x32xf32>
    %393 = vector.shape_cast %392 : vector<8x8x32xf32> to vector<64x32xf32>
    %394 = arith.truncf %393 : vector<64x32xf32> to vector<64x32xbf16>
    %c3_381 = arith.constant 3 : index
    %c0_382 = arith.constant 0 : index
    %c0_383 = arith.constant 0 : index
    %395 = vector.load %arg14[%c3_381, %c0_382, %c0_383] : memref<9x32x32xbf16, #tpu.memory_space<vmem>>, vector<1x32x32xbf16>
    %396 = vector.shape_cast %395 : vector<1x32x32xbf16> to vector<32x32xbf16>
    %cst_384 = arith.constant dense<0.000000e+00> : vector<64x32xf32>
    %397 = tpu.matmul %394, %396, %cst_384 {dimension_numbers = #tpu.dot_dimension_numbers<[1], [0], [0], [1], [0, 0, 1, 1], [], []>} : vector<64x32xbf16>, vector<32x32xbf16>, vector<64x32xf32> -> vector<64x32xf32>
    %398 = arith.addf %391, %397 : vector<64x32xf32>
    %c1_385 = arith.constant 1 : index
    %c1_386 = arith.constant 1 : index
    %c0_387 = arith.constant 0 : index
    %399 = vector.load %arg17[%c1_385, %c1_386, %c0_387] : memref<10x10x32xf32, #tpu.memory_space<vmem>>, vector<8x8x32xf32>
    %400 = vector.shape_cast %399 : vector<8x8x32xf32> to vector<64x32xf32>
    %401 = arith.truncf %400 : vector<64x32xf32> to vector<64x32xbf16>
    %c4_388 = arith.constant 4 : index
    %c0_389 = arith.constant 0 : index
    %c0_390 = arith.constant 0 : index
    %402 = vector.load %arg14[%c4_388, %c0_389, %c0_390] : memref<9x32x32xbf16, #tpu.memory_space<vmem>>, vector<1x32x32xbf16>
    %403 = vector.shape_cast %402 : vector<1x32x32xbf16> to vector<32x32xbf16>
    %cst_391 = arith.constant dense<0.000000e+00> : vector<64x32xf32>
    %404 = tpu.matmul %401, %403, %cst_391 {dimension_numbers = #tpu.dot_dimension_numbers<[1], [0], [0], [1], [0, 0, 1, 1], [], []>} : vector<64x32xbf16>, vector<32x32xbf16>, vector<64x32xf32> -> vector<64x32xf32>
    %405 = arith.addf %398, %404 : vector<64x32xf32>
    %c1_392 = arith.constant 1 : index
    %c2_393 = arith.constant 2 : index
    %c0_394 = arith.constant 0 : index
    %406 = vector.load %arg17[%c1_392, %c2_393, %c0_394] : memref<10x10x32xf32, #tpu.memory_space<vmem>>, vector<8x8x32xf32>
    %407 = vector.shape_cast %406 : vector<8x8x32xf32> to vector<64x32xf32>
    %408 = arith.truncf %407 : vector<64x32xf32> to vector<64x32xbf16>
    %c5_395 = arith.constant 5 : index
    %c0_396 = arith.constant 0 : index
    %c0_397 = arith.constant 0 : index
    %409 = vector.load %arg14[%c5_395, %c0_396, %c0_397] : memref<9x32x32xbf16, #tpu.memory_space<vmem>>, vector<1x32x32xbf16>
    %410 = vector.shape_cast %409 : vector<1x32x32xbf16> to vector<32x32xbf16>
    %cst_398 = arith.constant dense<0.000000e+00> : vector<64x32xf32>
    %411 = tpu.matmul %408, %410, %cst_398 {dimension_numbers = #tpu.dot_dimension_numbers<[1], [0], [0], [1], [0, 0, 1, 1], [], []>} : vector<64x32xbf16>, vector<32x32xbf16>, vector<64x32xf32> -> vector<64x32xf32>
    %412 = arith.addf %405, %411 : vector<64x32xf32>
    %c2_399 = arith.constant 2 : index
    %c0_400 = arith.constant 0 : index
    %c0_401 = arith.constant 0 : index
    %413 = vector.load %arg17[%c2_399, %c0_400, %c0_401] : memref<10x10x32xf32, #tpu.memory_space<vmem>>, vector<8x8x32xf32>
    %414 = vector.shape_cast %413 : vector<8x8x32xf32> to vector<64x32xf32>
    %415 = arith.truncf %414 : vector<64x32xf32> to vector<64x32xbf16>
    %c6_402 = arith.constant 6 : index
    %c0_403 = arith.constant 0 : index
    %c0_404 = arith.constant 0 : index
    %416 = vector.load %arg14[%c6_402, %c0_403, %c0_404] : memref<9x32x32xbf16, #tpu.memory_space<vmem>>, vector<1x32x32xbf16>
    %417 = vector.shape_cast %416 : vector<1x32x32xbf16> to vector<32x32xbf16>
    %cst_405 = arith.constant dense<0.000000e+00> : vector<64x32xf32>
    %418 = tpu.matmul %415, %417, %cst_405 {dimension_numbers = #tpu.dot_dimension_numbers<[1], [0], [0], [1], [0, 0, 1, 1], [], []>} : vector<64x32xbf16>, vector<32x32xbf16>, vector<64x32xf32> -> vector<64x32xf32>
    %419 = arith.addf %412, %418 : vector<64x32xf32>
    %c2_406 = arith.constant 2 : index
    %c1_407 = arith.constant 1 : index
    %c0_408 = arith.constant 0 : index
    %420 = vector.load %arg17[%c2_406, %c1_407, %c0_408] : memref<10x10x32xf32, #tpu.memory_space<vmem>>, vector<8x8x32xf32>
    %421 = vector.shape_cast %420 : vector<8x8x32xf32> to vector<64x32xf32>
    %422 = arith.truncf %421 : vector<64x32xf32> to vector<64x32xbf16>
    %c7_409 = arith.constant 7 : index
    %c0_410 = arith.constant 0 : index
    %c0_411 = arith.constant 0 : index
    %423 = vector.load %arg14[%c7_409, %c0_410, %c0_411] : memref<9x32x32xbf16, #tpu.memory_space<vmem>>, vector<1x32x32xbf16>
    %424 = vector.shape_cast %423 : vector<1x32x32xbf16> to vector<32x32xbf16>
    %cst_412 = arith.constant dense<0.000000e+00> : vector<64x32xf32>
    %425 = tpu.matmul %422, %424, %cst_412 {dimension_numbers = #tpu.dot_dimension_numbers<[1], [0], [0], [1], [0, 0, 1, 1], [], []>} : vector<64x32xbf16>, vector<32x32xbf16>, vector<64x32xf32> -> vector<64x32xf32>
    %426 = arith.addf %419, %425 : vector<64x32xf32>
    %c2_413 = arith.constant 2 : index
    %c2_414 = arith.constant 2 : index
    %c0_415 = arith.constant 0 : index
    %427 = vector.load %arg17[%c2_413, %c2_414, %c0_415] : memref<10x10x32xf32, #tpu.memory_space<vmem>>, vector<8x8x32xf32>
    %428 = vector.shape_cast %427 : vector<8x8x32xf32> to vector<64x32xf32>
    %429 = arith.truncf %428 : vector<64x32xf32> to vector<64x32xbf16>
    %c8_416 = arith.constant 8 : index
    %c0_417 = arith.constant 0 : index
    %c0_418 = arith.constant 0 : index
    %430 = vector.load %arg14[%c8_416, %c0_417, %c0_418] : memref<9x32x32xbf16, #tpu.memory_space<vmem>>, vector<1x32x32xbf16>
    %431 = vector.shape_cast %430 : vector<1x32x32xbf16> to vector<32x32xbf16>
    %cst_419 = arith.constant dense<0.000000e+00> : vector<64x32xf32>
    %432 = tpu.matmul %429, %431, %cst_419 {dimension_numbers = #tpu.dot_dimension_numbers<[1], [0], [0], [1], [0, 0, 1, 1], [], []>} : vector<64x32xbf16>, vector<32x32xbf16>, vector<64x32xf32> -> vector<64x32xf32>
    %433 = arith.addf %426, %432 : vector<64x32xf32>
    %c0_420 = arith.constant 0 : index
    %c0_421 = arith.constant 0 : index
    %434 = vector.load %arg15[%c0_420, %c0_421] : memref<1x32xf32, #tpu.memory_space<vmem>>, vector<1x32xf32>
    %435 = vector.broadcast %434 : vector<1x32xf32> to vector<64x32xf32>
    %436 = arith.addf %433, %435 : vector<64x32xf32>
    %437 = vector.shape_cast %297 : vector<8x8x32xf32> to vector<64x32xf32>
    %438 = arith.addf %436, %437 : vector<64x32xf32>
    %cst_422 = arith.constant 0.000000e+00 : f32
    %439 = vector.broadcast %cst_422 : f32 to vector<64x32xf32>
    %440 = arith.maximumf %438, %439 : vector<64x32xf32>
    %441 = vector.shape_cast %440 : vector<64x32xf32> to vector<8x8x32xf32>
    %442 = vector.shape_cast %441 : vector<8x8x32xf32> to vector<64x32xf32>
    %443 = arith.truncf %442 : vector<64x32xf32> to vector<64x32xbf16>
    %c0_423 = arith.constant 0 : index
    %c0_424 = arith.constant 0 : index
    %c0_425 = arith.constant 0 : index
    %444 = vector.load %arg16[%c0_423, %c0_424, %c0_425] : memref<1x64x32xbf16, #tpu.memory_space<vmem>>, vector<1x64x32xbf16>
    %445 = vector.shape_cast %444 : vector<1x64x32xbf16> to vector<64x32xbf16>
    %446 = vector.shape_cast %443 : vector<64x32xbf16> to vector<1x64x32xbf16>
    tpu.vector_store %arg16[%c0_423, %c0_424, %c0_425], %446 {strides = array<i32>} : memref<1x64x32xbf16, #tpu.memory_space<vmem>>, vector<1x64x32xbf16>,
    return
  }
  func.func @transform_0(%arg0: i32) -> (i32, i32, i32, i32) {
    %c0_i32 = arith.constant 0 : i32
    %c0_i32_0 = arith.constant 0 : i32
    %c0_i32_1 = arith.constant 0 : i32
    %c0_i32_2 = arith.constant 0 : i32
    return %arg0, %c0_i32, %c0_i32_0, %c0_i32_1 : i32, i32, i32, i32
  }
  func.func @transform_1(%arg0: i32) -> (i32, i32, i32) {
    %c0_i32 = arith.constant 0 : i32
    %c0_i32_0 = arith.constant 0 : i32
    %c0_i32_1 = arith.constant 0 : i32
    %c0_i32_2 = arith.constant 0 : i32
    return %c0_i32, %c0_i32_0, %c0_i32_1 : i32, i32, i32
  }
  func.func @transform_2(%arg0: i32) -> (i32, i32) {
    %c0_i32 = arith.constant 0 : i32
    %c0_i32_0 = arith.constant 0 : i32
    %c0_i32_1 = arith.constant 0 : i32
    return %c0_i32, %c0_i32_0 : i32, i32
  }
  func.func @transform_3(%arg0: i32) -> (i32, i32, i32) {
    %c0_i32 = arith.constant 0 : i32
    %c0_i32_0 = arith.constant 0 : i32
    %c0_i32_1 = arith.constant 0 : i32
    %c0_i32_2 = arith.constant 0 : i32
    return %c0_i32, %c0_i32_0, %c0_i32_1 : i32, i32, i32
  }
  func.func @transform_4(%arg0: i32) -> (i32, i32) {
    %c0_i32 = arith.constant 0 : i32
    %c0_i32_0 = arith.constant 0 : i32
    %c0_i32_1 = arith.constant 0 : i32
    return %c0_i32, %c0_i32_0 : i32, i32
  }
  func.func @transform_5(%arg0: i32) -> (i32, i32) {
    %c0_i32 = arith.constant 0 : i32
    %c0_i32_0 = arith.constant 0 : i32
    %c0_i32_1 = arith.constant 0 : i32
    return %c0_i32, %c0_i32_0 : i32, i32
  }
  func.func @transform_6(%arg0: i32) -> (i32, i32) {
    %c0_i32 = arith.constant 0 : i32
    %c0_i32_0 = arith.constant 0 : i32
    %c0_i32_1 = arith.constant 0 : i32
    return %c0_i32, %c0_i32_0 : i32, i32
  }
  func.func @transform_7(%arg0: i32) -> (i32, i32, i32) {
    %c0_i32 = arith.constant 0 : i32
    %c0_i32_0 = arith.constant 0 : i32
    %c0_i32_1 = arith.constant 0 : i32
    %c0_i32_2 = arith.constant 0 : i32
    return %c0_i32, %c0_i32_0, %c0_i32_1 : i32, i32, i32
  }
  func.func @transform_8(%arg0: i32) -> (i32, i32) {
    %c0_i32 = arith.constant 0 : i32
    %c0_i32_0 = arith.constant 0 : i32
    %c0_i32_1 = arith.constant 0 : i32
    return %c0_i32, %c0_i32_0 : i32, i32
  }
  func.func @transform_9(%arg0: i32) -> (i32, i32, i32) {
    %c0_i32 = arith.constant 0 : i32
    %c0_i32_0 = arith.constant 0 : i32
    %c0_i32_1 = arith.constant 0 : i32
    %c0_i32_2 = arith.constant 0 : i32
    return %c0_i32, %c0_i32_0, %c0_i32_1 : i32, i32, i32
  }
  func.func @transform_10(%arg0: i32) -> (i32, i32) {
    %c0_i32 = arith.constant 0 : i32
    %c0_i32_0 = arith.constant 0 : i32
    %c0_i32_1 = arith.constant 0 : i32
    return %c0_i32, %c0_i32_0 : i32, i32
  }
  func.func @transform_11(%arg0: i32) -> (i32, i32, i32) {
    %c0_i32 = arith.constant 0 : i32
    %c0_i32_0 = arith.constant 0 : i32
    %c0_i32_1 = arith.constant 0 : i32
    %c0_i32_2 = arith.constant 0 : i32
    return %c0_i32, %c0_i32_0, %c0_i32_1 : i32, i32, i32
  }
  func.func @transform_12(%arg0: i32) -> (i32, i32) {
    %c0_i32 = arith.constant 0 : i32
    %c0_i32_0 = arith.constant 0 : i32
    %c0_i32_1 = arith.constant 0 : i32
    return %c0_i32, %c0_i32_0 : i32, i32
  }
  func.func @transform_13(%arg0: i32) -> (i32, i32, i32) {
    %c0_i32 = arith.constant 0 : i32
    %c0_i32_0 = arith.constant 0 : i32
    %c0_i32_1 = arith.constant 0 : i32
    %c0_i32_2 = arith.constant 0 : i32
    return %c0_i32, %c0_i32_0, %c0_i32_1 : i32, i32, i32
  }
  func.func @transform_14(%arg0: i32) -> (i32, i32) {
    %c0_i32 = arith.constant 0 : i32
    %c0_i32_0 = arith.constant 0 : i32
    %c0_i32_1 = arith.constant 0 : i32
    return %c0_i32, %c0_i32_0 : i32, i32
  }
  func.func @transform_15(%arg0: i32) -> (i32, i32, i32) {
    %c0_i32 = arith.constant 0 : i32
    %c0_i32_0 = arith.constant 0 : i32
    %c0_i32_1 = arith.constant 0 : i32
    return %arg0, %c0_i32, %c0_i32_0 : i32, i32, i32
  }
}

module attributes {stable_mosaic.version = 11 : i64} {
  func.func @_heads_kernel(%arg0: memref<2x64x32xbf16, #tpu.memory_space<vmem>>, %arg1: memref<32x3xbf16, #tpu.memory_space<vmem>>, %arg2: memref<1x3xf32, #tpu.memory_space<vmem>>, %arg3: memref<64x64xf32, #tpu.memory_space<vmem>>, %arg4: memref<64x64xf32, #tpu.memory_space<vmem>>, %arg5: memref<1x64xf32, #tpu.memory_space<vmem>>, %arg6: memref<64x256xf32, #tpu.memory_space<vmem>>, %arg7: memref<1x256xf32, #tpu.memory_space<vmem>>, %arg8: memref<1x256xf32, #tpu.memory_space<vmem>>, %arg9: memref<1x1xf32, #tpu.memory_space<vmem>>, %arg10: memref<2x64xf32, #tpu.memory_space<vmem>>, %arg11: memref<2x1xf32, #tpu.memory_space<vmem>>, %arg12: memref<2x64xf32, #tpu.memory_space<vmem>>) attributes {dimension_semantics = [], scalar_prefetch = 0 : i64, scratch_operands = 1 : i64, tpu.core_type = #tpu.core_type<tc>} {
    %c0 = arith.constant 0 : index
    %c0_0 = arith.constant 0 : index
    %c0_1 = arith.constant 0 : index
    %0 = vector.load %arg0[%c0, %c0_0, %c0_1] : memref<2x64x32xbf16, #tpu.memory_space<vmem>>, vector<1x64x32xbf16>
    %1 = vector.shape_cast %0 : vector<1x64x32xbf16> to vector<64x32xbf16>
    %c0_2 = arith.constant 0 : index
    %c0_3 = arith.constant 0 : index
    %2 = vector.load %arg1[%c0_2, %c0_3] : memref<32x3xbf16, #tpu.memory_space<vmem>>, vector<32x3xbf16>
    %cst = arith.constant dense<0.000000e+00> : vector<64x3xf32>
    %3 = tpu.matmul %1, %2, %cst {dimension_numbers = #tpu.dot_dimension_numbers<[1], [0], [0], [1], [0, 0, 1, 1], [], []>} : vector<64x32xbf16>, vector<32x3xbf16>, vector<64x3xf32> -> vector<64x3xf32>
    %c0_4 = arith.constant 0 : index
    %c0_5 = arith.constant 0 : index
    %4 = vector.load %arg2[%c0_4, %c0_5] : memref<1x3xf32, #tpu.memory_space<vmem>>, vector<1x3xf32>
    %5 = vector.broadcast %4 : vector<1x3xf32> to vector<64x3xf32>
    %6 = arith.addf %3, %5 : vector<64x3xf32>
    %cst_6 = arith.constant 0.000000e+00 : f32
    %7 = vector.broadcast %cst_6 : f32 to vector<64x3xf32>
    %8 = arith.maximumf %6, %7 : vector<64x3xf32>
    %9 = vector.extract_strided_slice %8 {offsets = [0, 0], sizes = [64, 1], strides = [1, 1]} : vector<64x3xf32> to vector<64x1xf32>
    %10 = vector.extract_strided_slice %8 {offsets = [0, 1], sizes = [64, 1], strides = [1, 1]} : vector<64x3xf32> to vector<64x1xf32>
    %11 = vector.extract_strided_slice %8 {offsets = [0, 2], sizes = [64, 1], strides = [1, 1]} : vector<64x3xf32> to vector<64x1xf32>
    %c0_7 = arith.constant 0 : index
    %c0_8 = arith.constant 0 : index
    %12 = vector.load %arg3[%c0_7, %c0_8] : memref<64x64xf32, #tpu.memory_space<vmem>>, vector<64x64xf32>
    %13 = vector.broadcast %9 : vector<64x1xf32> to vector<64x64xf32>
    %14 = arith.mulf %13, %12 : vector<64x64xf32>
    %c0_9 = arith.constant 0 : index
    %c0_10 = arith.constant 0 : index
    %15 = vector.load %arg4[%c0_9, %c0_10] : memref<64x64xf32, #tpu.memory_space<vmem>>, vector<64x64xf32>
    %16 = vector.broadcast %10 : vector<64x1xf32> to vector<64x64xf32>
    %17 = arith.mulf %16, %15 : vector<64x64xf32>
    %18 = arith.addf %14, %17 : vector<64x64xf32>
    %cst_11 = arith.constant dense<0.000000e+00> : vector<64xf32>
    %19 = vector.multi_reduction <add>, %18, %cst_11 [0] : vector<64x64xf32> to vector<64xf32>
    %20 = vector.shape_cast %19 : vector<64xf32> to vector<1x64xf32>
    %c0_12 = arith.constant 0 : index
    %c0_13 = arith.constant 0 : index
    %21 = vector.load %arg5[%c0_12, %c0_13] : memref<1x64xf32, #tpu.memory_space<vmem>>, vector<1x64xf32>
    %22 = arith.addf %20, %21 : vector<1x64xf32>
    %c0_14 = arith.constant 0 : index
    %c0_15 = arith.constant 0 : index
    %23 = vector.load %arg12[%c0_14, %c0_15] : memref<2x64xf32, #tpu.memory_space<vmem>>, vector<1x64xf32>
    tpu.vector_store %arg12[%c0_14, %c0_15], %22 {strides = array<i32>} : memref<2x64xf32, #tpu.memory_space<vmem>>, vector<1x64xf32>,
    %c0_16 = arith.constant 0 : index
    %c0_17 = arith.constant 0 : index
    %24 = vector.load %arg6[%c0_16, %c0_17] : memref<64x256xf32, #tpu.memory_space<vmem>>, vector<64x256xf32>
    %25 = vector.broadcast %11 : vector<64x1xf32> to vector<64x256xf32>
    %26 = arith.mulf %25, %24 : vector<64x256xf32>
    %cst_18 = arith.constant dense<0.000000e+00> : vector<256xf32>
    %27 = vector.multi_reduction <add>, %26, %cst_18 [0] : vector<64x256xf32> to vector<256xf32>
    %28 = vector.shape_cast %27 : vector<256xf32> to vector<1x256xf32>
    %c0_19 = arith.constant 0 : index
    %c0_20 = arith.constant 0 : index
    %29 = vector.load %arg7[%c0_19, %c0_20] : memref<1x256xf32, #tpu.memory_space<vmem>>, vector<1x256xf32>
    %30 = arith.addf %28, %29 : vector<1x256xf32>
    %cst_21 = arith.constant 0.000000e+00 : f32
    %31 = vector.broadcast %cst_21 : f32 to vector<1x256xf32>
    %32 = arith.maximumf %30, %31 : vector<1x256xf32>
    %c0_22 = arith.constant 0 : index
    %c0_23 = arith.constant 0 : index
    %33 = vector.load %arg8[%c0_22, %c0_23] : memref<1x256xf32, #tpu.memory_space<vmem>>, vector<1x256xf32>
    %34 = arith.mulf %32, %33 : vector<1x256xf32>
    %cst_24 = arith.constant dense<0.000000e+00> : vector<1xf32>
    %35 = vector.multi_reduction <add>, %34, %cst_24 [1] : vector<1x256xf32> to vector<1xf32>
    %36 = vector.shape_cast %35 : vector<1xf32> to vector<1x1xf32>
    %c0_25 = arith.constant 0 : index
    %c0_26 = arith.constant 0 : index
    %37 = vector.load %arg9[%c0_25, %c0_26] : memref<1x1xf32, #tpu.memory_space<vmem>>, vector<1x1xf32>
    %38 = arith.addf %36, %37 : vector<1x1xf32>
    %39 = math.tanh %38 : vector<1x1xf32>
    %c0_27 = arith.constant 0 : index
    %c0_28 = arith.constant 0 : index
    %40 = vector.load %arg11[%c0_27, %c0_28] : memref<2x1xf32, #tpu.memory_space<vmem>>, vector<1x1xf32>
    tpu.vector_store %arg11[%c0_27, %c0_28], %39 {strides = array<i32>} : memref<2x1xf32, #tpu.memory_space<vmem>>, vector<1x1xf32>,
    %c1 = arith.constant 1 : index
    %c0_29 = arith.constant 0 : index
    %c0_30 = arith.constant 0 : index
    %41 = vector.load %arg0[%c1, %c0_29, %c0_30] : memref<2x64x32xbf16, #tpu.memory_space<vmem>>, vector<1x64x32xbf16>
    %42 = vector.shape_cast %41 : vector<1x64x32xbf16> to vector<64x32xbf16>
    %c0_31 = arith.constant 0 : index
    %c0_32 = arith.constant 0 : index
    %43 = vector.load %arg1[%c0_31, %c0_32] : memref<32x3xbf16, #tpu.memory_space<vmem>>, vector<32x3xbf16>
    %cst_33 = arith.constant dense<0.000000e+00> : vector<64x3xf32>
    %44 = tpu.matmul %42, %43, %cst_33 {dimension_numbers = #tpu.dot_dimension_numbers<[1], [0], [0], [1], [0, 0, 1, 1], [], []>} : vector<64x32xbf16>, vector<32x3xbf16>, vector<64x3xf32> -> vector<64x3xf32>
    %c0_34 = arith.constant 0 : index
    %c0_35 = arith.constant 0 : index
    %45 = vector.load %arg2[%c0_34, %c0_35] : memref<1x3xf32, #tpu.memory_space<vmem>>, vector<1x3xf32>
    %46 = vector.broadcast %45 : vector<1x3xf32> to vector<64x3xf32>
    %47 = arith.addf %44, %46 : vector<64x3xf32>
    %cst_36 = arith.constant 0.000000e+00 : f32
    %48 = vector.broadcast %cst_36 : f32 to vector<64x3xf32>
    %49 = arith.maximumf %47, %48 : vector<64x3xf32>
    %50 = vector.extract_strided_slice %49 {offsets = [0, 0], sizes = [64, 1], strides = [1, 1]} : vector<64x3xf32> to vector<64x1xf32>
    %51 = vector.extract_strided_slice %49 {offsets = [0, 1], sizes = [64, 1], strides = [1, 1]} : vector<64x3xf32> to vector<64x1xf32>
    %52 = vector.extract_strided_slice %49 {offsets = [0, 2], sizes = [64, 1], strides = [1, 1]} : vector<64x3xf32> to vector<64x1xf32>
    %c0_37 = arith.constant 0 : index
    %c0_38 = arith.constant 0 : index
    %53 = vector.load %arg3[%c0_37, %c0_38] : memref<64x64xf32, #tpu.memory_space<vmem>>, vector<64x64xf32>
    %54 = vector.broadcast %50 : vector<64x1xf32> to vector<64x64xf32>
    %55 = arith.mulf %54, %53 : vector<64x64xf32>
    %c0_39 = arith.constant 0 : index
    %c0_40 = arith.constant 0 : index
    %56 = vector.load %arg4[%c0_39, %c0_40] : memref<64x64xf32, #tpu.memory_space<vmem>>, vector<64x64xf32>
    %57 = vector.broadcast %51 : vector<64x1xf32> to vector<64x64xf32>
    %58 = arith.mulf %57, %56 : vector<64x64xf32>
    %59 = arith.addf %55, %58 : vector<64x64xf32>
    %cst_41 = arith.constant dense<0.000000e+00> : vector<64xf32>
    %60 = vector.multi_reduction <add>, %59, %cst_41 [0] : vector<64x64xf32> to vector<64xf32>
    %61 = vector.shape_cast %60 : vector<64xf32> to vector<1x64xf32>
    %c0_42 = arith.constant 0 : index
    %c0_43 = arith.constant 0 : index
    %62 = vector.load %arg5[%c0_42, %c0_43] : memref<1x64xf32, #tpu.memory_space<vmem>>, vector<1x64xf32>
    %63 = arith.addf %61, %62 : vector<1x64xf32>
    %c1_44 = arith.constant 1 : index
    %c0_45 = arith.constant 0 : index
    %64 = vector.load %arg12[%c1_44, %c0_45] : memref<2x64xf32, #tpu.memory_space<vmem>>, vector<1x64xf32>
    tpu.vector_store %arg12[%c1_44, %c0_45], %63 {strides = array<i32>} : memref<2x64xf32, #tpu.memory_space<vmem>>, vector<1x64xf32>,
    %c0_46 = arith.constant 0 : index
    %c0_47 = arith.constant 0 : index
    %65 = vector.load %arg6[%c0_46, %c0_47] : memref<64x256xf32, #tpu.memory_space<vmem>>, vector<64x256xf32>
    %66 = vector.broadcast %52 : vector<64x1xf32> to vector<64x256xf32>
    %67 = arith.mulf %66, %65 : vector<64x256xf32>
    %cst_48 = arith.constant dense<0.000000e+00> : vector<256xf32>
    %68 = vector.multi_reduction <add>, %67, %cst_48 [0] : vector<64x256xf32> to vector<256xf32>
    %69 = vector.shape_cast %68 : vector<256xf32> to vector<1x256xf32>
    %c0_49 = arith.constant 0 : index
    %c0_50 = arith.constant 0 : index
    %70 = vector.load %arg7[%c0_49, %c0_50] : memref<1x256xf32, #tpu.memory_space<vmem>>, vector<1x256xf32>
    %71 = arith.addf %69, %70 : vector<1x256xf32>
    %cst_51 = arith.constant 0.000000e+00 : f32
    %72 = vector.broadcast %cst_51 : f32 to vector<1x256xf32>
    %73 = arith.maximumf %71, %72 : vector<1x256xf32>
    %c0_52 = arith.constant 0 : index
    %c0_53 = arith.constant 0 : index
    %74 = vector.load %arg8[%c0_52, %c0_53] : memref<1x256xf32, #tpu.memory_space<vmem>>, vector<1x256xf32>
    %75 = arith.mulf %73, %74 : vector<1x256xf32>
    %cst_54 = arith.constant dense<0.000000e+00> : vector<1xf32>
    %76 = vector.multi_reduction <add>, %75, %cst_54 [1] : vector<1x256xf32> to vector<1xf32>
    %77 = vector.shape_cast %76 : vector<1xf32> to vector<1x1xf32>
    %c0_55 = arith.constant 0 : index
    %c0_56 = arith.constant 0 : index
    %78 = vector.load %arg9[%c0_55, %c0_56] : memref<1x1xf32, #tpu.memory_space<vmem>>, vector<1x1xf32>
    %79 = arith.addf %77, %78 : vector<1x1xf32>
    %80 = math.tanh %79 : vector<1x1xf32>
    %c1_57 = arith.constant 1 : index
    %c0_58 = arith.constant 0 : index
    %81 = vector.load %arg11[%c1_57, %c0_58] : memref<2x1xf32, #tpu.memory_space<vmem>>, vector<1x1xf32>
    tpu.vector_store %arg11[%c1_57, %c0_58], %80 {strides = array<i32>} : memref<2x1xf32, #tpu.memory_space<vmem>>, vector<1x1xf32>,
    %c0_59 = arith.constant 0 : index
    %c0_60 = arith.constant 0 : index
    %82 = vector.load %arg12[%c0_59, %c0_60] : memref<2x64xf32, #tpu.memory_space<vmem>>, vector<2x64xf32>
    %cst_61 = arith.constant dense<0xFF800000> : vector<64xf32>
    %83 = vector.multi_reduction <maximumf>, %82, %cst_61 [0] : vector<2x64xf32> to vector<64xf32>
    %84 = vector.shape_cast %83 : vector<64xf32> to vector<1x64xf32>
    %85 = vector.broadcast %84 : vector<1x64xf32> to vector<2x64xf32>
    %86 = arith.subf %82, %85 : vector<2x64xf32>
    %87 = math.exp %86 : vector<2x64xf32>
    %cst_62 = arith.constant dense<0.000000e+00> : vector<64xf32>
    %88 = vector.multi_reduction <add>, %87, %cst_62 [0] : vector<2x64xf32> to vector<64xf32>
    %89 = vector.shape_cast %88 : vector<64xf32> to vector<1x64xf32>
    %90 = vector.broadcast %89 : vector<1x64xf32> to vector<2x64xf32>
    %91 = arith.divf %87, %90 : vector<2x64xf32>
    %c0_63 = arith.constant 0 : index
    %c0_64 = arith.constant 0 : index
    %92 = vector.load %arg10[%c0_63, %c0_64] : memref<2x64xf32, #tpu.memory_space<vmem>>, vector<2x64xf32>
    tpu.vector_store %arg10[%c0_63, %c0_64], %91 {strides = array<i32>} : memref<2x64xf32, #tpu.memory_space<vmem>>, vector<2x64xf32>,
    return
  }
}

</mosaic_0001>

<llo_original>
// kernel: alphazero_forward.3
$region0: #{alphazero_forward.3}
  #allocation0 [shape = 'u32[]', space=smem, size = 0x4, offset = 0x4, fixed_abs, tag = 'smem constant byte address 0x4 - core index']
  #allocation1 [shape = 'u32[144,128]{1,0:T(1,128)}', space=vmem, size = 0x12000, scoped, tag = 'internal scratch']
  #allocation2 [shape = 'f32[2,64]{1,0:T(2,128)}', space=vmem, size = 0x400, scoped, tag = 'scratch operand']
  #allocation3 [shape = 'f32[1,1]{1,0:T(1,128)S(1)}', space=vmem, size = 0x200, scoped, tag = 'scoped memory for alphazero_forward.3']
  %s0 = inlined_call_operand.vmem [shape: bf16[2,64,32], index: 0, kind: input, shape index: {}]
  %s1 = inlined_call_operand.vmem [shape: bf16[32,3], index: 1, kind: input, shape index: {}]
  %s2 = inlined_call_operand.vmem [shape: f32[1,3], index: 2, kind: input, shape index: {}]
  %s3 = inlined_call_operand.vmem [shape: f32[64,64], index: 3, kind: input, shape index: {}]
  %s4 = inlined_call_operand.vmem [shape: f32[64,64], index: 4, kind: input, shape index: {}]
  %s5 = inlined_call_operand.vmem [shape: f32[1,64], index: 5, kind: input, shape index: {}]
  %s6 = inlined_call_operand.vmem [shape: f32[64,256], index: 6, kind: input, shape index: {}]
  %s7 = inlined_call_operand.vmem [shape: f32[1,256], index: 7, kind: input, shape index: {}]
  %s8 = inlined_call_operand.vmem [shape: f32[1,256], index: 8, kind: input, shape index: {}]
  %s9 = inlined_call_operand.<no memory space> [shape: f32[1,1], index: 9, kind: input, shape index: {}]
  %s10 = inlined_call_operand.hbm [shape: f32[2,64], index: 10, kind: output, shape index: {0}]
  %s11 = inlined_call_operand.vmem [shape: f32[2,1], index: 11, kind: output, shape index: {1}]
  %12 = xla_tuple %s10, %s11
  %s13 = sld [smem:[#allocation0]]
  $region58: #{alphazero_forward.3} parent=0
    _
  %s15 = ssub.s32 1, %s13
  %s16 = scalar_select 0, %s15, %s13
  %v17 = vstv %s9
  %18 = vst [vmem:[#allocation3] sm:$0x1] %v17
  $region1: #{alphazero_forward.3} parent=0
    #allocation4 [shape = 'u8[1024]{0}', space=vmem, size = 0x400, scoped, tag = 'output window, operand 0, single buffered']
    #allocation5 [shape = 's32[1]{0}', space=sflag, size = 0x4, scoped, tag = 'scoped memory for alphazero_forward.3']
    %19 = vsyncpa [#allocation5], 0
    // Predicated region
    $region2: #{alphazero_forward.3} parent=1 // pred_check
      _
    $region3: #{alphazero_forward.3} parent=1 // pred_check_branch
      %21 = sbr.rel (0) target = $region5
    $region4: #{alphazero_forward.3} parent=1 // pred_region
      _
    $region5: #{alphazero_forward.3} parent=1 // pred_fallthru
      _
    // Predicated region
    $region6: #{alphazero_forward.3} parent=1 // pred_check
      _
    $region7: #{alphazero_forward.3} parent=1 // pred_check_branch
      %23 = sbr.rel (0) target = $region9
    $region8: #{alphazero_forward.3} parent=1 // pred_region
      _
    $region9: #{alphazero_forward.3} parent=1 // pred_fallthru
      _
    // Predicated region
    $region10: #{alphazero_forward.3} parent=1 // pred_check
      _
    $region11: #{alphazero_forward.3} parent=1 // pred_check_branch
      %25 = sbr.rel (0) target = $region13
    $region12: #{alphazero_forward.3} parent=1 // pred_region
      _
    $region13: #{alphazero_forward.3} parent=1 // pred_fallthru
      _
    // Predicated region
    $region14: #{alphazero_forward.3} parent=1 // pred_check
      _
    $region15: #{alphazero_forward.3} parent=1 // pred_check_branch
      %27 = sbr.rel (0) target = $region17
    $region16: #{alphazero_forward.3} parent=1 // pred_region
      _
    $region17: #{alphazero_forward.3} parent=1 // pred_fallthru
      _
    // Predicated region
    $region18: #{alphazero_forward.3} parent=1 // pred_check
      _
    $region19: #{alphazero_forward.3} parent=1 // pred_check_branch
      %29 = sbr.rel (0) target = $region21
    $region20: #{alphazero_forward.3} parent=1 // pred_region
      _
    $region21: #{alphazero_forward.3} parent=1 // pred_fallthru
      _
    // Predicated region
    $region22: #{alphazero_forward.3} parent=1 // pred_check
      _
    $region23: #{alphazero_forward.3} parent=1 // pred_check_branch
      %31 = sbr.rel (0) target = $region25
    $region24: #{alphazero_forward.3} parent=1 // pred_region
      _
    $region25: #{alphazero_forward.3} parent=1 // pred_fallthru
      _
    // Predicated region
    $region26: #{alphazero_forward.3} parent=1 // pred_check
      _
    $region27: #{alphazero_forward.3} parent=1 // pred_check_branch
      %33 = sbr.rel (0) target = $region29
    $region28: #{alphazero_forward.3} parent=1 // pred_region
      _
    $region29: #{alphazero_forward.3} parent=1 // pred_fallthru
      _
    // Predicated region
    $region30: #{alphazero_forward.3} parent=1 // pred_check
      _
    $region31: #{alphazero_forward.3} parent=1 // pred_check_branch
      %35 = sbr.rel (0) target = $region33
    $region32: #{alphazero_forward.3} parent=1 // pred_region
      _
    $region33: #{alphazero_forward.3} parent=1 // pred_fallthru
      _
    // Predicated region
    $region34: #{alphazero_forward.3} parent=1 // pred_check
      _
    $region35: #{alphazero_forward.3} parent=1 // pred_check_branch
      %37 = sbr.rel (0) target = $region37
    $region36: #{alphazero_forward.3} parent=1 // pred_region
      _
    $region37: #{alphazero_forward.3} parent=1 // pred_fallthru
      _
    // Predicated region
    $region38: #{alphazero_forward.3} parent=1 // pred_check
      _
    $region39: #{alphazero_forward.3} parent=1 // pred_check_branch
      %39 = sbr.rel (0) target = $region41
    $region40: #{alphazero_forward.3} parent=1 // pred_region
      _
    $region41: #{alphazero_forward.3} parent=1 // pred_fallthru
      _
    %v41 = vld [vmem:[%s0] sm:$0xf]
    %v42 = vld [vmem:[%s0 + $0x4] sm:$0xf]
    %v43 = vld [vmem:[%s0 + $0x8] sm:$0xf]
    %v44 = vld [vmem:[%s0 + $0xc] sm:$0xf]
    %v45 = vld [vmem:[%s0 + $0x10] sm:$0xf]
    %v46 = vld [vmem:[%s0 + $0x14] sm:$0xf]
    %v47 = vld [vmem:[%s0 + $0x18] sm:$0xf]
    %v48 = vld [vmem:[%s0 + $0x1c] sm:$0xf]
    %v49 = vld [vmem:[%s1] sm:$0xf]
    %v50 = vld [vmem:[%s1 + $0x4] sm:$0xf]
    %v51 = vld [vmem:[%s1 + $0x8] sm:$0xf]
    %v52 = vld [vmem:[%s1 + $0xc] sm:$0xf]
    %v53 = vld [vmem:[%s2] sm:$0x1]
    %v55 = vlaneseq
    %v56 = vshrl.u32 %v55, 7
    %v57 = vsub.s32 0, %v56
    %v58 = vrot.slane %v53, %v57
    %v68 = vunpack.c.l.b16 %v41
    %v69 = vunpack.c.l.b16 %v42
    %v70 = vunpack.c.l.b16 %v43
    %v71 = vunpack.c.l.b16 %v44
    %v72 = vunpack.c.l.b16 %v45
    %v73 = vunpack.c.l.b16 %v46
    %v74 = vunpack.c.l.b16 %v47
    %v75 = vunpack.c.l.b16 %v48
    %v76 = vpack.c.b16 %v69, %v68
    %v77 = vpack.c.b16 %v71, %v70
    %v78 = vpack.c.b16 %v73, %v72
    %v79 = vpack.c.b16 %v75, %v74
    %v84 = vunpack.c.l.b16 %v49
    %v85 = vunpack.c.l.b16 %v50
    %v86 = vunpack.c.l.b16 %v51
    %v87 = vunpack.c.l.b16 %v52
    %v88 = vpack.c.b16 %v85, %v84
    %v89 = vpack.c.b16 %v87, %v86
    %vm92 = vcmask 261120
    %v94 = vsel %vm92, %v76, 0
    %v97 = vsel %vm92, %v77, 0
    %v100 = vsel %vm92, %v78, 0
    %v103 = vsel %vm92, %v79, 0
    %105 = vmatprep.subr.bf16.mxu0 0
    %106 = vmatpush1.bf16.msra.mxu0 0
    %107 = vmatprep.subr.bf16.mxu0 0
    %108 = vmatpush1.bf16.msra.mxu0 0
    %109 = vmatprep.subr.bf16.mxu0 0
    %110 = vmatpush1.bf16.msra.mxu0 0
    %111 = vmatprep.subr.bf16.mxu0 0
    %112 = vmatpush1.bf16.msra.mxu0 0
    %113 = vmatprep.subr.bf16.mxu0 0
    %114 = vmatpush1.bf16.msra.mxu0 0
    %115 = vmatprep.subr.bf16.mxu0 0
    %116 = vmatpush1.bf16.msra.mxu0 0
    %117 = vmatprep.subr.bf16.mxu0 0
    %118 = vmatpush1.bf16.msra.mxu0 %v89
    %119 = vmatprep.subr.bf16.mxu0 0
    %120 = vmatpush1.bf16.msra.mxu0 %v88
    %121 = vmatprep.subr.bf16.mxu0 0
    %122 = vmatpush2.bf16.msra.mxu0 0
    %123 = vmatprep.subr.bf16.mxu0 0
    %124 = vmatpush2.bf16.msra.mxu0 0
    %125 = vmatprep.subr.bf16.mxu0 0
    %126 = vmatpush2.bf16.msra.mxu0 0
    %127 = vmatprep.subr.bf16.mxu0 0
    %128 = vmatpush2.bf16.msra.mxu0 0
    %129 = vmatprep.subr.bf16.mxu0 0
    %130 = vmatpush2.bf16.msra.mxu0 0
    %131 = vmatprep.subr.bf16.mxu0 0
    %132 = vmatpush2.bf16.msra.mxu0 0
    %133 = vmatprep.subr.bf16.mxu0 0
    %134 = vmatpush2.bf16.msra.mxu0 0
    %135 = vmatprep.subr.bf16.mxu0 0
    %136 = vmatpush2.bf16.msra.mxu0 0
    %137 = vmatprep.mubr.bf16.mxu0 0
    %138 = vmatmul.mubr.bf16.gmra.mxu0 %v94
    %v139 = vpop.f32.mrf.mxu0
    %v140 = vadd.f32 %v58, %v139
    %v141 = vpop.f32.mrf.mxu0
    %v142 = vpop.f32.mrf.mxu0
    %v143 = vadd.f32 %v58, %v142
    %v144 = vpop.f32.mrf.mxu0
    %145 = vmatprep.mubr.bf16.mxu0 0
    %146 = vmatmul.mubr.bf16.gmra.mxu0 %v97
    %v147 = vpop.f32.mrf.mxu0
    %v148 = vadd.f32 %v58, %v147
    %v149 = vpop.f32.mrf.mxu0
    %v150 = vpop.f32.mrf.mxu0
    %v151 = vadd.f32 %v58, %v150
    %v152 = vpop.f32.mrf.mxu0
    %153 = vmatprep.mubr.bf16.mxu0 0
    %154 = vmatmul.mubr.bf16.gmra.mxu0 %v100
    %v155 = vpop.f32.mrf.mxu0
    %v156 = vadd.f32 %v58, %v155
    %v157 = vpop.f32.mrf.mxu0
    %v158 = vpop.f32.mrf.mxu0
    %v159 = vadd.f32 %v58, %v158
    %v160 = vpop.f32.mrf.mxu0
    %161 = vmatprep.mubr.bf16.mxu0 0
    %162 = vmatmul.mubr.bf16.gmra.mxu0 %v103
    %v163 = vpop.f32.mrf.mxu0
    %v164 = vadd.f32 %v58, %v163
    %v165 = vpop.f32.mrf.mxu0
    %v166 = vpop.f32.mrf.mxu0
    %v167 = vadd.f32 %v58, %v166
    %v168 = vpop.f32.mrf.mxu0
    %169 = vdwg.mxu0
    %v170 = vmax.f32 %v140, 0.0
    %v171 = vmax.f32 %v143, 0.0
    %v172 = vmax.f32 %v148, 0.0
    %v173 = vmax.f32 %v151, 0.0
    %v174 = vmax.f32 %v156, 0.0
    %v175 = vmax.f32 %v159, 0.0
    %v176 = vmax.f32 %v164, 0.0
    %v177 = vmax.f32 %v167, 0.0
    %v178 = vld [vmem:[%s3] sm:$0xff]
    %v179 = vld [vmem:[%s3 + $0x8] sm:$0xff]
    %v180 = vld [vmem:[%s3 + $0x10] sm:$0xff]
    %v181 = vld [vmem:[%s3 + $0x18] sm:$0xff]
    %v182 = vld [vmem:[%s3 + $0x20] sm:$0xff]
    %v183 = vld [vmem:[%s3 + $0x28] sm:$0xff]
    %v184 = vld [vmem:[%s3 + $0x30] sm:$0xff]
    %v185 = vld [vmem:[%s3 + $0x38] sm:$0xff]
    %187 = vset.pattern.permute.xlu0 0
    %188 = vperm.xlu0 %187, %v170
    %v189 = vpop.permute.xlu0 %188
    %192 = vset.pattern.permute.xlu0 0
    %193 = vperm.xlu0 %192, %v171
    %v194 = vpop.permute.xlu0 %193
    %197 = vset.pattern.permute.xlu0 0
    %198 = vperm.xlu0 %197, %v172
    %v199 = vpop.permute.xlu0 %198
    %202 = vset.pattern.permute.xlu0 0
    %203 = vperm.xlu0 %202, %v173
    %v204 = vpop.permute.xlu0 %203
    %207 = vset.pattern.permute.xlu0 0
    %208 = vperm.xlu0 %207, %v174
    %v209 = vpop.permute.xlu0 %208
    %212 = vset.pattern.permute.xlu0 0
    %213 = vperm.xlu0 %212, %v175
    %v214 = vpop.permute.xlu0 %213
    %217 = vset.pattern.permute.xlu0 0
    %218 = vperm.xlu0 %217, %v176
    %v219 = vpop.permute.xlu0 %218
    %222 = vset.pattern.permute.xlu0 0
    %223 = vperm.xlu0 %222, %v177
    %v224 = vpop.permute.xlu0 %223
    %v226 = vmul.f32 %v189, %v178
    %v227 = vmul.f32 %v194, %v179
    %v228 = vmul.f32 %v199, %v180
    %v229 = vmul.f32 %v204, %v181
    %v230 = vmul.f32 %v209, %v182
    %v231 = vmul.f32 %v214, %v183
    %v232 = vmul.f32 %v219, %v184
    %v233 = vmul.f32 %v224, %v185
    %v234 = vld [vmem:[%s4] sm:$0xff]
    %v235 = vld [vmem:[%s4 + $0x8] sm:$0xff]
    %v236 = vld [vmem:[%s4 + $0x10] sm:$0xff]
    %v237 = vld [vmem:[%s4 + $0x18] sm:$0xff]
    %v238 = vld [vmem:[%s4 + $0x20] sm:$0xff]
    %v239 = vld [vmem:[%s4 + $0x28] sm:$0xff]
    %v240 = vld [vmem:[%s4 + $0x30] sm:$0xff]
    %v241 = vld [vmem:[%s4 + $0x38] sm:$0xff]
    %242 = vset.pattern.permute.xlu0 1
    %243 = vperm.xlu0 %242, %v170
    %v244 = vpop.permute.xlu0 %243
    %246 = vset.pattern.permute.xlu0 1
    %247 = vperm.xlu0 %246, %v171
    %v248 = vpop.permute.xlu0 %247
    %250 = vset.pattern.permute.xlu0 1
    %251 = vperm.xlu0 %250, %v172
    %v252 = vpop.permute.xlu0 %251
    %254 = vset.pattern.permute.xlu0 1
    %255 = vperm.xlu0 %254, %v173
    %v256 = vpop.permute.xlu0 %255
    %258 = vset.pattern.permute.xlu0 1
    %259 = vperm.xlu0 %258, %v174
    %v260 = vpop.permute.xlu0 %259
    %262 = vset.pattern.permute.xlu0 1
    %263 = vperm.xlu0 %262, %v175
    %v264 = vpop.permute.xlu0 %263
    %266 = vset.pattern.permute.xlu0 1
    %267 = vperm.xlu0 %266, %v176
    %v268 = vpop.permute.xlu0 %267
    %270 = vset.pattern.permute.xlu0 1
    %271 = vperm.xlu0 %270, %v177
    %v272 = vpop.permute.xlu0 %271
    %v274 = vmul.f32 %v244, %v234
    %v275 = vmul.f32 %v248, %v235
    %v276 = vmul.f32 %v252, %v236
    %v277 = vmul.f32 %v256, %v237
    %v278 = vmul.f32 %v260, %v238
    %v279 = vmul.f32 %v264, %v239
    %v280 = vmul.f32 %v268, %v240
    %v281 = vmul.f32 %v272, %v241
    %v282 = vadd.f32 %v226, %v274
    %v283 = vadd.f32 %v227, %v275
    %v284 = vadd.f32 %v228, %v276
    %v285 = vadd.f32 %v229, %v277
    %v286 = vadd.f32 %v230, %v278
    %v287 = vadd.f32 %v231, %v279
    %v288 = vadd.f32 %v232, %v280
    %v289 = vadd.f32 %v233, %v281
    %vm290 = vcmask 523264
    %v291 = vsel %vm290, %v282, 0.0
    %v292 = vsel %vm290, %v283, 0.0
    %v293 = vadd.f32 %v291, %v292
    %v294 = vsel %vm290, %v284, 0.0
    %v295 = vadd.f32 %v293, %v294
    %v296 = vsel %vm290, %v285, 0.0
    %v297 = vadd.f32 %v295, %v296
    %v298 = vsel %vm290, %v286, 0.0
    %v299 = vadd.f32 %v297, %v298
    %v300 = vsel %vm290, %v287, 0.0
    %v301 = vadd.f32 %v299, %v300
    %v302 = vsel %vm290, %v288, 0.0
    %v303 = vadd.f32 %v301, %v302
    %v304 = vsel %vm290, %v289, 0.0
    %v305 = vadd.f32 %v303, %v304
    %v306 = vrot.slane %v305, 4
    %v307 = vadd.f32 %v305, %v306
    %v308 = vrot.slane %v307, 2
    %v309 = vadd.f32 %v307, %v308
    %v310 = vrot.slane %v309, 1
    %v311 = vadd.f32 %v309, %v310
    %v312 = vld [vmem:[%s5] sm:$0x1]
    %v313 = vadd.f32 %v311, %v312
    %vm314 = vcmask 516096
    %315 = vst.msk [vmem:[#allocation2] sm:$0x1] %vm314, %v313
    %v316 = vld [vmem:[%s6] sm:$0xff]
    %v317 = vld [vmem:[%s6 + $0x8] sm:$0xff]
    %v318 = vld [vmem:[%s6 + $0x10] sm:$0xff]
    %v319 = vld [vmem:[%s6 + $0x18] sm:$0xff]
    %v320 = vld [vmem:[%s6 + $0x20] sm:$0xff]
    %v321 = vld [vmem:[%s6 + $0x28] sm:$0xff]
    %v322 = vld [vmem:[%s6 + $0x30] sm:$0xff]
    %v323 = vld [vmem:[%s6 + $0x38] sm:$0xff]
    %v324 = vld [vmem:[%s6 + $0x40] sm:$0xff]
    %v325 = vld [vmem:[%s6 + $0x48] sm:$0xff]
    %v326 = vld [vmem:[%s6 + $0x50] sm:$0xff]
    %v327 = vld [vmem:[%s6 + $0x58] sm:$0xff]
    %v328 = vld [vmem:[%s6 + $0x60] sm:$0xff]
    %v329 = vld [vmem:[%s6 + $0x68] sm:$0xff]
    %v330 = vld [vmem:[%s6 + $0x70] sm:$0xff]
    %v331 = vld [vmem:[%s6 + $0x78] sm:$0xff]
    %332 = vset.pattern.permute.xlu0 2
    %333 = vperm.xlu0 %332, %v170
    %v334 = vpop.permute.xlu0 %333
    %336 = vset.pattern.permute.xlu0 2
    %337 = vperm.xlu0 %336, %v171
    %v338 = vpop.permute.xlu0 %337
    %340 = vset.pattern.permute.xlu0 2
    %341 = vperm.xlu0 %340, %v172
    %v342 = vpop.permute.xlu0 %341
    %344 = vset.pattern.permute.xlu0 2
    %345 = vperm.xlu0 %344, %v173
    %v346 = vpop.permute.xlu0 %345
    %348 = vset.pattern.permute.xlu0 2
    %349 = vperm.xlu0 %348, %v174
    %v350 = vpop.permute.xlu0 %349
    %352 = vset.pattern.permute.xlu0 2
    %353 = vperm.xlu0 %352, %v175
    %v354 = vpop.permute.xlu0 %353
    %356 = vset.pattern.permute.xlu0 2
    %357 = vperm.xlu0 %356, %v176
    %v358 = vpop.permute.xlu0 %357
    %360 = vset.pattern.permute.xlu0 2
    %361 = vperm.xlu0 %360, %v177
    %v362 = vpop.permute.xlu0 %361
    %v364 = vmul.f32 %v334, %v316
    %v365 = vmul.f32 %v334, %v317
    %v366 = vmul.f32 %v338, %v318
    %v367 = vmul.f32 %v338, %v319
    %v368 = vmul.f32 %v342, %v320
    %v369 = vmul.f32 %v342, %v321
    %v370 = vmul.f32 %v346, %v322
    %v371 = vmul.f32 %v346, %v323
    %v372 = vmul.f32 %v350, %v324
    %v373 = vmul.f32 %v350, %v325
    %v374 = vmul.f32 %v354, %v326
    %v375 = vmul.f32 %v354, %v327
    %v376 = vmul.f32 %v358, %v328
    %v377 = vmul.f32 %v358, %v329
    %v378 = vmul.f32 %v362, %v330
    %v379 = vmul.f32 %v362, %v331
    %v380 = vadd.f32 %v364, %v366
    %v381 = vadd.f32 %v380, %v368
    %v382 = vadd.f32 %v381, %v370
    %v383 = vadd.f32 %v382, %v372
    %v384 = vadd.f32 %v383, %v374
    %v385 = vadd.f32 %v384, %v376
    %v386 = vadd.f32 %v385, %v378
    %v387 = vrot.slane %v386, 4
    %v388 = vadd.f32 %v386, %v387
    %v389 = vrot.slane %v388, 2
    %v390 = vadd.f32 %v388, %v389
    %v391 = vrot.slane %v390, 1
    %v392 = vadd.f32 %v390, %v391
    %v393 = vadd.f32 %v365, %v367
    %v394 = vadd.f32 %v393, %v369
    %v395 = vadd.f32 %v394, %v371
    %v396 = vadd.f32 %v395, %v373
    %v397 = vadd.f32 %v396, %v375
    %v398 = vadd.f32 %v397, %v377
    %v399 = vadd.f32 %v398, %v379
    %v400 = vrot.slane %v399, 4
    %v401 = vadd.f32 %v399, %v400
    %v402 = vrot.slane %v401, 2
    %v403 = vadd.f32 %v401, %v402
    %v404 = vrot.slane %v403, 1
    %v405 = vadd.f32 %v403, %v404
    %v406 = vld [vmem:[%s7] sm:$0x3]
    %v408 = vlaneseq
    %v409 = vshrl.u32 %v408, 7
    %v410 = vsub.s32 0, %v409
    %v411 = vrot.slane %v406, %v410
    %v412 = vlaneseq
    %v413 = vshrl.u32 %v412, 7
    %v414 = vsub.s32 1, %v413
    %v415 = vrot.slane %v406, %v414
    %v418 = vadd.f32 %v392, %v411
    %v419 = vadd.f32 %v405, %v415
    %v420 = vmax.f32 %v418, 0.0
    %v421 = vmax.f32 %v419, 0.0
    %v422 = vld [vmem:[%s8] sm:$0x3]
    %v424 = vlaneseq
    %v425 = vshrl.u32 %v424, 7
    %v426 = vsub.s32 0, %v425
    %v427 = vrot.slane %v422, %v426
    %v428 = vlaneseq
    %v429 = vshrl.u32 %v428, 7
    %v430 = vsub.s32 1, %v429
    %v431 = vrot.slane %v422, %v430
    %v434 = vmul.f32 %v420, %v427
    %v435 = vmul.f32 %v421, %v431
    %vm436 = vcmask 1040384
    %v437 = vsel %vm436, %v434, 0.0
    %v438 = vsel %vm436, %v435, 0.0
    %v439 = vadd.f32 %v437, %v438
    %440 = vadd.xlane.f32.xlu0 %v439
    %v441 = vpop.xlane.xlu0 %440
    %v442 = vld [vmem:[#allocation3] sm:$0x1]
    %v443 = vadd.f32 %v441, %v442
    %v444 = vtanh.pop %v443
    %vm445 = vcmask 0
    %446 = vst.msk [vmem:[%s11] sm:$0x1] %vm445, %v444
    %s447 = scalar_lea.vmem %s0, 32
    %v448 = vld [vmem:[%s447] sm:$0xf]
    %v449 = vld [vmem:[%s447 + $0x4] sm:$0xf]
    %v450 = vld [vmem:[%s447 + $0x8] sm:$0xf]
    %v451 = vld [vmem:[%s447 + $0xc] sm:$0xf]
    %v452 = vld [vmem:[%s447 + $0x10] sm:$0xf]
    %v453 = vld [vmem:[%s447 + $0x14] sm:$0xf]
    %v454 = vld [vmem:[%s447 + $0x18] sm:$0xf]
    %v455 = vld [vmem:[%s447 + $0x1c] sm:$0xf]
    %v456 = vld [vmem:[%s1] sm:$0xf]
    %v457 = vld [vmem:[%s1 + $0x4] sm:$0xf]
    %v458 = vld [vmem:[%s1 + $0x8] sm:$0xf]
    %v459 = vld [vmem:[%s1 + $0xc] sm:$0xf]
    %v460 = vld [vmem:[%s2] sm:$0x1]
    %v462 = vlaneseq
    %v463 = vshrl.u32 %v462, 7
    %v464 = vsub.s32 0, %v463
    %v465 = vrot.slane %v460, %v464
    %v475 = vunpack.c.l.b16 %v448
    %v476 = vunpack.c.l.b16 %v449
    %v477 = vunpack.c.l.b16 %v450
    %v478 = vunpack.c.l.b16 %v451
    %v479 = vunpack.c.l.b16 %v452
    %v480 = vunpack.c.l.b16 %v453
    %v481 = vunpack.c.l.b16 %v454
    %v482 = vunpack.c.l.b16 %v455
    %v483 = vpack.c.b16 %v476, %v475
    %v484 = vpack.c.b16 %v478, %v477
    %v485 = vpack.c.b16 %v480, %v479
    %v486 = vpack.c.b16 %v482, %v481
    %v491 = vunpack.c.l.b16 %v456
    %v492 = vunpack.c.l.b16 %v457
    %v493 = vunpack.c.l.b16 %v458
    %v494 = vunpack.c.l.b16 %v459
    %v495 = vpack.c.b16 %v492, %v491
    %v496 = vpack.c.b16 %v494, %v493
    %v500 = vsel %vm92, %v483, 0
    %v503 = vsel %vm92, %v484, 0
    %v506 = vsel %vm92, %v485, 0
    %v509 = vsel %vm92, %v486, 0
    %511 = vmatprep.subr.bf16.mxu0 0
    %512 = vmatpush1.bf16.msra.mxu0 0
    %513 = vmatprep.subr.bf16.mxu0 0
    %514 = vmatpush1.bf16.msra.mxu0 0
    %515 = vmatprep.subr.bf16.mxu0 0
    %516 = vmatpush1.bf16.msra.mxu0 0
    %517 = vmatprep.subr.bf16.mxu0 0
    %518 = vmatpush1.bf16.msra.mxu0 0
    %519 = vmatprep.subr.bf16.mxu0 0
    %520 = vmatpush1.bf16.msra.mxu0 0
    %521 = vmatprep.subr.bf16.mxu0 0
    %522 = vmatpush1.bf16.msra.mxu0 0
    %523 = vmatprep.subr.bf16.mxu0 0
    %524 = vmatpush1.bf16.msra.mxu0 %v496
    %525 = vmatprep.subr.bf16.mxu0 0
    %526 = vmatpush1.bf16.msra.mxu0 %v495
    %527 = vmatprep.subr.bf16.mxu0 0
    %528 = vmatpush2.bf16.msra.mxu0 0
    %529 = vmatprep.subr.bf16.mxu0 0
    %530 = vmatpush2.bf16.msra.mxu0 0
    %531 = vmatprep.subr.bf16.mxu0 0
    %532 = vmatpush2.bf16.msra.mxu0 0
    %533 = vmatprep.subr.bf16.mxu0 0
    %534 = vmatpush2.bf16.msra.mxu0 0
    %535 = vmatprep.subr.bf16.mxu0 0
    %536 = vmatpush2.bf16.msra.mxu0 0
    %537 = vmatprep.subr.bf16.mxu0 0
    %538 = vmatpush2.bf16.msra.mxu0 0
    %539 = vmatprep.subr.bf16.mxu0 0
    %540 = vmatpush2.bf16.msra.mxu0 0
    %541 = vmatprep.subr.bf16.mxu0 0
    %542 = vmatpush2.bf16.msra.mxu0 0
    %543 = vmatprep.mubr.bf16.mxu0 0
    %544 = vmatmul.mubr.bf16.gmra.mxu0 %v500
    %v545 = vpop.f32.mrf.mxu0
    %v546 = vadd.f32 %v465, %v545
    %v547 = vpop.f32.mrf.mxu0
    %v548 = vpop.f32.mrf.mxu0
    %v549 = vadd.f32 %v465, %v548
    %v550 = vpop.f32.mrf.mxu0
    %551 = vmatprep.mubr.bf16.mxu0 0
    %552 = vmatmul.mubr.bf16.gmra.mxu0 %v503
    %v553 = vpop.f32.mrf.mxu0
    %v554 = vadd.f32 %v465, %v553
    %v555 = vpop.f32.mrf.mxu0
    %v556 = vpop.f32.mrf.mxu0
    %v557 = vadd.f32 %v465, %v556
    %v558 = vpop.f32.mrf.mxu0
    %559 = vmatprep.mubr.bf16.mxu0 0
    %560 = vmatmul.mubr.bf16.gmra.mxu0 %v506
    %v561 = vpop.f32.mrf.mxu0
    %v562 = vadd.f32 %v465, %v561
    %v563 = vpop.f32.mrf.mxu0
    %v564 = vpop.f32.mrf.mxu0
    %v565 = vadd.f32 %v465, %v564
    %v566 = vpop.f32.mrf.mxu0
    %567 = vmatprep.mubr.bf16.mxu0 0
    %568 = vmatmul.mubr.bf16.gmra.mxu0 %v509
    %v569 = vpop.f32.mrf.mxu0
    %v570 = vadd.f32 %v465, %v569
    %v571 = vpop.f32.mrf.mxu0
    %v572 = vpop.f32.mrf.mxu0
    %v573 = vadd.f32 %v465, %v572
    %v574 = vpop.f32.mrf.mxu0
    %575 = vdwg.mxu0
    %v576 = vmax.f32 %v546, 0.0
    %v577 = vmax.f32 %v549, 0.0
    %v578 = vmax.f32 %v554, 0.0
    %v579 = vmax.f32 %v557, 0.0
    %v580 = vmax.f32 %v562, 0.0
    %v581 = vmax.f32 %v565, 0.0
    %v582 = vmax.f32 %v570, 0.0
    %v583 = vmax.f32 %v573, 0.0
    %v584 = vld [vmem:[%s3] sm:$0xff]
    %v585 = vld [vmem:[%s3 + $0x8] sm:$0xff]
    %v586 = vld [vmem:[%s3 + $0x10] sm:$0xff]
    %v587 = vld [vmem:[%s3 + $0x18] sm:$0xff]
    %v588 = vld [vmem:[%s3 + $0x20] sm:$0xff]
    %v589 = vld [vmem:[%s3 + $0x28] sm:$0xff]
    %v590 = vld [vmem:[%s3 + $0x30] sm:$0xff]
    %v591 = vld [vmem:[%s3 + $0x38] sm:$0xff]
    %593 = vset.pattern.permute.xlu0 0
    %594 = vperm.xlu0 %593, %v576
    %v595 = vpop.permute.xlu0 %594
    %598 = vset.pattern.permute.xlu0 0
    %599 = vperm.xlu0 %598, %v577
    %v600 = vpop.permute.xlu0 %599
    %603 = vset.pattern.permute.xlu0 0
    %604 = vperm.xlu0 %603, %v578
    %v605 = vpop.permute.xlu0 %604
    %608 = vset.pattern.permute.xlu0 0
    %609 = vperm.xlu0 %608, %v579
    %v610 = vpop.permute.xlu0 %609
    %613 = vset.pattern.permute.xlu0 0
    %614 = vperm.xlu0 %613, %v580
    %v615 = vpop.permute.xlu0 %614
    %618 = vset.pattern.permute.xlu0 0
    %619 = vperm.xlu0 %618, %v581
    %v620 = vpop.permute.xlu0 %619
    %623 = vset.pattern.permute.xlu0 0
    %624 = vperm.xlu0 %623, %v582
    %v625 = vpop.permute.xlu0 %624
    %628 = vset.pattern.permute.xlu0 0
    %629 = vperm.xlu0 %628, %v583
    %v630 = vpop.permute.xlu0 %629
    %v632 = vmul.f32 %v595, %v584
    %v633 = vmul.f32 %v600, %v585
    %v634 = vmul.f32 %v605, %v586
    %v635 = vmul.f32 %v610, %v587
    %v636 = vmul.f32 %v615, %v588
    %v637 = vmul.f32 %v620, %v589
    %v638 = vmul.f32 %v625, %v590
    %v639 = vmul.f32 %v630, %v591
    %v640 = vld [vmem:[%s4] sm:$0xff]
    %v641 = vld [vmem:[%s4 + $0x8] sm:$0xff]
    %v642 = vld [vmem:[%s4 + $0x10] sm:$0xff]
    %v643 = vld [vmem:[%s4 + $0x18] sm:$0xff]
    %v644 = vld [vmem:[%s4 + $0x20] sm:$0xff]
    %v645 = vld [vmem:[%s4 + $0x28] sm:$0xff]
    %v646 = vld [vmem:[%s4 + $0x30] sm:$0xff]
    %v647 = vld [vmem:[%s4 + $0x38] sm:$0xff]
    %648 = vset.pattern.permute.xlu0 1
    %649 = vperm.xlu0 %648, %v576
    %v650 = vpop.permute.xlu0 %649
    %652 = vset.pattern.permute.xlu0 1
    %653 = vperm.xlu0 %652, %v577
    %v654 = vpop.permute.xlu0 %653
    %656 = vset.pattern.permute.xlu0 1
    %657 = vperm.xlu0 %656, %v578
    %v658 = vpop.permute.xlu0 %657
    %660 = vset.pattern.permute.xlu0 1
    %661 = vperm.xlu0 %660, %v579
    %v662 = vpop.permute.xlu0 %661
    %664 = vset.pattern.permute.xlu0 1
    %665 = vperm.xlu0 %664, %v580
    %v666 = vpop.permute.xlu0 %665
    %668 = vset.pattern.permute.xlu0 1
    %669 = vperm.xlu0 %668, %v581
    %v670 = vpop.permute.xlu0 %669
    %672 = vset.pattern.permute.xlu0 1
    %673 = vperm.xlu0 %672, %v582
    %v674 = vpop.permute.xlu0 %673
    %676 = vset.pattern.permute.xlu0 1
    %677 = vperm.xlu0 %676, %v583
    %v678 = vpop.permute.xlu0 %677
    %v680 = vmul.f32 %v650, %v640
    %v681 = vmul.f32 %v654, %v641
    %v682 = vmul.f32 %v658, %v642
    %v683 = vmul.f32 %v662, %v643
    %v684 = vmul.f32 %v666, %v644
    %v685 = vmul.f32 %v670, %v645
    %v686 = vmul.f32 %v674, %v646
    %v687 = vmul.f32 %v678, %v647
    %v688 = vadd.f32 %v632, %v680
    %v689 = vadd.f32 %v633, %v681
    %v690 = vadd.f32 %v634, %v682
    %v691 = vadd.f32 %v635, %v683
    %v692 = vadd.f32 %v636, %v684
    %v693 = vadd.f32 %v637, %v685
    %v694 = vadd.f32 %v638, %v686
    %v695 = vadd.f32 %v639, %v687
    %v696 = vsel %vm290, %v688, 0.0
    %v697 = vsel %vm290, %v689, 0.0
    %v698 = vadd.f32 %v696, %v697
    %v699 = vsel %vm290, %v690, 0.0
    %v700 = vadd.f32 %v698, %v699
    %v701 = vsel %vm290, %v691, 0.0
    %v702 = vadd.f32 %v700, %v701
    %v703 = vsel %vm290, %v692, 0.0
    %v704 = vadd.f32 %v702, %v703
    %v705 = vsel %vm290, %v693, 0.0
    %v706 = vadd.f32 %v704, %v705
    %v707 = vsel %vm290, %v694, 0.0
    %v708 = vadd.f32 %v706, %v707
    %v709 = vsel %vm290, %v695, 0.0
    %v710 = vadd.f32 %v708, %v709
    %v711 = vrot.slane %v710, 4
    %v712 = vadd.f32 %v710, %v711
    %v713 = vrot.slane %v712, 2
    %v714 = vadd.f32 %v712, %v713
    %v715 = vrot.slane %v714, 1
    %v716 = vadd.f32 %v714, %v715
    %v717 = vld [vmem:[%s5] sm:$0x1]
    %v718 = vadd.f32 %v716, %v717
    %719 = vst.msk [vmem:[#allocation2 + $0x1] sm:$0x1] %vm314, %v718
    %v720 = vld [vmem:[%s6] sm:$0xff]
    %v721 = vld [vmem:[%s6 + $0x8] sm:$0xff]
    %v722 = vld [vmem:[%s6 + $0x10] sm:$0xff]
    %v723 = vld [vmem:[%s6 + $0x18] sm:$0xff]
    %v724 = vld [vmem:[%s6 + $0x20] sm:$0xff]
    %v725 = vld [vmem:[%s6 + $0x28] sm:$0xff]
    %v726 = vld [vmem:[%s6 + $0x30] sm:$0xff]
    %v727 = vld [vmem:[%s6 + $0x38] sm:$0xff]
    %v728 = vld [vmem:[%s6 + $0x40] sm:$0xff]
    %v729 = vld [vmem:[%s6 + $0x48] sm:$0xff]
    %v730 = vld [vmem:[%s6 + $0x50] sm:$0xff]
    %v731 = vld [vmem:[%s6 + $0x58] sm:$0xff]
    %v732 = vld [vmem:[%s6 + $0x60] sm:$0xff]
    %v733 = vld [vmem:[%s6 + $0x68] sm:$0xff]
    %v734 = vld [vmem:[%s6 + $0x70] sm:$0xff]
    %v735 = vld [vmem:[%s6 + $0x78] sm:$0xff]
    %736 = vset.pattern.permute.xlu0 2
    %737 = vperm.xlu0 %736, %v576
    %v738 = vpop.permute.xlu0 %737
    %740 = vset.pattern.permute.xlu0 2
    %741 = vperm.xlu0 %740, %v577
    %v742 = vpop.permute.xlu0 %741
    %744 = vset.pattern.permute.xlu0 2
    %745 = vperm.xlu0 %744, %v578
    %v746 = vpop.permute.xlu0 %745
    %748 = vset.pattern.permute.xlu0 2
    %749 = vperm.xlu0 %748, %v579
    %v750 = vpop.permute.xlu0 %749
    %752 = vset.pattern.permute.xlu0 2
    %753 = vperm.xlu0 %752, %v580
    %v754 = vpop.permute.xlu0 %753
    %756 = vset.pattern.permute.xlu0 2
    %757 = vperm.xlu0 %756, %v581
    %v758 = vpop.permute.xlu0 %757
    %760 = vset.pattern.permute.xlu0 2
    %761 = vperm.xlu0 %760, %v582
    %v762 = vpop.permute.xlu0 %761
    %764 = vset.pattern.permute.xlu0 2
    %765 = vperm.xlu0 %764, %v583
    %v766 = vpop.permute.xlu0 %765
    %v768 = vmul.f32 %v738, %v720
    %v769 = vmul.f32 %v738, %v721
    %v770 = vmul.f32 %v742, %v722
    %v771 = vmul.f32 %v742, %v723
    %v772 = vmul.f32 %v746, %v724
    %v773 = vmul.f32 %v746, %v725
    %v774 = vmul.f32 %v750, %v726
    %v775 = vmul.f32 %v750, %v727
    %v776 = vmul.f32 %v754, %v728
    %v777 = vmul.f32 %v754, %v729
    %v778 = vmul.f32 %v758, %v730
    %v779 = vmul.f32 %v758, %v731
    %v780 = vmul.f32 %v762, %v732
    %v781 = vmul.f32 %v762, %v733
    %v782 = vmul.f32 %v766, %v734
    %v783 = vmul.f32 %v766, %v735
    %v784 = vadd.f32 %v768, %v770
    %v785 = vadd.f32 %v784, %v772
    %v786 = vadd.f32 %v785, %v774
    %v787 = vadd.f32 %v786, %v776
    %v788 = vadd.f32 %v787, %v778
    %v789 = vadd.f32 %v788, %v780
    %v790 = vadd.f32 %v789, %v782
    %v791 = vrot.slane %v790, 4
    %v792 = vadd.f32 %v790, %v791
    %v793 = vrot.slane %v792, 2
    %v794 = vadd.f32 %v792, %v793
    %v795 = vrot.slane %v794, 1
    %v796 = vadd.f32 %v794, %v795
    %v797 = vadd.f32 %v769, %v771
    %v798 = vadd.f32 %v797, %v773
    %v799 = vadd.f32 %v798, %v775
    %v800 = vadd.f32 %v799, %v777
    %v801 = vadd.f32 %v800, %v779
    %v802 = vadd.f32 %v801, %v781
    %v803 = vadd.f32 %v802, %v783
    %v804 = vrot.slane %v803, 4
    %v805 = vadd.f32 %v803, %v804
    %v806 = vrot.slane %v805, 2
    %v807 = vadd.f32 %v805, %v806
    %v808 = vrot.slane %v807, 1
    %v809 = vadd.f32 %v807, %v808
    %v810 = vld [vmem:[%s7] sm:$0x3]
    %v812 = vlaneseq
    %v813 = vshrl.u32 %v812, 7
    %v814 = vsub.s32 0, %v813
    %v815 = vrot.slane %v810, %v814
    %v816 = vlaneseq
    %v817 = vshrl.u32 %v816, 7
    %v818 = vsub.s32 1, %v817
    %v819 = vrot.slane %v810, %v818
    %v822 = vadd.f32 %v796, %v815
    %v823 = vadd.f32 %v809, %v819
    %v824 = vmax.f32 %v822, 0.0
    %v825 = vmax.f32 %v823, 0.0
    %v826 = vld [vmem:[%s8] sm:$0x3]
    %v828 = vlaneseq
    %v829 = vshrl.u32 %v828, 7
    %v830 = vsub.s32 0, %v829
    %v831 = vrot.slane %v826, %v830
    %v832 = vlaneseq
    %v833 = vshrl.u32 %v832, 7
    %v834 = vsub.s32 1, %v833
    %v835 = vrot.slane %v826, %v834
    %v838 = vmul.f32 %v824, %v831
    %v839 = vmul.f32 %v825, %v835
    %v840 = vsel %vm436, %v838, 0.0
    %v841 = vsel %vm436, %v839, 0.0
    %v842 = vadd.f32 %v840, %v841
    %843 = vadd.xlane.f32.xlu0 %v842
    %v844 = vpop.xlane.xlu0 %843
    %v845 = vld [vmem:[#allocation3] sm:$0x1]
    %v846 = vadd.f32 %v844, %v845
    %v847 = vtanh.pop %v846
    %848 = vst.msk [vmem:[%s11 + $0x1] sm:$0x1] %vm445, %v847
    %v849 = vld [vmem:[#allocation2] sm:$0x3]
    %vm850 = vcmask 517120
    %v851 = vsel %vm850, %v849, -inf
    %v852 = vrot.slane %v851, 4
    %v853 = vmax.f32 %v851, %v852
    %v854 = vrot.slane %v853, 2
    %v855 = vmax.f32 %v853, %v854
    %v856 = vrot.slane %v855, 1
    %v857 = vmax.f32 %v855, %v856
    %v858 = vsub.f32 %v849, %v857
    %v859 = vmul.f32 %v858, 1.442695
    %v860 = vpow.pop %v859
    %v861 = vsel %vm850, %v860, 0.0
    %v862 = vrot.slane %v861, 4
    %v863 = vadd.f32 %v861, %v862
    %v864 = vrot.slane %v863, 2
    %v865 = vadd.f32 %v863, %v864
    %v866 = vrot.slane %v865, 1
    %v867 = vadd.f32 %v865, %v866
    %v868 = vrcp.pop %v867
    %v869 = vmul.f32 %v860, %v868
    %870 = vst.msk [vmem:[#allocation4] sm:$0x3] %vm850, %v869
    // Predicated region
    $region42: #{alphazero_forward.3} parent=1 // pred_check
      _
    $region43: #{alphazero_forward.3} parent=1 // pred_check_branch
      %872 = sbr.rel (0) target = $region45
    $region44: #{alphazero_forward.3} parent=1 // pred_region
      %s874 = ssub.s32 32, 32
      %875 = vsyncadd [#allocation5], %s874
      %s877 = sshll.u32 [#allocation4], 4
      %s878 = int_to_ptr.vmem [resolvable:$true] %s877
      %880 = dma.vmem_to_hbm [thread:$0]  %s878, 32, %s10, [#allocation5]
    $region45: #{alphazero_forward.3} parent=1 // pred_fallthru
      _
    // Predicated region
    $region46: #{alphazero_forward.3} parent=1 // pred_check
      _
    $region47: #{alphazero_forward.3} parent=1 // pred_check_branch
      %882 = sbr.rel (0) target = $region49
    $region48: #{alphazero_forward.3} parent=1 // pred_region
      _
    $region49: #{alphazero_forward.3} parent=1 // pred_fallthru
      _
    // Predicated region
    $region50: #{alphazero_forward.3} parent=1 // pred_check
      _
    $region51: #{alphazero_forward.3} parent=1 // pred_check_branch
      %884 = sbr.rel (0) target = $region53
    $region52: #{alphazero_forward.3} parent=1 // pred_region
      %885 = dma.done [#allocation5], 32
    $region53: #{alphazero_forward.3} parent=1 // pred_fallthru
      _
    // Predicated region
    $region54: #{alphazero_forward.3} parent=1 // pred_check
      _
    $region55: #{alphazero_forward.3} parent=1 // pred_check_branch
      %887 = sbr.rel (0) target = $region57
    $region56: #{alphazero_forward.3} parent=1 // pred_region
      _
    $region57: #{alphazero_forward.3} parent=1 // pred_fallthru
      _
    %888 = vsyncpa [#allocation5], 1

// kernel: alphazero_forward.2
$region0: #{alphazero_forward.2}
  #allocation0 [shape = 'u32[]', space=smem, size = 0x4, offset = 0x4, fixed_abs, tag = 'smem constant byte address 0x4 - core index']
  #allocation1 [shape = 'u32[144,128]{1,0:T(1,128)}', space=vmem, size = 0x12000, scoped, tag = 'internal scratch']
  #allocation2 [shape = 'f32[10,10,32]{2,1,0:T(8,128)}', space=vmem, size = 0x14000, scoped, tag = 'scratch operand']
  %s0 = inlined_call_operand.vmem [shape: f32[2,8,8,32], index: 0, kind: input, shape index: {}]
  %s1 = inlined_call_operand.vmem [shape: bf16[9,32,32], index: 1, kind: input, shape index: {}]
  %s2 = inlined_call_operand.vmem [shape: f32[1,32], index: 2, kind: input, shape index: {}]
  %s3 = inlined_call_operand.vmem [shape: bf16[9,32,32], index: 3, kind: input, shape index: {}]
  %s4 = inlined_call_operand.vmem [shape: f32[1,32], index: 4, kind: input, shape index: {}]
  %s5 = inlined_call_operand.vmem [shape: bf16[32,32], index: 5, kind: input, shape index: {}]
  %s6 = inlined_call_operand.vmem [shape: f32[1,32], index: 6, kind: input, shape index: {}]
  %s7 = inlined_call_operand.vmem [shape: bf16[9,32,32], index: 7, kind: input, shape index: {}]
  %s8 = inlined_call_operand.vmem [shape: f32[1,32], index: 8, kind: input, shape index: {}]
  %s9 = inlined_call_operand.hbm [shape: bf16[9,32,32], index: 9, kind: input, shape index: {}]
  %s10 = inlined_call_operand.vmem [shape: f32[1,32], index: 10, kind: input, shape index: {}]
  %s11 = inlined_call_operand.hbm [shape: bf16[9,32,32], index: 11, kind: input, shape index: {}]
  %s12 = inlined_call_operand.vmem [shape: f32[1,32], index: 12, kind: input, shape index: {}]
  %s13 = inlined_call_operand.hbm [shape: bf16[9,32,32], index: 13, kind: input, shape index: {}]
  %s14 = inlined_call_operand.vmem [shape: f32[1,32], index: 14, kind: input, shape index: {}]
  %s15 = inlined_call_operand.vmem [shape: bf16[2,64,32], index: 15, kind: output, shape index: {}]
  %s16 = sld [smem:[#allocation0]]
  $region105: #{alphazero_forward.2} parent=0
    _
  %s18 = ssub.s32 1, %s16
  %s19 = scalar_select 0, %s18, %s16
  $region1: #{alphazero_forward.2} parent=0
    #allocation3 [shape = 'u8[73728]{0}', space=vmem, size = 0x12000, scoped, tag = 'input window, operand 9, single buffered']
    #allocation4 [shape = 's32[2]{0}', space=sflag, size = 0x8, scoped, tag = 'scoped memory for alphazero_forward.2']
    #allocation5 [shape = 'u8[73728]{0}', space=vmem, size = 0x12000, scoped, tag = 'input window, operand 11, single buffered']
    #allocation6 [shape = 's32[1]{0}', space=sflag, size = 0x4, scoped, tag = 'scoped memory for alphazero_forward.2']
    #allocation7 [shape = 'u8[73728]{0}', space=vmem, size = 0x12000, scoped, tag = 'input window, operand 13, single buffered']
    %20 = vsyncpa [#allocation4], 0
    %21 = vsyncpa [#allocation6], 0
    loop: start=0, step=1, limit=4
    $region2: #{alphazero_forward.2} parent=1 // loop_pre_header
      _
    $region3: #{alphazero_forward.2} parent=1 // loop_header
      %s23 = sphi 0, %s27
      %p24 = scmp.ge.s32.totalorder %s23, 4
      %s33 = sphi 0, %s35
      %s36 = sphi 0, %s33
      %s37 = sphi 0, %s36
      %s53 = sphi 0, %s37
      %s57 = sphi 0, %s57
      %s59 = sphi 0, %s57
      %s60 = sphi 0, %s59
      %s74 = sphi 0, %s60
      %s78 = sphi 0, %s78
      %s80 = sphi 0, %s78
      %s81 = sphi 0, %s80
      %s95 = sphi 0, %s81
      %s99 = sphi 0, %s99
      %s101 = sphi 0, %s99
      %s102 = sphi 0, %s101
      %s116 = sphi 0, %s102
      %s120 = sphi 0, %s120
      %s122 = sphi 0, %s120
      %s123 = sphi 0, %s122
      %s137 = sphi 0, %s123
      %s141 = sphi 0, %s141
      %s143 = sphi 0, %s141
      %s144 = sphi 0, %s143
      %s158 = sphi 0, %s144
      %s162 = sphi 0, %s162
      %s164 = sphi 0, %s162
      %s165 = sphi 0, %s164
      %s179 = sphi 0, %s165
      %s183 = sphi 0, %s183
      %s185 = sphi 0, %s183
      %s186 = sphi 0, %s185
      %s200 = sphi 0, %s186
      %s204 = sphi 0, %s204
      %s206 = sphi 0, %s204
      %s207 = sphi 0, %s206
      %s221 = sphi 0, %s207
      %s225 = sphi 0, %s225
      %s227 = sphi 0, %s225
      %s228 = sphi 0, %s227
      %s242 = sphi 0, %s228
      %s246 = sphi 0, %s246
      %s248 = sphi 0, %s246
      %s249 = sphi 0, %s248
      %s263 = sphi 0, %s249
      %s267 = sphi 0, %s267
      %s269 = sphi 0, %s267
      %s270 = sphi 0, %s269
      %s284 = sphi 0, %s270
      %s288 = sphi 0, %s288
      %s290 = sphi 0, %s288
      %s291 = sphi 0, %s290
      %s305 = sphi 0, %s291
      %s309 = sphi 0, %s309
      %s311 = sphi 0, %s309
      %s312 = sphi 0, %s311
      %s326 = sphi 0, %s312
      %s330 = sphi 0, %s330
      %s332 = sphi 0, %s330
      %s333 = sphi 0, %s332
      %s347 = sphi 0, %s333
      %s353 = sphi 0, %s355
      %s356 = sphi 0, %s353
      %s357 = sphi 0, %s356
      %s373 = sphi 0, %s357
    $region4: #{alphazero_forward.2} parent=1 // loop_header_branch
      %26 = sbr.rel (%p24) target = $region8
    $region5: #{alphazero_forward.2} parent=1 // loop_body
      %s28 = ssub.s32 %s23, 1
      %s29 = ssub.s32 %s23, 2
      %s30 = sadd.s32 %s23, 1
      %s31 = ssub.s32 %s23, %s30
      %p32 = scmp.eq.s32.totalorder %s31, 0
      %s34 = sadd.s32 %s33, 1
      %s35 = scalar_select %p32, %s33, %s34
      %p38 = pneg %p32
      %p39 = scmp.eq.s32.totalorder %s23, 1
      %p40 = por %p38, %p39
      %p41 = scmp.ne.s32.totalorder %s33, %s36
      %p42 = scmp.eq.s32.totalorder %s23, 0
      %p43 = por %p41, %p42
      %p44 = scmp.ne.s32.totalorder %s33, %s36
      %p45 = scmp.eq.s32.totalorder %s28, 1
      %p46 = por %p44, %p45
      %p47 = scmp.ne.s32.totalorder %s36, %s37
      %p48 = scmp.eq.s32.totalorder %s28, 0
      %p49 = por %p47, %p48
      %p50 = scmp.ne.s32.totalorder %s36, %s37
      %p51 = scmp.eq.s32.totalorder %s29, 1
      %p52 = por %p50, %p51
      %p54 = scmp.ne.s32.totalorder %s37, %s53
      %p55 = scmp.eq.s32.totalorder %s29, 0
      %p56 = por %p54, %p55
      %s58 = sadd.s32 %s57, 1
      %p61 = scmp.eq.s32.totalorder %s23, 1
      %p62 = scmp.ne.s32.totalorder %s57, %s59
      %p63 = scmp.eq.s32.totalorder %s23, 0
      %p64 = por %p62, %p63
      %p65 = scmp.ne.s32.totalorder %s57, %s59
      %p66 = scmp.eq.s32.totalorder %s28, 1
      %p67 = por %p65, %p66
      %p68 = scmp.ne.s32.totalorder %s59, %s60
      %p69 = scmp.eq.s32.totalorder %s28, 0
      %p70 = por %p68, %p69
      %p71 = scmp.ne.s32.totalorder %s59, %s60
      %p72 = scmp.eq.s32.totalorder %s29, 1
      %p73 = por %p71, %p72
      %p75 = scmp.ne.s32.totalorder %s60, %s74
      %p76 = scmp.eq.s32.totalorder %s29, 0
      %p77 = por %p75, %p76
      %s79 = sadd.s32 %s78, 1
      %p82 = scmp.eq.s32.totalorder %s23, 1
      %p83 = scmp.ne.s32.totalorder %s78, %s80
      %p84 = scmp.eq.s32.totalorder %s23, 0
      %p85 = por %p83, %p84
      %p86 = scmp.ne.s32.totalorder %s78, %s80
      %p87 = scmp.eq.s32.totalorder %s28, 1
      %p88 = por %p86, %p87
      %p89 = scmp.ne.s32.totalorder %s80, %s81
      %p90 = scmp.eq.s32.totalorder %s28, 0
      %p91 = por %p89, %p90
      %p92 = scmp.ne.s32.totalorder %s80, %s81
      %p93 = scmp.eq.s32.totalorder %s29, 1
      %p94 = por %p92, %p93
      %p96 = scmp.ne.s32.totalorder %s81, %s95
      %p97 = scmp.eq.s32.totalorder %s29, 0
      %p98 = por %p96, %p97
      %s100 = sadd.s32 %s99, 1
      %p103 = scmp.eq.s32.totalorder %s23, 1
      %p104 = scmp.ne.s32.totalorder %s99, %s101
      %p105 = scmp.eq.s32.totalorder %s23, 0
      %p106 = por %p104, %p105
      %p107 = scmp.ne.s32.totalorder %s99, %s101
      %p108 = scmp.eq.s32.totalorder %s28, 1
      %p109 = por %p107, %p108
      %p110 = scmp.ne.s32.totalorder %s101, %s102
      %p111 = scmp.eq.s32.totalorder %s28, 0
      %p112 = por %p110, %p111
      %p113 = scmp.ne.s32.totalorder %s101, %s102
      %p114 = scmp.eq.s32.totalorder %s29, 1
      %p115 = por %p113, %p114
      %p117 = scmp.ne.s32.totalorder %s102, %s116
      %p118 = scmp.eq.s32.totalorder %s29, 0
      %p119 = por %p117, %p118
      %s121 = sadd.s32 %s120, 1
      %p124 = scmp.eq.s32.totalorder %s23, 1
      %p125 = scmp.ne.s32.totalorder %s120, %s122
      %p126 = scmp.eq.s32.totalorder %s23, 0
      %p127 = por %p125, %p126
      %p128 = scmp.ne.s32.totalorder %s120, %s122
      %p129 = scmp.eq.s32.totalorder %s28, 1
      %p130 = por %p128, %p129
      %p131 = scmp.ne.s32.totalorder %s122, %s123
      %p132 = scmp.eq.s32.totalorder %s28, 0
      %p133 = por %p131, %p132
      %p134 = scmp.ne.s32.totalorder %s122, %s123
      %p135 = scmp.eq.s32.totalorder %s29, 1
      %p136 = por %p134, %p135
      %p138 = scmp.ne.s32.totalorder %s123, %s137
      %p139 = scmp.eq.s32.totalorder %s29, 0
      %p140 = por %p138, %p139
      %s142 = sadd.s32 %s141, 1
      %p145 = scmp.eq.s32.totalorder %s23, 1
      %p146 = scmp.ne.s32.totalorder %s141, %s143
      %p147 = scmp.eq.s32.totalorder %s23, 0
      %p148 = por %p146, %p147
      %p149 = scmp.ne.s32.totalorder %s141, %s143
      %p150 = scmp.eq.s32.totalorder %s28, 1
      %p151 = por %p149, %p150
      %p152 = scmp.ne.s32.totalorder %s143, %s144
      %p153 = scmp.eq.s32.totalorder %s28, 0
      %p154 = por %p152, %p153
      %p155 = scmp.ne.s32.totalorder %s143, %s144
      %p156 = scmp.eq.s32.totalorder %s29, 1
      %p157 = por %p155, %p156
      %p159 = scmp.ne.s32.totalorder %s144, %s158
      %p160 = scmp.eq.s32.totalorder %s29, 0
      %p161 = por %p159, %p160
      %s163 = sadd.s32 %s162, 1
      %p166 = scmp.eq.s32.totalorder %s23, 1
      %p167 = scmp.ne.s32.totalorder %s162, %s164
      %p168 = scmp.eq.s32.totalorder %s23, 0
      %p169 = por %p167, %p168
      %p170 = scmp.ne.s32.totalorder %s162, %s164
      %p171 = scmp.eq.s32.totalorder %s28, 1
      %p172 = por %p170, %p171
      %p173 = scmp.ne.s32.totalorder %s164, %s165
      %p174 = scmp.eq.s32.totalorder %s28, 0
      %p175 = por %p173, %p174
      %p176 = scmp.ne.s32.totalorder %s164, %s165
      %p177 = scmp.eq.s32.totalorder %s29, 1
      %p178 = por %p176, %p177
      %p180 = scmp.ne.s32.totalorder %s165, %s179
      %p181 = scmp.eq.s32.totalorder %s29, 0
      %p182 = por %p180, %p181
      %s184 = sadd.s32 %s183, 1
      %p187 = scmp.eq.s32.totalorder %s23, 1
      %p188 = scmp.ne.s32.totalorder %s183, %s185
      %p189 = scmp.eq.s32.totalorder %s23, 0
      %p190 = por %p188, %p189
      %p191 = scmp.ne.s32.totalorder %s183, %s185
      %p192 = scmp.eq.s32.totalorder %s28, 1
      %p193 = por %p191, %p192
      %p194 = scmp.ne.s32.totalorder %s185, %s186
      %p195 = scmp.eq.s32.totalorder %s28, 0
      %p196 = por %p194, %p195
      %p197 = scmp.ne.s32.totalorder %s185, %s186
      %p198 = scmp.eq.s32.totalorder %s29, 1
      %p199 = por %p197, %p198
      %p201 = scmp.ne.s32.totalorder %s186, %s200
      %p202 = scmp.eq.s32.totalorder %s29, 0
      %p203 = por %p201, %p202
      %s205 = sadd.s32 %s204, 1
      %p208 = scmp.eq.s32.totalorder %s23, 1
      %p209 = scmp.ne.s32.totalorder %s204, %s206
      %p210 = scmp.eq.s32.totalorder %s23, 0
      %p211 = por %p209, %p210
      %p212 = scmp.ne.s32.totalorder %s204, %s206
      %p213 = scmp.eq.s32.totalorder %s28, 1
      %p214 = por %p212, %p213
      %p215 = scmp.ne.s32.totalorder %s206, %s207
      %p216 = scmp.eq.s32.totalorder %s28, 0
      %p217 = por %p215, %p216
      %p218 = scmp.ne.s32.totalorder %s206, %s207
      %p219 = scmp.eq.s32.totalorder %s29, 1
      %p220 = por %p218, %p219
      %p222 = scmp.ne.s32.totalorder %s207, %s221
      %p223 = scmp.eq.s32.totalorder %s29, 0
      %p224 = por %p222, %p223
      %s226 = sadd.s32 %s225, 1
      %p229 = scmp.eq.s32.totalorder %s23, 1
      %p230 = scmp.ne.s32.totalorder %s225, %s227
      %p231 = scmp.eq.s32.totalorder %s23, 0
      %p232 = por %p230, %p231
      %p233 = scmp.ne.s32.totalorder %s225, %s227
      %p234 = scmp.eq.s32.totalorder %s28, 1
      %p235 = por %p233, %p234
      %p236 = scmp.ne.s32.totalorder %s227, %s228
      %p237 = scmp.eq.s32.totalorder %s28, 0
      %p238 = por %p236, %p237
      %p239 = scmp.ne.s32.totalorder %s227, %s228
      %p240 = scmp.eq.s32.totalorder %s29, 1
      %p241 = por %p239, %p240
      %p243 = scmp.ne.s32.totalorder %s228, %s242
      %p244 = scmp.eq.s32.totalorder %s29, 0
      %p245 = por %p243, %p244
      %s247 = sadd.s32 %s246, 1
      %p250 = scmp.eq.s32.totalorder %s23, 1
      %p251 = scmp.ne.s32.totalorder %s246, %s248
      %p252 = scmp.eq.s32.totalorder %s23, 0
      %p253 = por %p251, %p252
      %p254 = scmp.ne.s32.totalorder %s246, %s248
      %p255 = scmp.eq.s32.totalorder %s28, 1
      %p256 = por %p254, %p255
      %p257 = scmp.ne.s32.totalorder %s248, %s249
      %p258 = scmp.eq.s32.totalorder %s28, 0
      %p259 = por %p257, %p258
      %p260 = scmp.ne.s32.totalorder %s248, %s249
      %p261 = scmp.eq.s32.totalorder %s29, 1
      %p262 = por %p260, %p261
      %p264 = scmp.ne.s32.totalorder %s249, %s263
      %p265 = scmp.eq.s32.totalorder %s29, 0
      %p266 = por %p264, %p265
      %s268 = sadd.s32 %s267, 1
      %p271 = scmp.eq.s32.totalorder %s23, 1
      %p272 = scmp.ne.s32.totalorder %s267, %s269
      %p273 = scmp.eq.s32.totalorder %s23, 0
      %p274 = por %p272, %p273
      %p275 = scmp.ne.s32.totalorder %s267, %s269
      %p276 = scmp.eq.s32.totalorder %s28, 1
      %p277 = por %p275, %p276
      %p278 = scmp.ne.s32.totalorder %s269, %s270
      %p279 = scmp.eq.s32.totalorder %s28, 0
      %p280 = por %p278, %p279
      %p281 = scmp.ne.s32.totalorder %s269, %s270
      %p282 = scmp.eq.s32.totalorder %s29, 1
      %p283 = por %p281, %p282
      %p285 = scmp.ne.s32.totalorder %s270, %s284
      %p286 = scmp.eq.s32.totalorder %s29, 0
      %p287 = por %p285, %p286
      %s289 = sadd.s32 %s288, 1
      %p292 = scmp.eq.s32.totalorder %s23, 1
      %p293 = scmp.ne.s32.totalorder %s288, %s290
      %p294 = scmp.eq.s32.totalorder %s23, 0
      %p295 = por %p293, %p294
      %p296 = scmp.ne.s32.totalorder %s288, %s290
      %p297 = scmp.eq.s32.totalorder %s28, 1
      %p298 = por %p296, %p297
      %p299 = scmp.ne.s32.totalorder %s290, %s291
      %p300 = scmp.eq.s32.totalorder %s28, 0
      %p301 = por %p299, %p300
      %p302 = scmp.ne.s32.totalorder %s290, %s291
      %p303 = scmp.eq.s32.totalorder %s29, 1
      %p304 = por %p302, %p303
      %p306 = scmp.ne.s32.totalorder %s291, %s305
      %p307 = scmp.eq.s32.totalorder %s29, 0
      %p308 = por %p306, %p307
      %s310 = sadd.s32 %s309, 1
      %p313 = scmp.eq.s32.totalorder %s23, 1
      %p314 = scmp.ne.s32.totalorder %s309, %s311
      %p315 = scmp.eq.s32.totalorder %s23, 0
      %p316 = por %p314, %p315
      %p317 = scmp.ne.s32.totalorder %s309, %s311
      %p318 = scmp.eq.s32.totalorder %s28, 1
      %p319 = por %p317, %p318
      %p320 = scmp.ne.s32.totalorder %s311, %s312
      %p321 = scmp.eq.s32.totalorder %s28, 0
      %p322 = por %p320, %p321
      %p323 = scmp.ne.s32.totalorder %s311, %s312
      %p324 = scmp.eq.s32.totalorder %s29, 1
      %p325 = por %p323, %p324
      %p327 = scmp.ne.s32.totalorder %s312, %s326
      %p328 = scmp.eq.s32.totalorder %s29, 0
      %p329 = por %p327, %p328
      %s331 = sadd.s32 %s330, 1
      %p334 = scmp.eq.s32.totalorder %s23, 1
      %p335 = scmp.ne.s32.totalorder %s330, %s332
      %p336 = scmp.eq.s32.totalorder %s23, 0
      %p337 = por %p335, %p336
      %p338 = scmp.ne.s32.totalorder %s330, %s332
      %p339 = scmp.eq.s32.totalorder %s28, 1
      %p340 = por %p338, %p339
      %p341 = scmp.ne.s32.totalorder %s332, %s333
      %p342 = scmp.eq.s32.totalorder %s28, 0
      %p343 = por %p341, %p342
      %p344 = scmp.ne.s32.totalorder %s332, %s333
      %p345 = scmp.eq.s32.totalorder %s29, 1
      %p346 = por %p344, %p345
      %p348 = scmp.ne.s32.totalorder %s333, %s347
      %p349 = scmp.eq.s32.totalorder %s29, 0
      %p350 = por %p348, %p349
      %s351 = ssub.s32 %s23, %s30
      %p352 = scmp.eq.s32.totalorder %s351, 0
      %s354 = sadd.s32 %s353, 1
      %s355 = scalar_select %p352, %s353, %s354
      %p358 = pneg %p352
      %p359 = scmp.eq.s32.totalorder %s23, 1
      %p360 = por %p358, %p359
      %p361 = scmp.ne.s32.totalorder %s353, %s356
      %p362 = scmp.eq.s32.totalorder %s23, 0
      %p363 = por %p361, %p362
      %p364 = scmp.ne.s32.totalorder %s353, %s356
      %p365 = scmp.eq.s32.totalorder %s28, 1
      %p366 = por %p364, %p365
      %p367 = scmp.ne.s32.totalorder %s356, %s357
      %p368 = scmp.eq.s32.totalorder %s28, 0
      %p369 = por %p367, %p368
      %p370 = scmp.ne.s32.totalorder %s356, %s357
      %p371 = scmp.eq.s32.totalorder %s29, 1
      %p372 = por %p370, %p371
      %p374 = scmp.ne.s32.totalorder %s357, %s373
      %p375 = scmp.eq.s32.totalorder %s29, 0
      %p376 = por %p374, %p375
      %p377 = scmp.le.s32.totalorder 1, %s23
      %p378 = scmp.lt.s32.totalorder %s23, 3
      %p379 = pnand %p377, %p378
      %p380 = pneg %p379
      // Predicated region
      $region9: #{alphazero_forward.2} parent=5 // pred_check
        _
      $region10: #{alphazero_forward.2} parent=5 // pred_check_branch
        %382 = sbr.rel (%p379) target = $region12
      $region11: #{alphazero_forward.2} parent=5 // pred_region
        %s383 = ssub.s32 %s23, 1
        // Predicated region
        $region13: #{alphazero_forward.2} parent=11 // pred_check
          %p384 = pneg %p70
        $region14: #{alphazero_forward.2} parent=11 // pred_check_branch
          %386 = sbr.rel (%p384) target = $region16
        $region15: #{alphazero_forward.2} parent=11 // pred_region
          _
        $region16: #{alphazero_forward.2} parent=11 // pred_fallthru
          _
        // Predicated region
        $region17: #{alphazero_forward.2} parent=11 // pred_check
          %p387 = pneg %p91
        $region18: #{alphazero_forward.2} parent=11 // pred_check_branch
          %389 = sbr.rel (%p387) target = $region20
        $region19: #{alphazero_forward.2} parent=11 // pred_region
          _
        $region20: #{alphazero_forward.2} parent=11 // pred_fallthru
          _
        // Predicated region
        $region21: #{alphazero_forward.2} parent=11 // pred_check
          %p390 = pneg %p112
        $region22: #{alphazero_forward.2} parent=11 // pred_check_branch
          %392 = sbr.rel (%p390) target = $region24
        $region23: #{alphazero_forward.2} parent=11 // pred_region
          _
        $region24: #{alphazero_forward.2} parent=11 // pred_fallthru
          _
        // Predicated region
        $region25: #{alphazero_forward.2} parent=11 // pred_check
          %p393 = pneg %p133
        $region26: #{alphazero_forward.2} parent=11 // pred_check_branch
          %395 = sbr.rel (%p393) target = $region28
        $region27: #{alphazero_forward.2} parent=11 // pred_region
          _
        $region28: #{alphazero_forward.2} parent=11 // pred_fallthru
          _
        // Predicated region
        $region29: #{alphazero_forward.2} parent=11 // pred_check
          %p396 = pneg %p154
        $region30: #{alphazero_forward.2} parent=11 // pred_check_branch
          %398 = sbr.rel (%p396) target = $region32
        $region31: #{alphazero_forward.2} parent=11 // pred_region
          _
        $region32: #{alphazero_forward.2} parent=11 // pred_fallthru
          _
        // Predicated region
        $region33: #{alphazero_forward.2} parent=11 // pred_check
          %p399 = pneg %p175
        $region34: #{alphazero_forward.2} parent=11 // pred_check_branch
          %401 = sbr.rel (%p399) target = $region36
        $region35: #{alphazero_forward.2} parent=11 // pred_region
          _
        $region36: #{alphazero_forward.2} parent=11 // pred_fallthru
          _
        // Predicated region
        $region37: #{alphazero_forward.2} parent=11 // pred_check
          %p402 = pneg %p196
        $region38: #{alphazero_forward.2} parent=11 // pred_check_branch
          %404 = sbr.rel (%p402) target = $region40
        $region39: #{alphazero_forward.2} parent=11 // pred_region
          _
        $region40: #{alphazero_forward.2} parent=11 // pred_fallthru
          _
        // Predicated region
        $region41: #{alphazero_forward.2} parent=11 // pred_check
          %p405 = pneg %p217
        $region42: #{alphazero_forward.2} parent=11 // pred_check_branch
          %407 = sbr.rel (%p405) target = $region44
        $region43: #{alphazero_forward.2} parent=11 // pred_region
          _
        $region44: #{alphazero_forward.2} parent=11 // pred_fallthru
          _
        // Predicated region
        $region45: #{alphazero_forward.2} parent=11 // pred_check
          %p408 = pneg %p238
        $region46: #{alphazero_forward.2} parent=11 // pred_check_branch
          %410 = sbr.rel (%p408) target = $region48
        $region47: #{alphazero_forward.2} parent=11 // pred_region
          %s412 = ssub.s32 2304, 2304
          %413 = vsyncadd [#allocation4], %s412
          %s414 = sshll.u32 [#allocation3], 4
          %s415 = int_to_ptr.vmem [resolvable:$true] %s414
          %420 = dma.hbm_to_vmem [thread:$0]  %s9, 2304, %s415, [#allocation4], 64, 64, 4
        $region48: #{alphazero_forward.2} parent=11 // pred_fallthru
          _
        // Predicated region
        $region49: #{alphazero_forward.2} parent=11 // pred_check
          %p421 = pneg %p259
        $region50: #{alphazero_forward.2} parent=11 // pred_check_branch
          %423 = sbr.rel (%p421) target = $region52
        $region51: #{alphazero_forward.2} parent=11 // pred_region
          _
        $region52: #{alphazero_forward.2} parent=11 // pred_fallthru
          _
        // Predicated region
        $region53: #{alphazero_forward.2} parent=11 // pred_check
          %p424 = pneg %p280
        $region54: #{alphazero_forward.2} parent=11 // pred_check_branch
          %426 = sbr.rel (%p424) target = $region56
        $region55: #{alphazero_forward.2} parent=11 // pred_region
          %s428 = ssub.s32 2304, 2304
          %429 = vsyncadd [#allocation6], %s428
          %s430 = sshll.u32 [#allocation5], 4
          %s431 = int_to_ptr.vmem [resolvable:$true] %s430
          %436 = dma.hbm_to_vmem [thread:$0]  %s11, 2304, %s431, [#allocation6], 64, 64, 4
        $region56: #{alphazero_forward.2} parent=11 // pred_fallthru
          _
        // Predicated region
        $region57: #{alphazero_forward.2} parent=11 // pred_check
          %p437 = pneg %p301
        $region58: #{alphazero_forward.2} parent=11 // pred_check_branch
          %439 = sbr.rel (%p437) target = $region60
        $region59: #{alphazero_forward.2} parent=11 // pred_region
          _
        $region60: #{alphazero_forward.2} parent=11 // pred_fallthru
          _
        // Predicated region
        $region61: #{alphazero_forward.2} parent=11 // pred_check
          %p440 = pneg %p322
        $region62: #{alphazero_forward.2} parent=11 // pred_check_branch
          %442 = sbr.rel (%p440) target = $region64
        $region63: #{alphazero_forward.2} parent=11 // pred_region
          %s444 = ssub.s32 2304, 2304
          %445 = vsyncadd [#allocation6], %s444
          %s446 = sshll.u32 [#allocation7], 4
          %s447 = int_to_ptr.vmem [resolvable:$true] %s446
          %452 = dma.hbm_to_vmem [thread:$0]  %s13, 2304, %s447, [#allocation6], 64, 64, 4
        $region64: #{alphazero_forward.2} parent=11 // pred_fallthru
          _
        // Predicated region
        $region65: #{alphazero_forward.2} parent=11 // pred_check
          %p453 = pneg %p343
        $region66: #{alphazero_forward.2} parent=11 // pred_check_branch
          %455 = sbr.rel (%p453) target = $region68
        $region67: #{alphazero_forward.2} parent=11 // pred_region
          _
        $region68: #{alphazero_forward.2} parent=11 // pred_fallthru
          _
      $region12: #{alphazero_forward.2} parent=5 // pred_fallthru
        _
      %p456 = scmp.lt.s32.totalorder %s23, 2
      // Predicated region
      $region69: #{alphazero_forward.2} parent=5 // pred_check
        %p457 = pneg %p456
      $region70: #{alphazero_forward.2} parent=5 // pred_check_branch
        %459 = sbr.rel (%p457) target = $region72
      $region71: #{alphazero_forward.2} parent=5 // pred_region
        // Predicated region
        $region73: #{alphazero_forward.2} parent=71 // pred_check
          %p460 = pneg %p43
        $region74: #{alphazero_forward.2} parent=71 // pred_check_branch
          %462 = sbr.rel (%p460) target = $region76
        $region75: #{alphazero_forward.2} parent=71 // pred_region
          %p463 = scmp.lt.s32.totalorder %s23, 1
          %s464 = scalar_select %p463, %s23, 1
          %s465 = smul.addr %s464, 8
          %s466 = smul.addr %s465, 8
          %s467 = scalar_lea.vmem %s0, %s466
        $region76: #{alphazero_forward.2} parent=71 // pred_fallthru
          _
      $region72: #{alphazero_forward.2} parent=5 // pred_fallthru
        _
      %p468 = scmp.le.s32.totalorder 1, %s23
      %p469 = scmp.lt.s32.totalorder %s23, 3
      %p470 = pnand %p468, %p469
      %p471 = pneg %p470
      // Predicated region
      $region77: #{alphazero_forward.2} parent=5 // pred_check
        _
      $region78: #{alphazero_forward.2} parent=5 // pred_check_branch
        %473 = sbr.rel (%p470) target = $region80
      $region79: #{alphazero_forward.2} parent=5 // pred_region
        %s474 = ssub.s32 %s23, 1
        // Predicated region
        $region81: #{alphazero_forward.2} parent=79 // pred_check
          %p475 = pneg %p238
        $region82: #{alphazero_forward.2} parent=79 // pred_check_branch
          %477 = sbr.rel (%p475) target = $region84
        $region83: #{alphazero_forward.2} parent=79 // pred_region
          %478 = dma.done [#allocation4], 2304
        $region84: #{alphazero_forward.2} parent=79 // pred_fallthru
          _
        // Predicated region
        $region85: #{alphazero_forward.2} parent=79 // pred_check
          %p479 = pneg %p280
        $region86: #{alphazero_forward.2} parent=79 // pred_check_branch
          %481 = sbr.rel (%p479) target = $region88
        $region87: #{alphazero_forward.2} parent=79 // pred_region
          %482 = dma.done [#allocation6], 2304
        $region88: #{alphazero_forward.2} parent=79 // pred_fallthru
          _
        // Predicated region
        $region89: #{alphazero_forward.2} parent=79 // pred_check
          %p483 = pneg %p322
        $region90: #{alphazero_forward.2} parent=79 // pred_check_branch
          %485 = sbr.rel (%p483) target = $region92
        $region91: #{alphazero_forward.2} parent=79 // pred_region
          %486 = dma.done [#allocation6], 2304
        $region92: #{alphazero_forward.2} parent=79 // pred_fallthru
          _
        %p487 = scmp.lt.s32.totalorder %s28, 1
        %s488 = scalar_select %p487, %s28, 1
        %s489 = smul.addr %s488, 8
        %s490 = smul.addr %s489, 8
        %s491 = scalar_lea.vmem %s0, %s490
        %p492 = pneg %p49
        %p493 = pneg %p46
        %p494 = pneg %p70
        %p495 = pneg %p67
        %p496 = pneg %p91
        %p497 = pneg %p88
        %p498 = pneg %p112
        %p499 = pneg %p109
        %p500 = pneg %p133
        %p501 = pneg %p130
        %p502 = pneg %p154
        %p503 = pneg %p151
        %p504 = pneg %p175
        %p505 = pneg %p172
        %p506 = pneg %p196
        %p507 = pneg %p193
        %p508 = pneg %p217
        %p509 = pneg %p214
        %p510 = pneg %p238
        %p511 = pneg %p235
        %p512 = pneg %p259
        %p513 = pneg %p256
        %p514 = pneg %p280
        %p515 = pneg %p277
        %p516 = pneg %p301
        %p517 = pneg %p298
        %p518 = pneg %p322
        %p519 = pneg %p319
        %p520 = pneg %p343
        %p521 = pneg %p340
        %p522 = pneg %p369
        %p523 = pneg %p366
        %p524 = scmp.lt.s32.totalorder %s28, 1
        %s525 = scalar_select %p524, %s28, 1
        %s526 = smul.addr %s525, 8
        %s527 = smul.addr %s526, 4
        %s528 = scalar_lea.vmem %s15, %s527
        %p529 = scmp.lt.s32.totalorder %s28, 1
        %s530 = scalar_select %p529, %s28, 1
        %s531 = smul.addr %s530, 8
        %s532 = smul.addr %s531, 8
        %s533 = scalar_lea.vmem %s0, %s532
        %p534 = scmp.lt.s32.totalorder %s28, 1
        %s535 = scalar_select %p534, %s28, 1
        %s536 = smul.addr %s535, 8
        %s537 = smul.addr %s536, 4
        %s538 = scalar_lea.vmem %s15, %s537
        %vm540 = vcmask 261120
        %541 = vst.msk [vmem:[#allocation2] sm:$0xff] %vm540, 0.0
        %vm542 = vcmask 254976
        %543 = vst.msk [vmem:[#allocation2 + $0x8] sm:$0x3] %vm542, 0.0
        %544 = vst.msk [vmem:[#allocation2 + $0x10] sm:$0xff] %vm540, 0.0
        %545 = vst.msk [vmem:[#allocation2 + $0x18] sm:$0x3] %vm542, 0.0
        %546 = vst.msk [vmem:[#allocation2 + $0x20] sm:$0xff] %vm540, 0.0
        %547 = vst.msk [vmem:[#allocation2 + $0x28] sm:$0x3] %vm542, 0.0
        %548 = vst.msk [vmem:[#allocation2 + $0x30] sm:$0xff] %vm540, 0.0
        %549 = vst.msk [vmem:[#allocation2 + $0x38] sm:$0x3] %vm542, 0.0
        %550 = vst.msk [vmem:[#allocation2 + $0x40] sm:$0xff] %vm540, 0.0
        %551 = vst.msk [vmem:[#allocation2 + $0x48] sm:$0x3] %vm542, 0.0
        %552 = vst.msk [vmem:[#allocation2 + $0x50] sm:$0xff] %vm540, 0.0
        %553 = vst.msk [vmem:[#allocation2 + $0x58] sm:$0x3] %vm542, 0.0
        %554 = vst.msk [vmem:[#allocation2 + $0x60] sm:$0xff] %vm540, 0.0
        %555 = vst.msk [vmem:[#allocation2 + $0x68] sm:$0x3] %vm542, 0.0
        %556 = vst.msk [vmem:[#allocation2 + $0x70] sm:$0xff] %vm540, 0.0
        %557 = vst.msk [vmem:[#allocation2 + $0x78] sm:$0x3] %vm542, 0.0
        %558 = vst.msk [vmem:[#allocation2 + $0x80] sm:$0xff] %vm540, 0.0
        %559 = vst.msk [vmem:[#allocation2 + $0x88] sm:$0x3] %vm542, 0.0
        %560 = vst.msk [vmem:[#allocation2 + $0x90] sm:$0xff] %vm540, 0.0
        %561 = vst.msk [vmem:[#allocation2 + $0x98] sm:$0x3] %vm542, 0.0
        %v562 = vld [vmem:[%s533] sm:$0xff]
        %v563 = vld [vmem:[%s533 + $0x8] sm:$0xff]
        %v564 = vld [vmem:[%s533 + $0x10] sm:$0xff]
        %v565 = vld [vmem:[%s533 + $0x18] sm:$0xff]
        %v566 = vld [vmem:[%s533 + $0x20] sm:$0xff]
        %v567 = vld [vmem:[%s533 + $0x28] sm:$0xff]
        %v568 = vld [vmem:[%s533 + $0x30] sm:$0xff]
        %v569 = vld [vmem:[%s533 + $0x38] sm:$0xff]
        %s570 = scalar_lea.vmem [#allocation2], 16
        %571 = vst.msk [vmem:[%s570 + $0x1] sm:$0xff] %vm540, %v562
        %572 = vst.msk [vmem:[%s570 + $0x11] sm:$0xff] %vm540, %v563
        %573 = vst.msk [vmem:[%s570 + $0x21] sm:$0xff] %vm540, %v564
        %574 = vst.msk [vmem:[%s570 + $0x31] sm:$0xff] %vm540, %v565
        %575 = vst.msk [vmem:[%s570 + $0x41] sm:$0xff] %vm540, %v566
        %576 = vst.msk [vmem:[%s570 + $0x51] sm:$0xff] %vm540, %v567
        %577 = vst.msk [vmem:[%s570 + $0x61] sm:$0xff] %vm540, %v568
        %578 = vst.msk [vmem:[%s570 + $0x71] sm:$0xff] %vm540, %v569
        %v579 = vld [vmem:[#allocation2] sm:$0xff]
        %v580 = vld [vmem:[#allocation2 + $0x10] sm:$0xff]
        %v581 = vld [vmem:[#allocation2 + $0x20] sm:$0xff]
        %v582 = vld [vmem:[#allocation2 + $0x30] sm:$0xff]
        %v583 = vld [vmem:[#allocation2 + $0x40] sm:$0xff]
        %v584 = vld [vmem:[#allocation2 + $0x50] sm:$0xff]
        %v585 = vld [vmem:[#allocation2 + $0x60] sm:$0xff]
        %v586 = vld [vmem:[#allocation2 + $0x70] sm:$0xff]
        %v587 = vpack.c.bf16 %v580, %v579
        %v588 = vpack.c.bf16 %v582, %v581
        %v589 = vpack.c.bf16 %v584, %v583
        %v590 = vpack.c.bf16 %v586, %v585
        %v591 = vld [vmem:[%s1] sm:$0xf]
        %v592 = vld [vmem:[%s1 + $0x4] sm:$0xf]
        %v593 = vld [vmem:[%s1 + $0x8] sm:$0xf]
        %v594 = vld [vmem:[%s1 + $0xc] sm:$0xf]
        %v595 = vld [vmem:[#allocation2 + $0x1] sm:$0xff]
        %v596 = vld [vmem:[#allocation2 + $0x11] sm:$0xff]
        %v597 = vld [vmem:[#allocation2 + $0x21] sm:$0xff]
        %v598 = vld [vmem:[#allocation2 + $0x31] sm:$0xff]
        %v599 = vld [vmem:[#allocation2 + $0x41] sm:$0xff]
        %v600 = vld [vmem:[#allocation2 + $0x51] sm:$0xff]
        %v601 = vld [vmem:[#allocation2 + $0x61] sm:$0xff]
        %v602 = vld [vmem:[#allocation2 + $0x71] sm:$0xff]
        %v603 = vpack.c.bf16 %v596, %v595
        %v604 = vpack.c.bf16 %v598, %v597
        %v605 = vpack.c.bf16 %v600, %v599
        %v606 = vpack.c.bf16 %v602, %v601
        %s607 = scalar_lea.vmem %s1, 16
        %v608 = vld [vmem:[%s607] sm:$0xf]
        %v609 = vld [vmem:[%s607 + $0x4] sm:$0xf]
        %v610 = vld [vmem:[%s607 + $0x8] sm:$0xf]
        %v611 = vld [vmem:[%s607 + $0xc] sm:$0xf]
        %v616 = vunpack.c.l.b16 %v608
        %v617 = vunpack.c.l.b16 %v609
        %v618 = vunpack.c.l.b16 %v610
        %v619 = vunpack.c.l.b16 %v611
        %v620 = vpack.c.b16 %v617, %v616
        %v621 = vpack.c.b16 %v619, %v618
        %v625 = vsel %vm540, %v603, 0
        %v628 = vsel %vm540, %v604, 0
        %v631 = vsel %vm540, %v605, 0
        %v634 = vsel %vm540, %v606, 0
        %636 = vmatprep.subr.bf16.mxu0 0
        %637 = vmatpush1.bf16.msra.mxu0 0
        %638 = vmatprep.subr.bf16.mxu0 0
        %639 = vmatpush1.bf16.msra.mxu0 0
        %640 = vmatprep.subr.bf16.mxu0 0
        %641 = vmatpush1.bf16.msra.mxu0 0
        %642 = vmatprep.subr.bf16.mxu0 0
        %643 = vmatpush1.bf16.msra.mxu0 0
        %644 = vmatprep.subr.bf16.mxu0 0
        %645 = vmatpush1.bf16.msra.mxu0 0
        %646 = vmatprep.subr.bf16.mxu0 0
        %647 = vmatpush1.bf16.msra.mxu0 0
        %648 = vmatprep.subr.bf16.mxu0 0
        %649 = vmatpush1.bf16.msra.mxu0 %v621
        %650 = vmatprep.subr.bf16.mxu0 0
        %651 = vmatpush1.bf16.msra.mxu0 %v620
        %652 = vmatprep.subr.bf16.mxu0 0
        %653 = vmatpush2.bf16.msra.mxu0 0
        %654 = vmatprep.subr.bf16.mxu0 0
        %655 = vmatpush2.bf16.msra.mxu0 0
        %656 = vmatprep.subr.bf16.mxu0 0
        %657 = vmatpush2.bf16.msra.mxu0 0
        %658 = vmatprep.subr.bf16.mxu0 0
        %659 = vmatpush2.bf16.msra.mxu0 0
        %660 = vmatprep.subr.bf16.mxu0 0
        %661 = vmatpush2.bf16.msra.mxu0 0
        %662 = vmatprep.subr.bf16.mxu0 0
        %663 = vmatpush2.bf16.msra.mxu0 0
        %664 = vmatprep.subr.bf16.mxu0 0
        %665 = vmatpush2.bf16.msra.mxu0 0
        %666 = vmatprep.subr.bf16.mxu0 0
        %667 = vmatpush2.bf16.msra.mxu0 0
        %668 = vmatprep.mubr.bf16.mxu0 0
        %669 = vmatmul.mubr.bf16.gmra.mxu0 %v625
        %v670 = vpop.f32.mrf.mxu0
        %v671 = vadd.f32 0.0, %v670
        %v672 = vpop.f32.mrf.mxu0
        %v673 = vpop.f32.mrf.mxu0
        %v674 = vadd.f32 0.0, %v673
        %v675 = vpop.f32.mrf.mxu0
        %676 = vmatprep.mubr.bf16.mxu0 0
        %677 = vmatmul.mubr.bf16.gmra.mxu0 %v628
        %v678 = vpop.f32.mrf.mxu0
        %v679 = vadd.f32 0.0, %v678
        %v680 = vpop.f32.mrf.mxu0
        %v681 = vpop.f32.mrf.mxu0
        %v682 = vadd.f32 0.0, %v681
        %v683 = vpop.f32.mrf.mxu0
        %684 = vmatprep.mubr.bf16.mxu0 0
        %685 = vmatmul.mubr.bf16.gmra.mxu0 %v631
        %v686 = vpop.f32.mrf.mxu0
        %v687 = vadd.f32 0.0, %v686
        %v688 = vpop.f32.mrf.mxu0
        %v689 = vpop.f32.mrf.mxu0
        %v690 = vadd.f32 0.0, %v689
        %v691 = vpop.f32.mrf.mxu0
        %692 = vmatprep.mubr.bf16.mxu0 0
        %693 = vmatmul.mubr.bf16.gmra.mxu0 %v634
        %v694 = vpop.f32.mrf.mxu0
        %v695 = vadd.f32 0.0, %v694
        %v696 = vpop.f32.mrf.mxu0
        %v697 = vpop.f32.mrf.mxu0
        %v698 = vadd.f32 0.0, %v697
        %v699 = vpop.f32.mrf.mxu0
        %700 = vdwg.mxu0
        %v705 = vunpack.c.l.b16 %v591
        %v706 = vunpack.c.l.b16 %v592
        %v707 = vunpack.c.l.b16 %v593
        %v708 = vunpack.c.l.b16 %v594
        %v709 = vpack.c.b16 %v706, %v705
        %v710 = vpack.c.b16 %v708, %v707
        %v714 = vsel %vm540, %v587, 0
        %v717 = vsel %vm540, %v588, 0
        %v720 = vsel %vm540, %v589, 0
        %v723 = vsel %vm540, %v590, 0
        %725 = vmatprep.subr.bf16.mxu0 0
        %726 = vmatpush1.bf16.msra.mxu0 0
        %727 = vmatprep.subr.bf16.mxu0 0
        %728 = vmatpush1.bf16.msra.mxu0 0
        %729 = vmatprep.subr.bf16.mxu0 0
        %730 = vmatpush1.bf16.msra.mxu0 0
        %731 = vmatprep.subr.bf16.mxu0 0
        %732 = vmatpush1.bf16.msra.mxu0 0
        %733 = vmatprep.subr.bf16.mxu0 0
        %734 = vmatpush1.bf16.msra.mxu0 0
        %735 = vmatprep.subr.bf16.mxu0 0
        %736 = vmatpush1.bf16.msra.mxu0 0
        %737 = vmatprep.subr.bf16.mxu0 0
        %738 = vmatpush1.bf16.msra.mxu0 %v710
        %739 = vmatprep.subr.bf16.mxu0 0
        %740 = vmatpush1.bf16.msra.mxu0 %v709
        %741 = vmatprep.subr.bf16.mxu0 0
        %742 = vmatpush2.bf16.msra.mxu0 0
        %743 = vmatprep.subr.bf16.mxu0 0
        %744 = vmatpush2.bf16.msra.mxu0 0
        %745 = vmatprep.subr.bf16.mxu0 0
        %746 = vmatpush2.bf16.msra.mxu0 0
        %747 = vmatprep.subr.bf16.mxu0 0
        %748 = vmatpush2.bf16.msra.mxu0 0
        %749 = vmatprep.subr.bf16.mxu0 0
        %750 = vmatpush2.bf16.msra.mxu0 0
        %751 = vmatprep.subr.bf16.mxu0 0
        %752 = vmatpush2.bf16.msra.mxu0 0
        %753 = vmatprep.subr.bf16.mxu0 0
        %754 = vmatpush2.bf16.msra.mxu0 0
        %755 = vmatprep.subr.bf16.mxu0 0
        %756 = vmatpush2.bf16.msra.mxu0 0
        %757 = vmatprep.mubr.bf16.mxu0 0
        %758 = vmatmul.mubr.bf16.gmra.mxu0 %v714
        %v759 = vpop.f32.mrf.mxu0
        %v760 = vadd.f32 %v671, %v759
        %v761 = vpop.f32.mrf.mxu0
        %v762 = vpop.f32.mrf.mxu0
        %v763 = vadd.f32 %v674, %v762
        %v764 = vpop.f32.mrf.mxu0
        %765 = vmatprep.mubr.bf16.mxu0 0
        %766 = vmatmul.mubr.bf16.gmra.mxu0 %v717
        %v767 = vpop.f32.mrf.mxu0
        %v768 = vadd.f32 %v679, %v767
        %v769 = vpop.f32.mrf.mxu0
        %v770 = vpop.f32.mrf.mxu0
        %v771 = vadd.f32 %v682, %v770
        %v772 = vpop.f32.mrf.mxu0
        %773 = vmatprep.mubr.bf16.mxu0 0
        %774 = vmatmul.mubr.bf16.gmra.mxu0 %v720
        %v775 = vpop.f32.mrf.mxu0
        %v776 = vadd.f32 %v687, %v775
        %v777 = vpop.f32.mrf.mxu0
        %v778 = vpop.f32.mrf.mxu0
        %v779 = vadd.f32 %v690, %v778
        %v780 = vpop.f32.mrf.mxu0
        %781 = vmatprep.mubr.bf16.mxu0 0
        %782 = vmatmul.mubr.bf16.gmra.mxu0 %v723
        %v783 = vpop.f32.mrf.mxu0
        %v784 = vadd.f32 %v695, %v783
        %v785 = vpop.f32.mrf.mxu0
        %v786 = vpop.f32.mrf.mxu0
        %v787 = vadd.f32 %v698, %v786
        %v788 = vpop.f32.mrf.mxu0
        %789 = vdwg.mxu0
        %v790 = vld [vmem:[#allocation2 + $0x2] sm:$0xff]
        %v791 = vld [vmem:[#allocation2 + $0x12] sm:$0xff]
        %v792 = vld [vmem:[#allocation2 + $0x22] sm:$0xff]
        %v793 = vld [vmem:[#allocation2 + $0x32] sm:$0xff]
        %v794 = vld [vmem:[#allocation2 + $0x42] sm:$0xff]
        %v795 = vld [vmem:[#allocation2 + $0x52] sm:$0xff]
        %v796 = vld [vmem:[#allocation2 + $0x62] sm:$0xff]
        %v797 = vld [vmem:[#allocation2 + $0x72] sm:$0xff]
        %v798 = vpack.c.bf16 %v791, %v790
        %v799 = vpack.c.bf16 %v793, %v792
        %v800 = vpack.c.bf16 %v795, %v794
        %v801 = vpack.c.bf16 %v797, %v796
        %s802 = scalar_lea.vmem %s1, 32
        %v803 = vld [vmem:[%s802] sm:$0xf]
        %v804 = vld [vmem:[%s802 + $0x4] sm:$0xf]
        %v805 = vld [vmem:[%s802 + $0x8] sm:$0xf]
        %v806 = vld [vmem:[%s802 + $0xc] sm:$0xf]
        %v811 = vunpack.c.l.b16 %v803
        %v812 = vunpack.c.l.b16 %v804
        %v813 = vunpack.c.l.b16 %v805
        %v814 = vunpack.c.l.b16 %v806
        %v815 = vpack.c.b16 %v812, %v811
        %v816 = vpack.c.b16 %v814, %v813
        %v820 = vsel %vm540, %v798, 0
        %v823 = vsel %vm540, %v799, 0
        %v826 = vsel %vm540, %v800, 0
        %v829 = vsel %vm540, %v801, 0
        %831 = vmatprep.subr.bf16.mxu0 0
        %832 = vmatpush1.bf16.msra.mxu0 0
        %833 = vmatprep.subr.bf16.mxu0 0
        %834 = vmatpush1.bf16.msra.mxu0 0
        %835 = vmatprep.subr.bf16.mxu0 0
        %836 = vmatpush1.bf16.msra.mxu0 0
        %837 = vmatprep.subr.bf16.mxu0 0
        %838 = vmatpush1.bf16.msra.mxu0 0
        %839 = vmatprep.subr.bf16.mxu0 0
        %840 = vmatpush1.bf16.msra.mxu0 0
        %841 = vmatprep.subr.bf16.mxu0 0
        %842 = vmatpush1.bf16.msra.mxu0 0
        %843 = vmatprep.subr.bf16.mxu0 0
        %844 = vmatpush1.bf16.msra.mxu0 %v816
        %845 = vmatprep.subr.bf16.mxu0 0
        %846 = vmatpush1.bf16.msra.mxu0 %v815
        %847 = vmatprep.subr.bf16.mxu0 0
        %848 = vmatpush2.bf16.msra.mxu0 0
        %849 = vmatprep.subr.bf16.mxu0 0
        %850 = vmatpush2.bf16.msra.mxu0 0
        %851 = vmatprep.subr.bf16.mxu0 0
        %852 = vmatpush2.bf16.msra.mxu0 0
        %853 = vmatprep.subr.bf16.mxu0 0
        %854 = vmatpush2.bf16.msra.mxu0 0
        %855 = vmatprep.subr.bf16.mxu0 0
        %856 = vmatpush2.bf16.msra.mxu0 0
        %857 = vmatprep.subr.bf16.mxu0 0
        %858 = vmatpush2.bf16.msra.mxu0 0
        %859 = vmatprep.subr.bf16.mxu0 0
        %860 = vmatpush2.bf16.msra.mxu0 0
        %861 = vmatprep.subr.bf16.mxu0 0
        %862 = vmatpush2.bf16.msra.mxu0 0
        %863 = vmatprep.mubr.bf16.mxu0 0
        %864 = vmatmul.mubr.bf16.gmra.mxu0 %v820
        %v865 = vpop.f32.mrf.mxu0
        %v866 = vadd.f32 0.0, %v865
        %v867 = vpop.f32.mrf.mxu0
        %v868 = vpop.f32.mrf.mxu0
        %v869 = vadd.f32 0.0, %v868
        %v870 = vpop.f32.mrf.mxu0
        %871 = vmatprep.mubr.bf16.mxu0 0
        %872 = vmatmul.mubr.bf16.gmra.mxu0 %v823
        %v873 = vpop.f32.mrf.mxu0
        %v874 = vadd.f32 0.0, %v873
        %v875 = vpop.f32.mrf.mxu0
        %v876 = vpop.f32.mrf.mxu0
        %v877 = vadd.f32 0.0, %v876
        %v878 = vpop.f32.mrf.mxu0
        %879 = vmatprep.mubr.bf16.mxu0 0
        %880 = vmatmul.mubr.bf16.gmra.mxu0 %v826
        %v881 = vpop.f32.mrf.mxu0
        %v882 = vadd.f32 0.0, %v881
        %v883 = vpop.f32.mrf.mxu0
        %v884 = vpop.f32.mrf.mxu0
        %v885 = vadd.f32 0.0, %v884
        %v886 = vpop.f32.mrf.mxu0
        %887 = vmatprep.mubr.bf16.mxu0 0
        %888 = vmatmul.mubr.bf16.gmra.mxu0 %v829
        %v889 = vpop.f32.mrf.mxu0
        %v890 = vadd.f32 0.0, %v889
        %v891 = vpop.f32.mrf.mxu0
        %v892 = vpop.f32.mrf.mxu0
        %v893 = vadd.f32 0.0, %v892
        %v894 = vpop.f32.mrf.mxu0
        %895 = vdwg.mxu0
        %v896 = vadd.f32 %v760, %v866
        %v897 = vadd.f32 %v763, %v869
        %v898 = vadd.f32 %v768, %v874
        %v899 = vadd.f32 %v771, %v877
        %v900 = vadd.f32 %v776, %v882
        %v901 = vadd.f32 %v779, %v885
        %v902 = vadd.f32 %v784, %v890
        %v903 = vadd.f32 %v787, %v893
        %v904 = vld [vmem:[%s570] sm:$0xff]
        %v905 = vld [vmem:[%s570 + $0x10] sm:$0xff]
        %v906 = vld [vmem:[%s570 + $0x20] sm:$0xff]
        %v907 = vld [vmem:[%s570 + $0x30] sm:$0xff]
        %v908 = vld [vmem:[%s570 + $0x40] sm:$0xff]
        %v909 = vld [vmem:[%s570 + $0x50] sm:$0xff]
        %v910 = vld [vmem:[%s570 + $0x60] sm:$0xff]
        %v911 = vld [vmem:[%s570 + $0x70] sm:$0xff]
        %v912 = vpack.c.bf16 %v905, %v904
        %v913 = vpack.c.bf16 %v907, %v906
        %v914 = vpack.c.bf16 %v909, %v908
        %v915 = vpack.c.bf16 %v911, %v910
        %s916 = scalar_lea.vmem %s1, 48
        %v917 = vld [vmem:[%s916] sm:$0xf]
        %v918 = vld [vmem:[%s916 + $0x4] sm:$0xf]
        %v919 = vld [vmem:[%s916 + $0x8] sm:$0xf]
        %v920 = vld [vmem:[%s916 + $0xc] sm:$0xf]
        %v925 = vunpack.c.l.b16 %v917
        %v926 = vunpack.c.l.b16 %v918
        %v927 = vunpack.c.l.b16 %v919
        %v928 = vunpack.c.l.b16 %v920
        %v929 = vpack.c.b16 %v926, %v925
        %v930 = vpack.c.b16 %v928, %v927
        %v934 = vsel %vm540, %v912, 0
        %v937 = vsel %vm540, %v913, 0
        %v940 = vsel %vm540, %v914, 0
        %v943 = vsel %vm540, %v915, 0
        %945 = vmatprep.subr.bf16.mxu0 0
        %946 = vmatpush1.bf16.msra.mxu0 0
        %947 = vmatprep.subr.bf16.mxu0 0
        %948 = vmatpush1.bf16.msra.mxu0 0
        %949 = vmatprep.subr.bf16.mxu0 0
        %950 = vmatpush1.bf16.msra.mxu0 0
        %951 = vmatprep.subr.bf16.mxu0 0
        %952 = vmatpush1.bf16.msra.mxu0 0
        %953 = vmatprep.subr.bf16.mxu0 0
        %954 = vmatpush1.bf16.msra.mxu0 0
        %955 = vmatprep.subr.bf16.mxu0 0
        %956 = vmatpush1.bf16.msra.mxu0 0
        %957 = vmatprep.subr.bf16.mxu0 0
        %958 = vmatpush1.bf16.msra.mxu0 %v930
        %959 = vmatprep.subr.bf16.mxu0 0
        %960 = vmatpush1.bf16.msra.mxu0 %v929
        %961 = vmatprep.subr.bf16.mxu0 0
        %962 = vmatpush2.bf16.msra.mxu0 0
        %963 = vmatprep.subr.bf16.mxu0 0
        %964 = vmatpush2.bf16.msra.mxu0 0
        %965 = vmatprep.subr.bf16.mxu0 0
        %966 = vmatpush2.bf16.msra.mxu0 0
        %967 = vmatprep.subr.bf16.mxu0 0
        %968 = vmatpush2.bf16.msra.mxu0 0
        %969 = vmatprep.subr.bf16.mxu0 0
        %970 = vmatpush2.bf16.msra.mxu0 0
        %971 = vmatprep.subr.bf16.mxu0 0
        %972 = vmatpush2.bf16.msra.mxu0 0
        %973 = vmatprep.subr.bf16.mxu0 0
        %974 = vmatpush2.bf16.msra.mxu0 0
        %975 = vmatprep.subr.bf16.mxu0 0
        %976 = vmatpush2.bf16.msra.mxu0 0
        %977 = vmatprep.mubr.bf16.mxu0 0
        %978 = vmatmul.mubr.bf16.gmra.mxu0 %v934
        %v979 = vpop.f32.mrf.mxu0
        %v980 = vadd.f32 0.0, %v979
        %v981 = vpop.f32.mrf.mxu0
        %v982 = vpop.f32.mrf.mxu0
        %v983 = vadd.f32 0.0, %v982
        %v984 = vpop.f32.mrf.mxu0
        %985 = vmatprep.mubr.bf16.mxu0 0
        %986 = vmatmul.mubr.bf16.gmra.mxu0 %v937
        %v987 = vpop.f32.mrf.mxu0
        %v988 = vadd.f32 0.0, %v987
        %v989 = vpop.f32.mrf.mxu0
        %v990 = vpop.f32.mrf.mxu0
        %v991 = vadd.f32 0.0, %v990
        %v992 = vpop.f32.mrf.mxu0
        %993 = vmatprep.mubr.bf16.mxu0 0
        %994 = vmatmul.mubr.bf16.gmra.mxu0 %v940
        %v995 = vpop.f32.mrf.mxu0
        %v996 = vadd.f32 0.0, %v995
        %v997 = vpop.f32.mrf.mxu0
        %v998 = vpop.f32.mrf.mxu0
        %v999 = vadd.f32 0.0, %v998
        %v1000 = vpop.f32.mrf.mxu0
        %1001 = vmatprep.mubr.bf16.mxu0 0
        %1002 = vmatmul.mubr.bf16.gmra.mxu0 %v943
        %v1003 = vpop.f32.mrf.mxu0
        %v1004 = vadd.f32 0.0, %v1003
        %v1005 = vpop.f32.mrf.mxu0
        %v1006 = vpop.f32.mrf.mxu0
        %v1007 = vadd.f32 0.0, %v1006
        %v1008 = vpop.f32.mrf.mxu0
        %1009 = vdwg.mxu0
        %v1010 = vadd.f32 %v896, %v980
        %v1011 = vadd.f32 %v897, %v983
        %v1012 = vadd.f32 %v898, %v988
        %v1013 = vadd.f32 %v899, %v991
        %v1014 = vadd.f32 %v900, %v996
        %v1015 = vadd.f32 %v901, %v999
        %v1016 = vadd.f32 %v902, %v1004
        %v1017 = vadd.f32 %v903, %v1007
        %v1018 = vld [vmem:[%s570 + $0x1] sm:$0xff]
        %v1019 = vld [vmem:[%s570 + $0x11] sm:$0xff]
        %v1020 = vld [vmem:[%s570 + $0x21] sm:$0xff]
        %v1021 = vld [vmem:[%s570 + $0x31] sm:$0xff]
        %v1022 = vld [vmem:[%s570 + $0x41] sm:$0xff]
        %v1023 = vld [vmem:[%s570 + $0x51] sm:$0xff]
        %v1024 = vld [vmem:[%s570 + $0x61] sm:$0xff]
        %v1025 = vld [vmem:[%s570 + $0x71] sm:$0xff]
        %v1026 = vpack.c.bf16 %v1019, %v1018
        %v1027 = vpack.c.bf16 %v1021, %v1020
        %v1028 = vpack.c.bf16 %v1023, %v1022
        %v1029 = vpack.c.bf16 %v1025, %v1024
        %s1030 = scalar_lea.vmem %s1, 64
        %v1031 = vld [vmem:[%s1030] sm:$0xf]
        %v1032 = vld [vmem:[%s1030 + $0x4] sm:$0xf]
        %v1033 = vld [vmem:[%s1030 + $0x8] sm:$0xf]
        %v1034 = vld [vmem:[%s1030 + $0xc] sm:$0xf]
        %v1039 = vunpack.c.l.b16 %v1031
        %v1040 = vunpack.c.l.b16 %v1032
        %v1041 = vunpack.c.l.b16 %v1033
        %v1042 = vunpack.c.l.b16 %v1034
        %v1043 = vpack.c.b16 %v1040, %v1039
        %v1044 = vpack.c.b16 %v1042, %v1041
        %v1048 = vsel %vm540, %v1026, 0
        %v1051 = vsel %vm540, %v1027, 0
        %v1054 = vsel %vm540, %v1028, 0
        %v1057 = vsel %vm540, %v1029, 0
        %1059 = vmatprep.subr.bf16.mxu0 0
        %1060 = vmatpush1.bf16.msra.mxu0 0
        %1061 = vmatprep.subr.bf16.mxu0 0
        %1062 = vmatpush1.bf16.msra.mxu0 0
        %1063 = vmatprep.subr.bf16.mxu0 0
        %1064 = vmatpush1.bf16.msra.mxu0 0
        %1065 = vmatprep.subr.bf16.mxu0 0
        %1066 = vmatpush1.bf16.msra.mxu0 0
        %1067 = vmatprep.subr.bf16.mxu0 0
        %1068 = vmatpush1.bf16.msra.mxu0 0
        %1069 = vmatprep.subr.bf16.mxu0 0
        %1070 = vmatpush1.bf16.msra.mxu0 0
        %1071 = vmatprep.subr.bf16.mxu0 0
        %1072 = vmatpush1.bf16.msra.mxu0 %v1044
        %1073 = vmatprep.subr.bf16.mxu0 0
        %1074 = vmatpush1.bf16.msra.mxu0 %v1043
        %1075 = vmatprep.subr.bf16.mxu0 0
        %1076 = vmatpush2.bf16.msra.mxu0 0
        %1077 = vmatprep.subr.bf16.mxu0 0
        %1078 = vmatpush2.bf16.msra.mxu0 0
        %1079 = vmatprep.subr.bf16.mxu0 0
        %1080 = vmatpush2.bf16.msra.mxu0 0
        %1081 = vmatprep.subr.bf16.mxu0 0
        %1082 = vmatpush2.bf16.msra.mxu0 0
        %1083 = vmatprep.subr.bf16.mxu0 0
        %1084 = vmatpush2.bf16.msra.mxu0 0
        %1085 = vmatprep.subr.bf16.mxu0 0
        %1086 = vmatpush2.bf16.msra.mxu0 0
        %1087 = vmatprep.subr.bf16.mxu0 0
        %1088 = vmatpush2.bf16.msra.mxu0 0
        %1089 = vmatprep.subr.bf16.mxu0 0
        %1090 = vmatpush2.bf16.msra.mxu0 0
        %1091 = vmatprep.mubr.bf16.mxu0 0
        %1092 = vmatmul.mubr.bf16.gmra.mxu0 %v1048
        %v1093 = vpop.f32.mrf.mxu0
        %v1094 = vadd.f32 0.0, %v1093
        %v1095 = vpop.f32.mrf.mxu0
        %v1096 = vpop.f32.mrf.mxu0
        %v1097 = vadd.f32 0.0, %v1096
        %v1098 = vpop.f32.mrf.mxu0
        %1099 = vmatprep.mubr.bf16.mxu0 0
        %1100 = vmatmul.mubr.bf16.gmra.mxu0 %v1051
        %v1101 = vpop.f32.mrf.mxu0
        %v1102 = vadd.f32 0.0, %v1101
        %v1103 = vpop.f32.mrf.mxu0
        %v1104 = vpop.f32.mrf.mxu0
        %v1105 = vadd.f32 0.0, %v1104
        %v1106 = vpop.f32.mrf.mxu0
        %1107 = vmatprep.mubr.bf16.mxu0 0
        %1108 = vmatmul.mubr.bf16.gmra.mxu0 %v1054
        %v1109 = vpop.f32.mrf.mxu0
        %v1110 = vadd.f32 0.0, %v1109
        %v1111 = vpop.f32.mrf.mxu0
        %v1112 = vpop.f32.mrf.mxu0
        %v1113 = vadd.f32 0.0, %v1112
        %v1114 = vpop.f32.mrf.mxu0
        %1115 = vmatprep.mubr.bf16.mxu0 0
        %1116 = vmatmul.mubr.bf16.gmra.mxu0 %v1057
        %v1117 = vpop.f32.mrf.mxu0
        %v1118 = vadd.f32 0.0, %v1117
        %v1119 = vpop.f32.mrf.mxu0
        %v1120 = vpop.f32.mrf.mxu0
        %v1121 = vadd.f32 0.0, %v1120
        %v1122 = vpop.f32.mrf.mxu0
        %1123 = vdwg.mxu0
        %v1124 = vadd.f32 %v1010, %v1094
        %v1125 = vadd.f32 %v1011, %v1097
        %v1126 = vadd.f32 %v1012, %v1102
        %v1127 = vadd.f32 %v1013, %v1105
        %v1128 = vadd.f32 %v1014, %v1110
        %v1129 = vadd.f32 %v1015, %v1113
        %v1130 = vadd.f32 %v1016, %v1118
        %v1131 = vadd.f32 %v1017, %v1121
        %v1132 = vld [vmem:[%s570 + $0x2] sm:$0xff]
        %v1133 = vld [vmem:[%s570 + $0x12] sm:$0xff]
        %v1134 = vld [vmem:[%s570 + $0x22] sm:$0xff]
        %v1135 = vld [vmem:[%s570 + $0x32] sm:$0xff]
        %v1136 = vld [vmem:[%s570 + $0x42] sm:$0xff]
        %v1137 = vld [vmem:[%s570 + $0x52] sm:$0xff]
        %v1138 = vld [vmem:[%s570 + $0x62] sm:$0xff]
        %v1139 = vld [vmem:[%s570 + $0x72] sm:$0xff]
        %v1140 = vpack.c.bf16 %v1133, %v1132
        %v1141 = vpack.c.bf16 %v1135, %v1134
        %v1142 = vpack.c.bf16 %v1137, %v1136
        %v1143 = vpack.c.bf16 %v1139, %v1138
        %s1144 = scalar_lea.vmem %s1, 80
        %v1145 = vld [vmem:[%s1144] sm:$0xf]
        %v1146 = vld [vmem:[%s1144 + $0x4] sm:$0xf]
        %v1147 = vld [vmem:[%s1144 + $0x8] sm:$0xf]
        %v1148 = vld [vmem:[%s1144 + $0xc] sm:$0xf]
        %v1153 = vunpack.c.l.b16 %v1145
        %v1154 = vunpack.c.l.b16 %v1146
        %v1155 = vunpack.c.l.b16 %v1147
        %v1156 = vunpack.c.l.b16 %v1148
        %v1157 = vpack.c.b16 %v1154, %v1153
        %v1158 = vpack.c.b16 %v1156, %v1155
        %v1162 = vsel %vm540, %v1140, 0
        %v1165 = vsel %vm540, %v1141, 0
        %v1168 = vsel %vm540, %v1142, 0
        %v1171 = vsel %vm540, %v1143, 0
        %1173 = vmatprep.subr.bf16.mxu0 0
        %1174 = vmatpush1.bf16.msra.mxu0 0
        %1175 = vmatprep.subr.bf16.mxu0 0
        %1176 = vmatpush1.bf16.msra.mxu0 0
        %1177 = vmatprep.subr.bf16.mxu0 0
        %1178 = vmatpush1.bf16.msra.mxu0 0
        %1179 = vmatprep.subr.bf16.mxu0 0
        %1180 = vmatpush1.bf16.msra.mxu0 0
        %1181 = vmatprep.subr.bf16.mxu0 0
        %1182 = vmatpush1.bf16.msra.mxu0 0
        %1183 = vmatprep.subr.bf16.mxu0 0
        %1184 = vmatpush1.bf16.msra.mxu0 0
        %1185 = vmatprep.subr.bf16.mxu0 0
        %1186 = vmatpush1.bf16.msra.mxu0 %v1158
        %1187 = vmatprep.subr.bf16.mxu0 0
        %1188 = vmatpush1.bf16.msra.mxu0 %v1157
        %1189 = vmatprep.subr.bf16.mxu0 0
        %1190 = vmatpush2.bf16.msra.mxu0 0
        %1191 = vmatprep.subr.bf16.mxu0 0
        %1192 = vmatpush2.bf16.msra.mxu0 0
        %1193 = vmatprep.subr.bf16.mxu0 0
        %1194 = vmatpush2.bf16.msra.mxu0 0
        %1195 = vmatprep.subr.bf16.mxu0 0
        %1196 = vmatpush2.bf16.msra.mxu0 0
        %1197 = vmatprep.subr.bf16.mxu0 0
        %1198 = vmatpush2.bf16.msra.mxu0 0
        %1199 = vmatprep.subr.bf16.mxu0 0
        %1200 = vmatpush2.bf16.msra.mxu0 0
        %1201 = vmatprep.subr.bf16.mxu0 0
        %1202 = vmatpush2.bf16.msra.mxu0 0
        %1203 = vmatprep.subr.bf16.mxu0 0
        %1204 = vmatpush2.bf16.msra.mxu0 0
        %1205 = vmatprep.mubr.bf16.mxu0 0
        %1206 = vmatmul.mubr.bf16.gmra.mxu0 %v1162
        %v1207 = vpop.f32.mrf.mxu0
        %v1208 = vadd.f32 0.0, %v1207
        %v1209 = vpop.f32.mrf.mxu0
        %v1210 = vpop.f32.mrf.mxu0
        %v1211 = vadd.f32 0.0, %v1210
        %v1212 = vpop.f32.mrf.mxu0
        %1213 = vmatprep.mubr.bf16.mxu0 0
        %1214 = vmatmul.mubr.bf16.gmra.mxu0 %v1165
        %v1215 = vpop.f32.mrf.mxu0
        %v1216 = vadd.f32 0.0, %v1215
        %v1217 = vpop.f32.mrf.mxu0
        %v1218 = vpop.f32.mrf.mxu0
        %v1219 = vadd.f32 0.0, %v1218
        %v1220 = vpop.f32.mrf.mxu0
        %1221 = vmatprep.mubr.bf16.mxu0 0
        %1222 = vmatmul.mubr.bf16.gmra.mxu0 %v1168
        %v1223 = vpop.f32.mrf.mxu0
        %v1224 = vadd.f32 0.0, %v1223
        %v1225 = vpop.f32.mrf.mxu0
        %v1226 = vpop.f32.mrf.mxu0
        %v1227 = vadd.f32 0.0, %v1226
        %v1228 = vpop.f32.mrf.mxu0
        %1229 = vmatprep.mubr.bf16.mxu0 0
        %1230 = vmatmul.mubr.bf16.gmra.mxu0 %v1171
        %v1231 = vpop.f32.mrf.mxu0
        %v1232 = vadd.f32 0.0, %v1231
        %v1233 = vpop.f32.mrf.mxu0
        %v1234 = vpop.f32.mrf.mxu0
        %v1235 = vadd.f32 0.0, %v1234
        %v1236 = vpop.f32.mrf.mxu0
        %1237 = vdwg.mxu0
        %v1238 = vadd.f32 %v1124, %v1208
        %v1239 = vadd.f32 %v1125, %v1211
        %v1240 = vadd.f32 %v1126, %v1216
        %v1241 = vadd.f32 %v1127, %v1219
        %v1242 = vadd.f32 %v1128, %v1224
        %v1243 = vadd.f32 %v1129, %v1227
        %v1244 = vadd.f32 %v1130, %v1232
        %v1245 = vadd.f32 %v1131, %v1235
        %s1246 = scalar_lea.vmem [#allocation2], 32
        %v1247 = vld [vmem:[%s1246] sm:$0xff]
        %v1248 = vld [vmem:[%s1246 + $0x10] sm:$0xff]
        %v1249 = vld [vmem:[%s1246 + $0x20] sm:$0xff]
        %v1250 = vld [vmem:[%s1246 + $0x30] sm:$0xff]
        %v1251 = vld [vmem:[%s1246 + $0x40] sm:$0xff]
        %v1252 = vld [vmem:[%s1246 + $0x50] sm:$0xff]
        %v1253 = vld [vmem:[%s1246 + $0x60] sm:$0xff]
        %v1254 = vld [vmem:[%s1246 + $0x70] sm:$0xff]
        %v1255 = vpack.c.bf16 %v1248, %v1247
        %v1256 = vpack.c.bf16 %v1250, %v1249
        %v1257 = vpack.c.bf16 %v1252, %v1251
        %v1258 = vpack.c.bf16 %v1254, %v1253
        %s1259 = scalar_lea.vmem %s1, 96
        %v1260 = vld [vmem:[%s1259] sm:$0xf]
        %v1261 = vld [vmem:[%s1259 + $0x4] sm:$0xf]
        %v1262 = vld [vmem:[%s1259 + $0x8] sm:$0xf]
        %v1263 = vld [vmem:[%s1259 + $0xc] sm:$0xf]
        %v1268 = vunpack.c.l.b16 %v1260
        %v1269 = vunpack.c.l.b16 %v1261
        %v1270 = vunpack.c.l.b16 %v1262
        %v1271 = vunpack.c.l.b16 %v1263
        %v1272 = vpack.c.b16 %v1269, %v1268
        %v1273 = vpack.c.b16 %v1271, %v1270
        %v1277 = vsel %vm540, %v1255, 0
        %v1280 = vsel %vm540, %v1256, 0
        %v1283 = vsel %vm540, %v1257, 0
        %v1286 = vsel %vm540, %v1258, 0
        %1288 = vmatprep.subr.bf16.mxu0 0
        %1289 = vmatpush1.bf16.msra.mxu0 0
        %1290 = vmatprep.subr.bf16.mxu0 0
        %1291 = vmatpush1.bf16.msra.mxu0 0
        %1292 = vmatprep.subr.bf16.mxu0 0
        %1293 = vmatpush1.bf16.msra.mxu0 0
        %1294 = vmatprep.subr.bf16.mxu0 0
        %1295 = vmatpush1.bf16.msra.mxu0 0
        %1296 = vmatprep.subr.bf16.mxu0 0
        %1297 = vmatpush1.bf16.msra.mxu0 0
        %1298 = vmatprep.subr.bf16.mxu0 0
        %1299 = vmatpush1.bf16.msra.mxu0 0
        %1300 = vmatprep.subr.bf16.mxu0 0
        %1301 = vmatpush1.bf16.msra.mxu0 %v1273
        %1302 = vmatprep.subr.bf16.mxu0 0
        %1303 = vmatpush1.bf16.msra.mxu0 %v1272
        %1304 = vmatprep.subr.bf16.mxu0 0
        %1305 = vmatpush2.bf16.msra.mxu0 0
        %1306 = vmatprep.subr.bf16.mxu0 0
        %1307 = vmatpush2.bf16.msra.mxu0 0
        %1308 = vmatprep.subr.bf16.mxu0 0
        %1309 = vmatpush2.bf16.msra.mxu0 0
        %1310 = vmatprep.subr.bf16.mxu0 0
        %1311 = vmatpush2.bf16.msra.mxu0 0
        %1312 = vmatprep.subr.bf16.mxu0 0
        %1313 = vmatpush2.bf16.msra.mxu0 0
        %1314 = vmatprep.subr.bf16.mxu0 0
        %1315 = vmatpush2.bf16.msra.mxu0 0
        %1316 = vmatprep.subr.bf16.mxu0 0
        %1317 = vmatpush2.bf16.msra.mxu0 0
        %1318 = vmatprep.subr.bf16.mxu0 0
        %1319 = vmatpush2.bf16.msra.mxu0 0
        %1320 = vmatprep.mubr.bf16.mxu0 0
        %1321 = vmatmul.mubr.bf16.gmra.mxu0 %v1277
        %v1322 = vpop.f32.mrf.mxu0
        %v1323 = vadd.f32 0.0, %v1322
        %v1324 = vpop.f32.mrf.mxu0
        %v1325 = vpop.f32.mrf.mxu0
        %v1326 = vadd.f32 0.0, %v1325
        %v1327 = vpop.f32.mrf.mxu0
        %1328 = vmatprep.mubr.bf16.mxu0 0
        %1329 = vmatmul.mubr.bf16.gmra.mxu0 %v1280
        %v1330 = vpop.f32.mrf.mxu0
        %v1331 = vadd.f32 0.0, %v1330
        %v1332 = vpop.f32.mrf.mxu0
        %v1333 = vpop.f32.mrf.mxu0
        %v1334 = vadd.f32 0.0, %v1333
        %v1335 = vpop.f32.mrf.mxu0
        %1336 = vmatprep.mubr.bf16.mxu0 0
        %1337 = vmatmul.mubr.bf16.gmra.mxu0 %v1283
        %v1338 = vpop.f32.mrf.mxu0
        %v1339 = vadd.f32 0.0, %v1338
        %v1340 = vpop.f32.mrf.mxu0
        %v1341 = vpop.f32.mrf.mxu0
        %v1342 = vadd.f32 0.0, %v1341
        %v1343 = vpop.f32.mrf.mxu0
        %1344 = vmatprep.mubr.bf16.mxu0 0
        %1345 = vmatmul.mubr.bf16.gmra.mxu0 %v1286
        %v1346 = vpop.f32.mrf.mxu0
        %v1347 = vadd.f32 0.0, %v1346
        %v1348 = vpop.f32.mrf.mxu0
        %v1349 = vpop.f32.mrf.mxu0
        %v1350 = vadd.f32 0.0, %v1349
        %v1351 = vpop.f32.mrf.mxu0
        %1352 = vdwg.mxu0
        %v1353 = vadd.f32 %v1238, %v1323
        %v1354 = vadd.f32 %v1239, %v1326
        %v1355 = vadd.f32 %v1240, %v1331
        %v1356 = vadd.f32 %v1241, %v1334
        %v1357 = vadd.f32 %v1242, %v1339
        %v1358 = vadd.f32 %v1243, %v1342
        %v1359 = vadd.f32 %v1244, %v1347
        %v1360 = vadd.f32 %v1245, %v1350
        %v1361 = vld [vmem:[%s1246 + $0x1] sm:$0xff]
        %v1362 = vld [vmem:[%s1246 + $0x11] sm:$0xff]
        %v1363 = vld [vmem:[%s1246 + $0x21] sm:$0xff]
        %v1364 = vld [vmem:[%s1246 + $0x31] sm:$0xff]
        %v1365 = vld [vmem:[%s1246 + $0x41] sm:$0xff]
        %v1366 = vld [vmem:[%s1246 + $0x51] sm:$0xff]
        %v1367 = vld [vmem:[%s1246 + $0x61] sm:$0xff]
        %v1368 = vld [vmem:[%s1246 + $0x71] sm:$0xff]
        %v1369 = vpack.c.bf16 %v1362, %v1361
        %v1370 = vpack.c.bf16 %v1364, %v1363
        %v1371 = vpack.c.bf16 %v1366, %v1365
        %v1372 = vpack.c.bf16 %v1368, %v1367
        %s1373 = scalar_lea.vmem %s1, 112
        %v1374 = vld [vmem:[%s1373] sm:$0xf]
        %v1375 = vld [vmem:[%s1373 + $0x4] sm:$0xf]
        %v1376 = vld [vmem:[%s1373 + $0x8] sm:$0xf]
        %v1377 = vld [vmem:[%s1373 + $0xc] sm:$0xf]
        %v1382 = vunpack.c.l.b16 %v1374
        %v1383 = vunpack.c.l.b16 %v1375
        %v1384 = vunpack.c.l.b16 %v1376
        %v1385 = vunpack.c.l.b16 %v1377
        %v1386 = vpack.c.b16 %v1383, %v1382
        %v1387 = vpack.c.b16 %v1385, %v1384
        %v1391 = vsel %vm540, %v1369, 0
        %v1394 = vsel %vm540, %v1370, 0
        %v1397 = vsel %vm540, %v1371, 0
        %v1400 = vsel %vm540, %v1372, 0
        %1402 = vmatprep.subr.bf16.mxu0 0
        %1403 = vmatpush1.bf16.msra.mxu0 0
        %1404 = vmatprep.subr.bf16.mxu0 0
        %1405 = vmatpush1.bf16.msra.mxu0 0
        %1406 = vmatprep.subr.bf16.mxu0 0
        %1407 = vmatpush1.bf16.msra.mxu0 0
        %1408 = vmatprep.subr.bf16.mxu0 0
        %1409 = vmatpush1.bf16.msra.mxu0 0
        %1410 = vmatprep.subr.bf16.mxu0 0
        %1411 = vmatpush1.bf16.msra.mxu0 0
        %1412 = vmatprep.subr.bf16.mxu0 0
        %1413 = vmatpush1.bf16.msra.mxu0 0
        %1414 = vmatprep.subr.bf16.mxu0 0
        %1415 = vmatpush1.bf16.msra.mxu0 %v1387
        %1416 = vmatprep.subr.bf16.mxu0 0
        %1417 = vmatpush1.bf16.msra.mxu0 %v1386
        %1418 = vmatprep.subr.bf16.mxu0 0
        %1419 = vmatpush2.bf16.msra.mxu0 0
        %1420 = vmatprep.subr.bf16.mxu0 0
        %1421 = vmatpush2.bf16.msra.mxu0 0
        %1422 = vmatprep.subr.bf16.mxu0 0
        %1423 = vmatpush2.bf16.msra.mxu0 0
        %1424 = vmatprep.subr.bf16.mxu0 0
        %1425 = vmatpush2.bf16.msra.mxu0 0
        %1426 = vmatprep.subr.bf16.mxu0 0
        %1427 = vmatpush2.bf16.msra.mxu0 0
        %1428 = vmatprep.subr.bf16.mxu0 0
        %1429 = vmatpush2.bf16.msra.mxu0 0
        %1430 = vmatprep.subr.bf16.mxu0 0
        %1431 = vmatpush2.bf16.msra.mxu0 0
        %1432 = vmatprep.subr.bf16.mxu0 0
        %1433 = vmatpush2.bf16.msra.mxu0 0
        %1434 = vmatprep.mubr.bf16.mxu0 0
        %1435 = vmatmul.mubr.bf16.gmra.mxu0 %v1391
        %v1436 = vpop.f32.mrf.mxu0
        %v1437 = vadd.f32 0.0, %v1436
        %v1438 = vpop.f32.mrf.mxu0
        %v1439 = vpop.f32.mrf.mxu0
        %v1440 = vadd.f32 0.0, %v1439
        %v1441 = vpop.f32.mrf.mxu0
        %1442 = vmatprep.mubr.bf16.mxu0 0
        %1443 = vmatmul.mubr.bf16.gmra.mxu0 %v1394
        %v1444 = vpop.f32.mrf.mxu0
        %v1445 = vadd.f32 0.0, %v1444
        %v1446 = vpop.f32.mrf.mxu0
        %v1447 = vpop.f32.mrf.mxu0
        %v1448 = vadd.f32 0.0, %v1447
        %v1449 = vpop.f32.mrf.mxu0
        %1450 = vmatprep.mubr.bf16.mxu0 0
        %1451 = vmatmul.mubr.bf16.gmra.mxu0 %v1397
        %v1452 = vpop.f32.mrf.mxu0
        %v1453 = vadd.f32 0.0, %v1452
        %v1454 = vpop.f32.mrf.mxu0
        %v1455 = vpop.f32.mrf.mxu0
        %v1456 = vadd.f32 0.0, %v1455
        %v1457 = vpop.f32.mrf.mxu0
        %1458 = vmatprep.mubr.bf16.mxu0 0
        %1459 = vmatmul.mubr.bf16.gmra.mxu0 %v1400
        %v1460 = vpop.f32.mrf.mxu0
        %v1461 = vadd.f32 0.0, %v1460
        %v1462 = vpop.f32.mrf.mxu0
        %v1463 = vpop.f32.mrf.mxu0
        %v1464 = vadd.f32 0.0, %v1463
        %v1465 = vpop.f32.mrf.mxu0
        %1466 = vdwg.mxu0
        %v1467 = vadd.f32 %v1353, %v1437
        %v1468 = vadd.f32 %v1354, %v1440
        %v1469 = vadd.f32 %v1355, %v1445
        %v1470 = vadd.f32 %v1356, %v1448
        %v1471 = vadd.f32 %v1357, %v1453
        %v1472 = vadd.f32 %v1358, %v1456
        %v1473 = vadd.f32 %v1359, %v1461
        %v1474 = vadd.f32 %v1360, %v1464
        %v1475 = vld [vmem:[%s1246 + $0x2] sm:$0xff]
        %v1476 = vld [vmem:[%s1246 + $0x12] sm:$0xff]
        %v1477 = vld [vmem:[%s1246 + $0x22] sm:$0xff]
        %v1478 = vld [vmem:[%s1246 + $0x32] sm:$0xff]
        %v1479 = vld [vmem:[%s1246 + $0x42] sm:$0xff]
        %v1480 = vld [vmem:[%s1246 + $0x52] sm:$0xff]
        %v1481 = vld [vmem:[%s1246 + $0x62] sm:$0xff]
        %v1482 = vld [vmem:[%s1246 + $0x72] sm:$0xff]
        %v1483 = vpack.c.bf16 %v1476, %v1475
        %v1484 = vpack.c.bf16 %v1478, %v1477
        %v1485 = vpack.c.bf16 %v1480, %v1479
        %v1486 = vpack.c.bf16 %v1482, %v1481
        %s1487 = scalar_lea.vmem %s1, 128
        %v1488 = vld [vmem:[%s1487] sm:$0xf]
        %v1489 = vld [vmem:[%s1487 + $0x4] sm:$0xf]
        %v1490 = vld [vmem:[%s1487 + $0x8] sm:$0xf]
        %v1491 = vld [vmem:[%s1487 + $0xc] sm:$0xf]
        %v1496 = vunpack.c.l.b16 %v1488
        %v1497 = vunpack.c.l.b16 %v1489
        %v1498 = vunpack.c.l.b16 %v1490
        %v1499 = vunpack.c.l.b16 %v1491
        %v1500 = vpack.c.b16 %v1497, %v1496
        %v1501 = vpack.c.b16 %v1499, %v1498
        %v1505 = vsel %vm540, %v1483, 0
        %v1508 = vsel %vm540, %v1484, 0
        %v1511 = vsel %vm540, %v1485, 0
        %v1514 = vsel %vm540, %v1486, 0
        %1516 = vmatprep.subr.bf16.mxu0 0
        %1517 = vmatpush1.bf16.msra.mxu0 0
        %1518 = vmatprep.subr.bf16.mxu0 0
        %1519 = vmatpush1.bf16.msra.mxu0 0
        %1520 = vmatprep.subr.bf16.mxu0 0
        %1521 = vmatpush1.bf16.msra.mxu0 0
        %1522 = vmatprep.subr.bf16.mxu0 0
        %1523 = vmatpush1.bf16.msra.mxu0 0
        %1524 = vmatprep.subr.bf16.mxu0 0
        %1525 = vmatpush1.bf16.msra.mxu0 0
        %1526 = vmatprep.subr.bf16.mxu0 0
        %1527 = vmatpush1.bf16.msra.mxu0 0
        %1528 = vmatprep.subr.bf16.mxu0 0
        %1529 = vmatpush1.bf16.msra.mxu0 %v1501
        %1530 = vmatprep.subr.bf16.mxu0 0
        %1531 = vmatpush1.bf16.msra.mxu0 %v1500
        %1532 = vmatprep.subr.bf16.mxu0 0
        %1533 = vmatpush2.bf16.msra.mxu0 0
        %1534 = vmatprep.subr.bf16.mxu0 0
        %1535 = vmatpush2.bf16.msra.mxu0 0
        %1536 = vmatprep.subr.bf16.mxu0 0
        %1537 = vmatpush2.bf16.msra.mxu0 0
        %1538 = vmatprep.subr.bf16.mxu0 0
        %1539 = vmatpush2.bf16.msra.mxu0 0
        %1540 = vmatprep.subr.bf16.mxu0 0
        %1541 = vmatpush2.bf16.msra.mxu0 0
        %1542 = vmatprep.subr.bf16.mxu0 0
        %1543 = vmatpush2.bf16.msra.mxu0 0
        %1544 = vmatprep.subr.bf16.mxu0 0
        %1545 = vmatpush2.bf16.msra.mxu0 0
        %1546 = vmatprep.subr.bf16.mxu0 0
        %1547 = vmatpush2.bf16.msra.mxu0 0
        %1548 = vmatprep.mubr.bf16.mxu0 0
        %1549 = vmatmul.mubr.bf16.gmra.mxu0 %v1505
        %v1550 = vpop.f32.mrf.mxu0
        %v1551 = vadd.f32 0.0, %v1550
        %v1552 = vpop.f32.mrf.mxu0
        %v1553 = vpop.f32.mrf.mxu0
        %v1554 = vadd.f32 0.0, %v1553
        %v1555 = vpop.f32.mrf.mxu0
        %1556 = vmatprep.mubr.bf16.mxu0 0
        %1557 = vmatmul.mubr.bf16.gmra.mxu0 %v1508
        %v1558 = vpop.f32.mrf.mxu0
        %v1559 = vadd.f32 0.0, %v1558
        %v1560 = vpop.f32.mrf.mxu0
        %v1561 = vpop.f32.mrf.mxu0
        %v1562 = vadd.f32 0.0, %v1561
        %v1563 = vpop.f32.mrf.mxu0
        %1564 = vmatprep.mubr.bf16.mxu0 0
        %1565 = vmatmul.mubr.bf16.gmra.mxu0 %v1511
        %v1566 = vpop.f32.mrf.mxu0
        %v1567 = vadd.f32 0.0, %v1566
        %v1568 = vpop.f32.mrf.mxu0
        %v1569 = vpop.f32.mrf.mxu0
        %v1570 = vadd.f32 0.0, %v1569
        %v1571 = vpop.f32.mrf.mxu0
        %1572 = vmatprep.mubr.bf16.mxu0 0
        %1573 = vmatmul.mubr.bf16.gmra.mxu0 %v1514
        %v1574 = vpop.f32.mrf.mxu0
        %v1575 = vadd.f32 0.0, %v1574
        %v1576 = vpop.f32.mrf.mxu0
        %v1577 = vpop.f32.mrf.mxu0
        %v1578 = vadd.f32 0.0, %v1577
        %v1579 = vpop.f32.mrf.mxu0
        %1580 = vdwg.mxu0
        %v1581 = vadd.f32 %v1467, %v1551
        %v1582 = vadd.f32 %v1468, %v1554
        %v1583 = vadd.f32 %v1469, %v1559
        %v1584 = vadd.f32 %v1470, %v1562
        %v1585 = vadd.f32 %v1471, %v1567
        %v1586 = vadd.f32 %v1472, %v1570
        %v1587 = vadd.f32 %v1473, %v1575
        %v1588 = vadd.f32 %v1474, %v1578
        %v1589 = vld [vmem:[%s2] sm:$0x1]
        %v1591 = vlaneseq
        %v1592 = vshrl.u32 %v1591, 7
        %v1593 = vsub.s32 0, %v1592
        %v1594 = vrot.slane %v1589, %v1593
        %v1596 = vadd.f32 %v1581, %v1594
        %v1597 = vadd.f32 %v1582, %v1594
        %v1598 = vadd.f32 %v1583, %v1594
        %v1599 = vadd.f32 %v1584, %v1594
        %v1600 = vadd.f32 %v1585, %v1594
        %v1601 = vadd.f32 %v1586, %v1594
        %v1602 = vadd.f32 %v1587, %v1594
        %v1603 = vadd.f32 %v1588, %v1594
        %v1604 = vmax.f32 %v1596, 0.0
        %v1605 = vmax.f32 %v1597, 0.0
        %v1606 = vmax.f32 %v1598, 0.0
        %v1607 = vmax.f32 %v1599, 0.0
        %v1608 = vmax.f32 %v1600, 0.0
        %v1609 = vmax.f32 %v1601, 0.0
        %v1610 = vmax.f32 %v1602, 0.0
        %v1611 = vmax.f32 %v1603, 0.0
        %1612 = vst.msk [vmem:[%s570 + $0x1] sm:$0xff] %vm540, %v1604
        %1613 = vst.msk [vmem:[%s570 + $0x11] sm:$0xff] %vm540, %v1605
        %1614 = vst.msk [vmem:[%s570 + $0x21] sm:$0xff] %vm540, %v1606
        %1615 = vst.msk [vmem:[%s570 + $0x31] sm:$0xff] %vm540, %v1607
        %1616 = vst.msk [vmem:[%s570 + $0x41] sm:$0xff] %vm540, %v1608
        %1617 = vst.msk [vmem:[%s570 + $0x51] sm:$0xff] %vm540, %v1609
        %1618 = vst.msk [vmem:[%s570 + $0x61] sm:$0xff] %vm540, %v1610
        %1619 = vst.msk [vmem:[%s570 + $0x71] sm:$0xff] %vm540, %v1611
        %v1620 = vld [vmem:[#allocation2] sm:$0xff]
        %v1621 = vld [vmem:[#allocation2 + $0x10] sm:$0xff]
        %v1622 = vld [vmem:[#allocation2 + $0x20] sm:$0xff]
        %v1623 = vld [vmem:[#allocation2 + $0x30] sm:$0xff]
        %v1624 = vld [vmem:[#allocation2 + $0x40] sm:$0xff]
        %v1625 = vld [vmem:[#allocation2 + $0x50] sm:$0xff]
        %v1626 = vld [vmem:[#allocation2 + $0x60] sm:$0xff]
        %v1627 = vld [vmem:[#allocation2 + $0x70] sm:$0xff]
        %v1628 = vpack.c.bf16 %v1621, %v1620
        %v1629 = vpack.c.bf16 %v1623, %v1622
        %v1630 = vpack.c.bf16 %v1625, %v1624
        %v1631 = vpack.c.bf16 %v1627, %v1626
        %v1632 = vld [vmem:[%s3] sm:$0xf]
        %v1633 = vld [vmem:[%s3 + $0x4] sm:$0xf]
        %v1634 = vld [vmem:[%s3 + $0x8] sm:$0xf]
        %v1635 = vld [vmem:[%s3 + $0xc] sm:$0xf]
        %v1636 = vld [vmem:[#allocation2 + $0x1] sm:$0xff]
        %v1637 = vld [vmem:[#allocation2 + $0x11] sm:$0xff]
        %v1638 = vld [vmem:[#allocation2 + $0x21] sm:$0xff]
        %v1639 = vld [vmem:[#allocation2 + $0x31] sm:$0xff]
        %v1640 = vld [vmem:[#allocation2 + $0x41] sm:$0xff]
        %v1641 = vld [vmem:[#allocation2 + $0x51] sm:$0xff]
        %v1642 = vld [vmem:[#allocation2 + $0x61] sm:$0xff]
        %v1643 = vld [vmem:[#allocation2 + $0x71] sm:$0xff]
        %v1644 = vpack.c.bf16 %v1637, %v1636
        %v1645 = vpack.c.bf16 %v1639, %v1638
        %v1646 = vpack.c.bf16 %v1641, %v1640
        %v1647 = vpack.c.bf16 %v1643, %v1642
        %s1648 = scalar_lea.vmem %s3, 16
        %v1649 = vld [vmem:[%s1648] sm:$0xf]
        %v1650 = vld [vmem:[%s1648 + $0x4] sm:$0xf]
        %v1651 = vld [vmem:[%s1648 + $0x8] sm:$0xf]
        %v1652 = vld [vmem:[%s1648 + $0xc] sm:$0xf]
        %v1657 = vunpack.c.l.b16 %v1649
        %v1658 = vunpack.c.l.b16 %v1650
        %v1659 = vunpack.c.l.b16 %v1651
        %v1660 = vunpack.c.l.b16 %v1652
        %v1661 = vpack.c.b16 %v1658, %v1657
        %v1662 = vpack.c.b16 %v1660, %v1659
        %v1666 = vsel %vm540, %v1644, 0
        %v1669 = vsel %vm540, %v1645, 0
        %v1672 = vsel %vm540, %v1646, 0
        %v1675 = vsel %vm540, %v1647, 0
        %1677 = vmatprep.subr.bf16.mxu0 0
        %1678 = vmatpush1.bf16.msra.mxu0 0
        %1679 = vmatprep.subr.bf16.mxu0 0
        %1680 = vmatpush1.bf16.msra.mxu0 0
        %1681 = vmatprep.subr.bf16.mxu0 0
        %1682 = vmatpush1.bf16.msra.mxu0 0
        %1683 = vmatprep.subr.bf16.mxu0 0
        %1684 = vmatpush1.bf16.msra.mxu0 0
        %1685 = vmatprep.subr.bf16.mxu0 0
        %1686 = vmatpush1.bf16.msra.mxu0 0
        %1687 = vmatprep.subr.bf16.mxu0 0
        %1688 = vmatpush1.bf16.msra.mxu0 0
        %1689 = vmatprep.subr.bf16.mxu0 0
        %1690 = vmatpush1.bf16.msra.mxu0 %v1662
        %1691 = vmatprep.subr.bf16.mxu0 0
        %1692 = vmatpush1.bf16.msra.mxu0 %v1661
        %1693 = vmatprep.subr.bf16.mxu0 0
        %1694 = vmatpush2.bf16.msra.mxu0 0
        %1695 = vmatprep.subr.bf16.mxu0 0
        %1696 = vmatpush2.bf16.msra.mxu0 0
        %1697 = vmatprep.subr.bf16.mxu0 0
        %1698 = vmatpush2.bf16.msra.mxu0 0
        %1699 = vmatprep.subr.bf16.mxu0 0
        %1700 = vmatpush2.bf16.msra.mxu0 0
        %1701 = vmatprep.subr.bf16.mxu0 0
        %1702 = vmatpush2.bf16.msra.mxu0 0
        %1703 = vmatprep.subr.bf16.mxu0 0
        %1704 = vmatpush2.bf16.msra.mxu0 0
        %1705 = vmatprep.subr.bf16.mxu0 0
        %1706 = vmatpush2.bf16.msra.mxu0 0
        %1707 = vmatprep.subr.bf16.mxu0 0
        %1708 = vmatpush2.bf16.msra.mxu0 0
        %1709 = vmatprep.mubr.bf16.mxu0 0
        %1710 = vmatmul.mubr.bf16.gmra.mxu0 %v1666
        %v1711 = vpop.f32.mrf.mxu0
        %v1712 = vadd.f32 0.0, %v1711
        %v1713 = vpop.f32.mrf.mxu0
        %v1714 = vpop.f32.mrf.mxu0
        %v1715 = vadd.f32 0.0, %v1714
        %v1716 = vpop.f32.mrf.mxu0
        %1717 = vmatprep.mubr.bf16.mxu0 0
        %1718 = vmatmul.mubr.bf16.gmra.mxu0 %v1669
        %v1719 = vpop.f32.mrf.mxu0
        %v1720 = vadd.f32 0.0, %v1719
        %v1721 = vpop.f32.mrf.mxu0
        %v1722 = vpop.f32.mrf.mxu0
        %v1723 = vadd.f32 0.0, %v1722
        %v1724 = vpop.f32.mrf.mxu0
        %1725 = vmatprep.mubr.bf16.mxu0 0
        %1726 = vmatmul.mubr.bf16.gmra.mxu0 %v1672
        %v1727 = vpop.f32.mrf.mxu0
        %v1728 = vadd.f32 0.0, %v1727
        %v1729 = vpop.f32.mrf.mxu0
        %v1730 = vpop.f32.mrf.mxu0
        %v1731 = vadd.f32 0.0, %v1730
        %v1732 = vpop.f32.mrf.mxu0
        %1733 = vmatprep.mubr.bf16.mxu0 0
        %1734 = vmatmul.mubr.bf16.gmra.mxu0 %v1675
        %v1735 = vpop.f32.mrf.mxu0
        %v1736 = vadd.f32 0.0, %v1735
        %v1737 = vpop.f32.mrf.mxu0
        %v1738 = vpop.f32.mrf.mxu0
        %v1739 = vadd.f32 0.0, %v1738
        %v1740 = vpop.f32.mrf.mxu0
        %1741 = vdwg.mxu0
        %v1746 = vunpack.c.l.b16 %v1632
        %v1747 = vunpack.c.l.b16 %v1633
        %v1748 = vunpack.c.l.b16 %v1634
        %v1749 = vunpack.c.l.b16 %v1635
        %v1750 = vpack.c.b16 %v1747, %v1746
        %v1751 = vpack.c.b16 %v1749, %v1748
        %v1755 = vsel %vm540, %v1628, 0
        %v1758 = vsel %vm540, %v1629, 0
        %v1761 = vsel %vm540, %v1630, 0
        %v1764 = vsel %vm540, %v1631, 0
        %1766 = vmatprep.subr.bf16.mxu0 0
        %1767 = vmatpush1.bf16.msra.mxu0 0
        %1768 = vmatprep.subr.bf16.mxu0 0
        %1769 = vmatpush1.bf16.msra.mxu0 0
        %1770 = vmatprep.subr.bf16.mxu0 0
        %1771 = vmatpush1.bf16.msra.mxu0 0
        %1772 = vmatprep.subr.bf16.mxu0 0
        %1773 = vmatpush1.bf16.msra.mxu0 0
        %1774 = vmatprep.subr.bf16.mxu0 0
        %1775 = vmatpush1.bf16.msra.mxu0 0
        %1776 = vmatprep.subr.bf16.mxu0 0
        %1777 = vmatpush1.bf16.msra.mxu0 0
        %1778 = vmatprep.subr.bf16.mxu0 0
        %1779 = vmatpush1.bf16.msra.mxu0 %v1751
        %1780 = vmatprep.subr.bf16.mxu0 0
        %1781 = vmatpush1.bf16.msra.mxu0 %v1750
        %1782 = vmatprep.subr.bf16.mxu0 0
        %1783 = vmatpush2.bf16.msra.mxu0 0
        %1784 = vmatprep.subr.bf16.mxu0 0
        %1785 = vmatpush2.bf16.msra.mxu0 0
        %1786 = vmatprep.subr.bf16.mxu0 0
        %1787 = vmatpush2.bf16.msra.mxu0 0
        %1788 = vmatprep.subr.bf16.mxu0 0
        %1789 = vmatpush2.bf16.msra.mxu0 0
        %1790 = vmatprep.subr.bf16.mxu0 0
        %1791 = vmatpush2.bf16.msra.mxu0 0
        %1792 = vmatprep.subr.bf16.mxu0 0
        %1793 = vmatpush2.bf16.msra.mxu0 0
        %1794 = vmatprep.subr.bf16.mxu0 0
        %1795 = vmatpush2.bf16.msra.mxu0 0
        %1796 = vmatprep.subr.bf16.mxu0 0
        %1797 = vmatpush2.bf16.msra.mxu0 0
        %1798 = vmatprep.mubr.bf16.mxu0 0
        %1799 = vmatmul.mubr.bf16.gmra.mxu0 %v1755
        %v1800 = vpop.f32.mrf.mxu0
        %v1801 = vadd.f32 %v1712, %v1800
        %v1802 = vpop.f32.mrf.mxu0
        %v1803 = vpop.f32.mrf.mxu0
        %v1804 = vadd.f32 %v1715, %v1803
        %v1805 = vpop.f32.mrf.mxu0
        %1806 = vmatprep.mubr.bf16.mxu0 0
        %1807 = vmatmul.mubr.bf16.gmra.mxu0 %v1758
        %v1808 = vpop.f32.mrf.mxu0
        %v1809 = vadd.f32 %v1720, %v1808
        %v1810 = vpop.f32.mrf.mxu0
        %v1811 = vpop.f32.mrf.mxu0
        %v1812 = vadd.f32 %v1723, %v1811
        %v1813 = vpop.f32.mrf.mxu0
        %1814 = vmatprep.mubr.bf16.mxu0 0
        %1815 = vmatmul.mubr.bf16.gmra.mxu0 %v1761
        %v1816 = vpop.f32.mrf.mxu0
        %v1817 = vadd.f32 %v1728, %v1816
        %v1818 = vpop.f32.mrf.mxu0
        %v1819 = vpop.f32.mrf.mxu0
        %v1820 = vadd.f32 %v1731, %v1819
        %v1821 = vpop.f32.mrf.mxu0
        %1822 = vmatprep.mubr.bf16.mxu0 0
        %1823 = vmatmul.mubr.bf16.gmra.mxu0 %v1764
        %v1824 = vpop.f32.mrf.mxu0
        %v1825 = vadd.f32 %v1736, %v1824
        %v1826 = vpop.f32.mrf.mxu0
        %v1827 = vpop.f32.mrf.mxu0
        %v1828 = vadd.f32 %v1739, %v1827
        %v1829 = vpop.f32.mrf.mxu0
        %1830 = vdwg.mxu0
        %v1831 = vld [vmem:[#allocation2 + $0x2] sm:$0xff]
        %v1832 = vld [vmem:[#allocation2 + $0x12] sm:$0xff]
        %v1833 = vld [vmem:[#allocation2 + $0x22] sm:$0xff]
        %v1834 = vld [vmem:[#allocation2 + $0x32] sm:$0xff]
        %v1835 = vld [vmem:[#allocation2 + $0x42] sm:$0xff]
        %v1836 = vld [vmem:[#allocation2 + $0x52] sm:$0xff]
        %v1837 = vld [vmem:[#allocation2 + $0x62] sm:$0xff]
        %v1838 = vld [vmem:[#allocation2 + $0x72] sm:$0xff]
        %v1839 = vpack.c.bf16 %v1832, %v1831
        %v1840 = vpack.c.bf16 %v1834, %v1833
        %v1841 = vpack.c.bf16 %v1836, %v1835
        %v1842 = vpack.c.bf16 %v1838, %v1837
        %s1843 = scalar_lea.vmem %s3, 32
        %v1844 = vld [vmem:[%s1843] sm:$0xf]
        %v1845 = vld [vmem:[%s1843 + $0x4] sm:$0xf]
        %v1846 = vld [vmem:[%s1843 + $0x8] sm:$0xf]
        %v1847 = vld [vmem:[%s1843 + $0xc] sm:$0xf]
        %v1852 = vunpack.c.l.b16 %v1844
        %v1853 = vunpack.c.l.b16 %v1845
        %v1854 = vunpack.c.l.b16 %v1846
        %v1855 = vunpack.c.l.b16 %v1847
        %v1856 = vpack.c.b16 %v1853, %v1852
        %v1857 = vpack.c.b16 %v1855, %v1854
        %v1861 = vsel %vm540, %v1839, 0
        %v1864 = vsel %vm540, %v1840, 0
        %v1867 = vsel %vm540, %v1841, 0
        %v1870 = vsel %vm540, %v1842, 0
        %1872 = vmatprep.subr.bf16.mxu0 0
        %1873 = vmatpush1.bf16.msra.mxu0 0
        %1874 = vmatprep.subr.bf16.mxu0 0
        %1875 = vmatpush1.bf16.msra.mxu0 0
        %1876 = vmatprep.subr.bf16.mxu0 0
        %1877 = vmatpush1.bf16.msra.mxu0 0
        %1878 = vmatprep.subr.bf16.mxu0 0
        %1879 = vmatpush1.bf16.msra.mxu0 0
        %1880 = vmatprep.subr.bf16.mxu0 0
        %1881 = vmatpush1.bf16.msra.mxu0 0
        %1882 = vmatprep.subr.bf16.mxu0 0
        %1883 = vmatpush1.bf16.msra.mxu0 0
        %1884 = vmatprep.subr.bf16.mxu0 0
        %1885 = vmatpush1.bf16.msra.mxu0 %v1857
        %1886 = vmatprep.subr.bf16.mxu0 0
        %1887 = vmatpush1.bf16.msra.mxu0 %v1856
        %1888 = vmatprep.subr.bf16.mxu0 0
        %1889 = vmatpush2.bf16.msra.mxu0 0
        %1890 = vmatprep.subr.bf16.mxu0 0
        %1891 = vmatpush2.bf16.msra.mxu0 0
        %1892 = vmatprep.subr.bf16.mxu0 0
        %1893 = vmatpush2.bf16.msra.mxu0 0
        %1894 = vmatprep.subr.bf16.mxu0 0
        %1895 = vmatpush2.bf16.msra.mxu0 0
        %1896 = vmatprep.subr.bf16.mxu0 0
        %1897 = vmatpush2.bf16.msra.mxu0 0
        %1898 = vmatprep.subr.bf16.mxu0 0
        %1899 = vmatpush2.bf16.msra.mxu0 0
        %1900 = vmatprep.subr.bf16.mxu0 0
        %1901 = vmatpush2.bf16.msra.mxu0 0
        %1902 = vmatprep.subr.bf16.mxu0 0
        %1903 = vmatpush2.bf16.msra.mxu0 0
        %1904 = vmatprep.mubr.bf16.mxu0 0
        %1905 = vmatmul.mubr.bf16.gmra.mxu0 %v1861
        %v1906 = vpop.f32.mrf.mxu0
        %v1907 = vadd.f32 0.0, %v1906
        %v1908 = vpop.f32.mrf.mxu0
        %v1909 = vpop.f32.mrf.mxu0
        %v1910 = vadd.f32 0.0, %v1909
        %v1911 = vpop.f32.mrf.mxu0
        %1912 = vmatprep.mubr.bf16.mxu0 0
        %1913 = vmatmul.mubr.bf16.gmra.mxu0 %v1864
        %v1914 = vpop.f32.mrf.mxu0
        %v1915 = vadd.f32 0.0, %v1914
        %v1916 = vpop.f32.mrf.mxu0
        %v1917 = vpop.f32.mrf.mxu0
        %v1918 = vadd.f32 0.0, %v1917
        %v1919 = vpop.f32.mrf.mxu0
        %1920 = vmatprep.mubr.bf16.mxu0 0
        %1921 = vmatmul.mubr.bf16.gmra.mxu0 %v1867
        %v1922 = vpop.f32.mrf.mxu0
        %v1923 = vadd.f32 0.0, %v1922
        %v1924 = vpop.f32.mrf.mxu0
        %v1925 = vpop.f32.mrf.mxu0
        %v1926 = vadd.f32 0.0, %v1925
        %v1927 = vpop.f32.mrf.mxu0
        %1928 = vmatprep.mubr.bf16.mxu0 0
        %1929 = vmatmul.mubr.bf16.gmra.mxu0 %v1870
        %v1930 = vpop.f32.mrf.mxu0
        %v1931 = vadd.f32 0.0, %v1930
        %v1932 = vpop.f32.mrf.mxu0
        %v1933 = vpop.f32.mrf.mxu0
        %v1934 = vadd.f32 0.0, %v1933
        %v1935 = vpop.f32.mrf.mxu0
        %1936 = vdwg.mxu0
        %v1937 = vadd.f32 %v1801, %v1907
        %v1938 = vadd.f32 %v1804, %v1910
        %v1939 = vadd.f32 %v1809, %v1915
        %v1940 = vadd.f32 %v1812, %v1918
        %v1941 = vadd.f32 %v1817, %v1923
        %v1942 = vadd.f32 %v1820, %v1926
        %v1943 = vadd.f32 %v1825, %v1931
        %v1944 = vadd.f32 %v1828, %v1934
        %v1945 = vld [vmem:[%s570] sm:$0xff]
        %v1946 = vld [vmem:[%s570 + $0x10] sm:$0xff]
        %v1947 = vld [vmem:[%s570 + $0x20] sm:$0xff]
        %v1948 = vld [vmem:[%s570 + $0x30] sm:$0xff]
        %v1949 = vld [vmem:[%s570 + $0x40] sm:$0xff]
        %v1950 = vld [vmem:[%s570 + $0x50] sm:$0xff]
        %v1951 = vld [vmem:[%s570 + $0x60] sm:$0xff]
        %v1952 = vld [vmem:[%s570 + $0x70] sm:$0xff]
        %v1953 = vpack.c.bf16 %v1946, %v1945
        %v1954 = vpack.c.bf16 %v1948, %v1947
        %v1955 = vpack.c.bf16 %v1950, %v1949
        %v1956 = vpack.c.bf16 %v1952, %v1951
        %s1957 = scalar_lea.vmem %s3, 48
        %v1958 = vld [vmem:[%s1957] sm:$0xf]
        %v1959 = vld [vmem:[%s1957 + $0x4] sm:$0xf]
        %v1960 = vld [vmem:[%s1957 + $0x8] sm:$0xf]
        %v1961 = vld [vmem:[%s1957 + $0xc] sm:$0xf]
        %v1966 = vunpack.c.l.b16 %v1958
        %v1967 = vunpack.c.l.b16 %v1959
        %v1968 = vunpack.c.l.b16 %v1960
        %v1969 = vunpack.c.l.b16 %v1961
        %v1970 = vpack.c.b16 %v1967, %v1966
        %v1971 = vpack.c.b16 %v1969, %v1968
        %v1975 = vsel %vm540, %v1953, 0
        %v1978 = vsel %vm540, %v1954, 0
        %v1981 = vsel %vm540, %v1955, 0
        %v1984 = vsel %vm540, %v1956, 0
        %1986 = vmatprep.subr.bf16.mxu0 0
        %1987 = vmatpush1.bf16.msra.mxu0 0
        %1988 = vmatprep.subr.bf16.mxu0 0
        %1989 = vmatpush1.bf16.msra.mxu0 0
        %1990 = vmatprep.subr.bf16.mxu0 0
        %1991 = vmatpush1.bf16.msra.mxu0 0
        %1992 = vmatprep.subr.bf16.mxu0 0
        %1993 = vmatpush1.bf16.msra.mxu0 0
        %1994 = vmatprep.subr.bf16.mxu0 0
        %1995 = vmatpush1.bf16.msra.mxu0 0
        %1996 = vmatprep.subr.bf16.mxu0 0
        %1997 = vmatpush1.bf16.msra.mxu0 0
        %1998 = vmatprep.subr.bf16.mxu0 0
        %1999 = vmatpush1.bf16.msra.mxu0 %v1971
        %2000 = vmatprep.subr.bf16.mxu0 0
        %2001 = vmatpush1.bf16.msra.mxu0 %v1970
        %2002 = vmatprep.subr.bf16.mxu0 0
        %2003 = vmatpush2.bf16.msra.mxu0 0
        %2004 = vmatprep.subr.bf16.mxu0 0
        %2005 = vmatpush2.bf16.msra.mxu0 0
        %2006 = vmatprep.subr.bf16.mxu0 0
        %2007 = vmatpush2.bf16.msra.mxu0 0
        %2008 = vmatprep.subr.bf16.mxu0 0
        %2009 = vmatpush2.bf16.msra.mxu0 0
        %2010 = vmatprep.subr.bf16.mxu0 0
        %2011 = vmatpush2.bf16.msra.mxu0 0
        %2012 = vmatprep.subr.bf16.mxu0 0
        %2013 = vmatpush2.bf16.msra.mxu0 0
        %2014 = vmatprep.subr.bf16.mxu0 0
        %2015 = vmatpush2.bf16.msra.mxu0 0
        %2016 = vmatprep.subr.bf16.mxu0 0
        %2017 = vmatpush2.bf16.msra.mxu0 0
        %2018 = vmatprep.mubr.bf16.mxu0 0
        %2019 = vmatmul.mubr.bf16.gmra.mxu0 %v1975
        %v2020 = vpop.f32.mrf.mxu0
        %v2021 = vadd.f32 0.0, %v2020
        %v2022 = vpop.f32.mrf.mxu0
        %v2023 = vpop.f32.mrf.mxu0
        %v2024 = vadd.f32 0.0, %v2023
        %v2025 = vpop.f32.mrf.mxu0
        %2026 = vmatprep.mubr.bf16.mxu0 0
        %2027 = vmatmul.mubr.bf16.gmra.mxu0 %v1978
        %v2028 = vpop.f32.mrf.mxu0
        %v2029 = vadd.f32 0.0, %v2028
        %v2030 = vpop.f32.mrf.mxu0
        %v2031 = vpop.f32.mrf.mxu0
        %v2032 = vadd.f32 0.0, %v2031
        %v2033 = vpop.f32.mrf.mxu0
        %2034 = vmatprep.mubr.bf16.mxu0 0
        %2035 = vmatmul.mubr.bf16.gmra.mxu0 %v1981
        %v2036 = vpop.f32.mrf.mxu0
        %v2037 = vadd.f32 0.0, %v2036
        %v2038 = vpop.f32.mrf.mxu0
        %v2039 = vpop.f32.mrf.mxu0
        %v2040 = vadd.f32 0.0, %v2039
        %v2041 = vpop.f32.mrf.mxu0
        %2042 = vmatprep.mubr.bf16.mxu0 0
        %2043 = vmatmul.mubr.bf16.gmra.mxu0 %v1984
        %v2044 = vpop.f32.mrf.mxu0
        %v2045 = vadd.f32 0.0, %v2044
        %v2046 = vpop.f32.mrf.mxu0
        %v2047 = vpop.f32.mrf.mxu0
        %v2048 = vadd.f32 0.0, %v2047
        %v2049 = vpop.f32.mrf.mxu0
        %2050 = vdwg.mxu0
        %v2051 = vadd.f32 %v1937, %v2021
        %v2052 = vadd.f32 %v1938, %v2024
        %v2053 = vadd.f32 %v1939, %v2029
        %v2054 = vadd.f32 %v1940, %v2032
        %v2055 = vadd.f32 %v1941, %v2037
        %v2056 = vadd.f32 %v1942, %v2040
        %v2057 = vadd.f32 %v1943, %v2045
        %v2058 = vadd.f32 %v1944, %v2048
        %v2059 = vld [vmem:[%s570 + $0x1] sm:$0xff]
        %v2060 = vld [vmem:[%s570 + $0x11] sm:$0xff]
        %v2061 = vld [vmem:[%s570 + $0x21] sm:$0xff]
        %v2062 = vld [vmem:[%s570 + $0x31] sm:$0xff]
        %v2063 = vld [vmem:[%s570 + $0x41] sm:$0xff]
        %v2064 = vld [vmem:[%s570 + $0x51] sm:$0xff]
        %v2065 = vld [vmem:[%s570 + $0x61] sm:$0xff]
        %v2066 = vld [vmem:[%s570 + $0x71] sm:$0xff]
        %v2067 = vpack.c.bf16 %v2060, %v2059
        %v2068 = vpack.c.bf16 %v2062, %v2061
        %v2069 = vpack.c.bf16 %v2064, %v2063
        %v2070 = vpack.c.bf16 %v2066, %v2065
        %s2071 = scalar_lea.vmem %s3, 64
        %v2072 = vld [vmem:[%s2071] sm:$0xf]
        %v2073 = vld [vmem:[%s2071 + $0x4] sm:$0xf]
        %v2074 = vld [vmem:[%s2071 + $0x8] sm:$0xf]
        %v2075 = vld [vmem:[%s2071 + $0xc] sm:$0xf]
        %v2080 = vunpack.c.l.b16 %v2072
        %v2081 = vunpack.c.l.b16 %v2073
        %v2082 = vunpack.c.l.b16 %v2074
        %v2083 = vunpack.c.l.b16 %v2075
        %v2084 = vpack.c.b16 %v2081, %v2080
        %v2085 = vpack.c.b16 %v2083, %v2082
        %v2089 = vsel %vm540, %v2067, 0
        %v2092 = vsel %vm540, %v2068, 0
        %v2095 = vsel %vm540, %v2069, 0
        %v2098 = vsel %vm540, %v2070, 0
        %2100 = vmatprep.subr.bf16.mxu0 0
        %2101 = vmatpush1.bf16.msra.mxu0 0
        %2102 = vmatprep.subr.bf16.mxu0 0
        %2103 = vmatpush1.bf16.msra.mxu0 0
        %2104 = vmatprep.subr.bf16.mxu0 0
        %2105 = vmatpush1.bf16.msra.mxu0 0
        %2106 = vmatprep.subr.bf16.mxu0 0
        %2107 = vmatpush1.bf16.msra.mxu0 0
        %2108 = vmatprep.subr.bf16.mxu0 0
        %2109 = vmatpush1.bf16.msra.mxu0 0
        %2110 = vmatprep.subr.bf16.mxu0 0
        %2111 = vmatpush1.bf16.msra.mxu0 0
        %2112 = vmatprep.subr.bf16.mxu0 0
        %2113 = vmatpush1.bf16.msra.mxu0 %v2085
        %2114 = vmatprep.subr.bf16.mxu0 0
        %2115 = vmatpush1.bf16.msra.mxu0 %v2084
        %2116 = vmatprep.subr.bf16.mxu0 0
        %2117 = vmatpush2.bf16.msra.mxu0 0
        %2118 = vmatprep.subr.bf16.mxu0 0
        %2119 = vmatpush2.bf16.msra.mxu0 0
        %2120 = vmatprep.subr.bf16.mxu0 0
        %2121 = vmatpush2.bf16.msra.mxu0 0
        %2122 = vmatprep.subr.bf16.mxu0 0
        %2123 = vmatpush2.bf16.msra.mxu0 0
        %2124 = vmatprep.subr.bf16.mxu0 0
        %2125 = vmatpush2.bf16.msra.mxu0 0
        %2126 = vmatprep.subr.bf16.mxu0 0
        %2127 = vmatpush2.bf16.msra.mxu0 0
        %2128 = vmatprep.subr.bf16.mxu0 0
        %2129 = vmatpush2.bf16.msra.mxu0 0
        %2130 = vmatprep.subr.bf16.mxu0 0
        %2131 = vmatpush2.bf16.msra.mxu0 0
        %2132 = vmatprep.mubr.bf16.mxu0 0
        %2133 = vmatmul.mubr.bf16.gmra.mxu0 %v2089
        %v2134 = vpop.f32.mrf.mxu0
        %v2135 = vadd.f32 0.0, %v2134
        %v2136 = vpop.f32.mrf.mxu0
        %v2137 = vpop.f32.mrf.mxu0
        %v2138 = vadd.f32 0.0, %v2137
        %v2139 = vpop.f32.mrf.mxu0
        %2140 = vmatprep.mubr.bf16.mxu0 0
        %2141 = vmatmul.mubr.bf16.gmra.mxu0 %v2092
        %v2142 = vpop.f32.mrf.mxu0
        %v2143 = vadd.f32 0.0, %v2142
        %v2144 = vpop.f32.mrf.mxu0
        %v2145 = vpop.f32.mrf.mxu0
        %v2146 = vadd.f32 0.0, %v2145
        %v2147 = vpop.f32.mrf.mxu0
        %2148 = vmatprep.mubr.bf16.mxu0 0
        %2149 = vmatmul.mubr.bf16.gmra.mxu0 %v2095
        %v2150 = vpop.f32.mrf.mxu0
        %v2151 = vadd.f32 0.0, %v2150
        %v2152 = vpop.f32.mrf.mxu0
        %v2153 = vpop.f32.mrf.mxu0
        %v2154 = vadd.f32 0.0, %v2153
        %v2155 = vpop.f32.mrf.mxu0
        %2156 = vmatprep.mubr.bf16.mxu0 0
        %2157 = vmatmul.mubr.bf16.gmra.mxu0 %v2098
        %v2158 = vpop.f32.mrf.mxu0
        %v2159 = vadd.f32 0.0, %v2158
        %v2160 = vpop.f32.mrf.mxu0
        %v2161 = vpop.f32.mrf.mxu0
        %v2162 = vadd.f32 0.0, %v2161
        %v2163 = vpop.f32.mrf.mxu0
        %2164 = vdwg.mxu0
        %v2165 = vadd.f32 %v2051, %v2135
        %v2166 = vadd.f32 %v2052, %v2138
        %v2167 = vadd.f32 %v2053, %v2143
        %v2168 = vadd.f32 %v2054, %v2146
        %v2169 = vadd.f32 %v2055, %v2151
        %v2170 = vadd.f32 %v2056, %v2154
        %v2171 = vadd.f32 %v2057, %v2159
        %v2172 = vadd.f32 %v2058, %v2162
        %v2173 = vld [vmem:[%s570 + $0x2] sm:$0xff]
        %v2174 = vld [vmem:[%s570 + $0x12] sm:$0xff]
        %v2175 = vld [vmem:[%s570 + $0x22] sm:$0xff]
        %v2176 = vld [vmem:[%s570 + $0x32] sm:$0xff]
        %v2177 = vld [vmem:[%s570 + $0x42] sm:$0xff]
        %v2178 = vld [vmem:[%s570 + $0x52] sm:$0xff]
        %v2179 = vld [vmem:[%s570 + $0x62] sm:$0xff]
        %v2180 = vld [vmem:[%s570 + $0x72] sm:$0xff]
        %v2181 = vpack.c.bf16 %v2174, %v2173
        %v2182 = vpack.c.bf16 %v2176, %v2175
        %v2183 = vpack.c.bf16 %v2178, %v2177
        %v2184 = vpack.c.bf16 %v2180, %v2179
        %s2185 = scalar_lea.vmem %s3, 80
        %v2186 = vld [vmem:[%s2185] sm:$0xf]
        %v2187 = vld [vmem:[%s2185 + $0x4] sm:$0xf]
        %v2188 = vld [vmem:[%s2185 + $0x8] sm:$0xf]
        %v2189 = vld [vmem:[%s2185 + $0xc] sm:$0xf]
        %v2194 = vunpack.c.l.b16 %v2186
        %v2195 = vunpack.c.l.b16 %v2187
        %v2196 = vunpack.c.l.b16 %v2188
        %v2197 = vunpack.c.l.b16 %v2189
        %v2198 = vpack.c.b16 %v2195, %v2194
        %v2199 = vpack.c.b16 %v2197, %v2196
        %v2203 = vsel %vm540, %v2181, 0
        %v2206 = vsel %vm540, %v2182, 0
        %v2209 = vsel %vm540, %v2183, 0
        %v2212 = vsel %vm540, %v2184, 0
        %2214 = vmatprep.subr.bf16.mxu0 0
        %2215 = vmatpush1.bf16.msra.mxu0 0
        %2216 = vmatprep.subr.bf16.mxu0 0
        %2217 = vmatpush1.bf16.msra.mxu0 0
        %2218 = vmatprep.subr.bf16.mxu0 0
        %2219 = vmatpush1.bf16.msra.mxu0 0
        %2220 = vmatprep.subr.bf16.mxu0 0
        %2221 = vmatpush1.bf16.msra.mxu0 0
        %2222 = vmatprep.subr.bf16.mxu0 0
        %2223 = vmatpush1.bf16.msra.mxu0 0
        %2224 = vmatprep.subr.bf16.mxu0 0
        %2225 = vmatpush1.bf16.msra.mxu0 0
        %2226 = vmatprep.subr.bf16.mxu0 0
        %2227 = vmatpush1.bf16.msra.mxu0 %v2199
        %2228 = vmatprep.subr.bf16.mxu0 0
        %2229 = vmatpush1.bf16.msra.mxu0 %v2198
        %2230 = vmatprep.subr.bf16.mxu0 0
        %2231 = vmatpush2.bf16.msra.mxu0 0
        %2232 = vmatprep.subr.bf16.mxu0 0
        %2233 = vmatpush2.bf16.msra.mxu0 0
        %2234 = vmatprep.subr.bf16.mxu0 0
        %2235 = vmatpush2.bf16.msra.mxu0 0
        %2236 = vmatprep.subr.bf16.mxu0 0
        %2237 = vmatpush2.bf16.msra.mxu0 0
        %2238 = vmatprep.subr.bf16.mxu0 0
        %2239 = vmatpush2.bf16.msra.mxu0 0
        %2240 = vmatprep.subr.bf16.mxu0 0
        %2241 = vmatpush2.bf16.msra.mxu0 0
        %2242 = vmatprep.subr.bf16.mxu0 0
        %2243 = vmatpush2.bf16.msra.mxu0 0
        %2244 = vmatprep.subr.bf16.mxu0 0
        %2245 = vmatpush2.bf16.msra.mxu0 0
        %2246 = vmatprep.mubr.bf16.mxu0 0
        %2247 = vmatmul.mubr.bf16.gmra.mxu0 %v2203
        %v2248 = vpop.f32.mrf.mxu0
        %v2249 = vadd.f32 0.0, %v2248
        %v2250 = vpop.f32.mrf.mxu0
        %v2251 = vpop.f32.mrf.mxu0
        %v2252 = vadd.f32 0.0, %v2251
        %v2253 = vpop.f32.mrf.mxu0
        %2254 = vmatprep.mubr.bf16.mxu0 0
        %2255 = vmatmul.mubr.bf16.gmra.mxu0 %v2206
        %v2256 = vpop.f32.mrf.mxu0
        %v2257 = vadd.f32 0.0, %v2256
        %v2258 = vpop.f32.mrf.mxu0
        %v2259 = vpop.f32.mrf.mxu0
        %v2260 = vadd.f32 0.0, %v2259
        %v2261 = vpop.f32.mrf.mxu0
        %2262 = vmatprep.mubr.bf16.mxu0 0
        %2263 = vmatmul.mubr.bf16.gmra.mxu0 %v2209
        %v2264 = vpop.f32.mrf.mxu0
        %v2265 = vadd.f32 0.0, %v2264
        %v2266 = vpop.f32.mrf.mxu0
        %v2267 = vpop.f32.mrf.mxu0
        %v2268 = vadd.f32 0.0, %v2267
        %v2269 = vpop.f32.mrf.mxu0
        %2270 = vmatprep.mubr.bf16.mxu0 0
        %2271 = vmatmul.mubr.bf16.gmra.mxu0 %v2212
        %v2272 = vpop.f32.mrf.mxu0
        %v2273 = vadd.f32 0.0, %v2272
        %v2274 = vpop.f32.mrf.mxu0
        %v2275 = vpop.f32.mrf.mxu0
        %v2276 = vadd.f32 0.0, %v2275
        %v2277 = vpop.f32.mrf.mxu0
        %2278 = vdwg.mxu0
        %v2279 = vadd.f32 %v2165, %v2249
        %v2280 = vadd.f32 %v2166, %v2252
        %v2281 = vadd.f32 %v2167, %v2257
        %v2282 = vadd.f32 %v2168, %v2260
        %v2283 = vadd.f32 %v2169, %v2265
        %v2284 = vadd.f32 %v2170, %v2268
        %v2285 = vadd.f32 %v2171, %v2273
        %v2286 = vadd.f32 %v2172, %v2276
        %v2287 = vld [vmem:[%s1246] sm:$0xff]
        %v2288 = vld [vmem:[%s1246 + $0x10] sm:$0xff]
        %v2289 = vld [vmem:[%s1246 + $0x20] sm:$0xff]
        %v2290 = vld [vmem:[%s1246 + $0x30] sm:$0xff]
        %v2291 = vld [vmem:[%s1246 + $0x40] sm:$0xff]
        %v2292 = vld [vmem:[%s1246 + $0x50] sm:$0xff]
        %v2293 = vld [vmem:[%s1246 + $0x60] sm:$0xff]
        %v2294 = vld [vmem:[%s1246 + $0x70] sm:$0xff]
        %v2295 = vpack.c.bf16 %v2288, %v2287
        %v2296 = vpack.c.bf16 %v2290, %v2289
        %v2297 = vpack.c.bf16 %v2292, %v2291
        %v2298 = vpack.c.bf16 %v2294, %v2293
        %s2299 = scalar_lea.vmem %s3, 96
        %v2300 = vld [vmem:[%s2299] sm:$0xf]
        %v2301 = vld [vmem:[%s2299 + $0x4] sm:$0xf]
        %v2302 = vld [vmem:[%s2299 + $0x8] sm:$0xf]
        %v2303 = vld [vmem:[%s2299 + $0xc] sm:$0xf]
        %v2308 = vunpack.c.l.b16 %v2300
        %v2309 = vunpack.c.l.b16 %v2301
        %v2310 = vunpack.c.l.b16 %v2302
        %v2311 = vunpack.c.l.b16 %v2303
        %v2312 = vpack.c.b16 %v2309, %v2308
        %v2313 = vpack.c.b16 %v2311, %v2310
        %v2317 = vsel %vm540, %v2295, 0
        %v2320 = vsel %vm540, %v2296, 0
        %v2323 = vsel %vm540, %v2297, 0
        %v2326 = vsel %vm540, %v2298, 0
        %2328 = vmatprep.subr.bf16.mxu0 0
        %2329 = vmatpush1.bf16.msra.mxu0 0
        %2330 = vmatprep.subr.bf16.mxu0 0
        %2331 = vmatpush1.bf16.msra.mxu0 0
        %2332 = vmatprep.subr.bf16.mxu0 0
        %2333 = vmatpush1.bf16.msra.mxu0 0
        %2334 = vmatprep.subr.bf16.mxu0 0
        %2335 = vmatpush1.bf16.msra.mxu0 0
        %2336 = vmatprep.subr.bf16.mxu0 0
        %2337 = vmatpush1.bf16.msra.mxu0 0
        %2338 = vmatprep.subr.bf16.mxu0 0
        %2339 = vmatpush1.bf16.msra.mxu0 0
        %2340 = vmatprep.subr.bf16.mxu0 0
        %2341 = vmatpush1.bf16.msra.mxu0 %v2313
        %2342 = vmatprep.subr.bf16.mxu0 0
        %2343 = vmatpush1.bf16.msra.mxu0 %v2312
        %2344 = vmatprep.subr.bf16.mxu0 0
        %2345 = vmatpush2.bf16.msra.mxu0 0
        %2346 = vmatprep.subr.bf16.mxu0 0
        %2347 = vmatpush2.bf16.msra.mxu0 0
        %2348 = vmatprep.subr.bf16.mxu0 0
        %2349 = vmatpush2.bf16.msra.mxu0 0
        %2350 = vmatprep.subr.bf16.mxu0 0
        %2351 = vmatpush2.bf16.msra.mxu0 0
        %2352 = vmatprep.subr.bf16.mxu0 0
        %2353 = vmatpush2.bf16.msra.mxu0 0
        %2354 = vmatprep.subr.bf16.mxu0 0
        %2355 = vmatpush2.bf16.msra.mxu0 0
        %2356 = vmatprep.subr.bf16.mxu0 0
        %2357 = vmatpush2.bf16.msra.mxu0 0
        %2358 = vmatprep.subr.bf16.mxu0 0
        %2359 = vmatpush2.bf16.msra.mxu0 0
        %2360 = vmatprep.mubr.bf16.mxu0 0
        %2361 = vmatmul.mubr.bf16.gmra.mxu0 %v2317
        %v2362 = vpop.f32.mrf.mxu0
        %v2363 = vadd.f32 0.0, %v2362
        %v2364 = vpop.f32.mrf.mxu0
        %v2365 = vpop.f32.mrf.mxu0
        %v2366 = vadd.f32 0.0, %v2365
        %v2367 = vpop.f32.mrf.mxu0
        %2368 = vmatprep.mubr.bf16.mxu0 0
        %2369 = vmatmul.mubr.bf16.gmra.mxu0 %v2320
        %v2370 = vpop.f32.mrf.mxu0
        %v2371 = vadd.f32 0.0, %v2370
        %v2372 = vpop.f32.mrf.mxu0
        %v2373 = vpop.f32.mrf.mxu0
        %v2374 = vadd.f32 0.0, %v2373
        %v2375 = vpop.f32.mrf.mxu0
        %2376 = vmatprep.mubr.bf16.mxu0 0
        %2377 = vmatmul.mubr.bf16.gmra.mxu0 %v2323
        %v2378 = vpop.f32.mrf.mxu0
        %v2379 = vadd.f32 0.0, %v2378
        %v2380 = vpop.f32.mrf.mxu0
        %v2381 = vpop.f32.mrf.mxu0
        %v2382 = vadd.f32 0.0, %v2381
        %v2383 = vpop.f32.mrf.mxu0
        %2384 = vmatprep.mubr.bf16.mxu0 0
        %2385 = vmatmul.mubr.bf16.gmra.mxu0 %v2326
        %v2386 = vpop.f32.mrf.mxu0
        %v2387 = vadd.f32 0.0, %v2386
        %v2388 = vpop.f32.mrf.mxu0
        %v2389 = vpop.f32.mrf.mxu0
        %v2390 = vadd.f32 0.0, %v2389
        %v2391 = vpop.f32.mrf.mxu0
        %2392 = vdwg.mxu0
        %v2393 = vadd.f32 %v2279, %v2363
        %v2394 = vadd.f32 %v2280, %v2366
        %v2395 = vadd.f32 %v2281, %v2371
        %v2396 = vadd.f32 %v2282, %v2374
        %v2397 = vadd.f32 %v2283, %v2379
        %v2398 = vadd.f32 %v2284, %v2382
        %v2399 = vadd.f32 %v2285, %v2387
        %v2400 = vadd.f32 %v2286, %v2390
        %v2401 = vld [vmem:[%s1246 + $0x1] sm:$0xff]
        %v2402 = vld [vmem:[%s1246 + $0x11] sm:$0xff]
        %v2403 = vld [vmem:[%s1246 + $0x21] sm:$0xff]
        %v2404 = vld [vmem:[%s1246 + $0x31] sm:$0xff]
        %v2405 = vld [vmem:[%s1246 + $0x41] sm:$0xff]
        %v2406 = vld [vmem:[%s1246 + $0x51] sm:$0xff]
        %v2407 = vld [vmem:[%s1246 + $0x61] sm:$0xff]
        %v2408 = vld [vmem:[%s1246 + $0x71] sm:$0xff]
        %v2409 = vpack.c.bf16 %v2402, %v2401
        %v2410 = vpack.c.bf16 %v2404, %v2403
        %v2411 = vpack.c.bf16 %v2406, %v2405
        %v2412 = vpack.c.bf16 %v2408, %v2407
        %s2413 = scalar_lea.vmem %s3, 112
        %v2414 = vld [vmem:[%s2413] sm:$0xf]
        %v2415 = vld [vmem:[%s2413 + $0x4] sm:$0xf]
        %v2416 = vld [vmem:[%s2413 + $0x8] sm:$0xf]
        %v2417 = vld [vmem:[%s2413 + $0xc] sm:$0xf]
        %v2422 = vunpack.c.l.b16 %v2414
        %v2423 = vunpack.c.l.b16 %v2415
        %v2424 = vunpack.c.l.b16 %v2416
        %v2425 = vunpack.c.l.b16 %v2417
        %v2426 = vpack.c.b16 %v2423, %v2422
        %v2427 = vpack.c.b16 %v2425, %v2424
        %v2431 = vsel %vm540, %v2409, 0
        %v2434 = vsel %vm540, %v2410, 0
        %v2437 = vsel %vm540, %v2411, 0
        %v2440 = vsel %vm540, %v2412, 0
        %2442 = vmatprep.subr.bf16.mxu0 0
        %2443 = vmatpush1.bf16.msra.mxu0 0
        %2444 = vmatprep.subr.bf16.mxu0 0
        %2445 = vmatpush1.bf16.msra.mxu0 0
        %2446 = vmatprep.subr.bf16.mxu0 0
        %2447 = vmatpush1.bf16.msra.mxu0 0
        %2448 = vmatprep.subr.bf16.mxu0 0
        %2449 = vmatpush1.bf16.msra.mxu0 0
        %2450 = vmatprep.subr.bf16.mxu0 0
        %2451 = vmatpush1.bf16.msra.mxu0 0
        %2452 = vmatprep.subr.bf16.mxu0 0
        %2453 = vmatpush1.bf16.msra.mxu0 0
        %2454 = vmatprep.subr.bf16.mxu0 0
        %2455 = vmatpush1.bf16.msra.mxu0 %v2427
        %2456 = vmatprep.subr.bf16.mxu0 0
        %2457 = vmatpush1.bf16.msra.mxu0 %v2426
        %2458 = vmatprep.subr.bf16.mxu0 0
        %2459 = vmatpush2.bf16.msra.mxu0 0
        %2460 = vmatprep.subr.bf16.mxu0 0
        %2461 = vmatpush2.bf16.msra.mxu0 0
        %2462 = vmatprep.subr.bf16.mxu0 0
        %2463 = vmatpush2.bf16.msra.mxu0 0
        %2464 = vmatprep.subr.bf16.mxu0 0
        %2465 = vmatpush2.bf16.msra.mxu0 0
        %2466 = vmatprep.subr.bf16.mxu0 0
        %2467 = vmatpush2.bf16.msra.mxu0 0
        %2468 = vmatprep.subr.bf16.mxu0 0
        %2469 = vmatpush2.bf16.msra.mxu0 0
        %2470 = vmatprep.subr.bf16.mxu0 0
        %2471 = vmatpush2.bf16.msra.mxu0 0
        %2472 = vmatprep.subr.bf16.mxu0 0
        %2473 = vmatpush2.bf16.msra.mxu0 0
        %2474 = vmatprep.mubr.bf16.mxu0 0
        %2475 = vmatmul.mubr.bf16.gmra.mxu0 %v2431
        %v2476 = vpop.f32.mrf.mxu0
        %v2477 = vadd.f32 0.0, %v2476
        %v2478 = vpop.f32.mrf.mxu0
        %v2479 = vpop.f32.mrf.mxu0
        %v2480 = vadd.f32 0.0, %v2479
        %v2481 = vpop.f32.mrf.mxu0
        %2482 = vmatprep.mubr.bf16.mxu0 0
        %2483 = vmatmul.mubr.bf16.gmra.mxu0 %v2434
        %v2484 = vpop.f32.mrf.mxu0
        %v2485 = vadd.f32 0.0, %v2484
        %v2486 = vpop.f32.mrf.mxu0
        %v2487 = vpop.f32.mrf.mxu0
        %v2488 = vadd.f32 0.0, %v2487
        %v2489 = vpop.f32.mrf.mxu0
        %2490 = vmatprep.mubr.bf16.mxu0 0
        %2491 = vmatmul.mubr.bf16.gmra.mxu0 %v2437
        %v2492 = vpop.f32.mrf.mxu0
        %v2493 = vadd.f32 0.0, %v2492
        %v2494 = vpop.f32.mrf.mxu0
        %v2495 = vpop.f32.mrf.mxu0
        %v2496 = vadd.f32 0.0, %v2495
        %v2497 = vpop.f32.mrf.mxu0
        %2498 = vmatprep.mubr.bf16.mxu0 0
        %2499 = vmatmul.mubr.bf16.gmra.mxu0 %v2440
        %v2500 = vpop.f32.mrf.mxu0
        %v2501 = vadd.f32 0.0, %v2500
        %v2502 = vpop.f32.mrf.mxu0
        %v2503 = vpop.f32.mrf.mxu0
        %v2504 = vadd.f32 0.0, %v2503
        %v2505 = vpop.f32.mrf.mxu0
        %2506 = vdwg.mxu0
        %v2507 = vadd.f32 %v2393, %v2477
        %v2508 = vadd.f32 %v2394, %v2480
        %v2509 = vadd.f32 %v2395, %v2485
        %v2510 = vadd.f32 %v2396, %v2488
        %v2511 = vadd.f32 %v2397, %v2493
        %v2512 = vadd.f32 %v2398, %v2496
        %v2513 = vadd.f32 %v2399, %v2501
        %v2514 = vadd.f32 %v2400, %v2504
        %v2515 = vld [vmem:[%s1246 + $0x2] sm:$0xff]
        %v2516 = vld [vmem:[%s1246 + $0x12] sm:$0xff]
        %v2517 = vld [vmem:[%s1246 + $0x22] sm:$0xff]
        %v2518 = vld [vmem:[%s1246 + $0x32] sm:$0xff]
        %v2519 = vld [vmem:[%s1246 + $0x42] sm:$0xff]
        %v2520 = vld [vmem:[%s1246 + $0x52] sm:$0xff]
        %v2521 = vld [vmem:[%s1246 + $0x62] sm:$0xff]
        %v2522 = vld [vmem:[%s1246 + $0x72] sm:$0xff]
        %v2523 = vpack.c.bf16 %v2516, %v2515
        %v2524 = vpack.c.bf16 %v2518, %v2517
        %v2525 = vpack.c.bf16 %v2520, %v2519
        %v2526 = vpack.c.bf16 %v2522, %v2521
        %s2527 = scalar_lea.vmem %s3, 128
        %v2528 = vld [vmem:[%s2527] sm:$0xf]
        %v2529 = vld [vmem:[%s2527 + $0x4] sm:$0xf]
        %v2530 = vld [vmem:[%s2527 + $0x8] sm:$0xf]
        %v2531 = vld [vmem:[%s2527 + $0xc] sm:$0xf]
        %v2536 = vunpack.c.l.b16 %v2528
        %v2537 = vunpack.c.l.b16 %v2529
        %v2538 = vunpack.c.l.b16 %v2530
        %v2539 = vunpack.c.l.b16 %v2531
        %v2540 = vpack.c.b16 %v2537, %v2536
        %v2541 = vpack.c.b16 %v2539, %v2538
        %v2545 = vsel %vm540, %v2523, 0
        %v2548 = vsel %vm540, %v2524, 0
        %v2551 = vsel %vm540, %v2525, 0
        %v2554 = vsel %vm540, %v2526, 0
        %2556 = vmatprep.subr.bf16.mxu0 0
        %2557 = vmatpush1.bf16.msra.mxu0 0
        %2558 = vmatprep.subr.bf16.mxu0 0
        %2559 = vmatpush1.bf16.msra.mxu0 0
        %2560 = vmatprep.subr.bf16.mxu0 0
        %2561 = vmatpush1.bf16.msra.mxu0 0
        %2562 = vmatprep.subr.bf16.mxu0 0
        %2563 = vmatpush1.bf16.msra.mxu0 0
        %2564 = vmatprep.subr.bf16.mxu0 0
        %2565 = vmatpush1.bf16.msra.mxu0 0
        %2566 = vmatprep.subr.bf16.mxu0 0
        %2567 = vmatpush1.bf16.msra.mxu0 0
        %2568 = vmatprep.subr.bf16.mxu0 0
        %2569 = vmatpush1.bf16.msra.mxu0 %v2541
        %2570 = vmatprep.subr.bf16.mxu0 0
        %2571 = vmatpush1.bf16.msra.mxu0 %v2540
        %2572 = vmatprep.subr.bf16.mxu0 0
        %2573 = vmatpush2.bf16.msra.mxu0 0
        %2574 = vmatprep.subr.bf16.mxu0 0
        %2575 = vmatpush2.bf16.msra.mxu0 0
        %2576 = vmatprep.subr.bf16.mxu0 0
        %2577 = vmatpush2.bf16.msra.mxu0 0
        %2578 = vmatprep.subr.bf16.mxu0 0
        %2579 = vmatpush2.bf16.msra.mxu0 0
        %2580 = vmatprep.subr.bf16.mxu0 0
        %2581 = vmatpush2.bf16.msra.mxu0 0
        %2582 = vmatprep.subr.bf16.mxu0 0
        %2583 = vmatpush2.bf16.msra.mxu0 0
        %2584 = vmatprep.subr.bf16.mxu0 0
        %2585 = vmatpush2.bf16.msra.mxu0 0
        %2586 = vmatprep.subr.bf16.mxu0 0
        %2587 = vmatpush2.bf16.msra.mxu0 0
        %2588 = vmatprep.mubr.bf16.mxu0 0
        %2589 = vmatmul.mubr.bf16.gmra.mxu0 %v2545
        %v2590 = vpop.f32.mrf.mxu0
        %v2591 = vadd.f32 0.0, %v2590
        %v2592 = vpop.f32.mrf.mxu0
        %v2593 = vpop.f32.mrf.mxu0
        %v2594 = vadd.f32 0.0, %v2593
        %v2595 = vpop.f32.mrf.mxu0
        %2596 = vmatprep.mubr.bf16.mxu0 0
        %2597 = vmatmul.mubr.bf16.gmra.mxu0 %v2548
        %v2598 = vpop.f32.mrf.mxu0
        %v2599 = vadd.f32 0.0, %v2598
        %v2600 = vpop.f32.mrf.mxu0
        %v2601 = vpop.f32.mrf.mxu0
        %v2602 = vadd.f32 0.0, %v2601
        %v2603 = vpop.f32.mrf.mxu0
        %2604 = vmatprep.mubr.bf16.mxu0 0
        %2605 = vmatmul.mubr.bf16.gmra.mxu0 %v2551
        %v2606 = vpop.f32.mrf.mxu0
        %v2607 = vadd.f32 0.0, %v2606
        %v2608 = vpop.f32.mrf.mxu0
        %v2609 = vpop.f32.mrf.mxu0
        %v2610 = vadd.f32 0.0, %v2609
        %v2611 = vpop.f32.mrf.mxu0
        %2612 = vmatprep.mubr.bf16.mxu0 0
        %2613 = vmatmul.mubr.bf16.gmra.mxu0 %v2554
        %v2614 = vpop.f32.mrf.mxu0
        %v2615 = vadd.f32 0.0, %v2614
        %v2616 = vpop.f32.mrf.mxu0
        %v2617 = vpop.f32.mrf.mxu0
        %v2618 = vadd.f32 0.0, %v2617
        %v2619 = vpop.f32.mrf.mxu0
        %2620 = vdwg.mxu0
        %v2621 = vadd.f32 %v2507, %v2591
        %v2622 = vadd.f32 %v2508, %v2594
        %v2623 = vadd.f32 %v2509, %v2599
        %v2624 = vadd.f32 %v2510, %v2602
        %v2625 = vadd.f32 %v2511, %v2607
        %v2626 = vadd.f32 %v2512, %v2610
        %v2627 = vadd.f32 %v2513, %v2615
        %v2628 = vadd.f32 %v2514, %v2618
        %v2629 = vld [vmem:[%s4] sm:$0x1]
        %v2631 = vlaneseq
        %v2632 = vshrl.u32 %v2631, 7
        %v2633 = vsub.s32 0, %v2632
        %v2634 = vrot.slane %v2629, %v2633
        %v2636 = vadd.f32 %v2621, %v2634
        %v2637 = vadd.f32 %v2622, %v2634
        %v2638 = vadd.f32 %v2623, %v2634
        %v2639 = vadd.f32 %v2624, %v2634
        %v2640 = vadd.f32 %v2625, %v2634
        %v2641 = vadd.f32 %v2626, %v2634
        %v2642 = vadd.f32 %v2627, %v2634
        %v2643 = vadd.f32 %v2628, %v2634
        %v2644 = vpack.c.bf16 %v563, %v562
        %v2645 = vpack.c.bf16 %v565, %v564
        %v2646 = vpack.c.bf16 %v567, %v566
        %v2647 = vpack.c.bf16 %v569, %v568
        %v2648 = vld [vmem:[%s5] sm:$0xf]
        %v2649 = vld [vmem:[%s5 + $0x4] sm:$0xf]
        %v2650 = vld [vmem:[%s5 + $0x8] sm:$0xf]
        %v2651 = vld [vmem:[%s5 + $0xc] sm:$0xf]
        %v2652 = vld [vmem:[%s6] sm:$0x1]
        %v2654 = vlaneseq
        %v2655 = vshrl.u32 %v2654, 7
        %v2656 = vsub.s32 0, %v2655
        %v2657 = vrot.slane %v2652, %v2656
        %v2663 = vunpack.c.l.b16 %v2648
        %v2664 = vunpack.c.l.b16 %v2649
        %v2665 = vunpack.c.l.b16 %v2650
        %v2666 = vunpack.c.l.b16 %v2651
        %v2667 = vpack.c.b16 %v2664, %v2663
        %v2668 = vpack.c.b16 %v2666, %v2665
        %v2672 = vsel %vm540, %v2644, 0
        %v2675 = vsel %vm540, %v2645, 0
        %v2678 = vsel %vm540, %v2646, 0
        %v2681 = vsel %vm540, %v2647, 0
        %2683 = vmatprep.subr.bf16.mxu0 0
        %2684 = vmatpush1.bf16.msra.mxu0 0
        %2685 = vmatprep.subr.bf16.mxu0 0
        %2686 = vmatpush1.bf16.msra.mxu0 0
        %2687 = vmatprep.subr.bf16.mxu0 0
        %2688 = vmatpush1.bf16.msra.mxu0 0
        %2689 = vmatprep.subr.bf16.mxu0 0
        %2690 = vmatpush1.bf16.msra.mxu0 0
        %2691 = vmatprep.subr.bf16.mxu0 0
        %2692 = vmatpush1.bf16.msra.mxu0 0
        %2693 = vmatprep.subr.bf16.mxu0 0
        %2694 = vmatpush1.bf16.msra.mxu0 0
        %2695 = vmatprep.subr.bf16.mxu0 0
        %2696 = vmatpush1.bf16.msra.mxu0 %v2668
        %2697 = vmatprep.subr.bf16.mxu0 0
        %2698 = vmatpush1.bf16.msra.mxu0 %v2667
        %2699 = vmatprep.subr.bf16.mxu0 0
        %2700 = vmatpush2.bf16.msra.mxu0 0
        %2701 = vmatprep.subr.bf16.mxu0 0
        %2702 = vmatpush2.bf16.msra.mxu0 0
        %2703 = vmatprep.subr.bf16.mxu0 0
        %2704 = vmatpush2.bf16.msra.mxu0 0
        %2705 = vmatprep.subr.bf16.mxu0 0
        %2706 = vmatpush2.bf16.msra.mxu0 0
        %2707 = vmatprep.subr.bf16.mxu0 0
        %2708 = vmatpush2.bf16.msra.mxu0 0
        %2709 = vmatprep.subr.bf16.mxu0 0
        %2710 = vmatpush2.bf16.msra.mxu0 0
        %2711 = vmatprep.subr.bf16.mxu0 0
        %2712 = vmatpush2.bf16.msra.mxu0 0
        %2713 = vmatprep.subr.bf16.mxu0 0
        %2714 = vmatpush2.bf16.msra.mxu0 0
        %2715 = vmatprep.mubr.bf16.mxu0 0
        %2716 = vmatmul.mubr.bf16.gmra.mxu0 %v2672
        %v2717 = vpop.f32.mrf.mxu0
        %v2718 = vadd.f32 %v2657, %v2717
        %v2719 = vpop.f32.mrf.mxu0
        %v2720 = vpop.f32.mrf.mxu0
        %v2721 = vadd.f32 %v2657, %v2720
        %v2722 = vpop.f32.mrf.mxu0
        %2723 = vmatprep.mubr.bf16.mxu0 0
        %2724 = vmatmul.mubr.bf16.gmra.mxu0 %v2675
        %v2725 = vpop.f32.mrf.mxu0
        %v2726 = vadd.f32 %v2657, %v2725
        %v2727 = vpop.f32.mrf.mxu0
        %v2728 = vpop.f32.mrf.mxu0
        %v2729 = vadd.f32 %v2657, %v2728
        %v2730 = vpop.f32.mrf.mxu0
        %2731 = vmatprep.mubr.bf16.mxu0 0
        %2732 = vmatmul.mubr.bf16.gmra.mxu0 %v2678
        %v2733 = vpop.f32.mrf.mxu0
        %v2734 = vadd.f32 %v2657, %v2733
        %v2735 = vpop.f32.mrf.mxu0
        %v2736 = vpop.f32.mrf.mxu0
        %v2737 = vadd.f32 %v2657, %v2736
        %v2738 = vpop.f32.mrf.mxu0
        %2739 = vmatprep.mubr.bf16.mxu0 0
        %2740 = vmatmul.mubr.bf16.gmra.mxu0 %v2681
        %v2741 = vpop.f32.mrf.mxu0
        %v2742 = vadd.f32 %v2657, %v2741
        %v2743 = vpop.f32.mrf.mxu0
        %v2744 = vpop.f32.mrf.mxu0
        %v2745 = vadd.f32 %v2657, %v2744
        %v2746 = vpop.f32.mrf.mxu0
        %2747 = vdwg.mxu0
        %v2748 = vadd.f32 %v2636, %v2718
        %v2749 = vadd.f32 %v2637, %v2721
        %v2750 = vadd.f32 %v2638, %v2726
        %v2751 = vadd.f32 %v2639, %v2729
        %v2752 = vadd.f32 %v2640, %v2734
        %v2753 = vadd.f32 %v2641, %v2737
        %v2754 = vadd.f32 %v2642, %v2742
        %v2755 = vadd.f32 %v2643, %v2745
        %v2756 = vmax.f32 %v2748, 0.0
        %v2757 = vmax.f32 %v2749, 0.0
        %v2758 = vmax.f32 %v2750, 0.0
        %v2759 = vmax.f32 %v2751, 0.0
        %v2760 = vmax.f32 %v2752, 0.0
        %v2761 = vmax.f32 %v2753, 0.0
        %v2762 = vmax.f32 %v2754, 0.0
        %v2763 = vmax.f32 %v2755, 0.0
        %2764 = vst.msk [vmem:[%s570 + $0x1] sm:$0xff] %vm540, %v2756
        %2765 = vst.msk [vmem:[%s570 + $0x11] sm:$0xff] %vm540, %v2757
        %2766 = vst.msk [vmem:[%s570 + $0x21] sm:$0xff] %vm540, %v2758
        %2767 = vst.msk [vmem:[%s570 + $0x31] sm:$0xff] %vm540, %v2759
        %2768 = vst.msk [vmem:[%s570 + $0x41] sm:$0xff] %vm540, %v2760
        %2769 = vst.msk [vmem:[%s570 + $0x51] sm:$0xff] %vm540, %v2761
        %2770 = vst.msk [vmem:[%s570 + $0x61] sm:$0xff] %vm540, %v2762
        %2771 = vst.msk [vmem:[%s570 + $0x71] sm:$0xff] %vm540, %v2763
        %v2772 = vld [vmem:[#allocation2] sm:$0xff]
        %v2773 = vld [vmem:[#allocation2 + $0x10] sm:$0xff]
        %v2774 = vld [vmem:[#allocation2 + $0x20] sm:$0xff]
        %v2775 = vld [vmem:[#allocation2 + $0x30] sm:$0xff]
        %v2776 = vld [vmem:[#allocation2 + $0x40] sm:$0xff]
        %v2777 = vld [vmem:[#allocation2 + $0x50] sm:$0xff]
        %v2778 = vld [vmem:[#allocation2 + $0x60] sm:$0xff]
        %v2779 = vld [vmem:[#allocation2 + $0x70] sm:$0xff]
        %v2780 = vpack.c.bf16 %v2773, %v2772
        %v2781 = vpack.c.bf16 %v2775, %v2774
        %v2782 = vpack.c.bf16 %v2777, %v2776
        %v2783 = vpack.c.bf16 %v2779, %v2778
        %v2784 = vld [vmem:[%s7] sm:$0xf]
        %v2785 = vld [vmem:[%s7 + $0x4] sm:$0xf]
        %v2786 = vld [vmem:[%s7 + $0x8] sm:$0xf]
        %v2787 = vld [vmem:[%s7 + $0xc] sm:$0xf]
        %v2788 = vld [vmem:[#allocation2 + $0x1] sm:$0xff]
        %v2789 = vld [vmem:[#allocation2 + $0x11] sm:$0xff]
        %v2790 = vld [vmem:[#allocation2 + $0x21] sm:$0xff]
        %v2791 = vld [vmem:[#allocation2 + $0x31] sm:$0xff]
        %v2792 = vld [vmem:[#allocation2 + $0x41] sm:$0xff]
        %v2793 = vld [vmem:[#allocation2 + $0x51] sm:$0xff]
        %v2794 = vld [vmem:[#allocation2 + $0x61] sm:$0xff]
        %v2795 = vld [vmem:[#allocation2 + $0x71] sm:$0xff]
        %v2796 = vpack.c.bf16 %v2789, %v2788
        %v2797 = vpack.c.bf16 %v2791, %v2790
        %v2798 = vpack.c.bf16 %v2793, %v2792
        %v2799 = vpack.c.bf16 %v2795, %v2794
        %s2800 = scalar_lea.vmem %s7, 16
        %v2801 = vld [vmem:[%s2800] sm:$0xf]
        %v2802 = vld [vmem:[%s2800 + $0x4] sm:$0xf]
        %v2803 = vld [vmem:[%s2800 + $0x8] sm:$0xf]
        %v2804 = vld [vmem:[%s2800 + $0xc] sm:$0xf]
        %v2809 = vunpack.c.l.b16 %v2801
        %v2810 = vunpack.c.l.b16 %v2802
        %v2811 = vunpack.c.l.b16 %v2803
        %v2812 = vunpack.c.l.b16 %v2804
        %v2813 = vpack.c.b16 %v2810, %v2809
        %v2814 = vpack.c.b16 %v2812, %v2811
        %v2818 = vsel %vm540, %v2796, 0
        %v2821 = vsel %vm540, %v2797, 0
        %v2824 = vsel %vm540, %v2798, 0
        %v2827 = vsel %vm540, %v2799, 0
        %2829 = vmatprep.subr.bf16.mxu0 0
        %2830 = vmatpush1.bf16.msra.mxu0 0
        %2831 = vmatprep.subr.bf16.mxu0 0
        %2832 = vmatpush1.bf16.msra.mxu0 0
        %2833 = vmatprep.subr.bf16.mxu0 0
        %2834 = vmatpush1.bf16.msra.mxu0 0
        %2835 = vmatprep.subr.bf16.mxu0 0
        %2836 = vmatpush1.bf16.msra.mxu0 0
        %2837 = vmatprep.subr.bf16.mxu0 0
        %2838 = vmatpush1.bf16.msra.mxu0 0
        %2839 = vmatprep.subr.bf16.mxu0 0
        %2840 = vmatpush1.bf16.msra.mxu0 0
        %2841 = vmatprep.subr.bf16.mxu0 0
        %2842 = vmatpush1.bf16.msra.mxu0 %v2814
        %2843 = vmatprep.subr.bf16.mxu0 0
        %2844 = vmatpush1.bf16.msra.mxu0 %v2813
        %2845 = vmatprep.subr.bf16.mxu0 0
        %2846 = vmatpush2.bf16.msra.mxu0 0
        %2847 = vmatprep.subr.bf16.mxu0 0
        %2848 = vmatpush2.bf16.msra.mxu0 0
        %2849 = vmatprep.subr.bf16.mxu0 0
        %2850 = vmatpush2.bf16.msra.mxu0 0
        %2851 = vmatprep.subr.bf16.mxu0 0
        %2852 = vmatpush2.bf16.msra.mxu0 0
        %2853 = vmatprep.subr.bf16.mxu0 0
        %2854 = vmatpush2.bf16.msra.mxu0 0
        %2855 = vmatprep.subr.bf16.mxu0 0
        %2856 = vmatpush2.bf16.msra.mxu0 0
        %2857 = vmatprep.subr.bf16.mxu0 0
        %2858 = vmatpush2.bf16.msra.mxu0 0
        %2859 = vmatprep.subr.bf16.mxu0 0
        %2860 = vmatpush2.bf16.msra.mxu0 0
        %2861 = vmatprep.mubr.bf16.mxu0 0
        %2862 = vmatmul.mubr.bf16.gmra.mxu0 %v2818
        %v2863 = vpop.f32.mrf.mxu0
        %v2864 = vadd.f32 0.0, %v2863
        %v2865 = vpop.f32.mrf.mxu0
        %v2866 = vpop.f32.mrf.mxu0
        %v2867 = vadd.f32 0.0, %v2866
        %v2868 = vpop.f32.mrf.mxu0
        %2869 = vmatprep.mubr.bf16.mxu0 0
        %2870 = vmatmul.mubr.bf16.gmra.mxu0 %v2821
        %v2871 = vpop.f32.mrf.mxu0
        %v2872 = vadd.f32 0.0, %v2871
        %v2873 = vpop.f32.mrf.mxu0
        %v2874 = vpop.f32.mrf.mxu0
        %v2875 = vadd.f32 0.0, %v2874
        %v2876 = vpop.f32.mrf.mxu0
        %2877 = vmatprep.mubr.bf16.mxu0 0
        %2878 = vmatmul.mubr.bf16.gmra.mxu0 %v2824
        %v2879 = vpop.f32.mrf.mxu0
        %v2880 = vadd.f32 0.0, %v2879
        %v2881 = vpop.f32.mrf.mxu0
        %v2882 = vpop.f32.mrf.mxu0
        %v2883 = vadd.f32 0.0, %v2882
        %v2884 = vpop.f32.mrf.mxu0
        %2885 = vmatprep.mubr.bf16.mxu0 0
        %2886 = vmatmul.mubr.bf16.gmra.mxu0 %v2827
        %v2887 = vpop.f32.mrf.mxu0
        %v2888 = vadd.f32 0.0, %v2887
        %v2889 = vpop.f32.mrf.mxu0
        %v2890 = vpop.f32.mrf.mxu0
        %v2891 = vadd.f32 0.0, %v2890
        %v2892 = vpop.f32.mrf.mxu0
        %2893 = vdwg.mxu0
        %v2898 = vunpack.c.l.b16 %v2784
        %v2899 = vunpack.c.l.b16 %v2785
        %v2900 = vunpack.c.l.b16 %v2786
        %v2901 = vunpack.c.l.b16 %v2787
        %v2902 = vpack.c.b16 %v2899, %v2898
        %v2903 = vpack.c.b16 %v2901, %v2900
        %v2907 = vsel %vm540, %v2780, 0
        %v2910 = vsel %vm540, %v2781, 0
        %v2913 = vsel %vm540, %v2782, 0
        %v2916 = vsel %vm540, %v2783, 0
        %2918 = vmatprep.subr.bf16.mxu0 0
        %2919 = vmatpush1.bf16.msra.mxu0 0
        %2920 = vmatprep.subr.bf16.mxu0 0
        %2921 = vmatpush1.bf16.msra.mxu0 0
        %2922 = vmatprep.subr.bf16.mxu0 0
        %2923 = vmatpush1.bf16.msra.mxu0 0
        %2924 = vmatprep.subr.bf16.mxu0 0
        %2925 = vmatpush1.bf16.msra.mxu0 0
        %2926 = vmatprep.subr.bf16.mxu0 0
        %2927 = vmatpush1.bf16.msra.mxu0 0
        %2928 = vmatprep.subr.bf16.mxu0 0
        %2929 = vmatpush1.bf16.msra.mxu0 0
        %2930 = vmatprep.subr.bf16.mxu0 0
        %2931 = vmatpush1.bf16.msra.mxu0 %v2903
        %2932 = vmatprep.subr.bf16.mxu0 0
        %2933 = vmatpush1.bf16.msra.mxu0 %v2902
        %2934 = vmatprep.subr.bf16.mxu0 0
        %2935 = vmatpush2.bf16.msra.mxu0 0
        %2936 = vmatprep.subr.bf16.mxu0 0
        %2937 = vmatpush2.bf16.msra.mxu0 0
        %2938 = vmatprep.subr.bf16.mxu0 0
        %2939 = vmatpush2.bf16.msra.mxu0 0
        %2940 = vmatprep.subr.bf16.mxu0 0
        %2941 = vmatpush2.bf16.msra.mxu0 0
        %2942 = vmatprep.subr.bf16.mxu0 0
        %2943 = vmatpush2.bf16.msra.mxu0 0
        %2944 = vmatprep.subr.bf16.mxu0 0
        %2945 = vmatpush2.bf16.msra.mxu0 0
        %2946 = vmatprep.subr.bf16.mxu0 0
        %2947 = vmatpush2.bf16.msra.mxu0 0
        %2948 = vmatprep.subr.bf16.mxu0 0
        %2949 = vmatpush2.bf16.msra.mxu0 0
        %2950 = vmatprep.mubr.bf16.mxu0 0
        %2951 = vmatmul.mubr.bf16.gmra.mxu0 %v2907
        %v2952 = vpop.f32.mrf.mxu0
        %v2953 = vadd.f32 %v2864, %v2952
        %v2954 = vpop.f32.mrf.mxu0
        %v2955 = vpop.f32.mrf.mxu0
        %v2956 = vadd.f32 %v2867, %v2955
        %v2957 = vpop.f32.mrf.mxu0
        %2958 = vmatprep.mubr.bf16.mxu0 0
        %2959 = vmatmul.mubr.bf16.gmra.mxu0 %v2910
        %v2960 = vpop.f32.mrf.mxu0
        %v2961 = vadd.f32 %v2872, %v2960
        %v2962 = vpop.f32.mrf.mxu0
        %v2963 = vpop.f32.mrf.mxu0
        %v2964 = vadd.f32 %v2875, %v2963
        %v2965 = vpop.f32.mrf.mxu0
        %2966 = vmatprep.mubr.bf16.mxu0 0
        %2967 = vmatmul.mubr.bf16.gmra.mxu0 %v2913
        %v2968 = vpop.f32.mrf.mxu0
        %v2969 = vadd.f32 %v2880, %v2968
        %v2970 = vpop.f32.mrf.mxu0
        %v2971 = vpop.f32.mrf.mxu0
        %v2972 = vadd.f32 %v2883, %v2971
        %v2973 = vpop.f32.mrf.mxu0
        %2974 = vmatprep.mubr.bf16.mxu0 0
        %2975 = vmatmul.mubr.bf16.gmra.mxu0 %v2916
        %v2976 = vpop.f32.mrf.mxu0
        %v2977 = vadd.f32 %v2888, %v2976
        %v2978 = vpop.f32.mrf.mxu0
        %v2979 = vpop.f32.mrf.mxu0
        %v2980 = vadd.f32 %v2891, %v2979
        %v2981 = vpop.f32.mrf.mxu0
        %2982 = vdwg.mxu0
        %v2983 = vld [vmem:[#allocation2 + $0x2] sm:$0xff]
        %v2984 = vld [vmem:[#allocation2 + $0x12] sm:$0xff]
        %v2985 = vld [vmem:[#allocation2 + $0x22] sm:$0xff]
        %v2986 = vld [vmem:[#allocation2 + $0x32] sm:$0xff]
        %v2987 = vld [vmem:[#allocation2 + $0x42] sm:$0xff]
        %v2988 = vld [vmem:[#allocation2 + $0x52] sm:$0xff]
        %v2989 = vld [vmem:[#allocation2 + $0x62] sm:$0xff]
        %v2990 = vld [vmem:[#allocation2 + $0x72] sm:$0xff]
        %v2991 = vpack.c.bf16 %v2984, %v2983
        %v2992 = vpack.c.bf16 %v2986, %v2985
        %v2993 = vpack.c.bf16 %v2988, %v2987
        %v2994 = vpack.c.bf16 %v2990, %v2989
        %s2995 = scalar_lea.vmem %s7, 32
        %v2996 = vld [vmem:[%s2995] sm:$0xf]
        %v2997 = vld [vmem:[%s2995 + $0x4] sm:$0xf]
        %v2998 = vld [vmem:[%s2995 + $0x8] sm:$0xf]
        %v2999 = vld [vmem:[%s2995 + $0xc] sm:$0xf]
        %v3004 = vunpack.c.l.b16 %v2996
        %v3005 = vunpack.c.l.b16 %v2997
        %v3006 = vunpack.c.l.b16 %v2998
        %v3007 = vunpack.c.l.b16 %v2999
        %v3008 = vpack.c.b16 %v3005, %v3004
        %v3009 = vpack.c.b16 %v3007, %v3006
        %v3013 = vsel %vm540, %v2991, 0
        %v3016 = vsel %vm540, %v2992, 0
        %v3019 = vsel %vm540, %v2993, 0
        %v3022 = vsel %vm540, %v2994, 0
        %3024 = vmatprep.subr.bf16.mxu0 0
        %3025 = vmatpush1.bf16.msra.mxu0 0
        %3026 = vmatprep.subr.bf16.mxu0 0
        %3027 = vmatpush1.bf16.msra.mxu0 0
        %3028 = vmatprep.subr.bf16.mxu0 0
        %3029 = vmatpush1.bf16.msra.mxu0 0
        %3030 = vmatprep.subr.bf16.mxu0 0
        %3031 = vmatpush1.bf16.msra.mxu0 0
        %3032 = vmatprep.subr.bf16.mxu0 0
        %3033 = vmatpush1.bf16.msra.mxu0 0
        %3034 = vmatprep.subr.bf16.mxu0 0
        %3035 = vmatpush1.bf16.msra.mxu0 0
        %3036 = vmatprep.subr.bf16.mxu0 0
        %3037 = vmatpush1.bf16.msra.mxu0 %v3009
        %3038 = vmatprep.subr.bf16.mxu0 0
        %3039 = vmatpush1.bf16.msra.mxu0 %v3008
        %3040 = vmatprep.subr.bf16.mxu0 0
        %3041 = vmatpush2.bf16.msra.mxu0 0
        %3042 = vmatprep.subr.bf16.mxu0 0
        %3043 = vmatpush2.bf16.msra.mxu0 0
        %3044 = vmatprep.subr.bf16.mxu0 0
        %3045 = vmatpush2.bf16.msra.mxu0 0
        %3046 = vmatprep.subr.bf16.mxu0 0
        %3047 = vmatpush2.bf16.msra.mxu0 0
        %3048 = vmatprep.subr.bf16.mxu0 0
        %3049 = vmatpush2.bf16.msra.mxu0 0
        %3050 = vmatprep.subr.bf16.mxu0 0
        %3051 = vmatpush2.bf16.msra.mxu0 0
        %3052 = vmatprep.subr.bf16.mxu0 0
        %3053 = vmatpush2.bf16.msra.mxu0 0
        %3054 = vmatprep.subr.bf16.mxu0 0
        %3055 = vmatpush2.bf16.msra.mxu0 0
        %3056 = vmatprep.mubr.bf16.mxu0 0
        %3057 = vmatmul.mubr.bf16.gmra.mxu0 %v3013
        %v3058 = vpop.f32.mrf.mxu0
        %v3059 = vadd.f32 0.0, %v3058
        %v3060 = vpop.f32.mrf.mxu0
        %v3061 = vpop.f32.mrf.mxu0
        %v3062 = vadd.f32 0.0, %v3061
        %v3063 = vpop.f32.mrf.mxu0
        %3064 = vmatprep.mubr.bf16.mxu0 0
        %3065 = vmatmul.mubr.bf16.gmra.mxu0 %v3016
        %v3066 = vpop.f32.mrf.mxu0
        %v3067 = vadd.f32 0.0, %v3066
        %v3068 = vpop.f32.mrf.mxu0
        %v3069 = vpop.f32.mrf.mxu0
        %v3070 = vadd.f32 0.0, %v3069
        %v3071 = vpop.f32.mrf.mxu0
        %3072 = vmatprep.mubr.bf16.mxu0 0
        %3073 = vmatmul.mubr.bf16.gmra.mxu0 %v3019
        %v3074 = vpop.f32.mrf.mxu0
        %v3075 = vadd.f32 0.0, %v3074
        %v3076 = vpop.f32.mrf.mxu0
        %v3077 = vpop.f32.mrf.mxu0
        %v3078 = vadd.f32 0.0, %v3077
        %v3079 = vpop.f32.mrf.mxu0
        %3080 = vmatprep.mubr.bf16.mxu0 0
        %3081 = vmatmul.mubr.bf16.gmra.mxu0 %v3022
        %v3082 = vpop.f32.mrf.mxu0
        %v3083 = vadd.f32 0.0, %v3082
        %v3084 = vpop.f32.mrf.mxu0
        %v3085 = vpop.f32.mrf.mxu0
        %v3086 = vadd.f32 0.0, %v3085
        %v3087 = vpop.f32.mrf.mxu0
        %3088 = vdwg.mxu0
        %v3089 = vadd.f32 %v2953, %v3059
        %v3090 = vadd.f32 %v2956, %v3062
        %v3091 = vadd.f32 %v2961, %v3067
        %v3092 = vadd.f32 %v2964, %v3070
        %v3093 = vadd.f32 %v2969, %v3075
        %v3094 = vadd.f32 %v2972, %v3078
        %v3095 = vadd.f32 %v2977, %v3083
        %v3096 = vadd.f32 %v2980, %v3086
        %v3097 = vld [vmem:[%s570] sm:$0xff]
        %v3098 = vld [vmem:[%s570 + $0x10] sm:$0xff]
        %v3099 = vld [vmem:[%s570 + $0x20] sm:$0xff]
        %v3100 = vld [vmem:[%s570 + $0x30] sm:$0xff]
        %v3101 = vld [vmem:[%s570 + $0x40] sm:$0xff]
        %v3102 = vld [vmem:[%s570 + $0x50] sm:$0xff]
        %v3103 = vld [vmem:[%s570 + $0x60] sm:$0xff]
        %v3104 = vld [vmem:[%s570 + $0x70] sm:$0xff]
        %v3105 = vpack.c.bf16 %v3098, %v3097
        %v3106 = vpack.c.bf16 %v3100, %v3099
        %v3107 = vpack.c.bf16 %v3102, %v3101
        %v3108 = vpack.c.bf16 %v3104, %v3103
        %s3109 = scalar_lea.vmem %s7, 48
        %v3110 = vld [vmem:[%s3109] sm:$0xf]
        %v3111 = vld [vmem:[%s3109 + $0x4] sm:$0xf]
        %v3112 = vld [vmem:[%s3109 + $0x8] sm:$0xf]
        %v3113 = vld [vmem:[%s3109 + $0xc] sm:$0xf]
        %v3118 = vunpack.c.l.b16 %v3110
        %v3119 = vunpack.c.l.b16 %v3111
        %v3120 = vunpack.c.l.b16 %v3112
        %v3121 = vunpack.c.l.b16 %v3113
        %v3122 = vpack.c.b16 %v3119, %v3118
        %v3123 = vpack.c.b16 %v3121, %v3120
        %v3127 = vsel %vm540, %v3105, 0
        %v3130 = vsel %vm540, %v3106, 0
        %v3133 = vsel %vm540, %v3107, 0
        %v3136 = vsel %vm540, %v3108, 0
        %3138 = vmatprep.subr.bf16.mxu0 0
        %3139 = vmatpush1.bf16.msra.mxu0 0
        %3140 = vmatprep.subr.bf16.mxu0 0
        %3141 = vmatpush1.bf16.msra.mxu0 0
        %3142 = vmatprep.subr.bf16.mxu0 0
        %3143 = vmatpush1.bf16.msra.mxu0 0
        %3144 = vmatprep.subr.bf16.mxu0 0
        %3145 = vmatpush1.bf16.msra.mxu0 0
        %3146 = vmatprep.subr.bf16.mxu0 0
        %3147 = vmatpush1.bf16.msra.mxu0 0
        %3148 = vmatprep.subr.bf16.mxu0 0
        %3149 = vmatpush1.bf16.msra.mxu0 0
        %3150 = vmatprep.subr.bf16.mxu0 0
        %3151 = vmatpush1.bf16.msra.mxu0 %v3123
        %3152 = vmatprep.subr.bf16.mxu0 0
        %3153 = vmatpush1.bf16.msra.mxu0 %v3122
        %3154 = vmatprep.subr.bf16.mxu0 0
        %3155 = vmatpush2.bf16.msra.mxu0 0
        %3156 = vmatprep.subr.bf16.mxu0 0
        %3157 = vmatpush2.bf16.msra.mxu0 0
        %3158 = vmatprep.subr.bf16.mxu0 0
        %3159 = vmatpush2.bf16.msra.mxu0 0
        %3160 = vmatprep.subr.bf16.mxu0 0
        %3161 = vmatpush2.bf16.msra.mxu0 0
        %3162 = vmatprep.subr.bf16.mxu0 0
        %3163 = vmatpush2.bf16.msra.mxu0 0
        %3164 = vmatprep.subr.bf16.mxu0 0
        %3165 = vmatpush2.bf16.msra.mxu0 0
        %3166 = vmatprep.subr.bf16.mxu0 0
        %3167 = vmatpush2.bf16.msra.mxu0 0
        %3168 = vmatprep.subr.bf16.mxu0 0
        %3169 = vmatpush2.bf16.msra.mxu0 0
        %3170 = vmatprep.mubr.bf16.mxu0 0
        %3171 = vmatmul.mubr.bf16.gmra.mxu0 %v3127
        %v3172 = vpop.f32.mrf.mxu0
        %v3173 = vadd.f32 0.0, %v3172
        %v3174 = vpop.f32.mrf.mxu0
        %v3175 = vpop.f32.mrf.mxu0
        %v3176 = vadd.f32 0.0, %v3175
        %v3177 = vpop.f32.mrf.mxu0
        %3178 = vmatprep.mubr.bf16.mxu0 0
        %3179 = vmatmul.mubr.bf16.gmra.mxu0 %v3130
        %v3180 = vpop.f32.mrf.mxu0
        %v3181 = vadd.f32 0.0, %v3180
        %v3182 = vpop.f32.mrf.mxu0
        %v3183 = vpop.f32.mrf.mxu0
        %v3184 = vadd.f32 0.0, %v3183
        %v3185 = vpop.f32.mrf.mxu0
        %3186 = vmatprep.mubr.bf16.mxu0 0
        %3187 = vmatmul.mubr.bf16.gmra.mxu0 %v3133
        %v3188 = vpop.f32.mrf.mxu0
        %v3189 = vadd.f32 0.0, %v3188
        %v3190 = vpop.f32.mrf.mxu0
        %v3191 = vpop.f32.mrf.mxu0
        %v3192 = vadd.f32 0.0, %v3191
        %v3193 = vpop.f32.mrf.mxu0
        %3194 = vmatprep.mubr.bf16.mxu0 0
        %3195 = vmatmul.mubr.bf16.gmra.mxu0 %v3136
        %v3196 = vpop.f32.mrf.mxu0
        %v3197 = vadd.f32 0.0, %v3196
        %v3198 = vpop.f32.mrf.mxu0
        %v3199 = vpop.f32.mrf.mxu0
        %v3200 = vadd.f32 0.0, %v3199
        %v3201 = vpop.f32.mrf.mxu0
        %3202 = vdwg.mxu0
        %v3203 = vadd.f32 %v3089, %v3173
        %v3204 = vadd.f32 %v3090, %v3176
        %v3205 = vadd.f32 %v3091, %v3181
        %v3206 = vadd.f32 %v3092, %v3184
        %v3207 = vadd.f32 %v3093, %v3189
        %v3208 = vadd.f32 %v3094, %v3192
        %v3209 = vadd.f32 %v3095, %v3197
        %v3210 = vadd.f32 %v3096, %v3200
        %v3211 = vld [vmem:[%s570 + $0x1] sm:$0xff]
        %v3212 = vld [vmem:[%s570 + $0x11] sm:$0xff]
        %v3213 = vld [vmem:[%s570 + $0x21] sm:$0xff]
        %v3214 = vld [vmem:[%s570 + $0x31] sm:$0xff]
        %v3215 = vld [vmem:[%s570 + $0x41] sm:$0xff]
        %v3216 = vld [vmem:[%s570 + $0x51] sm:$0xff]
        %v3217 = vld [vmem:[%s570 + $0x61] sm:$0xff]
        %v3218 = vld [vmem:[%s570 + $0x71] sm:$0xff]
        %v3219 = vpack.c.bf16 %v3212, %v3211
        %v3220 = vpack.c.bf16 %v3214, %v3213
        %v3221 = vpack.c.bf16 %v3216, %v3215
        %v3222 = vpack.c.bf16 %v3218, %v3217
        %s3223 = scalar_lea.vmem %s7, 64
        %v3224 = vld [vmem:[%s3223] sm:$0xf]
        %v3225 = vld [vmem:[%s3223 + $0x4] sm:$0xf]
        %v3226 = vld [vmem:[%s3223 + $0x8] sm:$0xf]
        %v3227 = vld [vmem:[%s3223 + $0xc] sm:$0xf]
        %v3232 = vunpack.c.l.b16 %v3224
        %v3233 = vunpack.c.l.b16 %v3225
        %v3234 = vunpack.c.l.b16 %v3226
        %v3235 = vunpack.c.l.b16 %v3227
        %v3236 = vpack.c.b16 %v3233, %v3232
        %v3237 = vpack.c.b16 %v3235, %v3234
        %v3241 = vsel %vm540, %v3219, 0
        %v3244 = vsel %vm540, %v3220, 0
        %v3247 = vsel %vm540, %v3221, 0
        %v3250 = vsel %vm540, %v3222, 0
        %3252 = vmatprep.subr.bf16.mxu0 0
        %3253 = vmatpush1.bf16.msra.mxu0 0
        %3254 = vmatprep.subr.bf16.mxu0 0
        %3255 = vmatpush1.bf16.msra.mxu0 0
        %3256 = vmatprep.subr.bf16.mxu0 0
        %3257 = vmatpush1.bf16.msra.mxu0 0
        %3258 = vmatprep.subr.bf16.mxu0 0
        %3259 = vmatpush1.bf16.msra.mxu0 0
        %3260 = vmatprep.subr.bf16.mxu0 0
        %3261 = vmatpush1.bf16.msra.mxu0 0
        %3262 = vmatprep.subr.bf16.mxu0 0
        %3263 = vmatpush1.bf16.msra.mxu0 0
        %3264 = vmatprep.subr.bf16.mxu0 0
        %3265 = vmatpush1.bf16.msra.mxu0 %v3237
        %3266 = vmatprep.subr.bf16.mxu0 0
        %3267 = vmatpush1.bf16.msra.mxu0 %v3236
        %3268 = vmatprep.subr.bf16.mxu0 0
        %3269 = vmatpush2.bf16.msra.mxu0 0
        %3270 = vmatprep.subr.bf16.mxu0 0
        %3271 = vmatpush2.bf16.msra.mxu0 0
        %3272 = vmatprep.subr.bf16.mxu0 0
        %3273 = vmatpush2.bf16.msra.mxu0 0
        %3274 = vmatprep.subr.bf16.mxu0 0
        %3275 = vmatpush2.bf16.msra.mxu0 0
        %3276 = vmatprep.subr.bf16.mxu0 0
        %3277 = vmatpush2.bf16.msra.mxu0 0
        %3278 = vmatprep.subr.bf16.mxu0 0
        %3279 = vmatpush2.bf16.msra.mxu0 0
        %3280 = vmatprep.subr.bf16.mxu0 0
        %3281 = vmatpush2.bf16.msra.mxu0 0
        %3282 = vmatprep.subr.bf16.mxu0 0
        %3283 = vmatpush2.bf16.msra.mxu0 0
        %3284 = vmatprep.mubr.bf16.mxu0 0
        %3285 = vmatmul.mubr.bf16.gmra.mxu0 %v3241
        %v3286 = vpop.f32.mrf.mxu0
        %v3287 = vadd.f32 0.0, %v3286
        %v3288 = vpop.f32.mrf.mxu0
        %v3289 = vpop.f32.mrf.mxu0
        %v3290 = vadd.f32 0.0, %v3289
        %v3291 = vpop.f32.mrf.mxu0
        %3292 = vmatprep.mubr.bf16.mxu0 0
        %3293 = vmatmul.mubr.bf16.gmra.mxu0 %v3244
        %v3294 = vpop.f32.mrf.mxu0
        %v3295 = vadd.f32 0.0, %v3294
        %v3296 = vpop.f32.mrf.mxu0
        %v3297 = vpop.f32.mrf.mxu0
        %v3298 = vadd.f32 0.0, %v3297
        %v3299 = vpop.f32.mrf.mxu0
        %3300 = vmatprep.mubr.bf16.mxu0 0
        %3301 = vmatmul.mubr.bf16.gmra.mxu0 %v3247
        %v3302 = vpop.f32.mrf.mxu0
        %v3303 = vadd.f32 0.0, %v3302
        %v3304 = vpop.f32.mrf.mxu0
        %v3305 = vpop.f32.mrf.mxu0
        %v3306 = vadd.f32 0.0, %v3305
        %v3307 = vpop.f32.mrf.mxu0
        %3308 = vmatprep.mubr.bf16.mxu0 0
        %3309 = vmatmul.mubr.bf16.gmra.mxu0 %v3250
        %v3310 = vpop.f32.mrf.mxu0
        %v3311 = vadd.f32 0.0, %v3310
        %v3312 = vpop.f32.mrf.mxu0
        %v3313 = vpop.f32.mrf.mxu0
        %v3314 = vadd.f32 0.0, %v3313
        %v3315 = vpop.f32.mrf.mxu0
        %3316 = vdwg.mxu0
        %v3317 = vadd.f32 %v3203, %v3287
        %v3318 = vadd.f32 %v3204, %v3290
        %v3319 = vadd.f32 %v3205, %v3295
        %v3320 = vadd.f32 %v3206, %v3298
        %v3321 = vadd.f32 %v3207, %v3303
        %v3322 = vadd.f32 %v3208, %v3306
        %v3323 = vadd.f32 %v3209, %v3311
        %v3324 = vadd.f32 %v3210, %v3314
        %v3325 = vld [vmem:[%s570 + $0x2] sm:$0xff]
        %v3326 = vld [vmem:[%s570 + $0x12] sm:$0xff]
        %v3327 = vld [vmem:[%s570 + $0x22] sm:$0xff]
        %v3328 = vld [vmem:[%s570 + $0x32] sm:$0xff]
        %v3329 = vld [vmem:[%s570 + $0x42] sm:$0xff]
        %v3330 = vld [vmem:[%s570 + $0x52] sm:$0xff]
        %v3331 = vld [vmem:[%s570 + $0x62] sm:$0xff]
        %v3332 = vld [vmem:[%s570 + $0x72] sm:$0xff]
        %v3333 = vpack.c.bf16 %v3326, %v3325
        %v3334 = vpack.c.bf16 %v3328, %v3327
        %v3335 = vpack.c.bf16 %v3330, %v3329
        %v3336 = vpack.c.bf16 %v3332, %v3331
        %s3337 = scalar_lea.vmem %s7, 80
        %v3338 = vld [vmem:[%s3337] sm:$0xf]
        %v3339 = vld [vmem:[%s3337 + $0x4] sm:$0xf]
        %v3340 = vld [vmem:[%s3337 + $0x8] sm:$0xf]
        %v3341 = vld [vmem:[%s3337 + $0xc] sm:$0xf]
        %v3346 = vunpack.c.l.b16 %v3338
        %v3347 = vunpack.c.l.b16 %v3339
        %v3348 = vunpack.c.l.b16 %v3340
        %v3349 = vunpack.c.l.b16 %v3341
        %v3350 = vpack.c.b16 %v3347, %v3346
        %v3351 = vpack.c.b16 %v3349, %v3348
        %v3355 = vsel %vm540, %v3333, 0
        %v3358 = vsel %vm540, %v3334, 0
        %v3361 = vsel %vm540, %v3335, 0
        %v3364 = vsel %vm540, %v3336, 0
        %3366 = vmatprep.subr.bf16.mxu0 0
        %3367 = vmatpush1.bf16.msra.mxu0 0
        %3368 = vmatprep.subr.bf16.mxu0 0
        %3369 = vmatpush1.bf16.msra.mxu0 0
        %3370 = vmatprep.subr.bf16.mxu0 0
        %3371 = vmatpush1.bf16.msra.mxu0 0
        %3372 = vmatprep.subr.bf16.mxu0 0
        %3373 = vmatpush1.bf16.msra.mxu0 0
        %3374 = vmatprep.subr.bf16.mxu0 0
        %3375 = vmatpush1.bf16.msra.mxu0 0
        %3376 = vmatprep.subr.bf16.mxu0 0
        %3377 = vmatpush1.bf16.msra.mxu0 0
        %3378 = vmatprep.subr.bf16.mxu0 0
        %3379 = vmatpush1.bf16.msra.mxu0 %v3351
        %3380 = vmatprep.subr.bf16.mxu0 0
        %3381 = vmatpush1.bf16.msra.mxu0 %v3350
        %3382 = vmatprep.subr.bf16.mxu0 0
        %3383 = vmatpush2.bf16.msra.mxu0 0
        %3384 = vmatprep.subr.bf16.mxu0 0
        %3385 = vmatpush2.bf16.msra.mxu0 0
        %3386 = vmatprep.subr.bf16.mxu0 0
        %3387 = vmatpush2.bf16.msra.mxu0 0
        %3388 = vmatprep.subr.bf16.mxu0 0
        %3389 = vmatpush2.bf16.msra.mxu0 0
        %3390 = vmatprep.subr.bf16.mxu0 0
        %3391 = vmatpush2.bf16.msra.mxu0 0
        %3392 = vmatprep.subr.bf16.mxu0 0
        %3393 = vmatpush2.bf16.msra.mxu0 0
        %3394 = vmatprep.subr.bf16.mxu0 0
        %3395 = vmatpush2.bf16.msra.mxu0 0
        %3396 = vmatprep.subr.bf16.mxu0 0
        %3397 = vmatpush2.bf16.msra.mxu0 0
        %3398 = vmatprep.mubr.bf16.mxu0 0
        %3399 = vmatmul.mubr.bf16.gmra.mxu0 %v3355
        %v3400 = vpop.f32.mrf.mxu0
        %v3401 = vadd.f32 0.0, %v3400
        %v3402 = vpop.f32.mrf.mxu0
        %v3403 = vpop.f32.mrf.mxu0
        %v3404 = vadd.f32 0.0, %v3403
        %v3405 = vpop.f32.mrf.mxu0
        %3406 = vmatprep.mubr.bf16.mxu0 0
        %3407 = vmatmul.mubr.bf16.gmra.mxu0 %v3358
        %v3408 = vpop.f32.mrf.mxu0
        %v3409 = vadd.f32 0.0, %v3408
        %v3410 = vpop.f32.mrf.mxu0
        %v3411 = vpop.f32.mrf.mxu0
        %v3412 = vadd.f32 0.0, %v3411
        %v3413 = vpop.f32.mrf.mxu0
        %3414 = vmatprep.mubr.bf16.mxu0 0
        %3415 = vmatmul.mubr.bf16.gmra.mxu0 %v3361
        %v3416 = vpop.f32.mrf.mxu0
        %v3417 = vadd.f32 0.0, %v3416
        %v3418 = vpop.f32.mrf.mxu0
        %v3419 = vpop.f32.mrf.mxu0
        %v3420 = vadd.f32 0.0, %v3419
        %v3421 = vpop.f32.mrf.mxu0
        %3422 = vmatprep.mubr.bf16.mxu0 0
        %3423 = vmatmul.mubr.bf16.gmra.mxu0 %v3364
        %v3424 = vpop.f32.mrf.mxu0
        %v3425 = vadd.f32 0.0, %v3424
        %v3426 = vpop.f32.mrf.mxu0
        %v3427 = vpop.f32.mrf.mxu0
        %v3428 = vadd.f32 0.0, %v3427
        %v3429 = vpop.f32.mrf.mxu0
        %3430 = vdwg.mxu0
        %v3431 = vadd.f32 %v3317, %v3401
        %v3432 = vadd.f32 %v3318, %v3404
        %v3433 = vadd.f32 %v3319, %v3409
        %v3434 = vadd.f32 %v3320, %v3412
        %v3435 = vadd.f32 %v3321, %v3417
        %v3436 = vadd.f32 %v3322, %v3420
        %v3437 = vadd.f32 %v3323, %v3425
        %v3438 = vadd.f32 %v3324, %v3428
        %v3439 = vld [vmem:[%s1246] sm:$0xff]
        %v3440 = vld [vmem:[%s1246 + $0x10] sm:$0xff]
        %v3441 = vld [vmem:[%s1246 + $0x20] sm:$0xff]
        %v3442 = vld [vmem:[%s1246 + $0x30] sm:$0xff]
        %v3443 = vld [vmem:[%s1246 + $0x40] sm:$0xff]
        %v3444 = vld [vmem:[%s1246 + $0x50] sm:$0xff]
        %v3445 = vld [vmem:[%s1246 + $0x60] sm:$0xff]
        %v3446 = vld [vmem:[%s1246 + $0x70] sm:$0xff]
        %v3447 = vpack.c.bf16 %v3440, %v3439
        %v3448 = vpack.c.bf16 %v3442, %v3441
        %v3449 = vpack.c.bf16 %v3444, %v3443
        %v3450 = vpack.c.bf16 %v3446, %v3445
        %s3451 = scalar_lea.vmem %s7, 96
        %v3452 = vld [vmem:[%s3451] sm:$0xf]
        %v3453 = vld [vmem:[%s3451 + $0x4] sm:$0xf]
        %v3454 = vld [vmem:[%s3451 + $0x8] sm:$0xf]
        %v3455 = vld [vmem:[%s3451 + $0xc] sm:$0xf]
        %v3460 = vunpack.c.l.b16 %v3452
        %v3461 = vunpack.c.l.b16 %v3453
        %v3462 = vunpack.c.l.b16 %v3454
        %v3463 = vunpack.c.l.b16 %v3455
        %v3464 = vpack.c.b16 %v3461, %v3460
        %v3465 = vpack.c.b16 %v3463, %v3462
        %v3469 = vsel %vm540, %v3447, 0
        %v3472 = vsel %vm540, %v3448, 0
        %v3475 = vsel %vm540, %v3449, 0
        %v3478 = vsel %vm540, %v3450, 0
        %3480 = vmatprep.subr.bf16.mxu0 0
        %3481 = vmatpush1.bf16.msra.mxu0 0
        %3482 = vmatprep.subr.bf16.mxu0 0
        %3483 = vmatpush1.bf16.msra.mxu0 0
        %3484 = vmatprep.subr.bf16.mxu0 0
        %3485 = vmatpush1.bf16.msra.mxu0 0
        %3486 = vmatprep.subr.bf16.mxu0 0
        %3487 = vmatpush1.bf16.msra.mxu0 0
        %3488 = vmatprep.subr.bf16.mxu0 0
        %3489 = vmatpush1.bf16.msra.mxu0 0
        %3490 = vmatprep.subr.bf16.mxu0 0
        %3491 = vmatpush1.bf16.msra.mxu0 0
        %3492 = vmatprep.subr.bf16.mxu0 0
        %3493 = vmatpush1.bf16.msra.mxu0 %v3465
        %3494 = vmatprep.subr.bf16.mxu0 0
        %3495 = vmatpush1.bf16.msra.mxu0 %v3464
        %3496 = vmatprep.subr.bf16.mxu0 0
        %3497 = vmatpush2.bf16.msra.mxu0 0
        %3498 = vmatprep.subr.bf16.mxu0 0
        %3499 = vmatpush2.bf16.msra.mxu0 0
        %3500 = vmatprep.subr.bf16.mxu0 0
        %3501 = vmatpush2.bf16.msra.mxu0 0
        %3502 = vmatprep.subr.bf16.mxu0 0
        %3503 = vmatpush2.bf16.msra.mxu0 0
        %3504 = vmatprep.subr.bf16.mxu0 0
        %3505 = vmatpush2.bf16.msra.mxu0 0
        %3506 = vmatprep.subr.bf16.mxu0 0
        %3507 = vmatpush2.bf16.msra.mxu0 0
        %3508 = vmatprep.subr.bf16.mxu0 0
        %3509 = vmatpush2.bf16.msra.mxu0 0
        %3510 = vmatprep.subr.bf16.mxu0 0
        %3511 = vmatpush2.bf16.msra.mxu0 0
        %3512 = vmatprep.mubr.bf16.mxu0 0
        %3513 = vmatmul.mubr.bf16.gmra.mxu0 %v3469
        %v3514 = vpop.f32.mrf.mxu0
        %v3515 = vadd.f32 0.0, %v3514
        %v3516 = vpop.f32.mrf.mxu0
        %v3517 = vpop.f32.mrf.mxu0
        %v3518 = vadd.f32 0.0, %v3517
        %v3519 = vpop.f32.mrf.mxu0
        %3520 = vmatprep.mubr.bf16.mxu0 0
        %3521 = vmatmul.mubr.bf16.gmra.mxu0 %v3472
        %v3522 = vpop.f32.mrf.mxu0
        %v3523 = vadd.f32 0.0, %v3522
        %v3524 = vpop.f32.mrf.mxu0
        %v3525 = vpop.f32.mrf.mxu0
        %v3526 = vadd.f32 0.0, %v3525
        %v3527 = vpop.f32.mrf.mxu0
        %3528 = vmatprep.mubr.bf16.mxu0 0
        %3529 = vmatmul.mubr.bf16.gmra.mxu0 %v3475
        %v3530 = vpop.f32.mrf.mxu0
        %v3531 = vadd.f32 0.0, %v3530
        %v3532 = vpop.f32.mrf.mxu0
        %v3533 = vpop.f32.mrf.mxu0
        %v3534 = vadd.f32 0.0, %v3533
        %v3535 = vpop.f32.mrf.mxu0
        %3536 = vmatprep.mubr.bf16.mxu0 0
        %3537 = vmatmul.mubr.bf16.gmra.mxu0 %v3478
        %v3538 = vpop.f32.mrf.mxu0
        %v3539 = vadd.f32 0.0, %v3538
        %v3540 = vpop.f32.mrf.mxu0
        %v3541 = vpop.f32.mrf.mxu0
        %v3542 = vadd.f32 0.0, %v3541
        %v3543 = vpop.f32.mrf.mxu0
        %3544 = vdwg.mxu0
        %v3545 = vadd.f32 %v3431, %v3515
        %v3546 = vadd.f32 %v3432, %v3518
        %v3547 = vadd.f32 %v3433, %v3523
        %v3548 = vadd.f32 %v3434, %v3526
        %v3549 = vadd.f32 %v3435, %v3531
        %v3550 = vadd.f32 %v3436, %v3534
        %v3551 = vadd.f32 %v3437, %v3539
        %v3552 = vadd.f32 %v3438, %v3542
        %v3553 = vld [vmem:[%s1246 + $0x1] sm:$0xff]
        %v3554 = vld [vmem:[%s1246 + $0x11] sm:$0xff]
        %v3555 = vld [vmem:[%s1246 + $0x21] sm:$0xff]
        %v3556 = vld [vmem:[%s1246 + $0x31] sm:$0xff]
        %v3557 = vld [vmem:[%s1246 + $0x41] sm:$0xff]
        %v3558 = vld [vmem:[%s1246 + $0x51] sm:$0xff]
        %v3559 = vld [vmem:[%s1246 + $0x61] sm:$0xff]
        %v3560 = vld [vmem:[%s1246 + $0x71] sm:$0xff]
        %v3561 = vpack.c.bf16 %v3554, %v3553
        %v3562 = vpack.c.bf16 %v3556, %v3555
        %v3563 = vpack.c.bf16 %v3558, %v3557
        %v3564 = vpack.c.bf16 %v3560, %v3559
        %s3565 = scalar_lea.vmem %s7, 112
        %v3566 = vld [vmem:[%s3565] sm:$0xf]
        %v3567 = vld [vmem:[%s3565 + $0x4] sm:$0xf]
        %v3568 = vld [vmem:[%s3565 + $0x8] sm:$0xf]
        %v3569 = vld [vmem:[%s3565 + $0xc] sm:$0xf]
        %v3574 = vunpack.c.l.b16 %v3566
        %v3575 = vunpack.c.l.b16 %v3567
        %v3576 = vunpack.c.l.b16 %v3568
        %v3577 = vunpack.c.l.b16 %v3569
        %v3578 = vpack.c.b16 %v3575, %v3574
        %v3579 = vpack.c.b16 %v3577, %v3576
        %v3583 = vsel %vm540, %v3561, 0
        %v3586 = vsel %vm540, %v3562, 0
        %v3589 = vsel %vm540, %v3563, 0
        %v3592 = vsel %vm540, %v3564, 0
        %3594 = vmatprep.subr.bf16.mxu0 0
        %3595 = vmatpush1.bf16.msra.mxu0 0
        %3596 = vmatprep.subr.bf16.mxu0 0
        %3597 = vmatpush1.bf16.msra.mxu0 0
        %3598 = vmatprep.subr.bf16.mxu0 0
        %3599 = vmatpush1.bf16.msra.mxu0 0
        %3600 = vmatprep.subr.bf16.mxu0 0
        %3601 = vmatpush1.bf16.msra.mxu0 0
        %3602 = vmatprep.subr.bf16.mxu0 0
        %3603 = vmatpush1.bf16.msra.mxu0 0
        %3604 = vmatprep.subr.bf16.mxu0 0
        %3605 = vmatpush1.bf16.msra.mxu0 0
        %3606 = vmatprep.subr.bf16.mxu0 0
        %3607 = vmatpush1.bf16.msra.mxu0 %v3579
        %3608 = vmatprep.subr.bf16.mxu0 0
        %3609 = vmatpush1.bf16.msra.mxu0 %v3578
        %3610 = vmatprep.subr.bf16.mxu0 0
        %3611 = vmatpush2.bf16.msra.mxu0 0
        %3612 = vmatprep.subr.bf16.mxu0 0
        %3613 = vmatpush2.bf16.msra.mxu0 0
        %3614 = vmatprep.subr.bf16.mxu0 0
        %3615 = vmatpush2.bf16.msra.mxu0 0
        %3616 = vmatprep.subr.bf16.mxu0 0
        %3617 = vmatpush2.bf16.msra.mxu0 0
        %3618 = vmatprep.subr.bf16.mxu0 0
        %3619 = vmatpush2.bf16.msra.mxu0 0
        %3620 = vmatprep.subr.bf16.mxu0 0
        %3621 = vmatpush2.bf16.msra.mxu0 0
        %3622 = vmatprep.subr.bf16.mxu0 0
        %3623 = vmatpush2.bf16.msra.mxu0 0
        %3624 = vmatprep.subr.bf16.mxu0 0
        %3625 = vmatpush2.bf16.msra.mxu0 0
        %3626 = vmatprep.mubr.bf16.mxu0 0
        %3627 = vmatmul.mubr.bf16.gmra.mxu0 %v3583
        %v3628 = vpop.f32.mrf.mxu0
        %v3629 = vadd.f32 0.0, %v3628
        %v3630 = vpop.f32.mrf.mxu0
        %v3631 = vpop.f32.mrf.mxu0
        %v3632 = vadd.f32 0.0, %v3631
        %v3633 = vpop.f32.mrf.mxu0
        %3634 = vmatprep.mubr.bf16.mxu0 0
        %3635 = vmatmul.mubr.bf16.gmra.mxu0 %v3586
        %v3636 = vpop.f32.mrf.mxu0
        %v3637 = vadd.f32 0.0, %v3636
        %v3638 = vpop.f32.mrf.mxu0
        %v3639 = vpop.f32.mrf.mxu0
        %v3640 = vadd.f32 0.0, %v3639
        %v3641 = vpop.f32.mrf.mxu0
        %3642 = vmatprep.mubr.bf16.mxu0 0
        %3643 = vmatmul.mubr.bf16.gmra.mxu0 %v3589
        %v3644 = vpop.f32.mrf.mxu0
        %v3645 = vadd.f32 0.0, %v3644
        %v3646 = vpop.f32.mrf.mxu0
        %v3647 = vpop.f32.mrf.mxu0
        %v3648 = vadd.f32 0.0, %v3647
        %v3649 = vpop.f32.mrf.mxu0
        %3650 = vmatprep.mubr.bf16.mxu0 0
        %3651 = vmatmul.mubr.bf16.gmra.mxu0 %v3592
        %v3652 = vpop.f32.mrf.mxu0
        %v3653 = vadd.f32 0.0, %v3652
        %v3654 = vpop.f32.mrf.mxu0
        %v3655 = vpop.f32.mrf.mxu0
        %v3656 = vadd.f32 0.0, %v3655
        %v3657 = vpop.f32.mrf.mxu0
        %3658 = vdwg.mxu0
        %v3659 = vadd.f32 %v3545, %v3629
        %v3660 = vadd.f32 %v3546, %v3632
        %v3661 = vadd.f32 %v3547, %v3637
        %v3662 = vadd.f32 %v3548, %v3640
        %v3663 = vadd.f32 %v3549, %v3645
        %v3664 = vadd.f32 %v3550, %v3648
        %v3665 = vadd.f32 %v3551, %v3653
        %v3666 = vadd.f32 %v3552, %v3656
        %v3667 = vld [vmem:[%s1246 + $0x2] sm:$0xff]
        %v3668 = vld [vmem:[%s1246 + $0x12] sm:$0xff]
        %v3669 = vld [vmem:[%s1246 + $0x22] sm:$0xff]
        %v3670 = vld [vmem:[%s1246 + $0x32] sm:$0xff]
        %v3671 = vld [vmem:[%s1246 + $0x42] sm:$0xff]
        %v3672 = vld [vmem:[%s1246 + $0x52] sm:$0xff]
        %v3673 = vld [vmem:[%s1246 + $0x62] sm:$0xff]
        %v3674 = vld [vmem:[%s1246 + $0x72] sm:$0xff]
        %v3675 = vpack.c.bf16 %v3668, %v3667
        %v3676 = vpack.c.bf16 %v3670, %v3669
        %v3677 = vpack.c.bf16 %v3672, %v3671
        %v3678 = vpack.c.bf16 %v3674, %v3673
        %s3679 = scalar_lea.vmem %s7, 128
        %v3680 = vld [vmem:[%s3679] sm:$0xf]
        %v3681 = vld [vmem:[%s3679 + $0x4] sm:$0xf]
        %v3682 = vld [vmem:[%s3679 + $0x8] sm:$0xf]
        %v3683 = vld [vmem:[%s3679 + $0xc] sm:$0xf]
        %v3688 = vunpack.c.l.b16 %v3680
        %v3689 = vunpack.c.l.b16 %v3681
        %v3690 = vunpack.c.l.b16 %v3682
        %v3691 = vunpack.c.l.b16 %v3683
        %v3692 = vpack.c.b16 %v3689, %v3688
        %v3693 = vpack.c.b16 %v3691, %v3690
        %v3697 = vsel %vm540, %v3675, 0
        %v3700 = vsel %vm540, %v3676, 0
        %v3703 = vsel %vm540, %v3677, 0
        %v3706 = vsel %vm540, %v3678, 0
        %3708 = vmatprep.subr.bf16.mxu0 0
        %3709 = vmatpush1.bf16.msra.mxu0 0
        %3710 = vmatprep.subr.bf16.mxu0 0
        %3711 = vmatpush1.bf16.msra.mxu0 0
        %3712 = vmatprep.subr.bf16.mxu0 0
        %3713 = vmatpush1.bf16.msra.mxu0 0
        %3714 = vmatprep.subr.bf16.mxu0 0
        %3715 = vmatpush1.bf16.msra.mxu0 0
        %3716 = vmatprep.subr.bf16.mxu0 0
        %3717 = vmatpush1.bf16.msra.mxu0 0
        %3718 = vmatprep.subr.bf16.mxu0 0
        %3719 = vmatpush1.bf16.msra.mxu0 0
        %3720 = vmatprep.subr.bf16.mxu0 0
        %3721 = vmatpush1.bf16.msra.mxu0 %v3693
        %3722 = vmatprep.subr.bf16.mxu0 0
        %3723 = vmatpush1.bf16.msra.mxu0 %v3692
        %3724 = vmatprep.subr.bf16.mxu0 0
        %3725 = vmatpush2.bf16.msra.mxu0 0
        %3726 = vmatprep.subr.bf16.mxu0 0
        %3727 = vmatpush2.bf16.msra.mxu0 0
        %3728 = vmatprep.subr.bf16.mxu0 0
        %3729 = vmatpush2.bf16.msra.mxu0 0
        %3730 = vmatprep.subr.bf16.mxu0 0
        %3731 = vmatpush2.bf16.msra.mxu0 0
        %3732 = vmatprep.subr.bf16.mxu0 0
        %3733 = vmatpush2.bf16.msra.mxu0 0
        %3734 = vmatprep.subr.bf16.mxu0 0
        %3735 = vmatpush2.bf16.msra.mxu0 0
        %3736 = vmatprep.subr.bf16.mxu0 0
        %3737 = vmatpush2.bf16.msra.mxu0 0
        %3738 = vmatprep.subr.bf16.mxu0 0
        %3739 = vmatpush2.bf16.msra.mxu0 0
        %3740 = vmatprep.mubr.bf16.mxu0 0
        %3741 = vmatmul.mubr.bf16.gmra.mxu0 %v3697
        %v3742 = vpop.f32.mrf.mxu0
        %v3743 = vadd.f32 0.0, %v3742
        %v3744 = vpop.f32.mrf.mxu0
        %v3745 = vpop.f32.mrf.mxu0
        %v3746 = vadd.f32 0.0, %v3745
        %v3747 = vpop.f32.mrf.mxu0
        %3748 = vmatprep.mubr.bf16.mxu0 0
        %3749 = vmatmul.mubr.bf16.gmra.mxu0 %v3700
        %v3750 = vpop.f32.mrf.mxu0
        %v3751 = vadd.f32 0.0, %v3750
        %v3752 = vpop.f32.mrf.mxu0
        %v3753 = vpop.f32.mrf.mxu0
        %v3754 = vadd.f32 0.0, %v3753
        %v3755 = vpop.f32.mrf.mxu0
        %3756 = vmatprep.mubr.bf16.mxu0 0
        %3757 = vmatmul.mubr.bf16.gmra.mxu0 %v3703
        %v3758 = vpop.f32.mrf.mxu0
        %v3759 = vadd.f32 0.0, %v3758
        %v3760 = vpop.f32.mrf.mxu0
        %v3761 = vpop.f32.mrf.mxu0
        %v3762 = vadd.f32 0.0, %v3761
        %v3763 = vpop.f32.mrf.mxu0
        %3764 = vmatprep.mubr.bf16.mxu0 0
        %3765 = vmatmul.mubr.bf16.gmra.mxu0 %v3706
        %v3766 = vpop.f32.mrf.mxu0
        %v3767 = vadd.f32 0.0, %v3766
        %v3768 = vpop.f32.mrf.mxu0
        %v3769 = vpop.f32.mrf.mxu0
        %v3770 = vadd.f32 0.0, %v3769
        %v3771 = vpop.f32.mrf.mxu0
        %3772 = vdwg.mxu0
        %v3773 = vadd.f32 %v3659, %v3743
        %v3774 = vadd.f32 %v3660, %v3746
        %v3775 = vadd.f32 %v3661, %v3751
        %v3776 = vadd.f32 %v3662, %v3754
        %v3777 = vadd.f32 %v3663, %v3759
        %v3778 = vadd.f32 %v3664, %v3762
        %v3779 = vadd.f32 %v3665, %v3767
        %v3780 = vadd.f32 %v3666, %v3770
        %v3781 = vld [vmem:[%s8] sm:$0x1]
        %v3783 = vlaneseq
        %v3784 = vshrl.u32 %v3783, 7
        %v3785 = vsub.s32 0, %v3784
        %v3786 = vrot.slane %v3781, %v3785
        %v3788 = vadd.f32 %v3773, %v3786
        %v3789 = vadd.f32 %v3774, %v3786
        %v3790 = vadd.f32 %v3775, %v3786
        %v3791 = vadd.f32 %v3776, %v3786
        %v3792 = vadd.f32 %v3777, %v3786
        %v3793 = vadd.f32 %v3778, %v3786
        %v3794 = vadd.f32 %v3779, %v3786
        %v3795 = vadd.f32 %v3780, %v3786
        %v3796 = vmax.f32 %v3788, 0.0
        %v3797 = vmax.f32 %v3789, 0.0
        %v3798 = vmax.f32 %v3790, 0.0
        %v3799 = vmax.f32 %v3791, 0.0
        %v3800 = vmax.f32 %v3792, 0.0
        %v3801 = vmax.f32 %v3793, 0.0
        %v3802 = vmax.f32 %v3794, 0.0
        %v3803 = vmax.f32 %v3795, 0.0
        %3804 = vst.msk [vmem:[%s570 + $0x1] sm:$0xff] %vm540, %v3796
        %3805 = vst.msk [vmem:[%s570 + $0x11] sm:$0xff] %vm540, %v3797
        %3806 = vst.msk [vmem:[%s570 + $0x21] sm:$0xff] %vm540, %v3798
        %3807 = vst.msk [vmem:[%s570 + $0x31] sm:$0xff] %vm540, %v3799
        %3808 = vst.msk [vmem:[%s570 + $0x41] sm:$0xff] %vm540, %v3800
        %3809 = vst.msk [vmem:[%s570 + $0x51] sm:$0xff] %vm540, %v3801
        %3810 = vst.msk [vmem:[%s570 + $0x61] sm:$0xff] %vm540, %v3802
        %3811 = vst.msk [vmem:[%s570 + $0x71] sm:$0xff] %vm540, %v3803
        %v3812 = vld [vmem:[#allocation2] sm:$0xff]
        %v3813 = vld [vmem:[#allocation2 + $0x10] sm:$0xff]
        %v3814 = vld [vmem:[#allocation2 + $0x20] sm:$0xff]
        %v3815 = vld [vmem:[#allocation2 + $0x30] sm:$0xff]
        %v3816 = vld [vmem:[#allocation2 + $0x40] sm:$0xff]
        %v3817 = vld [vmem:[#allocation2 + $0x50] sm:$0xff]
        %v3818 = vld [vmem:[#allocation2 + $0x60] sm:$0xff]
        %v3819 = vld [vmem:[#allocation2 + $0x70] sm:$0xff]
        %v3820 = vpack.c.bf16 %v3813, %v3812
        %v3821 = vpack.c.bf16 %v3815, %v3814
        %v3822 = vpack.c.bf16 %v3817, %v3816
        %v3823 = vpack.c.bf16 %v3819, %v3818
        %v3824 = vld [vmem:[#allocation3] sm:$0xf]
        %v3825 = vld [vmem:[#allocation3 + $0x4] sm:$0xf]
        %v3826 = vld [vmem:[#allocation3 + $0x8] sm:$0xf]
        %v3827 = vld [vmem:[#allocation3 + $0xc] sm:$0xf]
        %v3828 = vld [vmem:[#allocation2 + $0x1] sm:$0xff]
        %v3829 = vld [vmem:[#allocation2 + $0x11] sm:$0xff]
        %v3830 = vld [vmem:[#allocation2 + $0x21] sm:$0xff]
        %v3831 = vld [vmem:[#allocation2 + $0x31] sm:$0xff]
        %v3832 = vld [vmem:[#allocation2 + $0x41] sm:$0xff]
        %v3833 = vld [vmem:[#allocation2 + $0x51] sm:$0xff]
        %v3834 = vld [vmem:[#allocation2 + $0x61] sm:$0xff]
        %v3835 = vld [vmem:[#allocation2 + $0x71] sm:$0xff]
        %v3836 = vpack.c.bf16 %v3829, %v3828
        %v3837 = vpack.c.bf16 %v3831, %v3830
        %v3838 = vpack.c.bf16 %v3833, %v3832
        %v3839 = vpack.c.bf16 %v3835, %v3834
        %s3840 = scalar_lea.vmem [#allocation3], 16
        %v3841 = vld [vmem:[%s3840] sm:$0xf]
        %v3842 = vld [vmem:[%s3840 + $0x4] sm:$0xf]
        %v3843 = vld [vmem:[%s3840 + $0x8] sm:$0xf]
        %v3844 = vld [vmem:[%s3840 + $0xc] sm:$0xf]
        %v3849 = vunpack.c.l.b16 %v3841
        %v3850 = vunpack.c.l.b16 %v3842
        %v3851 = vunpack.c.l.b16 %v3843
        %v3852 = vunpack.c.l.b16 %v3844
        %v3853 = vpack.c.b16 %v3850, %v3849
        %v3854 = vpack.c.b16 %v3852, %v3851
        %v3858 = vsel %vm540, %v3836, 0
        %v3861 = vsel %vm540, %v3837, 0
        %v3864 = vsel %vm540, %v3838, 0
        %v3867 = vsel %vm540, %v3839, 0
        %3869 = vmatprep.subr.bf16.mxu0 0
        %3870 = vmatpush1.bf16.msra.mxu0 0
        %3871 = vmatprep.subr.bf16.mxu0 0
        %3872 = vmatpush1.bf16.msra.mxu0 0
        %3873 = vmatprep.subr.bf16.mxu0 0
        %3874 = vmatpush1.bf16.msra.mxu0 0
        %3875 = vmatprep.subr.bf16.mxu0 0
        %3876 = vmatpush1.bf16.msra.mxu0 0
        %3877 = vmatprep.subr.bf16.mxu0 0
        %3878 = vmatpush1.bf16.msra.mxu0 0
        %3879 = vmatprep.subr.bf16.mxu0 0
        %3880 = vmatpush1.bf16.msra.mxu0 0
        %3881 = vmatprep.subr.bf16.mxu0 0
        %3882 = vmatpush1.bf16.msra.mxu0 %v3854
        %3883 = vmatprep.subr.bf16.mxu0 0
        %3884 = vmatpush1.bf16.msra.mxu0 %v3853
        %3885 = vmatprep.subr.bf16.mxu0 0
        %3886 = vmatpush2.bf16.msra.mxu0 0
        %3887 = vmatprep.subr.bf16.mxu0 0
        %3888 = vmatpush2.bf16.msra.mxu0 0
        %3889 = vmatprep.subr.bf16.mxu0 0
        %3890 = vmatpush2.bf16.msra.mxu0 0
        %3891 = vmatprep.subr.bf16.mxu0 0
        %3892 = vmatpush2.bf16.msra.mxu0 0
        %3893 = vmatprep.subr.bf16.mxu0 0
        %3894 = vmatpush2.bf16.msra.mxu0 0
        %3895 = vmatprep.subr.bf16.mxu0 0
        %3896 = vmatpush2.bf16.msra.mxu0 0
        %3897 = vmatprep.subr.bf16.mxu0 0
        %3898 = vmatpush2.bf16.msra.mxu0 0
        %3899 = vmatprep.subr.bf16.mxu0 0
        %3900 = vmatpush2.bf16.msra.mxu0 0
        %3901 = vmatprep.mubr.bf16.mxu0 0
        %3902 = vmatmul.mubr.bf16.gmra.mxu0 %v3858
        %v3903 = vpop.f32.mrf.mxu0
        %v3904 = vadd.f32 0.0, %v3903
        %v3905 = vpop.f32.mrf.mxu0
        %v3906 = vpop.f32.mrf.mxu0
        %v3907 = vadd.f32 0.0, %v3906
        %v3908 = vpop.f32.mrf.mxu0
        %3909 = vmatprep.mubr.bf16.mxu0 0
        %3910 = vmatmul.mubr.bf16.gmra.mxu0 %v3861
        %v3911 = vpop.f32.mrf.mxu0
        %v3912 = vadd.f32 0.0, %v3911
        %v3913 = vpop.f32.mrf.mxu0
        %v3914 = vpop.f32.mrf.mxu0
        %v3915 = vadd.f32 0.0, %v3914
        %v3916 = vpop.f32.mrf.mxu0
        %3917 = vmatprep.mubr.bf16.mxu0 0
        %3918 = vmatmul.mubr.bf16.gmra.mxu0 %v3864
        %v3919 = vpop.f32.mrf.mxu0
        %v3920 = vadd.f32 0.0, %v3919
        %v3921 = vpop.f32.mrf.mxu0
        %v3922 = vpop.f32.mrf.mxu0
        %v3923 = vadd.f32 0.0, %v3922
        %v3924 = vpop.f32.mrf.mxu0
        %3925 = vmatprep.mubr.bf16.mxu0 0
        %3926 = vmatmul.mubr.bf16.gmra.mxu0 %v3867
        %v3927 = vpop.f32.mrf.mxu0
        %v3928 = vadd.f32 0.0, %v3927
        %v3929 = vpop.f32.mrf.mxu0
        %v3930 = vpop.f32.mrf.mxu0
        %v3931 = vadd.f32 0.0, %v3930
        %v3932 = vpop.f32.mrf.mxu0
        %3933 = vdwg.mxu0
        %v3938 = vunpack.c.l.b16 %v3824
        %v3939 = vunpack.c.l.b16 %v3825
        %v3940 = vunpack.c.l.b16 %v3826
        %v3941 = vunpack.c.l.b16 %v3827
        %v3942 = vpack.c.b16 %v3939, %v3938
        %v3943 = vpack.c.b16 %v3941, %v3940
        %v3947 = vsel %vm540, %v3820, 0
        %v3950 = vsel %vm540, %v3821, 0
        %v3953 = vsel %vm540, %v3822, 0
        %v3956 = vsel %vm540, %v3823, 0
        %3958 = vmatprep.subr.bf16.mxu0 0
        %3959 = vmatpush1.bf16.msra.mxu0 0
        %3960 = vmatprep.subr.bf16.mxu0 0
        %3961 = vmatpush1.bf16.msra.mxu0 0
        %3962 = vmatprep.subr.bf16.mxu0 0
        %3963 = vmatpush1.bf16.msra.mxu0 0
        %3964 = vmatprep.subr.bf16.mxu0 0
        %3965 = vmatpush1.bf16.msra.mxu0 0
        %3966 = vmatprep.subr.bf16.mxu0 0
        %3967 = vmatpush1.bf16.msra.mxu0 0
        %3968 = vmatprep.subr.bf16.mxu0 0
        %3969 = vmatpush1.bf16.msra.mxu0 0
        %3970 = vmatprep.subr.bf16.mxu0 0
        %3971 = vmatpush1.bf16.msra.mxu0 %v3943
        %3972 = vmatprep.subr.bf16.mxu0 0
        %3973 = vmatpush1.bf16.msra.mxu0 %v3942
        %3974 = vmatprep.subr.bf16.mxu0 0
        %3975 = vmatpush2.bf16.msra.mxu0 0
        %3976 = vmatprep.subr.bf16.mxu0 0
        %3977 = vmatpush2.bf16.msra.mxu0 0
        %3978 = vmatprep.subr.bf16.mxu0 0
        %3979 = vmatpush2.bf16.msra.mxu0 0
        %3980 = vmatprep.subr.bf16.mxu0 0
        %3981 = vmatpush2.bf16.msra.mxu0 0
        %3982 = vmatprep.subr.bf16.mxu0 0
        %3983 = vmatpush2.bf16.msra.mxu0 0
        %3984 = vmatprep.subr.bf16.mxu0 0
        %3985 = vmatpush2.bf16.msra.mxu0 0
        %3986 = vmatprep.subr.bf16.mxu0 0
        %3987 = vmatpush2.bf16.msra.mxu0 0
        %3988 = vmatprep.subr.bf16.mxu0 0
        %3989 = vmatpush2.bf16.msra.mxu0 0
        %3990 = vmatprep.mubr.bf16.mxu0 0
        %3991 = vmatmul.mubr.bf16.gmra.mxu0 %v3947
        %v3992 = vpop.f32.mrf.mxu0
        %v3993 = vadd.f32 %v3904, %v3992
        %v3994 = vpop.f32.mrf.mxu0
        %v3995 = vpop.f32.mrf.mxu0
        %v3996 = vadd.f32 %v3907, %v3995
        %v3997 = vpop.f32.mrf.mxu0
        %3998 = vmatprep.mubr.bf16.mxu0 0
        %3999 = vmatmul.mubr.bf16.gmra.mxu0 %v3950
        %v4000 = vpop.f32.mrf.mxu0
        %v4001 = vadd.f32 %v3912, %v4000
        %v4002 = vpop.f32.mrf.mxu0
        %v4003 = vpop.f32.mrf.mxu0
        %v4004 = vadd.f32 %v3915, %v4003
        %v4005 = vpop.f32.mrf.mxu0
        %4006 = vmatprep.mubr.bf16.mxu0 0
        %4007 = vmatmul.mubr.bf16.gmra.mxu0 %v3953
        %v4008 = vpop.f32.mrf.mxu0
        %v4009 = vadd.f32 %v3920, %v4008
        %v4010 = vpop.f32.mrf.mxu0
        %v4011 = vpop.f32.mrf.mxu0
        %v4012 = vadd.f32 %v3923, %v4011
        %v4013 = vpop.f32.mrf.mxu0
        %4014 = vmatprep.mubr.bf16.mxu0 0
        %4015 = vmatmul.mubr.bf16.gmra.mxu0 %v3956
        %v4016 = vpop.f32.mrf.mxu0
        %v4017 = vadd.f32 %v3928, %v4016
        %v4018 = vpop.f32.mrf.mxu0
        %v4019 = vpop.f32.mrf.mxu0
        %v4020 = vadd.f32 %v3931, %v4019
        %v4021 = vpop.f32.mrf.mxu0
        %4022 = vdwg.mxu0
        %v4023 = vld [vmem:[#allocation2 + $0x2] sm:$0xff]
        %v4024 = vld [vmem:[#allocation2 + $0x12] sm:$0xff]
        %v4025 = vld [vmem:[#allocation2 + $0x22] sm:$0xff]
        %v4026 = vld [vmem:[#allocation2 + $0x32] sm:$0xff]
        %v4027 = vld [vmem:[#allocation2 + $0x42] sm:$0xff]
        %v4028 = vld [vmem:[#allocation2 + $0x52] sm:$0xff]
        %v4029 = vld [vmem:[#allocation2 + $0x62] sm:$0xff]
        %v4030 = vld [vmem:[#allocation2 + $0x72] sm:$0xff]
        %v4031 = vpack.c.bf16 %v4024, %v4023
        %v4032 = vpack.c.bf16 %v4026, %v4025
        %v4033 = vpack.c.bf16 %v4028, %v4027
        %v4034 = vpack.c.bf16 %v4030, %v4029
        %s4035 = scalar_lea.vmem [#allocation3], 32
        %v4036 = vld [vmem:[%s4035] sm:$0xf]
        %v4037 = vld [vmem:[%s4035 + $0x4] sm:$0xf]
        %v4038 = vld [vmem:[%s4035 + $0x8] sm:$0xf]
        %v4039 = vld [vmem:[%s4035 + $0xc] sm:$0xf]
        %v4044 = vunpack.c.l.b16 %v4036
        %v4045 = vunpack.c.l.b16 %v4037
        %v4046 = vunpack.c.l.b16 %v4038
        %v4047 = vunpack.c.l.b16 %v4039
        %v4048 = vpack.c.b16 %v4045, %v4044
        %v4049 = vpack.c.b16 %v4047, %v4046
        %v4053 = vsel %vm540, %v4031, 0
        %v4056 = vsel %vm540, %v4032, 0
        %v4059 = vsel %vm540, %v4033, 0
        %v4062 = vsel %vm540, %v4034, 0
        %4064 = vmatprep.subr.bf16.mxu0 0
        %4065 = vmatpush1.bf16.msra.mxu0 0
        %4066 = vmatprep.subr.bf16.mxu0 0
        %4067 = vmatpush1.bf16.msra.mxu0 0
        %4068 = vmatprep.subr.bf16.mxu0 0
        %4069 = vmatpush1.bf16.msra.mxu0 0
        %4070 = vmatprep.subr.bf16.mxu0 0
        %4071 = vmatpush1.bf16.msra.mxu0 0
        %4072 = vmatprep.subr.bf16.mxu0 0
        %4073 = vmatpush1.bf16.msra.mxu0 0
        %4074 = vmatprep.subr.bf16.mxu0 0
        %4075 = vmatpush1.bf16.msra.mxu0 0
        %4076 = vmatprep.subr.bf16.mxu0 0
        %4077 = vmatpush1.bf16.msra.mxu0 %v4049
        %4078 = vmatprep.subr.bf16.mxu0 0
        %4079 = vmatpush1.bf16.msra.mxu0 %v4048
        %4080 = vmatprep.subr.bf16.mxu0 0
        %4081 = vmatpush2.bf16.msra.mxu0 0
        %4082 = vmatprep.subr.bf16.mxu0 0
        %4083 = vmatpush2.bf16.msra.mxu0 0
        %4084 = vmatprep.subr.bf16.mxu0 0
        %4085 = vmatpush2.bf16.msra.mxu0 0
        %4086 = vmatprep.subr.bf16.mxu0 0
        %4087 = vmatpush2.bf16.msra.mxu0 0
        %4088 = vmatprep.subr.bf16.mxu0 0
        %4089 = vmatpush2.bf16.msra.mxu0 0
        %4090 = vmatprep.subr.bf16.mxu0 0
        %4091 = vmatpush2.bf16.msra.mxu0 0
        %4092 = vmatprep.subr.bf16.mxu0 0
        %4093 = vmatpush2.bf16.msra.mxu0 0
        %4094 = vmatprep.subr.bf16.mxu0 0
        %4095 = vmatpush2.bf16.msra.mxu0 0
        %4096 = vmatprep.mubr.bf16.mxu0 0
        %4097 = vmatmul.mubr.bf16.gmra.mxu0 %v4053
        %v4098 = vpop.f32.mrf.mxu0
        %v4099 = vadd.f32 0.0, %v4098
        %v4100 = vpop.f32.mrf.mxu0
        %v4101 = vpop.f32.mrf.mxu0
        %v4102 = vadd.f32 0.0, %v4101
        %v4103 = vpop.f32.mrf.mxu0
        %4104 = vmatprep.mubr.bf16.mxu0 0
        %4105 = vmatmul.mubr.bf16.gmra.mxu0 %v4056
        %v4106 = vpop.f32.mrf.mxu0
        %v4107 = vadd.f32 0.0, %v4106
        %v4108 = vpop.f32.mrf.mxu0
        %v4109 = vpop.f32.mrf.mxu0
        %v4110 = vadd.f32 0.0, %v4109
        %v4111 = vpop.f32.mrf.mxu0
        %4112 = vmatprep.mubr.bf16.mxu0 0
        %4113 = vmatmul.mubr.bf16.gmra.mxu0 %v4059
        %v4114 = vpop.f32.mrf.mxu0
        %v4115 = vadd.f32 0.0, %v4114
        %v4116 = vpop.f32.mrf.mxu0
        %v4117 = vpop.f32.mrf.mxu0
        %v4118 = vadd.f32 0.0, %v4117
        %v4119 = vpop.f32.mrf.mxu0
        %4120 = vmatprep.mubr.bf16.mxu0 0
        %4121 = vmatmul.mubr.bf16.gmra.mxu0 %v4062
        %v4122 = vpop.f32.mrf.mxu0
        %v4123 = vadd.f32 0.0, %v4122
        %v4124 = vpop.f32.mrf.mxu0
        %v4125 = vpop.f32.mrf.mxu0
        %v4126 = vadd.f32 0.0, %v4125
        %v4127 = vpop.f32.mrf.mxu0
        %4128 = vdwg.mxu0
        %v4129 = vadd.f32 %v3993, %v4099
        %v4130 = vadd.f32 %v3996, %v4102
        %v4131 = vadd.f32 %v4001, %v4107
        %v4132 = vadd.f32 %v4004, %v4110
        %v4133 = vadd.f32 %v4009, %v4115
        %v4134 = vadd.f32 %v4012, %v4118
        %v4135 = vadd.f32 %v4017, %v4123
        %v4136 = vadd.f32 %v4020, %v4126
        %v4137 = vld [vmem:[%s570] sm:$0xff]
        %v4138 = vld [vmem:[%s570 + $0x10] sm:$0xff]
        %v4139 = vld [vmem:[%s570 + $0x20] sm:$0xff]
        %v4140 = vld [vmem:[%s570 + $0x30] sm:$0xff]
        %v4141 = vld [vmem:[%s570 + $0x40] sm:$0xff]
        %v4142 = vld [vmem:[%s570 + $0x50] sm:$0xff]
        %v4143 = vld [vmem:[%s570 + $0x60] sm:$0xff]
        %v4144 = vld [vmem:[%s570 + $0x70] sm:$0xff]
        %v4145 = vpack.c.bf16 %v4138, %v4137
        %v4146 = vpack.c.bf16 %v4140, %v4139
        %v4147 = vpack.c.bf16 %v4142, %v4141
        %v4148 = vpack.c.bf16 %v4144, %v4143
        %s4149 = scalar_lea.vmem [#allocation3], 48
        %v4150 = vld [vmem:[%s4149] sm:$0xf]
        %v4151 = vld [vmem:[%s4149 + $0x4] sm:$0xf]
        %v4152 = vld [vmem:[%s4149 + $0x8] sm:$0xf]
        %v4153 = vld [vmem:[%s4149 + $0xc] sm:$0xf]
        %v4158 = vunpack.c.l.b16 %v4150
        %v4159 = vunpack.c.l.b16 %v4151
        %v4160 = vunpack.c.l.b16 %v4152
        %v4161 = vunpack.c.l.b16 %v4153
        %v4162 = vpack.c.b16 %v4159, %v4158
        %v4163 = vpack.c.b16 %v4161, %v4160
        %v4167 = vsel %vm540, %v4145, 0
        %v4170 = vsel %vm540, %v4146, 0
        %v4173 = vsel %vm540, %v4147, 0
        %v4176 = vsel %vm540, %v4148, 0
        %4178 = vmatprep.subr.bf16.mxu0 0
        %4179 = vmatpush1.bf16.msra.mxu0 0
        %4180 = vmatprep.subr.bf16.mxu0 0
        %4181 = vmatpush1.bf16.msra.mxu0 0
        %4182 = vmatprep.subr.bf16.mxu0 0
        %4183 = vmatpush1.bf16.msra.mxu0 0
        %4184 = vmatprep.subr.bf16.mxu0 0
        %4185 = vmatpush1.bf16.msra.mxu0 0
        %4186 = vmatprep.subr.bf16.mxu0 0
        %4187 = vmatpush1.bf16.msra.mxu0 0
        %4188 = vmatprep.subr.bf16.mxu0 0
        %4189 = vmatpush1.bf16.msra.mxu0 0
        %4190 = vmatprep.subr.bf16.mxu0 0
        %4191 = vmatpush1.bf16.msra.mxu0 %v4163
        %4192 = vmatprep.subr.bf16.mxu0 0
        %4193 = vmatpush1.bf16.msra.mxu0 %v4162
        %4194 = vmatprep.subr.bf16.mxu0 0
        %4195 = vmatpush2.bf16.msra.mxu0 0
        %4196 = vmatprep.subr.bf16.mxu0 0
        %4197 = vmatpush2.bf16.msra.mxu0 0
        %4198 = vmatprep.subr.bf16.mxu0 0
        %4199 = vmatpush2.bf16.msra.mxu0 0
        %4200 = vmatprep.subr.bf16.mxu0 0
        %4201 = vmatpush2.bf16.msra.mxu0 0
        %4202 = vmatprep.subr.bf16.mxu0 0
        %4203 = vmatpush2.bf16.msra.mxu0 0
        %4204 = vmatprep.subr.bf16.mxu0 0
        %4205 = vmatpush2.bf16.msra.mxu0 0
        %4206 = vmatprep.subr.bf16.mxu0 0
        %4207 = vmatpush2.bf16.msra.mxu0 0
        %4208 = vmatprep.subr.bf16.mxu0 0
        %4209 = vmatpush2.bf16.msra.mxu0 0
        %4210 = vmatprep.mubr.bf16.mxu0 0
        %4211 = vmatmul.mubr.bf16.gmra.mxu0 %v4167
        %v4212 = vpop.f32.mrf.mxu0
        %v4213 = vadd.f32 0.0, %v4212
        %v4214 = vpop.f32.mrf.mxu0
        %v4215 = vpop.f32.mrf.mxu0
        %v4216 = vadd.f32 0.0, %v4215
        %v4217 = vpop.f32.mrf.mxu0
        %4218 = vmatprep.mubr.bf16.mxu0 0
        %4219 = vmatmul.mubr.bf16.gmra.mxu0 %v4170
        %v4220 = vpop.f32.mrf.mxu0
        %v4221 = vadd.f32 0.0, %v4220
        %v4222 = vpop.f32.mrf.mxu0
        %v4223 = vpop.f32.mrf.mxu0
        %v4224 = vadd.f32 0.0, %v4223
        %v4225 = vpop.f32.mrf.mxu0
        %4226 = vmatprep.mubr.bf16.mxu0 0
        %4227 = vmatmul.mubr.bf16.gmra.mxu0 %v4173
        %v4228 = vpop.f32.mrf.mxu0
        %v4229 = vadd.f32 0.0, %v4228
        %v4230 = vpop.f32.mrf.mxu0
        %v4231 = vpop.f32.mrf.mxu0
        %v4232 = vadd.f32 0.0, %v4231
        %v4233 = vpop.f32.mrf.mxu0
        %4234 = vmatprep.mubr.bf16.mxu0 0
        %4235 = vmatmul.mubr.bf16.gmra.mxu0 %v4176
        %v4236 = vpop.f32.mrf.mxu0
        %v4237 = vadd.f32 0.0, %v4236
        %v4238 = vpop.f32.mrf.mxu0
        %v4239 = vpop.f32.mrf.mxu0
        %v4240 = vadd.f32 0.0, %v4239
        %v4241 = vpop.f32.mrf.mxu0
        %4242 = vdwg.mxu0
        %v4243 = vadd.f32 %v4129, %v4213
        %v4244 = vadd.f32 %v4130, %v4216
        %v4245 = vadd.f32 %v4131, %v4221
        %v4246 = vadd.f32 %v4132, %v4224
        %v4247 = vadd.f32 %v4133, %v4229
        %v4248 = vadd.f32 %v4134, %v4232
        %v4249 = vadd.f32 %v4135, %v4237
        %v4250 = vadd.f32 %v4136, %v4240
        %v4251 = vld [vmem:[%s570 + $0x1] sm:$0xff]
        %v4252 = vld [vmem:[%s570 + $0x11] sm:$0xff]
        %v4253 = vld [vmem:[%s570 + $0x21] sm:$0xff]
        %v4254 = vld [vmem:[%s570 + $0x31] sm:$0xff]
        %v4255 = vld [vmem:[%s570 + $0x41] sm:$0xff]
        %v4256 = vld [vmem:[%s570 + $0x51] sm:$0xff]
        %v4257 = vld [vmem:[%s570 + $0x61] sm:$0xff]
        %v4258 = vld [vmem:[%s570 + $0x71] sm:$0xff]
        %v4259 = vpack.c.bf16 %v4252, %v4251
        %v4260 = vpack.c.bf16 %v4254, %v4253
        %v4261 = vpack.c.bf16 %v4256, %v4255
        %v4262 = vpack.c.bf16 %v4258, %v4257
        %s4263 = scalar_lea.vmem [#allocation3], 64
        %v4264 = vld [vmem:[%s4263] sm:$0xf]
        %v4265 = vld [vmem:[%s4263 + $0x4] sm:$0xf]
        %v4266 = vld [vmem:[%s4263 + $0x8] sm:$0xf]
        %v4267 = vld [vmem:[%s4263 + $0xc] sm:$0xf]
        %v4272 = vunpack.c.l.b16 %v4264
        %v4273 = vunpack.c.l.b16 %v4265
        %v4274 = vunpack.c.l.b16 %v4266
        %v4275 = vunpack.c.l.b16 %v4267
        %v4276 = vpack.c.b16 %v4273, %v4272
        %v4277 = vpack.c.b16 %v4275, %v4274
        %v4281 = vsel %vm540, %v4259, 0
        %v4284 = vsel %vm540, %v4260, 0
        %v4287 = vsel %vm540, %v4261, 0
        %v4290 = vsel %vm540, %v4262, 0
        %4292 = vmatprep.subr.bf16.mxu0 0
        %4293 = vmatpush1.bf16.msra.mxu0 0
        %4294 = vmatprep.subr.bf16.mxu0 0
        %4295 = vmatpush1.bf16.msra.mxu0 0
        %4296 = vmatprep.subr.bf16.mxu0 0
        %4297 = vmatpush1.bf16.msra.mxu0 0
        %4298 = vmatprep.subr.bf16.mxu0 0
        %4299 = vmatpush1.bf16.msra.mxu0 0
        %4300 = vmatprep.subr.bf16.mxu0 0
        %4301 = vmatpush1.bf16.msra.mxu0 0
        %4302 = vmatprep.subr.bf16.mxu0 0
        %4303 = vmatpush1.bf16.msra.mxu0 0
        %4304 = vmatprep.subr.bf16.mxu0 0
        %4305 = vmatpush1.bf16.msra.mxu0 %v4277
        %4306 = vmatprep.subr.bf16.mxu0 0
        %4307 = vmatpush1.bf16.msra.mxu0 %v4276
        %4308 = vmatprep.subr.bf16.mxu0 0
        %4309 = vmatpush2.bf16.msra.mxu0 0
        %4310 = vmatprep.subr.bf16.mxu0 0
        %4311 = vmatpush2.bf16.msra.mxu0 0
        %4312 = vmatprep.subr.bf16.mxu0 0
        %4313 = vmatpush2.bf16.msra.mxu0 0
        %4314 = vmatprep.subr.bf16.mxu0 0
        %4315 = vmatpush2.bf16.msra.mxu0 0
        %4316 = vmatprep.subr.bf16.mxu0 0
        %4317 = vmatpush2.bf16.msra.mxu0 0
        %4318 = vmatprep.subr.bf16.mxu0 0
        %4319 = vmatpush2.bf16.msra.mxu0 0
        %4320 = vmatprep.subr.bf16.mxu0 0
        %4321 = vmatpush2.bf16.msra.mxu0 0
        %4322 = vmatprep.subr.bf16.mxu0 0
        %4323 = vmatpush2.bf16.msra.mxu0 0
        %4324 = vmatprep.mubr.bf16.mxu0 0
        %4325 = vmatmul.mubr.bf16.gmra.mxu0 %v4281
        %v4326 = vpop.f32.mrf.mxu0
        %v4327 = vadd.f32 0.0, %v4326
        %v4328 = vpop.f32.mrf.mxu0
        %v4329 = vpop.f32.mrf.mxu0
        %v4330 = vadd.f32 0.0, %v4329
        %v4331 = vpop.f32.mrf.mxu0
        %4332 = vmatprep.mubr.bf16.mxu0 0
        %4333 = vmatmul.mubr.bf16.gmra.mxu0 %v4284
        %v4334 = vpop.f32.mrf.mxu0
        %v4335 = vadd.f32 0.0, %v4334
        %v4336 = vpop.f32.mrf.mxu0
        %v4337 = vpop.f32.mrf.mxu0
        %v4338 = vadd.f32 0.0, %v4337
        %v4339 = vpop.f32.mrf.mxu0
        %4340 = vmatprep.mubr.bf16.mxu0 0
        %4341 = vmatmul.mubr.bf16.gmra.mxu0 %v4287
        %v4342 = vpop.f32.mrf.mxu0
        %v4343 = vadd.f32 0.0, %v4342
        %v4344 = vpop.f32.mrf.mxu0
        %v4345 = vpop.f32.mrf.mxu0
        %v4346 = vadd.f32 0.0, %v4345
        %v4347 = vpop.f32.mrf.mxu0
        %4348 = vmatprep.mubr.bf16.mxu0 0
        %4349 = vmatmul.mubr.bf16.gmra.mxu0 %v4290
        %v4350 = vpop.f32.mrf.mxu0
        %v4351 = vadd.f32 0.0, %v4350
        %v4352 = vpop.f32.mrf.mxu0
        %v4353 = vpop.f32.mrf.mxu0
        %v4354 = vadd.f32 0.0, %v4353
        %v4355 = vpop.f32.mrf.mxu0
        %4356 = vdwg.mxu0
        %v4357 = vadd.f32 %v4243, %v4327
        %v4358 = vadd.f32 %v4244, %v4330
        %v4359 = vadd.f32 %v4245, %v4335
        %v4360 = vadd.f32 %v4246, %v4338
        %v4361 = vadd.f32 %v4247, %v4343
        %v4362 = vadd.f32 %v4248, %v4346
        %v4363 = vadd.f32 %v4249, %v4351
        %v4364 = vadd.f32 %v4250, %v4354
        %v4365 = vld [vmem:[%s570 + $0x2] sm:$0xff]
        %v4366 = vld [vmem:[%s570 + $0x12] sm:$0xff]
        %v4367 = vld [vmem:[%s570 + $0x22] sm:$0xff]
        %v4368 = vld [vmem:[%s570 + $0x32] sm:$0xff]
        %v4369 = vld [vmem:[%s570 + $0x42] sm:$0xff]
        %v4370 = vld [vmem:[%s570 + $0x52] sm:$0xff]
        %v4371 = vld [vmem:[%s570 + $0x62] sm:$0xff]
        %v4372 = vld [vmem:[%s570 + $0x72] sm:$0xff]
        %v4373 = vpack.c.bf16 %v4366, %v4365
        %v4374 = vpack.c.bf16 %v4368, %v4367
        %v4375 = vpack.c.bf16 %v4370, %v4369
        %v4376 = vpack.c.bf16 %v4372, %v4371
        %s4377 = scalar_lea.vmem [#allocation3], 80
        %v4378 = vld [vmem:[%s4377] sm:$0xf]
        %v4379 = vld [vmem:[%s4377 + $0x4] sm:$0xf]
        %v4380 = vld [vmem:[%s4377 + $0x8] sm:$0xf]
        %v4381 = vld [vmem:[%s4377 + $0xc] sm:$0xf]
        %v4386 = vunpack.c.l.b16 %v4378
        %v4387 = vunpack.c.l.b16 %v4379
        %v4388 = vunpack.c.l.b16 %v4380
        %v4389 = vunpack.c.l.b16 %v4381
        %v4390 = vpack.c.b16 %v4387, %v4386
        %v4391 = vpack.c.b16 %v4389, %v4388
        %v4395 = vsel %vm540, %v4373, 0
        %v4398 = vsel %vm540, %v4374, 0
        %v4401 = vsel %vm540, %v4375, 0
        %v4404 = vsel %vm540, %v4376, 0
        %4406 = vmatprep.subr.bf16.mxu0 0
        %4407 = vmatpush1.bf16.msra.mxu0 0
        %4408 = vmatprep.subr.bf16.mxu0 0
        %4409 = vmatpush1.bf16.msra.mxu0 0
        %4410 = vmatprep.subr.bf16.mxu0 0
        %4411 = vmatpush1.bf16.msra.mxu0 0
        %4412 = vmatprep.subr.bf16.mxu0 0
        %4413 = vmatpush1.bf16.msra.mxu0 0
        %4414 = vmatprep.subr.bf16.mxu0 0
        %4415 = vmatpush1.bf16.msra.mxu0 0
        %4416 = vmatprep.subr.bf16.mxu0 0
        %4417 = vmatpush1.bf16.msra.mxu0 0
        %4418 = vmatprep.subr.bf16.mxu0 0
        %4419 = vmatpush1.bf16.msra.mxu0 %v4391
        %4420 = vmatprep.subr.bf16.mxu0 0
        %4421 = vmatpush1.bf16.msra.mxu0 %v4390
        %4422 = vmatprep.subr.bf16.mxu0 0
        %4423 = vmatpush2.bf16.msra.mxu0 0
        %4424 = vmatprep.subr.bf16.mxu0 0
        %4425 = vmatpush2.bf16.msra.mxu0 0
        %4426 = vmatprep.subr.bf16.mxu0 0
        %4427 = vmatpush2.bf16.msra.mxu0 0
        %4428 = vmatprep.subr.bf16.mxu0 0
        %4429 = vmatpush2.bf16.msra.mxu0 0
        %4430 = vmatprep.subr.bf16.mxu0 0
        %4431 = vmatpush2.bf16.msra.mxu0 0
        %4432 = vmatprep.subr.bf16.mxu0 0
        %4433 = vmatpush2.bf16.msra.mxu0 0
        %4434 = vmatprep.subr.bf16.mxu0 0
        %4435 = vmatpush2.bf16.msra.mxu0 0
        %4436 = vmatprep.subr.bf16.mxu0 0
        %4437 = vmatpush2.bf16.msra.mxu0 0
        %4438 = vmatprep.mubr.bf16.mxu0 0
        %4439 = vmatmul.mubr.bf16.gmra.mxu0 %v4395
        %v4440 = vpop.f32.mrf.mxu0
        %v4441 = vadd.f32 0.0, %v4440
        %v4442 = vpop.f32.mrf.mxu0
        %v4443 = vpop.f32.mrf.mxu0
        %v4444 = vadd.f32 0.0, %v4443
        %v4445 = vpop.f32.mrf.mxu0
        %4446 = vmatprep.mubr.bf16.mxu0 0
        %4447 = vmatmul.mubr.bf16.gmra.mxu0 %v4398
        %v4448 = vpop.f32.mrf.mxu0
        %v4449 = vadd.f32 0.0, %v4448
        %v4450 = vpop.f32.mrf.mxu0
        %v4451 = vpop.f32.mrf.mxu0
        %v4452 = vadd.f32 0.0, %v4451
        %v4453 = vpop.f32.mrf.mxu0
        %4454 = vmatprep.mubr.bf16.mxu0 0
        %4455 = vmatmul.mubr.bf16.gmra.mxu0 %v4401
        %v4456 = vpop.f32.mrf.mxu0
        %v4457 = vadd.f32 0.0, %v4456
        %v4458 = vpop.f32.mrf.mxu0
        %v4459 = vpop.f32.mrf.mxu0
        %v4460 = vadd.f32 0.0, %v4459
        %v4461 = vpop.f32.mrf.mxu0
        %4462 = vmatprep.mubr.bf16.mxu0 0
        %4463 = vmatmul.mubr.bf16.gmra.mxu0 %v4404
        %v4464 = vpop.f32.mrf.mxu0
        %v4465 = vadd.f32 0.0, %v4464
        %v4466 = vpop.f32.mrf.mxu0
        %v4467 = vpop.f32.mrf.mxu0
        %v4468 = vadd.f32 0.0, %v4467
        %v4469 = vpop.f32.mrf.mxu0
        %4470 = vdwg.mxu0
        %v4471 = vadd.f32 %v4357, %v4441
        %v4472 = vadd.f32 %v4358, %v4444
        %v4473 = vadd.f32 %v4359, %v4449
        %v4474 = vadd.f32 %v4360, %v4452
        %v4475 = vadd.f32 %v4361, %v4457
        %v4476 = vadd.f32 %v4362, %v4460
        %v4477 = vadd.f32 %v4363, %v4465
        %v4478 = vadd.f32 %v4364, %v4468
        %v4479 = vld [vmem:[%s1246] sm:$0xff]
        %v4480 = vld [vmem:[%s1246 + $0x10] sm:$0xff]
        %v4481 = vld [vmem:[%s1246 + $0x20] sm:$0xff]
        %v4482 = vld [vmem:[%s1246 + $0x30] sm:$0xff]
        %v4483 = vld [vmem:[%s1246 + $0x40] sm:$0xff]
        %v4484 = vld [vmem:[%s1246 + $0x50] sm:$0xff]
        %v4485 = vld [vmem:[%s1246 + $0x60] sm:$0xff]
        %v4486 = vld [vmem:[%s1246 + $0x70] sm:$0xff]
        %v4487 = vpack.c.bf16 %v4480, %v4479
        %v4488 = vpack.c.bf16 %v4482, %v4481
        %v4489 = vpack.c.bf16 %v4484, %v4483
        %v4490 = vpack.c.bf16 %v4486, %v4485
        %s4491 = scalar_lea.vmem [#allocation3], 96
        %v4492 = vld [vmem:[%s4491] sm:$0xf]
        %v4493 = vld [vmem:[%s4491 + $0x4] sm:$0xf]
        %v4494 = vld [vmem:[%s4491 + $0x8] sm:$0xf]
        %v4495 = vld [vmem:[%s4491 + $0xc] sm:$0xf]
        %v4500 = vunpack.c.l.b16 %v4492
        %v4501 = vunpack.c.l.b16 %v4493
        %v4502 = vunpack.c.l.b16 %v4494
        %v4503 = vunpack.c.l.b16 %v4495
        %v4504 = vpack.c.b16 %v4501, %v4500
        %v4505 = vpack.c.b16 %v4503, %v4502
        %v4509 = vsel %vm540, %v4487, 0
        %v4512 = vsel %vm540, %v4488, 0
        %v4515 = vsel %vm540, %v4489, 0
        %v4518 = vsel %vm540, %v4490, 0
        %4520 = vmatprep.subr.bf16.mxu0 0
        %4521 = vmatpush1.bf16.msra.mxu0 0
        %4522 = vmatprep.subr.bf16.mxu0 0
        %4523 = vmatpush1.bf16.msra.mxu0 0
        %4524 = vmatprep.subr.bf16.mxu0 0
        %4525 = vmatpush1.bf16.msra.mxu0 0
        %4526 = vmatprep.subr.bf16.mxu0 0
        %4527 = vmatpush1.bf16.msra.mxu0 0
        %4528 = vmatprep.subr.bf16.mxu0 0
        %4529 = vmatpush1.bf16.msra.mxu0 0
        %4530 = vmatprep.subr.bf16.mxu0 0
        %4531 = vmatpush1.bf16.msra.mxu0 0
        %4532 = vmatprep.subr.bf16.mxu0 0
        %4533 = vmatpush1.bf16.msra.mxu0 %v4505
        %4534 = vmatprep.subr.bf16.mxu0 0
        %4535 = vmatpush1.bf16.msra.mxu0 %v4504
        %4536 = vmatprep.subr.bf16.mxu0 0
        %4537 = vmatpush2.bf16.msra.mxu0 0
        %4538 = vmatprep.subr.bf16.mxu0 0
        %4539 = vmatpush2.bf16.msra.mxu0 0
        %4540 = vmatprep.subr.bf16.mxu0 0
        %4541 = vmatpush2.bf16.msra.mxu0 0
        %4542 = vmatprep.subr.bf16.mxu0 0
        %4543 = vmatpush2.bf16.msra.mxu0 0
        %4544 = vmatprep.subr.bf16.mxu0 0
        %4545 = vmatpush2.bf16.msra.mxu0 0
        %4546 = vmatprep.subr.bf16.mxu0 0
        %4547 = vmatpush2.bf16.msra.mxu0 0
        %4548 = vmatprep.subr.bf16.mxu0 0
        %4549 = vmatpush2.bf16.msra.mxu0 0
        %4550 = vmatprep.subr.bf16.mxu0 0
        %4551 = vmatpush2.bf16.msra.mxu0 0
        %4552 = vmatprep.mubr.bf16.mxu0 0
        %4553 = vmatmul.mubr.bf16.gmra.mxu0 %v4509
        %v4554 = vpop.f32.mrf.mxu0
        %v4555 = vadd.f32 0.0, %v4554
        %v4556 = vpop.f32.mrf.mxu0
        %v4557 = vpop.f32.mrf.mxu0
        %v4558 = vadd.f32 0.0, %v4557
        %v4559 = vpop.f32.mrf.mxu0
        %4560 = vmatprep.mubr.bf16.mxu0 0
        %4561 = vmatmul.mubr.bf16.gmra.mxu0 %v4512
        %v4562 = vpop.f32.mrf.mxu0
        %v4563 = vadd.f32 0.0, %v4562
        %v4564 = vpop.f32.mrf.mxu0
        %v4565 = vpop.f32.mrf.mxu0
        %v4566 = vadd.f32 0.0, %v4565
        %v4567 = vpop.f32.mrf.mxu0
        %4568 = vmatprep.mubr.bf16.mxu0 0
        %4569 = vmatmul.mubr.bf16.gmra.mxu0 %v4515
        %v4570 = vpop.f32.mrf.mxu0
        %v4571 = vadd.f32 0.0, %v4570
        %v4572 = vpop.f32.mrf.mxu0
        %v4573 = vpop.f32.mrf.mxu0
        %v4574 = vadd.f32 0.0, %v4573
        %v4575 = vpop.f32.mrf.mxu0
        %4576 = vmatprep.mubr.bf16.mxu0 0
        %4577 = vmatmul.mubr.bf16.gmra.mxu0 %v4518
        %v4578 = vpop.f32.mrf.mxu0
        %v4579 = vadd.f32 0.0, %v4578
        %v4580 = vpop.f32.mrf.mxu0
        %v4581 = vpop.f32.mrf.mxu0
        %v4582 = vadd.f32 0.0, %v4581
        %v4583 = vpop.f32.mrf.mxu0
        %4584 = vdwg.mxu0
        %v4585 = vadd.f32 %v4471, %v4555
        %v4586 = vadd.f32 %v4472, %v4558
        %v4587 = vadd.f32 %v4473, %v4563
        %v4588 = vadd.f32 %v4474, %v4566
        %v4589 = vadd.f32 %v4475, %v4571
        %v4590 = vadd.f32 %v4476, %v4574
        %v4591 = vadd.f32 %v4477, %v4579
        %v4592 = vadd.f32 %v4478, %v4582
        %v4593 = vld [vmem:[%s1246 + $0x1] sm:$0xff]
        %v4594 = vld [vmem:[%s1246 + $0x11] sm:$0xff]
        %v4595 = vld [vmem:[%s1246 + $0x21] sm:$0xff]
        %v4596 = vld [vmem:[%s1246 + $0x31] sm:$0xff]
        %v4597 = vld [vmem:[%s1246 + $0x41] sm:$0xff]
        %v4598 = vld [vmem:[%s1246 + $0x51] sm:$0xff]
        %v4599 = vld [vmem:[%s1246 + $0x61] sm:$0xff]
        %v4600 = vld [vmem:[%s1246 + $0x71] sm:$0xff]
        %v4601 = vpack.c.bf16 %v4594, %v4593
        %v4602 = vpack.c.bf16 %v4596, %v4595
        %v4603 = vpack.c.bf16 %v4598, %v4597
        %v4604 = vpack.c.bf16 %v4600, %v4599
        %s4605 = scalar_lea.vmem [#allocation3], 112
        %v4606 = vld [vmem:[%s4605] sm:$0xf]
        %v4607 = vld [vmem:[%s4605 + $0x4] sm:$0xf]
        %v4608 = vld [vmem:[%s4605 + $0x8] sm:$0xf]
        %v4609 = vld [vmem:[%s4605 + $0xc] sm:$0xf]
        %v4614 = vunpack.c.l.b16 %v4606
        %v4615 = vunpack.c.l.b16 %v4607
        %v4616 = vunpack.c.l.b16 %v4608
        %v4617 = vunpack.c.l.b16 %v4609
        %v4618 = vpack.c.b16 %v4615, %v4614
        %v4619 = vpack.c.b16 %v4617, %v4616
        %v4623 = vsel %vm540, %v4601, 0
        %v4626 = vsel %vm540, %v4602, 0
        %v4629 = vsel %vm540, %v4603, 0
        %v4632 = vsel %vm540, %v4604, 0
        %4634 = vmatprep.subr.bf16.mxu0 0
        %4635 = vmatpush1.bf16.msra.mxu0 0
        %4636 = vmatprep.subr.bf16.mxu0 0
        %4637 = vmatpush1.bf16.msra.mxu0 0
        %4638 = vmatprep.subr.bf16.mxu0 0
        %4639 = vmatpush1.bf16.msra.mxu0 0
        %4640 = vmatprep.subr.bf16.mxu0 0
        %4641 = vmatpush1.bf16.msra.mxu0 0
        %4642 = vmatprep.subr.bf16.mxu0 0
        %4643 = vmatpush1.bf16.msra.mxu0 0
        %4644 = vmatprep.subr.bf16.mxu0 0
        %4645 = vmatpush1.bf16.msra.mxu0 0
        %4646 = vmatprep.subr.bf16.mxu0 0
        %4647 = vmatpush1.bf16.msra.mxu0 %v4619
        %4648 = vmatprep.subr.bf16.mxu0 0
        %4649 = vmatpush1.bf16.msra.mxu0 %v4618
        %4650 = vmatprep.subr.bf16.mxu0 0
        %4651 = vmatpush2.bf16.msra.mxu0 0
        %4652 = vmatprep.subr.bf16.mxu0 0
        %4653 = vmatpush2.bf16.msra.mxu0 0
        %4654 = vmatprep.subr.bf16.mxu0 0
        %4655 = vmatpush2.bf16.msra.mxu0 0
        %4656 = vmatprep.subr.bf16.mxu0 0
        %4657 = vmatpush2.bf16.msra.mxu0 0
        %4658 = vmatprep.subr.bf16.mxu0 0
        %4659 = vmatpush2.bf16.msra.mxu0 0
        %4660 = vmatprep.subr.bf16.mxu0 0
        %4661 = vmatpush2.bf16.msra.mxu0 0
        %4662 = vmatprep.subr.bf16.mxu0 0
        %4663 = vmatpush2.bf16.msra.mxu0 0
        %4664 = vmatprep.subr.bf16.mxu0 0
        %4665 = vmatpush2.bf16.msra.mxu0 0
        %4666 = vmatprep.mubr.bf16.mxu0 0
        %4667 = vmatmul.mubr.bf16.gmra.mxu0 %v4623
        %v4668 = vpop.f32.mrf.mxu0
        %v4669 = vadd.f32 0.0, %v4668
        %v4670 = vpop.f32.mrf.mxu0
        %v4671 = vpop.f32.mrf.mxu0
        %v4672 = vadd.f32 0.0, %v4671
        %v4673 = vpop.f32.mrf.mxu0
        %4674 = vmatprep.mubr.bf16.mxu0 0
        %4675 = vmatmul.mubr.bf16.gmra.mxu0 %v4626
        %v4676 = vpop.f32.mrf.mxu0
        %v4677 = vadd.f32 0.0, %v4676
        %v4678 = vpop.f32.mrf.mxu0
        %v4679 = vpop.f32.mrf.mxu0
        %v4680 = vadd.f32 0.0, %v4679
        %v4681 = vpop.f32.mrf.mxu0
        %4682 = vmatprep.mubr.bf16.mxu0 0
        %4683 = vmatmul.mubr.bf16.gmra.mxu0 %v4629
        %v4684 = vpop.f32.mrf.mxu0
        %v4685 = vadd.f32 0.0, %v4684
        %v4686 = vpop.f32.mrf.mxu0
        %v4687 = vpop.f32.mrf.mxu0
        %v4688 = vadd.f32 0.0, %v4687
        %v4689 = vpop.f32.mrf.mxu0
        %4690 = vmatprep.mubr.bf16.mxu0 0
        %4691 = vmatmul.mubr.bf16.gmra.mxu0 %v4632
        %v4692 = vpop.f32.mrf.mxu0
        %v4693 = vadd.f32 0.0, %v4692
        %v4694 = vpop.f32.mrf.mxu0
        %v4695 = vpop.f32.mrf.mxu0
        %v4696 = vadd.f32 0.0, %v4695
        %v4697 = vpop.f32.mrf.mxu0
        %4698 = vdwg.mxu0
        %v4699 = vadd.f32 %v4585, %v4669
        %v4700 = vadd.f32 %v4586, %v4672
        %v4701 = vadd.f32 %v4587, %v4677
        %v4702 = vadd.f32 %v4588, %v4680
        %v4703 = vadd.f32 %v4589, %v4685
        %v4704 = vadd.f32 %v4590, %v4688
        %v4705 = vadd.f32 %v4591, %v4693
        %v4706 = vadd.f32 %v4592, %v4696
        %v4707 = vld [vmem:[%s1246 + $0x2] sm:$0xff]
        %v4708 = vld [vmem:[%s1246 + $0x12] sm:$0xff]
        %v4709 = vld [vmem:[%s1246 + $0x22] sm:$0xff]
        %v4710 = vld [vmem:[%s1246 + $0x32] sm:$0xff]
        %v4711 = vld [vmem:[%s1246 + $0x42] sm:$0xff]
        %v4712 = vld [vmem:[%s1246 + $0x52] sm:$0xff]
        %v4713 = vld [vmem:[%s1246 + $0x62] sm:$0xff]
        %v4714 = vld [vmem:[%s1246 + $0x72] sm:$0xff]
        %v4715 = vpack.c.bf16 %v4708, %v4707
        %v4716 = vpack.c.bf16 %v4710, %v4709
        %v4717 = vpack.c.bf16 %v4712, %v4711
        %v4718 = vpack.c.bf16 %v4714, %v4713
        %s4719 = scalar_lea.vmem [#allocation3], 128
        %v4720 = vld [vmem:[%s4719] sm:$0xf]
        %v4721 = vld [vmem:[%s4719 + $0x4] sm:$0xf]
        %v4722 = vld [vmem:[%s4719 + $0x8] sm:$0xf]
        %v4723 = vld [vmem:[%s4719 + $0xc] sm:$0xf]
        %v4728 = vunpack.c.l.b16 %v4720
        %v4729 = vunpack.c.l.b16 %v4721
        %v4730 = vunpack.c.l.b16 %v4722
        %v4731 = vunpack.c.l.b16 %v4723
        %v4732 = vpack.c.b16 %v4729, %v4728
        %v4733 = vpack.c.b16 %v4731, %v4730
        %v4737 = vsel %vm540, %v4715, 0
        %v4740 = vsel %vm540, %v4716, 0
        %v4743 = vsel %vm540, %v4717, 0
        %v4746 = vsel %vm540, %v4718, 0
        %4748 = vmatprep.subr.bf16.mxu0 0
        %4749 = vmatpush1.bf16.msra.mxu0 0
        %4750 = vmatprep.subr.bf16.mxu0 0
        %4751 = vmatpush1.bf16.msra.mxu0 0
        %4752 = vmatprep.subr.bf16.mxu0 0
        %4753 = vmatpush1.bf16.msra.mxu0 0
        %4754 = vmatprep.subr.bf16.mxu0 0
        %4755 = vmatpush1.bf16.msra.mxu0 0
        %4756 = vmatprep.subr.bf16.mxu0 0
        %4757 = vmatpush1.bf16.msra.mxu0 0
        %4758 = vmatprep.subr.bf16.mxu0 0
        %4759 = vmatpush1.bf16.msra.mxu0 0
        %4760 = vmatprep.subr.bf16.mxu0 0
        %4761 = vmatpush1.bf16.msra.mxu0 %v4733
        %4762 = vmatprep.subr.bf16.mxu0 0
        %4763 = vmatpush1.bf16.msra.mxu0 %v4732
        %4764 = vmatprep.subr.bf16.mxu0 0
        %4765 = vmatpush2.bf16.msra.mxu0 0
        %4766 = vmatprep.subr.bf16.mxu0 0
        %4767 = vmatpush2.bf16.msra.mxu0 0
        %4768 = vmatprep.subr.bf16.mxu0 0
        %4769 = vmatpush2.bf16.msra.mxu0 0
        %4770 = vmatprep.subr.bf16.mxu0 0
        %4771 = vmatpush2.bf16.msra.mxu0 0
        %4772 = vmatprep.subr.bf16.mxu0 0
        %4773 = vmatpush2.bf16.msra.mxu0 0
        %4774 = vmatprep.subr.bf16.mxu0 0
        %4775 = vmatpush2.bf16.msra.mxu0 0
        %4776 = vmatprep.subr.bf16.mxu0 0
        %4777 = vmatpush2.bf16.msra.mxu0 0
        %4778 = vmatprep.subr.bf16.mxu0 0
        %4779 = vmatpush2.bf16.msra.mxu0 0
        %4780 = vmatprep.mubr.bf16.mxu0 0
        %4781 = vmatmul.mubr.bf16.gmra.mxu0 %v4737
        %v4782 = vpop.f32.mrf.mxu0
        %v4783 = vadd.f32 0.0, %v4782
        %v4784 = vpop.f32.mrf.mxu0
        %v4785 = vpop.f32.mrf.mxu0
        %v4786 = vadd.f32 0.0, %v4785
        %v4787 = vpop.f32.mrf.mxu0
        %4788 = vmatprep.mubr.bf16.mxu0 0
        %4789 = vmatmul.mubr.bf16.gmra.mxu0 %v4740
        %v4790 = vpop.f32.mrf.mxu0
        %v4791 = vadd.f32 0.0, %v4790
        %v4792 = vpop.f32.mrf.mxu0
        %v4793 = vpop.f32.mrf.mxu0
        %v4794 = vadd.f32 0.0, %v4793
        %v4795 = vpop.f32.mrf.mxu0
        %4796 = vmatprep.mubr.bf16.mxu0 0
        %4797 = vmatmul.mubr.bf16.gmra.mxu0 %v4743
        %v4798 = vpop.f32.mrf.mxu0
        %v4799 = vadd.f32 0.0, %v4798
        %v4800 = vpop.f32.mrf.mxu0
        %v4801 = vpop.f32.mrf.mxu0
        %v4802 = vadd.f32 0.0, %v4801
        %v4803 = vpop.f32.mrf.mxu0
        %4804 = vmatprep.mubr.bf16.mxu0 0
        %4805 = vmatmul.mubr.bf16.gmra.mxu0 %v4746
        %v4806 = vpop.f32.mrf.mxu0
        %v4807 = vadd.f32 0.0, %v4806
        %v4808 = vpop.f32.mrf.mxu0
        %v4809 = vpop.f32.mrf.mxu0
        %v4810 = vadd.f32 0.0, %v4809
        %v4811 = vpop.f32.mrf.mxu0
        %4812 = vdwg.mxu0
        %v4813 = vadd.f32 %v4699, %v4783
        %v4814 = vadd.f32 %v4700, %v4786
        %v4815 = vadd.f32 %v4701, %v4791
        %v4816 = vadd.f32 %v4702, %v4794
        %v4817 = vadd.f32 %v4703, %v4799
        %v4818 = vadd.f32 %v4704, %v4802
        %v4819 = vadd.f32 %v4705, %v4807
        %v4820 = vadd.f32 %v4706, %v4810
        %v4821 = vld [vmem:[%s10] sm:$0x1]
        %v4823 = vlaneseq
        %v4824 = vshrl.u32 %v4823, 7
        %v4825 = vsub.s32 0, %v4824
        %v4826 = vrot.slane %v4821, %v4825
        %v4828 = vadd.f32 %v4813, %v4826
        %v4829 = vadd.f32 %v4814, %v4826
        %v4830 = vadd.f32 %v4815, %v4826
        %v4831 = vadd.f32 %v4816, %v4826
        %v4832 = vadd.f32 %v4817, %v4826
        %v4833 = vadd.f32 %v4818, %v4826
        %v4834 = vadd.f32 %v4819, %v4826
        %v4835 = vadd.f32 %v4820, %v4826
        %v4836 = vadd.f32 %v4828, %v2756
        %v4837 = vadd.f32 %v4829, %v2757
        %v4838 = vadd.f32 %v4830, %v2758
        %v4839 = vadd.f32 %v4831, %v2759
        %v4840 = vadd.f32 %v4832, %v2760
        %v4841 = vadd.f32 %v4833, %v2761
        %v4842 = vadd.f32 %v4834, %v2762
        %v4843 = vadd.f32 %v4835, %v2763
        %v4844 = vmax.f32 %v4836, 0.0
        %v4845 = vmax.f32 %v4837, 0.0
        %v4846 = vmax.f32 %v4838, 0.0
        %v4847 = vmax.f32 %v4839, 0.0
        %v4848 = vmax.f32 %v4840, 0.0
        %v4849 = vmax.f32 %v4841, 0.0
        %v4850 = vmax.f32 %v4842, 0.0
        %v4851 = vmax.f32 %v4843, 0.0
        %4852 = vst.msk [vmem:[%s570 + $0x1] sm:$0xff] %vm540, %v4844
        %4853 = vst.msk [vmem:[%s570 + $0x11] sm:$0xff] %vm540, %v4845
        %4854 = vst.msk [vmem:[%s570 + $0x21] sm:$0xff] %vm540, %v4846
        %4855 = vst.msk [vmem:[%s570 + $0x31] sm:$0xff] %vm540, %v4847
        %4856 = vst.msk [vmem:[%s570 + $0x41] sm:$0xff] %vm540, %v4848
        %4857 = vst.msk [vmem:[%s570 + $0x51] sm:$0xff] %vm540, %v4849
        %4858 = vst.msk [vmem:[%s570 + $0x61] sm:$0xff] %vm540, %v4850
        %4859 = vst.msk [vmem:[%s570 + $0x71] sm:$0xff] %vm540, %v4851
        %v4860 = vld [vmem:[#allocation2] sm:$0xff]
        %v4861 = vld [vmem:[#allocation2 + $0x10] sm:$0xff]
        %v4862 = vld [vmem:[#allocation2 + $0x20] sm:$0xff]
        %v4863 = vld [vmem:[#allocation2 + $0x30] sm:$0xff]
        %v4864 = vld [vmem:[#allocation2 + $0x40] sm:$0xff]
        %v4865 = vld [vmem:[#allocation2 + $0x50] sm:$0xff]
        %v4866 = vld [vmem:[#allocation2 + $0x60] sm:$0xff]
        %v4867 = vld [vmem:[#allocation2 + $0x70] sm:$0xff]
        %v4868 = vpack.c.bf16 %v4861, %v4860
        %v4869 = vpack.c.bf16 %v4863, %v4862
        %v4870 = vpack.c.bf16 %v4865, %v4864
        %v4871 = vpack.c.bf16 %v4867, %v4866
        %v4872 = vld [vmem:[#allocation5] sm:$0xf]
        %v4873 = vld [vmem:[#allocation5 + $0x4] sm:$0xf]
        %v4874 = vld [vmem:[#allocation5 + $0x8] sm:$0xf]
        %v4875 = vld [vmem:[#allocation5 + $0xc] sm:$0xf]
        %v4876 = vld [vmem:[#allocation2 + $0x1] sm:$0xff]
        %v4877 = vld [vmem:[#allocation2 + $0x11] sm:$0xff]
        %v4878 = vld [vmem:[#allocation2 + $0x21] sm:$0xff]
        %v4879 = vld [vmem:[#allocation2 + $0x31] sm:$0xff]
        %v4880 = vld [vmem:[#allocation2 + $0x41] sm:$0xff]
        %v4881 = vld [vmem:[#allocation2 + $0x51] sm:$0xff]
        %v4882 = vld [vmem:[#allocation2 + $0x61] sm:$0xff]
        %v4883 = vld [vmem:[#allocation2 + $0x71] sm:$0xff]
        %v4884 = vpack.c.bf16 %v4877, %v4876
        %v4885 = vpack.c.bf16 %v4879, %v4878
        %v4886 = vpack.c.bf16 %v4881, %v4880
        %v4887 = vpack.c.bf16 %v4883, %v4882
        %s4888 = scalar_lea.vmem [#allocation5], 16
        %v4889 = vld [vmem:[%s4888] sm:$0xf]
        %v4890 = vld [vmem:[%s4888 + $0x4] sm:$0xf]
        %v4891 = vld [vmem:[%s4888 + $0x8] sm:$0xf]
        %v4892 = vld [vmem:[%s4888 + $0xc] sm:$0xf]
        %v4897 = vunpack.c.l.b16 %v4889
        %v4898 = vunpack.c.l.b16 %v4890
        %v4899 = vunpack.c.l.b16 %v4891
        %v4900 = vunpack.c.l.b16 %v4892
        %v4901 = vpack.c.b16 %v4898, %v4897
        %v4902 = vpack.c.b16 %v4900, %v4899
        %v4906 = vsel %vm540, %v4884, 0
        %v4909 = vsel %vm540, %v4885, 0
        %v4912 = vsel %vm540, %v4886, 0
        %v4915 = vsel %vm540, %v4887, 0
        %4917 = vmatprep.subr.bf16.mxu0 0
        %4918 = vmatpush1.bf16.msra.mxu0 0
        %4919 = vmatprep.subr.bf16.mxu0 0
        %4920 = vmatpush1.bf16.msra.mxu0 0
        %4921 = vmatprep.subr.bf16.mxu0 0
        %4922 = vmatpush1.bf16.msra.mxu0 0
        %4923 = vmatprep.subr.bf16.mxu0 0
        %4924 = vmatpush1.bf16.msra.mxu0 0
        %4925 = vmatprep.subr.bf16.mxu0 0
        %4926 = vmatpush1.bf16.msra.mxu0 0
        %4927 = vmatprep.subr.bf16.mxu0 0
        %4928 = vmatpush1.bf16.msra.mxu0 0
        %4929 = vmatprep.subr.bf16.mxu0 0
        %4930 = vmatpush1.bf16.msra.mxu0 %v4902
        %4931 = vmatprep.subr.bf16.mxu0 0
        %4932 = vmatpush1.bf16.msra.mxu0 %v4901
        %4933 = vmatprep.subr.bf16.mxu0 0
        %4934 = vmatpush2.bf16.msra.mxu0 0
        %4935 = vmatprep.subr.bf16.mxu0 0
        %4936 = vmatpush2.bf16.msra.mxu0 0
        %4937 = vmatprep.subr.bf16.mxu0 0
        %4938 = vmatpush2.bf16.msra.mxu0 0
        %4939 = vmatprep.subr.bf16.mxu0 0
        %4940 = vmatpush2.bf16.msra.mxu0 0
        %4941 = vmatprep.subr.bf16.mxu0 0
        %4942 = vmatpush2.bf16.msra.mxu0 0
        %4943 = vmatprep.subr.bf16.mxu0 0
        %4944 = vmatpush2.bf16.msra.mxu0 0
        %4945 = vmatprep.subr.bf16.mxu0 0
        %4946 = vmatpush2.bf16.msra.mxu0 0
        %4947 = vmatprep.subr.bf16.mxu0 0
        %4948 = vmatpush2.bf16.msra.mxu0 0
        %4949 = vmatprep.mubr.bf16.mxu0 0
        %4950 = vmatmul.mubr.bf16.gmra.mxu0 %v4906
        %v4951 = vpop.f32.mrf.mxu0
        %v4952 = vadd.f32 0.0, %v4951
        %v4953 = vpop.f32.mrf.mxu0
        %v4954 = vpop.f32.mrf.mxu0
        %v4955 = vadd.f32 0.0, %v4954
        %v4956 = vpop.f32.mrf.mxu0
        %4957 = vmatprep.mubr.bf16.mxu0 0
        %4958 = vmatmul.mubr.bf16.gmra.mxu0 %v4909
        %v4959 = vpop.f32.mrf.mxu0
        %v4960 = vadd.f32 0.0, %v4959
        %v4961 = vpop.f32.mrf.mxu0
        %v4962 = vpop.f32.mrf.mxu0
        %v4963 = vadd.f32 0.0, %v4962
        %v4964 = vpop.f32.mrf.mxu0
        %4965 = vmatprep.mubr.bf16.mxu0 0
        %4966 = vmatmul.mubr.bf16.gmra.mxu0 %v4912
        %v4967 = vpop.f32.mrf.mxu0
        %v4968 = vadd.f32 0.0, %v4967
        %v4969 = vpop.f32.mrf.mxu0
        %v4970 = vpop.f32.mrf.mxu0
        %v4971 = vadd.f32 0.0, %v4970
        %v4972 = vpop.f32.mrf.mxu0
        %4973 = vmatprep.mubr.bf16.mxu0 0
        %4974 = vmatmul.mubr.bf16.gmra.mxu0 %v4915
        %v4975 = vpop.f32.mrf.mxu0
        %v4976 = vadd.f32 0.0, %v4975
        %v4977 = vpop.f32.mrf.mxu0
        %v4978 = vpop.f32.mrf.mxu0
        %v4979 = vadd.f32 0.0, %v4978
        %v4980 = vpop.f32.mrf.mxu0
        %4981 = vdwg.mxu0
        %v4986 = vunpack.c.l.b16 %v4872
        %v4987 = vunpack.c.l.b16 %v4873
        %v4988 = vunpack.c.l.b16 %v4874
        %v4989 = vunpack.c.l.b16 %v4875
        %v4990 = vpack.c.b16 %v4987, %v4986
        %v4991 = vpack.c.b16 %v4989, %v4988
        %v4995 = vsel %vm540, %v4868, 0
        %v4998 = vsel %vm540, %v4869, 0
        %v5001 = vsel %vm540, %v4870, 0
        %v5004 = vsel %vm540, %v4871, 0
        %5006 = vmatprep.subr.bf16.mxu0 0
        %5007 = vmatpush1.bf16.msra.mxu0 0
        %5008 = vmatprep.subr.bf16.mxu0 0
        %5009 = vmatpush1.bf16.msra.mxu0 0
        %5010 = vmatprep.subr.bf16.mxu0 0
        %5011 = vmatpush1.bf16.msra.mxu0 0
        %5012 = vmatprep.subr.bf16.mxu0 0
        %5013 = vmatpush1.bf16.msra.mxu0 0
        %5014 = vmatprep.subr.bf16.mxu0 0
        %5015 = vmatpush1.bf16.msra.mxu0 0
        %5016 = vmatprep.subr.bf16.mxu0 0
        %5017 = vmatpush1.bf16.msra.mxu0 0
        %5018 = vmatprep.subr.bf16.mxu0 0
        %5019 = vmatpush1.bf16.msra.mxu0 %v4991
        %5020 = vmatprep.subr.bf16.mxu0 0
        %5021 = vmatpush1.bf16.msra.mxu0 %v4990
        %5022 = vmatprep.subr.bf16.mxu0 0
        %5023 = vmatpush2.bf16.msra.mxu0 0
        %5024 = vmatprep.subr.bf16.mxu0 0
        %5025 = vmatpush2.bf16.msra.mxu0 0
        %5026 = vmatprep.subr.bf16.mxu0 0
        %5027 = vmatpush2.bf16.msra.mxu0 0
        %5028 = vmatprep.subr.bf16.mxu0 0
        %5029 = vmatpush2.bf16.msra.mxu0 0
        %5030 = vmatprep.subr.bf16.mxu0 0
        %5031 = vmatpush2.bf16.msra.mxu0 0
        %5032 = vmatprep.subr.bf16.mxu0 0
        %5033 = vmatpush2.bf16.msra.mxu0 0
        %5034 = vmatprep.subr.bf16.mxu0 0
        %5035 = vmatpush2.bf16.msra.mxu0 0
        %5036 = vmatprep.subr.bf16.mxu0 0
        %5037 = vmatpush2.bf16.msra.mxu0 0
        %5038 = vmatprep.mubr.bf16.mxu0 0
        %5039 = vmatmul.mubr.bf16.gmra.mxu0 %v4995
        %v5040 = vpop.f32.mrf.mxu0
        %v5041 = vadd.f32 %v4952, %v5040
        %v5042 = vpop.f32.mrf.mxu0
        %v5043 = vpop.f32.mrf.mxu0
        %v5044 = vadd.f32 %v4955, %v5043
        %v5045 = vpop.f32.mrf.mxu0
        %5046 = vmatprep.mubr.bf16.mxu0 0
        %5047 = vmatmul.mubr.bf16.gmra.mxu0 %v4998
        %v5048 = vpop.f32.mrf.mxu0
        %v5049 = vadd.f32 %v4960, %v5048
        %v5050 = vpop.f32.mrf.mxu0
        %v5051 = vpop.f32.mrf.mxu0
        %v5052 = vadd.f32 %v4963, %v5051
        %v5053 = vpop.f32.mrf.mxu0
        %5054 = vmatprep.mubr.bf16.mxu0 0
        %5055 = vmatmul.mubr.bf16.gmra.mxu0 %v5001
        %v5056 = vpop.f32.mrf.mxu0
        %v5057 = vadd.f32 %v4968, %v5056
        %v5058 = vpop.f32.mrf.mxu0
        %v5059 = vpop.f32.mrf.mxu0
        %v5060 = vadd.f32 %v4971, %v5059
        %v5061 = vpop.f32.mrf.mxu0
        %5062 = vmatprep.mubr.bf16.mxu0 0
        %5063 = vmatmul.mubr.bf16.gmra.mxu0 %v5004
        %v5064 = vpop.f32.mrf.mxu0
        %v5065 = vadd.f32 %v4976, %v5064
        %v5066 = vpop.f32.mrf.mxu0
        %v5067 = vpop.f32.mrf.mxu0
        %v5068 = vadd.f32 %v4979, %v5067
        %v5069 = vpop.f32.mrf.mxu0
        %5070 = vdwg.mxu0
        %v5071 = vld [vmem:[#allocation2 + $0x2] sm:$0xff]
        %v5072 = vld [vmem:[#allocation2 + $0x12] sm:$0xff]
        %v5073 = vld [vmem:[#allocation2 + $0x22] sm:$0xff]
        %v5074 = vld [vmem:[#allocation2 + $0x32] sm:$0xff]
        %v5075 = vld [vmem:[#allocation2 + $0x42] sm:$0xff]
        %v5076 = vld [vmem:[#allocation2 + $0x52] sm:$0xff]
        %v5077 = vld [vmem:[#allocation2 + $0x62] sm:$0xff]
        %v5078 = vld [vmem:[#allocation2 + $0x72] sm:$0xff]
        %v5079 = vpack.c.bf16 %v5072, %v5071
        %v5080 = vpack.c.bf16 %v5074, %v5073
        %v5081 = vpack.c.bf16 %v5076, %v5075
        %v5082 = vpack.c.bf16 %v5078, %v5077
        %s5083 = scalar_lea.vmem [#allocation5], 32
        %v5084 = vld [vmem:[%s5083] sm:$0xf]
        %v5085 = vld [vmem:[%s5083 + $0x4] sm:$0xf]
        %v5086 = vld [vmem:[%s5083 + $0x8] sm:$0xf]
        %v5087 = vld [vmem:[%s5083 + $0xc] sm:$0xf]
        %v5092 = vunpack.c.l.b16 %v5084
        %v5093 = vunpack.c.l.b16 %v5085
        %v5094 = vunpack.c.l.b16 %v5086
        %v5095 = vunpack.c.l.b16 %v5087
        %v5096 = vpack.c.b16 %v5093, %v5092
        %v5097 = vpack.c.b16 %v5095, %v5094
        %v5101 = vsel %vm540, %v5079, 0
        %v5104 = vsel %vm540, %v5080, 0
        %v5107 = vsel %vm540, %v5081, 0
        %v5110 = vsel %vm540, %v5082, 0
        %5112 = vmatprep.subr.bf16.mxu0 0
        %5113 = vmatpush1.bf16.msra.mxu0 0
        %5114 = vmatprep.subr.bf16.mxu0 0
        %5115 = vmatpush1.bf16.msra.mxu0 0
        %5116 = vmatprep.subr.bf16.mxu0 0
        %5117 = vmatpush1.bf16.msra.mxu0 0
        %5118 = vmatprep.subr.bf16.mxu0 0
        %5119 = vmatpush1.bf16.msra.mxu0 0
        %5120 = vmatprep.subr.bf16.mxu0 0
        %5121 = vmatpush1.bf16.msra.mxu0 0
        %5122 = vmatprep.subr.bf16.mxu0 0
        %5123 = vmatpush1.bf16.msra.mxu0 0
        %5124 = vmatprep.subr.bf16.mxu0 0
        %5125 = vmatpush1.bf16.msra.mxu0 %v5097
        %5126 = vmatprep.subr.bf16.mxu0 0
        %5127 = vmatpush1.bf16.msra.mxu0 %v5096
        %5128 = vmatprep.subr.bf16.mxu0 0
        %5129 = vmatpush2.bf16.msra.mxu0 0
        %5130 = vmatprep.subr.bf16.mxu0 0
        %5131 = vmatpush2.bf16.msra.mxu0 0
        %5132 = vmatprep.subr.bf16.mxu0 0
        %5133 = vmatpush2.bf16.msra.mxu0 0
        %5134 = vmatprep.subr.bf16.mxu0 0
        %5135 = vmatpush2.bf16.msra.mxu0 0
        %5136 = vmatprep.subr.bf16.mxu0 0
        %5137 = vmatpush2.bf16.msra.mxu0 0
        %5138 = vmatprep.subr.bf16.mxu0 0
        %5139 = vmatpush2.bf16.msra.mxu0 0
        %5140 = vmatprep.subr.bf16.mxu0 0
        %5141 = vmatpush2.bf16.msra.mxu0 0
        %5142 = vmatprep.subr.bf16.mxu0 0
        %5143 = vmatpush2.bf16.msra.mxu0 0
        %5144 = vmatprep.mubr.bf16.mxu0 0
        %5145 = vmatmul.mubr.bf16.gmra.mxu0 %v5101
        %v5146 = vpop.f32.mrf.mxu0
        %v5147 = vadd.f32 0.0, %v5146
        %v5148 = vpop.f32.mrf.mxu0
        %v5149 = vpop.f32.mrf.mxu0
        %v5150 = vadd.f32 0.0, %v5149
        %v5151 = vpop.f32.mrf.mxu0
        %5152 = vmatprep.mubr.bf16.mxu0 0
        %5153 = vmatmul.mubr.bf16.gmra.mxu0 %v5104
        %v5154 = vpop.f32.mrf.mxu0
        %v5155 = vadd.f32 0.0, %v5154
        %v5156 = vpop.f32.mrf.mxu0
        %v5157 = vpop.f32.mrf.mxu0
        %v5158 = vadd.f32 0.0, %v5157
        %v5159 = vpop.f32.mrf.mxu0
        %5160 = vmatprep.mubr.bf16.mxu0 0
        %5161 = vmatmul.mubr.bf16.gmra.mxu0 %v5107
        %v5162 = vpop.f32.mrf.mxu0
        %v5163 = vadd.f32 0.0, %v5162
        %v5164 = vpop.f32.mrf.mxu0
        %v5165 = vpop.f32.mrf.mxu0
        %v5166 = vadd.f32 0.0, %v5165
        %v5167 = vpop.f32.mrf.mxu0
        %5168 = vmatprep.mubr.bf16.mxu0 0
        %5169 = vmatmul.mubr.bf16.gmra.mxu0 %v5110
        %v5170 = vpop.f32.mrf.mxu0
        %v5171 = vadd.f32 0.0, %v5170
        %v5172 = vpop.f32.mrf.mxu0
        %v5173 = vpop.f32.mrf.mxu0
        %v5174 = vadd.f32 0.0, %v5173
        %v5175 = vpop.f32.mrf.mxu0
        %5176 = vdwg.mxu0
        %v5177 = vadd.f32 %v5041, %v5147
        %v5178 = vadd.f32 %v5044, %v5150
        %v5179 = vadd.f32 %v5049, %v5155
        %v5180 = vadd.f32 %v5052, %v5158
        %v5181 = vadd.f32 %v5057, %v5163
        %v5182 = vadd.f32 %v5060, %v5166
        %v5183 = vadd.f32 %v5065, %v5171
        %v5184 = vadd.f32 %v5068, %v5174
        %v5185 = vld [vmem:[%s570] sm:$0xff]
        %v5186 = vld [vmem:[%s570 + $0x10] sm:$0xff]
        %v5187 = vld [vmem:[%s570 + $0x20] sm:$0xff]
        %v5188 = vld [vmem:[%s570 + $0x30] sm:$0xff]
        %v5189 = vld [vmem:[%s570 + $0x40] sm:$0xff]
        %v5190 = vld [vmem:[%s570 + $0x50] sm:$0xff]
        %v5191 = vld [vmem:[%s570 + $0x60] sm:$0xff]
        %v5192 = vld [vmem:[%s570 + $0x70] sm:$0xff]
        %v5193 = vpack.c.bf16 %v5186, %v5185
        %v5194 = vpack.c.bf16 %v5188, %v5187
        %v5195 = vpack.c.bf16 %v5190, %v5189
        %v5196 = vpack.c.bf16 %v5192, %v5191
        %s5197 = scalar_lea.vmem [#allocation5], 48
        %v5198 = vld [vmem:[%s5197] sm:$0xf]
        %v5199 = vld [vmem:[%s5197 + $0x4] sm:$0xf]
        %v5200 = vld [vmem:[%s5197 + $0x8] sm:$0xf]
        %v5201 = vld [vmem:[%s5197 + $0xc] sm:$0xf]
        %v5206 = vunpack.c.l.b16 %v5198
        %v5207 = vunpack.c.l.b16 %v5199
        %v5208 = vunpack.c.l.b16 %v5200
        %v5209 = vunpack.c.l.b16 %v5201
        %v5210 = vpack.c.b16 %v5207, %v5206
        %v5211 = vpack.c.b16 %v5209, %v5208
        %v5215 = vsel %vm540, %v5193, 0
        %v5218 = vsel %vm540, %v5194, 0
        %v5221 = vsel %vm540, %v5195, 0
        %v5224 = vsel %vm540, %v5196, 0
        %5226 = vmatprep.subr.bf16.mxu0 0
        %5227 = vmatpush1.bf16.msra.mxu0 0
        %5228 = vmatprep.subr.bf16.mxu0 0
        %5229 = vmatpush1.bf16.msra.mxu0 0
        %5230 = vmatprep.subr.bf16.mxu0 0
        %5231 = vmatpush1.bf16.msra.mxu0 0
        %5232 = vmatprep.subr.bf16.mxu0 0
        %5233 = vmatpush1.bf16.msra.mxu0 0
        %5234 = vmatprep.subr.bf16.mxu0 0
        %5235 = vmatpush1.bf16.msra.mxu0 0
        %5236 = vmatprep.subr.bf16.mxu0 0
        %5237 = vmatpush1.bf16.msra.mxu0 0
        %5238 = vmatprep.subr.bf16.mxu0 0
        %5239 = vmatpush1.bf16.msra.mxu0 %v5211
        %5240 = vmatprep.subr.bf16.mxu0 0
        %5241 = vmatpush1.bf16.msra.mxu0 %v5210
        %5242 = vmatprep.subr.bf16.mxu0 0
        %5243 = vmatpush2.bf16.msra.mxu0 0
        %5244 = vmatprep.subr.bf16.mxu0 0
        %5245 = vmatpush2.bf16.msra.mxu0 0
        %5246 = vmatprep.subr.bf16.mxu0 0
        %5247 = vmatpush2.bf16.msra.mxu0 0
        %5248 = vmatprep.subr.bf16.mxu0 0
        %5249 = vmatpush2.bf16.msra.mxu0 0
        %5250 = vmatprep.subr.bf16.mxu0 0
        %5251 = vmatpush2.bf16.msra.mxu0 0
        %5252 = vmatprep.subr.bf16.mxu0 0
        %5253 = vmatpush2.bf16.msra.mxu0 0
        %5254 = vmatprep.subr.bf16.mxu0 0
        %5255 = vmatpush2.bf16.msra.mxu0 0
        %5256 = vmatprep.subr.bf16.mxu0 0
        %5257 = vmatpush2.bf16.msra.mxu0 0
        %5258 = vmatprep.mubr.bf16.mxu0 0
        %5259 = vmatmul.mubr.bf16.gmra.mxu0 %v5215
        %v5260 = vpop.f32.mrf.mxu0
        %v5261 = vadd.f32 0.0, %v5260
        %v5262 = vpop.f32.mrf.mxu0
        %v5263 = vpop.f32.mrf.mxu0
        %v5264 = vadd.f32 0.0, %v5263
        %v5265 = vpop.f32.mrf.mxu0
        %5266 = vmatprep.mubr.bf16.mxu0 0
        %5267 = vmatmul.mubr.bf16.gmra.mxu0 %v5218
        %v5268 = vpop.f32.mrf.mxu0
        %v5269 = vadd.f32 0.0, %v5268
        %v5270 = vpop.f32.mrf.mxu0
        %v5271 = vpop.f32.mrf.mxu0
        %v5272 = vadd.f32 0.0, %v5271
        %v5273 = vpop.f32.mrf.mxu0
        %5274 = vmatprep.mubr.bf16.mxu0 0
        %5275 = vmatmul.mubr.bf16.gmra.mxu0 %v5221
        %v5276 = vpop.f32.mrf.mxu0
        %v5277 = vadd.f32 0.0, %v5276
        %v5278 = vpop.f32.mrf.mxu0
        %v5279 = vpop.f32.mrf.mxu0
        %v5280 = vadd.f32 0.0, %v5279
        %v5281 = vpop.f32.mrf.mxu0
        %5282 = vmatprep.mubr.bf16.mxu0 0
        %5283 = vmatmul.mubr.bf16.gmra.mxu0 %v5224
        %v5284 = vpop.f32.mrf.mxu0
        %v5285 = vadd.f32 0.0, %v5284
        %v5286 = vpop.f32.mrf.mxu0
        %v5287 = vpop.f32.mrf.mxu0
        %v5288 = vadd.f32 0.0, %v5287
        %v5289 = vpop.f32.mrf.mxu0
        %5290 = vdwg.mxu0
        %v5291 = vadd.f32 %v5177, %v5261
        %v5292 = vadd.f32 %v5178, %v5264
        %v5293 = vadd.f32 %v5179, %v5269
        %v5294 = vadd.f32 %v5180, %v5272
        %v5295 = vadd.f32 %v5181, %v5277
        %v5296 = vadd.f32 %v5182, %v5280
        %v5297 = vadd.f32 %v5183, %v5285
        %v5298 = vadd.f32 %v5184, %v5288
        %v5299 = vld [vmem:[%s570 + $0x1] sm:$0xff]
        %v5300 = vld [vmem:[%s570 + $0x11] sm:$0xff]
        %v5301 = vld [vmem:[%s570 + $0x21] sm:$0xff]
        %v5302 = vld [vmem:[%s570 + $0x31] sm:$0xff]
        %v5303 = vld [vmem:[%s570 + $0x41] sm:$0xff]
        %v5304 = vld [vmem:[%s570 + $0x51] sm:$0xff]
        %v5305 = vld [vmem:[%s570 + $0x61] sm:$0xff]
        %v5306 = vld [vmem:[%s570 + $0x71] sm:$0xff]
        %v5307 = vpack.c.bf16 %v5300, %v5299
        %v5308 = vpack.c.bf16 %v5302, %v5301
        %v5309 = vpack.c.bf16 %v5304, %v5303
        %v5310 = vpack.c.bf16 %v5306, %v5305
        %s5311 = scalar_lea.vmem [#allocation5], 64
        %v5312 = vld [vmem:[%s5311] sm:$0xf]
        %v5313 = vld [vmem:[%s5311 + $0x4] sm:$0xf]
        %v5314 = vld [vmem:[%s5311 + $0x8] sm:$0xf]
        %v5315 = vld [vmem:[%s5311 + $0xc] sm:$0xf]
        %v5320 = vunpack.c.l.b16 %v5312
        %v5321 = vunpack.c.l.b16 %v5313
        %v5322 = vunpack.c.l.b16 %v5314
        %v5323 = vunpack.c.l.b16 %v5315
        %v5324 = vpack.c.b16 %v5321, %v5320
        %v5325 = vpack.c.b16 %v5323, %v5322
        %v5329 = vsel %vm540, %v5307, 0
        %v5332 = vsel %vm540, %v5308, 0
        %v5335 = vsel %vm540, %v5309, 0
        %v5338 = vsel %vm540, %v5310, 0
        %5340 = vmatprep.subr.bf16.mxu0 0
        %5341 = vmatpush1.bf16.msra.mxu0 0
        %5342 = vmatprep.subr.bf16.mxu0 0
        %5343 = vmatpush1.bf16.msra.mxu0 0
        %5344 = vmatprep.subr.bf16.mxu0 0
        %5345 = vmatpush1.bf16.msra.mxu0 0
        %5346 = vmatprep.subr.bf16.mxu0 0
        %5347 = vmatpush1.bf16.msra.mxu0 0
        %5348 = vmatprep.subr.bf16.mxu0 0
        %5349 = vmatpush1.bf16.msra.mxu0 0
        %5350 = vmatprep.subr.bf16.mxu0 0
        %5351 = vmatpush1.bf16.msra.mxu0 0
        %5352 = vmatprep.subr.bf16.mxu0 0
        %5353 = vmatpush1.bf16.msra.mxu0 %v5325
        %5354 = vmatprep.subr.bf16.mxu0 0
        %5355 = vmatpush1.bf16.msra.mxu0 %v5324
        %5356 = vmatprep.subr.bf16.mxu0 0
        %5357 = vmatpush2.bf16.msra.mxu0 0
        %5358 = vmatprep.subr.bf16.mxu0 0
        %5359 = vmatpush2.bf16.msra.mxu0 0
        %5360 = vmatprep.subr.bf16.mxu0 0
        %5361 = vmatpush2.bf16.msra.mxu0 0
        %5362 = vmatprep.subr.bf16.mxu0 0
        %5363 = vmatpush2.bf16.msra.mxu0 0
        %5364 = vmatprep.subr.bf16.mxu0 0
        %5365 = vmatpush2.bf16.msra.mxu0 0
        %5366 = vmatprep.subr.bf16.mxu0 0
        %5367 = vmatpush2.bf16.msra.mxu0 0
        %5368 = vmatprep.subr.bf16.mxu0 0
        %5369 = vmatpush2.bf16.msra.mxu0 0
        %5370 = vmatprep.subr.bf16.mxu0 0
        %5371 = vmatpush2.bf16.msra.mxu0 0
        %5372 = vmatprep.mubr.bf16.mxu0 0
        %5373 = vmatmul.mubr.bf16.gmra.mxu0 %v5329
        %v5374 = vpop.f32.mrf.mxu0
        %v5375 = vadd.f32 0.0, %v5374
        %v5376 = vpop.f32.mrf.mxu0
        %v5377 = vpop.f32.mrf.mxu0
        %v5378 = vadd.f32 0.0, %v5377
        %v5379 = vpop.f32.mrf.mxu0
        %5380 = vmatprep.mubr.bf16.mxu0 0
        %5381 = vmatmul.mubr.bf16.gmra.mxu0 %v5332
        %v5382 = vpop.f32.mrf.mxu0
        %v5383 = vadd.f32 0.0, %v5382
        %v5384 = vpop.f32.mrf.mxu0
        %v5385 = vpop.f32.mrf.mxu0
        %v5386 = vadd.f32 0.0, %v5385
        %v5387 = vpop.f32.mrf.mxu0
        %5388 = vmatprep.mubr.bf16.mxu0 0
        %5389 = vmatmul.mubr.bf16.gmra.mxu0 %v5335
        %v5390 = vpop.f32.mrf.mxu0
        %v5391 = vadd.f32 0.0, %v5390
        %v5392 = vpop.f32.mrf.mxu0
        %v5393 = vpop.f32.mrf.mxu0
        %v5394 = vadd.f32 0.0, %v5393
        %v5395 = vpop.f32.mrf.mxu0
        %5396 = vmatprep.mubr.bf16.mxu0 0
        %5397 = vmatmul.mubr.bf16.gmra.mxu0 %v5338
        %v5398 = vpop.f32.mrf.mxu0
        %v5399 = vadd.f32 0.0, %v5398
        %v5400 = vpop.f32.mrf.mxu0
        %v5401 = vpop.f32.mrf.mxu0
        %v5402 = vadd.f32 0.0, %v5401
        %v5403 = vpop.f32.mrf.mxu0
        %5404 = vdwg.mxu0
        %v5405 = vadd.f32 %v5291, %v5375
        %v5406 = vadd.f32 %v5292, %v5378
        %v5407 = vadd.f32 %v5293, %v5383
        %v5408 = vadd.f32 %v5294, %v5386
        %v5409 = vadd.f32 %v5295, %v5391
        %v5410 = vadd.f32 %v5296, %v5394
        %v5411 = vadd.f32 %v5297, %v5399
        %v5412 = vadd.f32 %v5298, %v5402
        %v5413 = vld [vmem:[%s570 + $0x2] sm:$0xff]
        %v5414 = vld [vmem:[%s570 + $0x12] sm:$0xff]
        %v5415 = vld [vmem:[%s570 + $0x22] sm:$0xff]
        %v5416 = vld [vmem:[%s570 + $0x32] sm:$0xff]
        %v5417 = vld [vmem:[%s570 + $0x42] sm:$0xff]
        %v5418 = vld [vmem:[%s570 + $0x52] sm:$0xff]
        %v5419 = vld [vmem:[%s570 + $0x62] sm:$0xff]
        %v5420 = vld [vmem:[%s570 + $0x72] sm:$0xff]
        %v5421 = vpack.c.bf16 %v5414, %v5413
        %v5422 = vpack.c.bf16 %v5416, %v5415
        %v5423 = vpack.c.bf16 %v5418, %v5417
        %v5424 = vpack.c.bf16 %v5420, %v5419
        %s5425 = scalar_lea.vmem [#allocation5], 80
        %v5426 = vld [vmem:[%s5425] sm:$0xf]
        %v5427 = vld [vmem:[%s5425 + $0x4] sm:$0xf]
        %v5428 = vld [vmem:[%s5425 + $0x8] sm:$0xf]
        %v5429 = vld [vmem:[%s5425 + $0xc] sm:$0xf]
        %v5434 = vunpack.c.l.b16 %v5426
        %v5435 = vunpack.c.l.b16 %v5427
        %v5436 = vunpack.c.l.b16 %v5428
        %v5437 = vunpack.c.l.b16 %v5429
        %v5438 = vpack.c.b16 %v5435, %v5434
        %v5439 = vpack.c.b16 %v5437, %v5436
        %v5443 = vsel %vm540, %v5421, 0
        %v5446 = vsel %vm540, %v5422, 0
        %v5449 = vsel %vm540, %v5423, 0
        %v5452 = vsel %vm540, %v5424, 0
        %5454 = vmatprep.subr.bf16.mxu0 0
        %5455 = vmatpush1.bf16.msra.mxu0 0
        %5456 = vmatprep.subr.bf16.mxu0 0
        %5457 = vmatpush1.bf16.msra.mxu0 0
        %5458 = vmatprep.subr.bf16.mxu0 0
        %5459 = vmatpush1.bf16.msra.mxu0 0
        %5460 = vmatprep.subr.bf16.mxu0 0
        %5461 = vmatpush1.bf16.msra.mxu0 0
        %5462 = vmatprep.subr.bf16.mxu0 0
        %5463 = vmatpush1.bf16.msra.mxu0 0
        %5464 = vmatprep.subr.bf16.mxu0 0
        %5465 = vmatpush1.bf16.msra.mxu0 0
        %5466 = vmatprep.subr.bf16.mxu0 0
        %5467 = vmatpush1.bf16.msra.mxu0 %v5439
        %5468 = vmatprep.subr.bf16.mxu0 0
        %5469 = vmatpush1.bf16.msra.mxu0 %v5438
        %5470 = vmatprep.subr.bf16.mxu0 0
        %5471 = vmatpush2.bf16.msra.mxu0 0
        %5472 = vmatprep.subr.bf16.mxu0 0
        %5473 = vmatpush2.bf16.msra.mxu0 0
        %5474 = vmatprep.subr.bf16.mxu0 0
        %5475 = vmatpush2.bf16.msra.mxu0 0
        %5476 = vmatprep.subr.bf16.mxu0 0
        %5477 = vmatpush2.bf16.msra.mxu0 0
        %5478 = vmatprep.subr.bf16.mxu0 0
        %5479 = vmatpush2.bf16.msra.mxu0 0
        %5480 = vmatprep.subr.bf16.mxu0 0
        %5481 = vmatpush2.bf16.msra.mxu0 0
        %5482 = vmatprep.subr.bf16.mxu0 0
        %5483 = vmatpush2.bf16.msra.mxu0 0
        %5484 = vmatprep.subr.bf16.mxu0 0
        %5485 = vmatpush2.bf16.msra.mxu0 0
        %5486 = vmatprep.mubr.bf16.mxu0 0
        %5487 = vmatmul.mubr.bf16.gmra.mxu0 %v5443
        %v5488 = vpop.f32.mrf.mxu0
        %v5489 = vadd.f32 0.0, %v5488
        %v5490 = vpop.f32.mrf.mxu0
        %v5491 = vpop.f32.mrf.mxu0
        %v5492 = vadd.f32 0.0, %v5491
        %v5493 = vpop.f32.mrf.mxu0
        %5494 = vmatprep.mubr.bf16.mxu0 0
        %5495 = vmatmul.mubr.bf16.gmra.mxu0 %v5446
        %v5496 = vpop.f32.mrf.mxu0
        %v5497 = vadd.f32 0.0, %v5496
        %v5498 = vpop.f32.mrf.mxu0
        %v5499 = vpop.f32.mrf.mxu0
        %v5500 = vadd.f32 0.0, %v5499
        %v5501 = vpop.f32.mrf.mxu0
        %5502 = vmatprep.mubr.bf16.mxu0 0
        %5503 = vmatmul.mubr.bf16.gmra.mxu0 %v5449
        %v5504 = vpop.f32.mrf.mxu0
        %v5505 = vadd.f32 0.0, %v5504
        %v5506 = vpop.f32.mrf.mxu0
        %v5507 = vpop.f32.mrf.mxu0
        %v5508 = vadd.f32 0.0, %v5507
        %v5509 = vpop.f32.mrf.mxu0
        %5510 = vmatprep.mubr.bf16.mxu0 0
        %5511 = vmatmul.mubr.bf16.gmra.mxu0 %v5452
        %v5512 = vpop.f32.mrf.mxu0
        %v5513 = vadd.f32 0.0, %v5512
        %v5514 = vpop.f32.mrf.mxu0
        %v5515 = vpop.f32.mrf.mxu0
        %v5516 = vadd.f32 0.0, %v5515
        %v5517 = vpop.f32.mrf.mxu0
        %5518 = vdwg.mxu0
        %v5519 = vadd.f32 %v5405, %v5489
        %v5520 = vadd.f32 %v5406, %v5492
        %v5521 = vadd.f32 %v5407, %v5497
        %v5522 = vadd.f32 %v5408, %v5500
        %v5523 = vadd.f32 %v5409, %v5505
        %v5524 = vadd.f32 %v5410, %v5508
        %v5525 = vadd.f32 %v5411, %v5513
        %v5526 = vadd.f32 %v5412, %v5516
        %v5527 = vld [vmem:[%s1246] sm:$0xff]
        %v5528 = vld [vmem:[%s1246 + $0x10] sm:$0xff]
        %v5529 = vld [vmem:[%s1246 + $0x20] sm:$0xff]
        %v5530 = vld [vmem:[%s1246 + $0x30] sm:$0xff]
        %v5531 = vld [vmem:[%s1246 + $0x40] sm:$0xff]
        %v5532 = vld [vmem:[%s1246 + $0x50] sm:$0xff]
        %v5533 = vld [vmem:[%s1246 + $0x60] sm:$0xff]
        %v5534 = vld [vmem:[%s1246 + $0x70] sm:$0xff]
        %v5535 = vpack.c.bf16 %v5528, %v5527
        %v5536 = vpack.c.bf16 %v5530, %v5529
        %v5537 = vpack.c.bf16 %v5532, %v5531
        %v5538 = vpack.c.bf16 %v5534, %v5533
        %s5539 = scalar_lea.vmem [#allocation5], 96
        %v5540 = vld [vmem:[%s5539] sm:$0xf]
        %v5541 = vld [vmem:[%s5539 + $0x4] sm:$0xf]
        %v5542 = vld [vmem:[%s5539 + $0x8] sm:$0xf]
        %v5543 = vld [vmem:[%s5539 + $0xc] sm:$0xf]
        %v5548 = vunpack.c.l.b16 %v5540
        %v5549 = vunpack.c.l.b16 %v5541
        %v5550 = vunpack.c.l.b16 %v5542
        %v5551 = vunpack.c.l.b16 %v5543
        %v5552 = vpack.c.b16 %v5549, %v5548
        %v5553 = vpack.c.b16 %v5551, %v5550
        %v5557 = vsel %vm540, %v5535, 0
        %v5560 = vsel %vm540, %v5536, 0
        %v5563 = vsel %vm540, %v5537, 0
        %v5566 = vsel %vm540, %v5538, 0
        %5568 = vmatprep.subr.bf16.mxu0 0
        %5569 = vmatpush1.bf16.msra.mxu0 0
        %5570 = vmatprep.subr.bf16.mxu0 0
        %5571 = vmatpush1.bf16.msra.mxu0 0
        %5572 = vmatprep.subr.bf16.mxu0 0
        %5573 = vmatpush1.bf16.msra.mxu0 0
        %5574 = vmatprep.subr.bf16.mxu0 0
        %5575 = vmatpush1.bf16.msra.mxu0 0
        %5576 = vmatprep.subr.bf16.mxu0 0
        %5577 = vmatpush1.bf16.msra.mxu0 0
        %5578 = vmatprep.subr.bf16.mxu0 0
        %5579 = vmatpush1.bf16.msra.mxu0 0
        %5580 = vmatprep.subr.bf16.mxu0 0
        %5581 = vmatpush1.bf16.msra.mxu0 %v5553
        %5582 = vmatprep.subr.bf16.mxu0 0
        %5583 = vmatpush1.bf16.msra.mxu0 %v5552
        %5584 = vmatprep.subr.bf16.mxu0 0
        %5585 = vmatpush2.bf16.msra.mxu0 0
        %5586 = vmatprep.subr.bf16.mxu0 0
        %5587 = vmatpush2.bf16.msra.mxu0 0
        %5588 = vmatprep.subr.bf16.mxu0 0
        %5589 = vmatpush2.bf16.msra.mxu0 0
        %5590 = vmatprep.subr.bf16.mxu0 0
        %5591 = vmatpush2.bf16.msra.mxu0 0
        %5592 = vmatprep.subr.bf16.mxu0 0
        %5593 = vmatpush2.bf16.msra.mxu0 0
        %5594 = vmatprep.subr.bf16.mxu0 0
        %5595 = vmatpush2.bf16.msra.mxu0 0
        %5596 = vmatprep.subr.bf16.mxu0 0
        %5597 = vmatpush2.bf16.msra.mxu0 0
        %5598 = vmatprep.subr.bf16.mxu0 0
        %5599 = vmatpush2.bf16.msra.mxu0 0
        %5600 = vmatprep.mubr.bf16.mxu0 0
        %5601 = vmatmul.mubr.bf16.gmra.mxu0 %v5557
        %v5602 = vpop.f32.mrf.mxu0
        %v5603 = vadd.f32 0.0, %v5602
        %v5604 = vpop.f32.mrf.mxu0
        %v5605 = vpop.f32.mrf.mxu0
        %v5606 = vadd.f32 0.0, %v5605
        %v5607 = vpop.f32.mrf.mxu0
        %5608 = vmatprep.mubr.bf16.mxu0 0
        %5609 = vmatmul.mubr.bf16.gmra.mxu0 %v5560
        %v5610 = vpop.f32.mrf.mxu0
        %v5611 = vadd.f32 0.0, %v5610
        %v5612 = vpop.f32.mrf.mxu0
        %v5613 = vpop.f32.mrf.mxu0
        %v5614 = vadd.f32 0.0, %v5613
        %v5615 = vpop.f32.mrf.mxu0
        %5616 = vmatprep.mubr.bf16.mxu0 0
        %5617 = vmatmul.mubr.bf16.gmra.mxu0 %v5563
        %v5618 = vpop.f32.mrf.mxu0
        %v5619 = vadd.f32 0.0, %v5618
        %v5620 = vpop.f32.mrf.mxu0
        %v5621 = vpop.f32.mrf.mxu0
        %v5622 = vadd.f32 0.0, %v5621
        %v5623 = vpop.f32.mrf.mxu0
        %5624 = vmatprep.mubr.bf16.mxu0 0
        %5625 = vmatmul.mubr.bf16.gmra.mxu0 %v5566
        %v5626 = vpop.f32.mrf.mxu0
        %v5627 = vadd.f32 0.0, %v5626
        %v5628 = vpop.f32.mrf.mxu0
        %v5629 = vpop.f32.mrf.mxu0
        %v5630 = vadd.f32 0.0, %v5629
        %v5631 = vpop.f32.mrf.mxu0
        %5632 = vdwg.mxu0
        %v5633 = vadd.f32 %v5519, %v5603
        %v5634 = vadd.f32 %v5520, %v5606
        %v5635 = vadd.f32 %v5521, %v5611
        %v5636 = vadd.f32 %v5522, %v5614
        %v5637 = vadd.f32 %v5523, %v5619
        %v5638 = vadd.f32 %v5524, %v5622
        %v5639 = vadd.f32 %v5525, %v5627
        %v5640 = vadd.f32 %v5526, %v5630
        %v5641 = vld [vmem:[%s1246 + $0x1] sm:$0xff]
        %v5642 = vld [vmem:[%s1246 + $0x11] sm:$0xff]
        %v5643 = vld [vmem:[%s1246 + $0x21] sm:$0xff]
        %v5644 = vld [vmem:[%s1246 + $0x31] sm:$0xff]
        %v5645 = vld [vmem:[%s1246 + $0x41] sm:$0xff]
        %v5646 = vld [vmem:[%s1246 + $0x51] sm:$0xff]
        %v5647 = vld [vmem:[%s1246 + $0x61] sm:$0xff]
        %v5648 = vld [vmem:[%s1246 + $0x71] sm:$0xff]
        %v5649 = vpack.c.bf16 %v5642, %v5641
        %v5650 = vpack.c.bf16 %v5644, %v5643
        %v5651 = vpack.c.bf16 %v5646, %v5645
        %v5652 = vpack.c.bf16 %v5648, %v5647
        %s5653 = scalar_lea.vmem [#allocation5], 112
        %v5654 = vld [vmem:[%s5653] sm:$0xf]
        %v5655 = vld [vmem:[%s5653 + $0x4] sm:$0xf]
        %v5656 = vld [vmem:[%s5653 + $0x8] sm:$0xf]
        %v5657 = vld [vmem:[%s5653 + $0xc] sm:$0xf]
        %v5662 = vunpack.c.l.b16 %v5654
        %v5663 = vunpack.c.l.b16 %v5655
        %v5664 = vunpack.c.l.b16 %v5656
        %v5665 = vunpack.c.l.b16 %v5657
        %v5666 = vpack.c.b16 %v5663, %v5662
        %v5667 = vpack.c.b16 %v5665, %v5664
        %v5671 = vsel %vm540, %v5649, 0
        %v5674 = vsel %vm540, %v5650, 0
        %v5677 = vsel %vm540, %v5651, 0
        %v5680 = vsel %vm540, %v5652, 0
        %5682 = vmatprep.subr.bf16.mxu0 0
        %5683 = vmatpush1.bf16.msra.mxu0 0
        %5684 = vmatprep.subr.bf16.mxu0 0
        %5685 = vmatpush1.bf16.msra.mxu0 0
        %5686 = vmatprep.subr.bf16.mxu0 0
        %5687 = vmatpush1.bf16.msra.mxu0 0
        %5688 = vmatprep.subr.bf16.mxu0 0
        %5689 = vmatpush1.bf16.msra.mxu0 0
        %5690 = vmatprep.subr.bf16.mxu0 0
        %5691 = vmatpush1.bf16.msra.mxu0 0
        %5692 = vmatprep.subr.bf16.mxu0 0
        %5693 = vmatpush1.bf16.msra.mxu0 0
        %5694 = vmatprep.subr.bf16.mxu0 0
        %5695 = vmatpush1.bf16.msra.mxu0 %v5667
        %5696 = vmatprep.subr.bf16.mxu0 0
        %5697 = vmatpush1.bf16.msra.mxu0 %v5666
        %5698 = vmatprep.subr.bf16.mxu0 0
        %5699 = vmatpush2.bf16.msra.mxu0 0
        %5700 = vmatprep.subr.bf16.mxu0 0
        %5701 = vmatpush2.bf16.msra.mxu0 0
        %5702 = vmatprep.subr.bf16.mxu0 0
        %5703 = vmatpush2.bf16.msra.mxu0 0
        %5704 = vmatprep.subr.bf16.mxu0 0
        %5705 = vmatpush2.bf16.msra.mxu0 0
        %5706 = vmatprep.subr.bf16.mxu0 0
        %5707 = vmatpush2.bf16.msra.mxu0 0
        %5708 = vmatprep.subr.bf16.mxu0 0
        %5709 = vmatpush2.bf16.msra.mxu0 0
        %5710 = vmatprep.subr.bf16.mxu0 0
        %5711 = vmatpush2.bf16.msra.mxu0 0
        %5712 = vmatprep.subr.bf16.mxu0 0
        %5713 = vmatpush2.bf16.msra.mxu0 0
        %5714 = vmatprep.mubr.bf16.mxu0 0
        %5715 = vmatmul.mubr.bf16.gmra.mxu0 %v5671
        %v5716 = vpop.f32.mrf.mxu0
        %v5717 = vadd.f32 0.0, %v5716
        %v5718 = vpop.f32.mrf.mxu0
        %v5719 = vpop.f32.mrf.mxu0
        %v5720 = vadd.f32 0.0, %v5719
        %v5721 = vpop.f32.mrf.mxu0
        %5722 = vmatprep.mubr.bf16.mxu0 0
        %5723 = vmatmul.mubr.bf16.gmra.mxu0 %v5674
        %v5724 = vpop.f32.mrf.mxu0
        %v5725 = vadd.f32 0.0, %v5724
        %v5726 = vpop.f32.mrf.mxu0
        %v5727 = vpop.f32.mrf.mxu0
        %v5728 = vadd.f32 0.0, %v5727
        %v5729 = vpop.f32.mrf.mxu0
        %5730 = vmatprep.mubr.bf16.mxu0 0
        %5731 = vmatmul.mubr.bf16.gmra.mxu0 %v5677
        %v5732 = vpop.f32.mrf.mxu0
        %v5733 = vadd.f32 0.0, %v5732
        %v5734 = vpop.f32.mrf.mxu0
        %v5735 = vpop.f32.mrf.mxu0
        %v5736 = vadd.f32 0.0, %v5735
        %v5737 = vpop.f32.mrf.mxu0
        %5738 = vmatprep.mubr.bf16.mxu0 0
        %5739 = vmatmul.mubr.bf16.gmra.mxu0 %v5680
        %v5740 = vpop.f32.mrf.mxu0
        %v5741 = vadd.f32 0.0, %v5740
        %v5742 = vpop.f32.mrf.mxu0
        %v5743 = vpop.f32.mrf.mxu0
        %v5744 = vadd.f32 0.0, %v5743
        %v5745 = vpop.f32.mrf.mxu0
        %5746 = vdwg.mxu0
        %v5747 = vadd.f32 %v5633, %v5717
        %v5748 = vadd.f32 %v5634, %v5720
        %v5749 = vadd.f32 %v5635, %v5725
        %v5750 = vadd.f32 %v5636, %v5728
        %v5751 = vadd.f32 %v5637, %v5733
        %v5752 = vadd.f32 %v5638, %v5736
        %v5753 = vadd.f32 %v5639, %v5741
        %v5754 = vadd.f32 %v5640, %v5744
        %v5755 = vld [vmem:[%s1246 + $0x2] sm:$0xff]
        %v5756 = vld [vmem:[%s1246 + $0x12] sm:$0xff]
        %v5757 = vld [vmem:[%s1246 + $0x22] sm:$0xff]
        %v5758 = vld [vmem:[%s1246 + $0x32] sm:$0xff]
        %v5759 = vld [vmem:[%s1246 + $0x42] sm:$0xff]
        %v5760 = vld [vmem:[%s1246 + $0x52] sm:$0xff]
        %v5761 = vld [vmem:[%s1246 + $0x62] sm:$0xff]
        %v5762 = vld [vmem:[%s1246 + $0x72] sm:$0xff]
        %v5763 = vpack.c.bf16 %v5756, %v5755
        %v5764 = vpack.c.bf16 %v5758, %v5757
        %v5765 = vpack.c.bf16 %v5760, %v5759
        %v5766 = vpack.c.bf16 %v5762, %v5761
        %s5767 = scalar_lea.vmem [#allocation5], 128
        %v5768 = vld [vmem:[%s5767] sm:$0xf]
        %v5769 = vld [vmem:[%s5767 + $0x4] sm:$0xf]
        %v5770 = vld [vmem:[%s5767 + $0x8] sm:$0xf]
        %v5771 = vld [vmem:[%s5767 + $0xc] sm:$0xf]
        %v5776 = vunpack.c.l.b16 %v5768
        %v5777 = vunpack.c.l.b16 %v5769
        %v5778 = vunpack.c.l.b16 %v5770
        %v5779 = vunpack.c.l.b16 %v5771
        %v5780 = vpack.c.b16 %v5777, %v5776
        %v5781 = vpack.c.b16 %v5779, %v5778
        %v5785 = vsel %vm540, %v5763, 0
        %v5788 = vsel %vm540, %v5764, 0
        %v5791 = vsel %vm540, %v5765, 0
        %v5794 = vsel %vm540, %v5766, 0
        %5796 = vmatprep.subr.bf16.mxu0 0
        %5797 = vmatpush1.bf16.msra.mxu0 0
        %5798 = vmatprep.subr.bf16.mxu0 0
        %5799 = vmatpush1.bf16.msra.mxu0 0
        %5800 = vmatprep.subr.bf16.mxu0 0
        %5801 = vmatpush1.bf16.msra.mxu0 0
        %5802 = vmatprep.subr.bf16.mxu0 0
        %5803 = vmatpush1.bf16.msra.mxu0 0
        %5804 = vmatprep.subr.bf16.mxu0 0
        %5805 = vmatpush1.bf16.msra.mxu0 0
        %5806 = vmatprep.subr.bf16.mxu0 0
        %5807 = vmatpush1.bf16.msra.mxu0 0
        %5808 = vmatprep.subr.bf16.mxu0 0
        %5809 = vmatpush1.bf16.msra.mxu0 %v5781
        %5810 = vmatprep.subr.bf16.mxu0 0
        %5811 = vmatpush1.bf16.msra.mxu0 %v5780
        %5812 = vmatprep.subr.bf16.mxu0 0
        %5813 = vmatpush2.bf16.msra.mxu0 0
        %5814 = vmatprep.subr.bf16.mxu0 0
        %5815 = vmatpush2.bf16.msra.mxu0 0
        %5816 = vmatprep.subr.bf16.mxu0 0
        %5817 = vmatpush2.bf16.msra.mxu0 0
        %5818 = vmatprep.subr.bf16.mxu0 0
        %5819 = vmatpush2.bf16.msra.mxu0 0
        %5820 = vmatprep.subr.bf16.mxu0 0
        %5821 = vmatpush2.bf16.msra.mxu0 0
        %5822 = vmatprep.subr.bf16.mxu0 0
        %5823 = vmatpush2.bf16.msra.mxu0 0
        %5824 = vmatprep.subr.bf16.mxu0 0
        %5825 = vmatpush2.bf16.msra.mxu0 0
        %5826 = vmatprep.subr.bf16.mxu0 0
        %5827 = vmatpush2.bf16.msra.mxu0 0
        %5828 = vmatprep.mubr.bf16.mxu0 0
        %5829 = vmatmul.mubr.bf16.gmra.mxu0 %v5785
        %v5830 = vpop.f32.mrf.mxu0
        %v5831 = vadd.f32 0.0, %v5830
        %v5832 = vpop.f32.mrf.mxu0
        %v5833 = vpop.f32.mrf.mxu0
        %v5834 = vadd.f32 0.0, %v5833
        %v5835 = vpop.f32.mrf.mxu0
        %5836 = vmatprep.mubr.bf16.mxu0 0
        %5837 = vmatmul.mubr.bf16.gmra.mxu0 %v5788
        %v5838 = vpop.f32.mrf.mxu0
        %v5839 = vadd.f32 0.0, %v5838
        %v5840 = vpop.f32.mrf.mxu0
        %v5841 = vpop.f32.mrf.mxu0
        %v5842 = vadd.f32 0.0, %v5841
        %v5843 = vpop.f32.mrf.mxu0
        %5844 = vmatprep.mubr.bf16.mxu0 0
        %5845 = vmatmul.mubr.bf16.gmra.mxu0 %v5791
        %v5846 = vpop.f32.mrf.mxu0
        %v5847 = vadd.f32 0.0, %v5846
        %v5848 = vpop.f32.mrf.mxu0
        %v5849 = vpop.f32.mrf.mxu0
        %v5850 = vadd.f32 0.0, %v5849
        %v5851 = vpop.f32.mrf.mxu0
        %5852 = vmatprep.mubr.bf16.mxu0 0
        %5853 = vmatmul.mubr.bf16.gmra.mxu0 %v5794
        %v5854 = vpop.f32.mrf.mxu0
        %v5855 = vadd.f32 0.0, %v5854
        %v5856 = vpop.f32.mrf.mxu0
        %v5857 = vpop.f32.mrf.mxu0
        %v5858 = vadd.f32 0.0, %v5857
        %v5859 = vpop.f32.mrf.mxu0
        %5860 = vdwg.mxu0
        %v5861 = vadd.f32 %v5747, %v5831
        %v5862 = vadd.f32 %v5748, %v5834
        %v5863 = vadd.f32 %v5749, %v5839
        %v5864 = vadd.f32 %v5750, %v5842
        %v5865 = vadd.f32 %v5751, %v5847
        %v5866 = vadd.f32 %v5752, %v5850
        %v5867 = vadd.f32 %v5753, %v5855
        %v5868 = vadd.f32 %v5754, %v5858
        %v5869 = vld [vmem:[%s12] sm:$0x1]
        %v5871 = vlaneseq
        %v5872 = vshrl.u32 %v5871, 7
        %v5873 = vsub.s32 0, %v5872
        %v5874 = vrot.slane %v5869, %v5873
        %v5876 = vadd.f32 %v5861, %v5874
        %v5877 = vadd.f32 %v5862, %v5874
        %v5878 = vadd.f32 %v5863, %v5874
        %v5879 = vadd.f32 %v5864, %v5874
        %v5880 = vadd.f32 %v5865, %v5874
        %v5881 = vadd.f32 %v5866, %v5874
        %v5882 = vadd.f32 %v5867, %v5874
        %v5883 = vadd.f32 %v5868, %v5874
        %v5884 = vmax.f32 %v5876, 0.0
        %v5885 = vmax.f32 %v5877, 0.0
        %v5886 = vmax.f32 %v5878, 0.0
        %v5887 = vmax.f32 %v5879, 0.0
        %v5888 = vmax.f32 %v5880, 0.0
        %v5889 = vmax.f32 %v5881, 0.0
        %v5890 = vmax.f32 %v5882, 0.0
        %v5891 = vmax.f32 %v5883, 0.0
        %5892 = vst.msk [vmem:[%s570 + $0x1] sm:$0xff] %vm540, %v5884
        %5893 = vst.msk [vmem:[%s570 + $0x11] sm:$0xff] %vm540, %v5885
        %5894 = vst.msk [vmem:[%s570 + $0x21] sm:$0xff] %vm540, %v5886
        %5895 = vst.msk [vmem:[%s570 + $0x31] sm:$0xff] %vm540, %v5887
        %5896 = vst.msk [vmem:[%s570 + $0x41] sm:$0xff] %vm540, %v5888
        %5897 = vst.msk [vmem:[%s570 + $0x51] sm:$0xff] %vm540, %v5889
        %5898 = vst.msk [vmem:[%s570 + $0x61] sm:$0xff] %vm540, %v5890
        %5899 = vst.msk [vmem:[%s570 + $0x71] sm:$0xff] %vm540, %v5891
        %v5900 = vld [vmem:[#allocation2] sm:$0xff]
        %v5901 = vld [vmem:[#allocation2 + $0x10] sm:$0xff]
        %v5902 = vld [vmem:[#allocation2 + $0x20] sm:$0xff]
        %v5903 = vld [vmem:[#allocation2 + $0x30] sm:$0xff]
        %v5904 = vld [vmem:[#allocation2 + $0x40] sm:$0xff]
        %v5905 = vld [vmem:[#allocation2 + $0x50] sm:$0xff]
        %v5906 = vld [vmem:[#allocation2 + $0x60] sm:$0xff]
        %v5907 = vld [vmem:[#allocation2 + $0x70] sm:$0xff]
        %v5908 = vpack.c.bf16 %v5901, %v5900
        %v5909 = vpack.c.bf16 %v5903, %v5902
        %v5910 = vpack.c.bf16 %v5905, %v5904
        %v5911 = vpack.c.bf16 %v5907, %v5906
        %v5912 = vld [vmem:[#allocation7] sm:$0xf]
        %v5913 = vld [vmem:[#allocation7 + $0x4] sm:$0xf]
        %v5914 = vld [vmem:[#allocation7 + $0x8] sm:$0xf]
        %v5915 = vld [vmem:[#allocation7 + $0xc] sm:$0xf]
        %v5916 = vld [vmem:[#allocation2 + $0x1] sm:$0xff]
        %v5917 = vld [vmem:[#allocation2 + $0x11] sm:$0xff]
        %v5918 = vld [vmem:[#allocation2 + $0x21] sm:$0xff]
        %v5919 = vld [vmem:[#allocation2 + $0x31] sm:$0xff]
        %v5920 = vld [vmem:[#allocation2 + $0x41] sm:$0xff]
        %v5921 = vld [vmem:[#allocation2 + $0x51] sm:$0xff]
        %v5922 = vld [vmem:[#allocation2 + $0x61] sm:$0xff]
        %v5923 = vld [vmem:[#allocation2 + $0x71] sm:$0xff]
        %v5924 = vpack.c.bf16 %v5917, %v5916
        %v5925 = vpack.c.bf16 %v5919, %v5918
        %v5926 = vpack.c.bf16 %v5921, %v5920
        %v5927 = vpack.c.bf16 %v5923, %v5922
        %s5928 = scalar_lea.vmem [#allocation7], 16
        %v5929 = vld [vmem:[%s5928] sm:$0xf]
        %v5930 = vld [vmem:[%s5928 + $0x4] sm:$0xf]
        %v5931 = vld [vmem:[%s5928 + $0x8] sm:$0xf]
        %v5932 = vld [vmem:[%s5928 + $0xc] sm:$0xf]
        %v5937 = vunpack.c.l.b16 %v5929
        %v5938 = vunpack.c.l.b16 %v5930
        %v5939 = vunpack.c.l.b16 %v5931
        %v5940 = vunpack.c.l.b16 %v5932
        %v5941 = vpack.c.b16 %v5938, %v5937
        %v5942 = vpack.c.b16 %v5940, %v5939
        %v5946 = vsel %vm540, %v5924, 0
        %v5949 = vsel %vm540, %v5925, 0
        %v5952 = vsel %vm540, %v5926, 0
        %v5955 = vsel %vm540, %v5927, 0
        %5957 = vmatprep.subr.bf16.mxu0 0
        %5958 = vmatpush1.bf16.msra.mxu0 0
        %5959 = vmatprep.subr.bf16.mxu0 0
        %5960 = vmatpush1.bf16.msra.mxu0 0
        %5961 = vmatprep.subr.bf16.mxu0 0
        %5962 = vmatpush1.bf16.msra.mxu0 0
        %5963 = vmatprep.subr.bf16.mxu0 0
        %5964 = vmatpush1.bf16.msra.mxu0 0
        %5965 = vmatprep.subr.bf16.mxu0 0
        %5966 = vmatpush1.bf16.msra.mxu0 0
        %5967 = vmatprep.subr.bf16.mxu0 0
        %5968 = vmatpush1.bf16.msra.mxu0 0
        %5969 = vmatprep.subr.bf16.mxu0 0
        %5970 = vmatpush1.bf16.msra.mxu0 %v5942
        %5971 = vmatprep.subr.bf16.mxu0 0
        %5972 = vmatpush1.bf16.msra.mxu0 %v5941
        %5973 = vmatprep.subr.bf16.mxu0 0
        %5974 = vmatpush2.bf16.msra.mxu0 0
        %5975 = vmatprep.subr.bf16.mxu0 0
        %5976 = vmatpush2.bf16.msra.mxu0 0
        %5977 = vmatprep.subr.bf16.mxu0 0
        %5978 = vmatpush2.bf16.msra.mxu0 0
        %5979 = vmatprep.subr.bf16.mxu0 0
        %5980 = vmatpush2.bf16.msra.mxu0 0
        %5981 = vmatprep.subr.bf16.mxu0 0
        %5982 = vmatpush2.bf16.msra.mxu0 0
        %5983 = vmatprep.subr.bf16.mxu0 0
        %5984 = vmatpush2.bf16.msra.mxu0 0
        %5985 = vmatprep.subr.bf16.mxu0 0
        %5986 = vmatpush2.bf16.msra.mxu0 0
        %5987 = vmatprep.subr.bf16.mxu0 0
        %5988 = vmatpush2.bf16.msra.mxu0 0
        %5989 = vmatprep.mubr.bf16.mxu0 0
        %5990 = vmatmul.mubr.bf16.gmra.mxu0 %v5946
        %v5991 = vpop.f32.mrf.mxu0
        %v5992 = vadd.f32 0.0, %v5991
        %v5993 = vpop.f32.mrf.mxu0
        %v5994 = vpop.f32.mrf.mxu0
        %v5995 = vadd.f32 0.0, %v5994
        %v5996 = vpop.f32.mrf.mxu0
        %5997 = vmatprep.mubr.bf16.mxu0 0
        %5998 = vmatmul.mubr.bf16.gmra.mxu0 %v5949
        %v5999 = vpop.f32.mrf.mxu0
        %v6000 = vadd.f32 0.0, %v5999
        %v6001 = vpop.f32.mrf.mxu0
        %v6002 = vpop.f32.mrf.mxu0
        %v6003 = vadd.f32 0.0, %v6002
        %v6004 = vpop.f32.mrf.mxu0
        %6005 = vmatprep.mubr.bf16.mxu0 0
        %6006 = vmatmul.mubr.bf16.gmra.mxu0 %v5952
        %v6007 = vpop.f32.mrf.mxu0
        %v6008 = vadd.f32 0.0, %v6007
        %v6009 = vpop.f32.mrf.mxu0
        %v6010 = vpop.f32.mrf.mxu0
        %v6011 = vadd.f32 0.0, %v6010
        %v6012 = vpop.f32.mrf.mxu0
        %6013 = vmatprep.mubr.bf16.mxu0 0
        %6014 = vmatmul.mubr.bf16.gmra.mxu0 %v5955
        %v6015 = vpop.f32.mrf.mxu0
        %v6016 = vadd.f32 0.0, %v6015
        %v6017 = vpop.f32.mrf.mxu0
        %v6018 = vpop.f32.mrf.mxu0
        %v6019 = vadd.f32 0.0, %v6018
        %v6020 = vpop.f32.mrf.mxu0
        %6021 = vdwg.mxu0
        %v6026 = vunpack.c.l.b16 %v5912
        %v6027 = vunpack.c.l.b16 %v5913
        %v6028 = vunpack.c.l.b16 %v5914
        %v6029 = vunpack.c.l.b16 %v5915
        %v6030 = vpack.c.b16 %v6027, %v6026
        %v6031 = vpack.c.b16 %v6029, %v6028
        %v6035 = vsel %vm540, %v5908, 0
        %v6038 = vsel %vm540, %v5909, 0
        %v6041 = vsel %vm540, %v5910, 0
        %v6044 = vsel %vm540, %v5911, 0
        %6046 = vmatprep.subr.bf16.mxu0 0
        %6047 = vmatpush1.bf16.msra.mxu0 0
        %6048 = vmatprep.subr.bf16.mxu0 0
        %6049 = vmatpush1.bf16.msra.mxu0 0
        %6050 = vmatprep.subr.bf16.mxu0 0
        %6051 = vmatpush1.bf16.msra.mxu0 0
        %6052 = vmatprep.subr.bf16.mxu0 0
        %6053 = vmatpush1.bf16.msra.mxu0 0
        %6054 = vmatprep.subr.bf16.mxu0 0
        %6055 = vmatpush1.bf16.msra.mxu0 0
        %6056 = vmatprep.subr.bf16.mxu0 0
        %6057 = vmatpush1.bf16.msra.mxu0 0
        %6058 = vmatprep.subr.bf16.mxu0 0
        %6059 = vmatpush1.bf16.msra.mxu0 %v6031
        %6060 = vmatprep.subr.bf16.mxu0 0
        %6061 = vmatpush1.bf16.msra.mxu0 %v6030
        %6062 = vmatprep.subr.bf16.mxu0 0
        %6063 = vmatpush2.bf16.msra.mxu0 0
        %6064 = vmatprep.subr.bf16.mxu0 0
        %6065 = vmatpush2.bf16.msra.mxu0 0
        %6066 = vmatprep.subr.bf16.mxu0 0
        %6067 = vmatpush2.bf16.msra.mxu0 0
        %6068 = vmatprep.subr.bf16.mxu0 0
        %6069 = vmatpush2.bf16.msra.mxu0 0
        %6070 = vmatprep.subr.bf16.mxu0 0
        %6071 = vmatpush2.bf16.msra.mxu0 0
        %6072 = vmatprep.subr.bf16.mxu0 0
        %6073 = vmatpush2.bf16.msra.mxu0 0
        %6074 = vmatprep.subr.bf16.mxu0 0
        %6075 = vmatpush2.bf16.msra.mxu0 0
        %6076 = vmatprep.subr.bf16.mxu0 0
        %6077 = vmatpush2.bf16.msra.mxu0 0
        %6078 = vmatprep.mubr.bf16.mxu0 0
        %6079 = vmatmul.mubr.bf16.gmra.mxu0 %v6035
        %v6080 = vpop.f32.mrf.mxu0
        %v6081 = vadd.f32 %v5992, %v6080
        %v6082 = vpop.f32.mrf.mxu0
        %v6083 = vpop.f32.mrf.mxu0
        %v6084 = vadd.f32 %v5995, %v6083
        %v6085 = vpop.f32.mrf.mxu0
        %6086 = vmatprep.mubr.bf16.mxu0 0
        %6087 = vmatmul.mubr.bf16.gmra.mxu0 %v6038
        %v6088 = vpop.f32.mrf.mxu0
        %v6089 = vadd.f32 %v6000, %v6088
        %v6090 = vpop.f32.mrf.mxu0
        %v6091 = vpop.f32.mrf.mxu0
        %v6092 = vadd.f32 %v6003, %v6091
        %v6093 = vpop.f32.mrf.mxu0
        %6094 = vmatprep.mubr.bf16.mxu0 0
        %6095 = vmatmul.mubr.bf16.gmra.mxu0 %v6041
        %v6096 = vpop.f32.mrf.mxu0
        %v6097 = vadd.f32 %v6008, %v6096
        %v6098 = vpop.f32.mrf.mxu0
        %v6099 = vpop.f32.mrf.mxu0
        %v6100 = vadd.f32 %v6011, %v6099
        %v6101 = vpop.f32.mrf.mxu0
        %6102 = vmatprep.mubr.bf16.mxu0 0
        %6103 = vmatmul.mubr.bf16.gmra.mxu0 %v6044
        %v6104 = vpop.f32.mrf.mxu0
        %v6105 = vadd.f32 %v6016, %v6104
        %v6106 = vpop.f32.mrf.mxu0
        %v6107 = vpop.f32.mrf.mxu0
        %v6108 = vadd.f32 %v6019, %v6107
        %v6109 = vpop.f32.mrf.mxu0
        %6110 = vdwg.mxu0
        %v6111 = vld [vmem:[#allocation2 + $0x2] sm:$0xff]
        %v6112 = vld [vmem:[#allocation2 + $0x12] sm:$0xff]
        %v6113 = vld [vmem:[#allocation2 + $0x22] sm:$0xff]
        %v6114 = vld [vmem:[#allocation2 + $0x32] sm:$0xff]
        %v6115 = vld [vmem:[#allocation2 + $0x42] sm:$0xff]
        %v6116 = vld [vmem:[#allocation2 + $0x52] sm:$0xff]
        %v6117 = vld [vmem:[#allocation2 + $0x62] sm:$0xff]
        %v6118 = vld [vmem:[#allocation2 + $0x72] sm:$0xff]
        %v6119 = vpack.c.bf16 %v6112, %v6111
        %v6120 = vpack.c.bf16 %v6114, %v6113
        %v6121 = vpack.c.bf16 %v6116, %v6115
        %v6122 = vpack.c.bf16 %v6118, %v6117
        %s6123 = scalar_lea.vmem [#allocation7], 32
        %v6124 = vld [vmem:[%s6123] sm:$0xf]
        %v6125 = vld [vmem:[%s6123 + $0x4] sm:$0xf]
        %v6126 = vld [vmem:[%s6123 + $0x8] sm:$0xf]
        %v6127 = vld [vmem:[%s6123 + $0xc] sm:$0xf]
        %v6132 = vunpack.c.l.b16 %v6124
        %v6133 = vunpack.c.l.b16 %v6125
        %v6134 = vunpack.c.l.b16 %v6126
        %v6135 = vunpack.c.l.b16 %v6127
        %v6136 = vpack.c.b16 %v6133, %v6132
        %v6137 = vpack.c.b16 %v6135, %v6134
        %v6141 = vsel %vm540, %v6119, 0
        %v6144 = vsel %vm540, %v6120, 0
        %v6147 = vsel %vm540, %v6121, 0
        %v6150 = vsel %vm540, %v6122, 0
        %6152 = vmatprep.subr.bf16.mxu0 0
        %6153 = vmatpush1.bf16.msra.mxu0 0
        %6154 = vmatprep.subr.bf16.mxu0 0
        %6155 = vmatpush1.bf16.msra.mxu0 0
        %6156 = vmatprep.subr.bf16.mxu0 0
        %6157 = vmatpush1.bf16.msra.mxu0 0
        %6158 = vmatprep.subr.bf16.mxu0 0
        %6159 = vmatpush1.bf16.msra.mxu0 0
        %6160 = vmatprep.subr.bf16.mxu0 0
        %6161 = vmatpush1.bf16.msra.mxu0 0
        %6162 = vmatprep.subr.bf16.mxu0 0
        %6163 = vmatpush1.bf16.msra.mxu0 0
        %6164 = vmatprep.subr.bf16.mxu0 0
        %6165 = vmatpush1.bf16.msra.mxu0 %v6137
        %6166 = vmatprep.subr.bf16.mxu0 0
        %6167 = vmatpush1.bf16.msra.mxu0 %v6136
        %6168 = vmatprep.subr.bf16.mxu0 0
        %6169 = vmatpush2.bf16.msra.mxu0 0
        %6170 = vmatprep.subr.bf16.mxu0 0
        %6171 = vmatpush2.bf16.msra.mxu0 0
        %6172 = vmatprep.subr.bf16.mxu0 0
        %6173 = vmatpush2.bf16.msra.mxu0 0
        %6174 = vmatprep.subr.bf16.mxu0 0
        %6175 = vmatpush2.bf16.msra.mxu0 0
        %6176 = vmatprep.subr.bf16.mxu0 0
        %6177 = vmatpush2.bf16.msra.mxu0 0
        %6178 = vmatprep.subr.bf16.mxu0 0
        %6179 = vmatpush2.bf16.msra.mxu0 0
        %6180 = vmatprep.subr.bf16.mxu0 0
        %6181 = vmatpush2.bf16.msra.mxu0 0
        %6182 = vmatprep.subr.bf16.mxu0 0
        %6183 = vmatpush2.bf16.msra.mxu0 0
        %6184 = vmatprep.mubr.bf16.mxu0 0
        %6185 = vmatmul.mubr.bf16.gmra.mxu0 %v6141
        %v6186 = vpop.f32.mrf.mxu0
        %v6187 = vadd.f32 0.0, %v6186
        %v6188 = vpop.f32.mrf.mxu0
        %v6189 = vpop.f32.mrf.mxu0
        %v6190 = vadd.f32 0.0, %v6189
        %v6191 = vpop.f32.mrf.mxu0
        %6192 = vmatprep.mubr.bf16.mxu0 0
        %6193 = vmatmul.mubr.bf16.gmra.mxu0 %v6144
        %v6194 = vpop.f32.mrf.mxu0
        %v6195 = vadd.f32 0.0, %v6194
        %v6196 = vpop.f32.mrf.mxu0
        %v6197 = vpop.f32.mrf.mxu0
        %v6198 = vadd.f32 0.0, %v6197
        %v6199 = vpop.f32.mrf.mxu0
        %6200 = vmatprep.mubr.bf16.mxu0 0
        %6201 = vmatmul.mubr.bf16.gmra.mxu0 %v6147
        %v6202 = vpop.f32.mrf.mxu0
        %v6203 = vadd.f32 0.0, %v6202
        %v6204 = vpop.f32.mrf.mxu0
        %v6205 = vpop.f32.mrf.mxu0
        %v6206 = vadd.f32 0.0, %v6205
        %v6207 = vpop.f32.mrf.mxu0
        %6208 = vmatprep.mubr.bf16.mxu0 0
        %6209 = vmatmul.mubr.bf16.gmra.mxu0 %v6150
        %v6210 = vpop.f32.mrf.mxu0
        %v6211 = vadd.f32 0.0, %v6210
        %v6212 = vpop.f32.mrf.mxu0
        %v6213 = vpop.f32.mrf.mxu0
        %v6214 = vadd.f32 0.0, %v6213
        %v6215 = vpop.f32.mrf.mxu0
        %6216 = vdwg.mxu0
        %v6217 = vadd.f32 %v6081, %v6187
        %v6218 = vadd.f32 %v6084, %v6190
        %v6219 = vadd.f32 %v6089, %v6195
        %v6220 = vadd.f32 %v6092, %v6198
        %v6221 = vadd.f32 %v6097, %v6203
        %v6222 = vadd.f32 %v6100, %v6206
        %v6223 = vadd.f32 %v6105, %v6211
        %v6224 = vadd.f32 %v6108, %v6214
        %v6225 = vld [vmem:[%s570] sm:$0xff]
        %v6226 = vld [vmem:[%s570 + $0x10] sm:$0xff]
        %v6227 = vld [vmem:[%s570 + $0x20] sm:$0xff]
        %v6228 = vld [vmem:[%s570 + $0x30] sm:$0xff]
        %v6229 = vld [vmem:[%s570 + $0x40] sm:$0xff]
        %v6230 = vld [vmem:[%s570 + $0x50] sm:$0xff]
        %v6231 = vld [vmem:[%s570 + $0x60] sm:$0xff]
        %v6232 = vld [vmem:[%s570 + $0x70] sm:$0xff]
        %v6233 = vpack.c.bf16 %v6226, %v6225
        %v6234 = vpack.c.bf16 %v6228, %v6227
        %v6235 = vpack.c.bf16 %v6230, %v6229
        %v6236 = vpack.c.bf16 %v6232, %v6231
        %s6237 = scalar_lea.vmem [#allocation7], 48
        %v6238 = vld [vmem:[%s6237] sm:$0xf]
        %v6239 = vld [vmem:[%s6237 + $0x4] sm:$0xf]
        %v6240 = vld [vmem:[%s6237 + $0x8] sm:$0xf]
        %v6241 = vld [vmem:[%s6237 + $0xc] sm:$0xf]
        %v6246 = vunpack.c.l.b16 %v6238
        %v6247 = vunpack.c.l.b16 %v6239
        %v6248 = vunpack.c.l.b16 %v6240
        %v6249 = vunpack.c.l.b16 %v6241
        %v6250 = vpack.c.b16 %v6247, %v6246
        %v6251 = vpack.c.b16 %v6249, %v6248
        %v6255 = vsel %vm540, %v6233, 0
        %v6258 = vsel %vm540, %v6234, 0
        %v6261 = vsel %vm540, %v6235, 0
        %v6264 = vsel %vm540, %v6236, 0
        %6266 = vmatprep.subr.bf16.mxu0 0
        %6267 = vmatpush1.bf16.msra.mxu0 0
        %6268 = vmatprep.subr.bf16.mxu0 0
        %6269 = vmatpush1.bf16.msra.mxu0 0
        %6270 = vmatprep.subr.bf16.mxu0 0
        %6271 = vmatpush1.bf16.msra.mxu0 0
        %6272 = vmatprep.subr.bf16.mxu0 0
        %6273 = vmatpush1.bf16.msra.mxu0 0
        %6274 = vmatprep.subr.bf16.mxu0 0
        %6275 = vmatpush1.bf16.msra.mxu0 0
        %6276 = vmatprep.subr.bf16.mxu0 0
        %6277 = vmatpush1.bf16.msra.mxu0 0
        %6278 = vmatprep.subr.bf16.mxu0 0
        %6279 = vmatpush1.bf16.msra.mxu0 %v6251
        %6280 = vmatprep.subr.bf16.mxu0 0
        %6281 = vmatpush1.bf16.msra.mxu0 %v6250
        %6282 = vmatprep.subr.bf16.mxu0 0
        %6283 = vmatpush2.bf16.msra.mxu0 0
        %6284 = vmatprep.subr.bf16.mxu0 0
        %6285 = vmatpush2.bf16.msra.mxu0 0
        %6286 = vmatprep.subr.bf16.mxu0 0
        %6287 = vmatpush2.bf16.msra.mxu0 0
        %6288 = vmatprep.subr.bf16.mxu0 0
        %6289 = vmatpush2.bf16.msra.mxu0 0
        %6290 = vmatprep.subr.bf16.mxu0 0
        %6291 = vmatpush2.bf16.msra.mxu0 0
        %6292 = vmatprep.subr.bf16.mxu0 0
        %6293 = vmatpush2.bf16.msra.mxu0 0
        %6294 = vmatprep.subr.bf16.mxu0 0
        %6295 = vmatpush2.bf16.msra.mxu0 0
        %6296 = vmatprep.subr.bf16.mxu0 0
        %6297 = vmatpush2.bf16.msra.mxu0 0
        %6298 = vmatprep.mubr.bf16.mxu0 0
        %6299 = vmatmul.mubr.bf16.gmra.mxu0 %v6255
        %v6300 = vpop.f32.mrf.mxu0
        %v6301 = vadd.f32 0.0, %v6300
        %v6302 = vpop.f32.mrf.mxu0
        %v6303 = vpop.f32.mrf.mxu0
        %v6304 = vadd.f32 0.0, %v6303
        %v6305 = vpop.f32.mrf.mxu0
        %6306 = vmatprep.mubr.bf16.mxu0 0
        %6307 = vmatmul.mubr.bf16.gmra.mxu0 %v6258
        %v6308 = vpop.f32.mrf.mxu0
        %v6309 = vadd.f32 0.0, %v6308
        %v6310 = vpop.f32.mrf.mxu0
        %v6311 = vpop.f32.mrf.mxu0
        %v6312 = vadd.f32 0.0, %v6311
        %v6313 = vpop.f32.mrf.mxu0
        %6314 = vmatprep.mubr.bf16.mxu0 0
        %6315 = vmatmul.mubr.bf16.gmra.mxu0 %v6261
        %v6316 = vpop.f32.mrf.mxu0
        %v6317 = vadd.f32 0.0, %v6316
        %v6318 = vpop.f32.mrf.mxu0
        %v6319 = vpop.f32.mrf.mxu0
        %v6320 = vadd.f32 0.0, %v6319
        %v6321 = vpop.f32.mrf.mxu0
        %6322 = vmatprep.mubr.bf16.mxu0 0
        %6323 = vmatmul.mubr.bf16.gmra.mxu0 %v6264
        %v6324 = vpop.f32.mrf.mxu0
        %v6325 = vadd.f32 0.0, %v6324
        %v6326 = vpop.f32.mrf.mxu0
        %v6327 = vpop.f32.mrf.mxu0
        %v6328 = vadd.f32 0.0, %v6327
        %v6329 = vpop.f32.mrf.mxu0
        %6330 = vdwg.mxu0
        %v6331 = vadd.f32 %v6217, %v6301
        %v6332 = vadd.f32 %v6218, %v6304
        %v6333 = vadd.f32 %v6219, %v6309
        %v6334 = vadd.f32 %v6220, %v6312
        %v6335 = vadd.f32 %v6221, %v6317
        %v6336 = vadd.f32 %v6222, %v6320
        %v6337 = vadd.f32 %v6223, %v6325
        %v6338 = vadd.f32 %v6224, %v6328
        %v6339 = vld [vmem:[%s570 + $0x1] sm:$0xff]
        %v6340 = vld [vmem:[%s570 + $0x11] sm:$0xff]
        %v6341 = vld [vmem:[%s570 + $0x21] sm:$0xff]
        %v6342 = vld [vmem:[%s570 + $0x31] sm:$0xff]
        %v6343 = vld [vmem:[%s570 + $0x41] sm:$0xff]
        %v6344 = vld [vmem:[%s570 + $0x51] sm:$0xff]
        %v6345 = vld [vmem:[%s570 + $0x61] sm:$0xff]
        %v6346 = vld [vmem:[%s570 + $0x71] sm:$0xff]
        %v6347 = vpack.c.bf16 %v6340, %v6339
        %v6348 = vpack.c.bf16 %v6342, %v6341
        %v6349 = vpack.c.bf16 %v6344, %v6343
        %v6350 = vpack.c.bf16 %v6346, %v6345
        %s6351 = scalar_lea.vmem [#allocation7], 64
        %v6352 = vld [vmem:[%s6351] sm:$0xf]
        %v6353 = vld [vmem:[%s6351 + $0x4] sm:$0xf]
        %v6354 = vld [vmem:[%s6351 + $0x8] sm:$0xf]
        %v6355 = vld [vmem:[%s6351 + $0xc] sm:$0xf]
        %v6360 = vunpack.c.l.b16 %v6352
        %v6361 = vunpack.c.l.b16 %v6353
        %v6362 = vunpack.c.l.b16 %v6354
        %v6363 = vunpack.c.l.b16 %v6355
        %v6364 = vpack.c.b16 %v6361, %v6360
        %v6365 = vpack.c.b16 %v6363, %v6362
        %v6369 = vsel %vm540, %v6347, 0
        %v6372 = vsel %vm540, %v6348, 0
        %v6375 = vsel %vm540, %v6349, 0
        %v6378 = vsel %vm540, %v6350, 0
        %6380 = vmatprep.subr.bf16.mxu0 0
        %6381 = vmatpush1.bf16.msra.mxu0 0
        %6382 = vmatprep.subr.bf16.mxu0 0
        %6383 = vmatpush1.bf16.msra.mxu0 0
        %6384 = vmatprep.subr.bf16.mxu0 0
        %6385 = vmatpush1.bf16.msra.mxu0 0
        %6386 = vmatprep.subr.bf16.mxu0 0
        %6387 = vmatpush1.bf16.msra.mxu0 0
        %6388 = vmatprep.subr.bf16.mxu0 0
        %6389 = vmatpush1.bf16.msra.mxu0 0
        %6390 = vmatprep.subr.bf16.mxu0 0
        %6391 = vmatpush1.bf16.msra.mxu0 0
        %6392 = vmatprep.subr.bf16.mxu0 0
        %6393 = vmatpush1.bf16.msra.mxu0 %v6365
        %6394 = vmatprep.subr.bf16.mxu0 0
        %6395 = vmatpush1.bf16.msra.mxu0 %v6364
        %6396 = vmatprep.subr.bf16.mxu0 0
        %6397 = vmatpush2.bf16.msra.mxu0 0
        %6398 = vmatprep.subr.bf16.mxu0 0
        %6399 = vmatpush2.bf16.msra.mxu0 0
        %6400 = vmatprep.subr.bf16.mxu0 0
        %6401 = vmatpush2.bf16.msra.mxu0 0
        %6402 = vmatprep.subr.bf16.mxu0 0
        %6403 = vmatpush2.bf16.msra.mxu0 0
        %6404 = vmatprep.subr.bf16.mxu0 0
        %6405 = vmatpush2.bf16.msra.mxu0 0
        %6406 = vmatprep.subr.bf16.mxu0 0
        %6407 = vmatpush2.bf16.msra.mxu0 0
        %6408 = vmatprep.subr.bf16.mxu0 0
        %6409 = vmatpush2.bf16.msra.mxu0 0
        %6410 = vmatprep.subr.bf16.mxu0 0
        %6411 = vmatpush2.bf16.msra.mxu0 0
        %6412 = vmatprep.mubr.bf16.mxu0 0
        %6413 = vmatmul.mubr.bf16.gmra.mxu0 %v6369
        %v6414 = vpop.f32.mrf.mxu0
        %v6415 = vadd.f32 0.0, %v6414
        %v6416 = vpop.f32.mrf.mxu0
        %v6417 = vpop.f32.mrf.mxu0
        %v6418 = vadd.f32 0.0, %v6417
        %v6419 = vpop.f32.mrf.mxu0
        %6420 = vmatprep.mubr.bf16.mxu0 0
        %6421 = vmatmul.mubr.bf16.gmra.mxu0 %v6372
        %v6422 = vpop.f32.mrf.mxu0
        %v6423 = vadd.f32 0.0, %v6422
        %v6424 = vpop.f32.mrf.mxu0
        %v6425 = vpop.f32.mrf.mxu0
        %v6426 = vadd.f32 0.0, %v6425
        %v6427 = vpop.f32.mrf.mxu0
        %6428 = vmatprep.mubr.bf16.mxu0 0
        %6429 = vmatmul.mubr.bf16.gmra.mxu0 %v6375
        %v6430 = vpop.f32.mrf.mxu0
        %v6431 = vadd.f32 0.0, %v6430
        %v6432 = vpop.f32.mrf.mxu0
        %v6433 = vpop.f32.mrf.mxu0
        %v6434 = vadd.f32 0.0, %v6433
        %v6435 = vpop.f32.mrf.mxu0
        %6436 = vmatprep.mubr.bf16.mxu0 0
        %6437 = vmatmul.mubr.bf16.gmra.mxu0 %v6378
        %v6438 = vpop.f32.mrf.mxu0
        %v6439 = vadd.f32 0.0, %v6438
        %v6440 = vpop.f32.mrf.mxu0
        %v6441 = vpop.f32.mrf.mxu0
        %v6442 = vadd.f32 0.0, %v6441
        %v6443 = vpop.f32.mrf.mxu0
        %6444 = vdwg.mxu0
        %v6445 = vadd.f32 %v6331, %v6415
        %v6446 = vadd.f32 %v6332, %v6418
        %v6447 = vadd.f32 %v6333, %v6423
        %v6448 = vadd.f32 %v6334, %v6426
        %v6449 = vadd.f32 %v6335, %v6431
        %v6450 = vadd.f32 %v6336, %v6434
        %v6451 = vadd.f32 %v6337, %v6439
        %v6452 = vadd.f32 %v6338, %v6442
        %v6453 = vld [vmem:[%s570 + $0x2] sm:$0xff]
        %v6454 = vld [vmem:[%s570 + $0x12] sm:$0xff]
        %v6455 = vld [vmem:[%s570 + $0x22] sm:$0xff]
        %v6456 = vld [vmem:[%s570 + $0x32] sm:$0xff]
        %v6457 = vld [vmem:[%s570 + $0x42] sm:$0xff]
        %v6458 = vld [vmem:[%s570 + $0x52] sm:$0xff]
        %v6459 = vld [vmem:[%s570 + $0x62] sm:$0xff]
        %v6460 = vld [vmem:[%s570 + $0x72] sm:$0xff]
        %v6461 = vpack.c.bf16 %v6454, %v6453
        %v6462 = vpack.c.bf16 %v6456, %v6455
        %v6463 = vpack.c.bf16 %v6458, %v6457
        %v6464 = vpack.c.bf16 %v6460, %v6459
        %s6465 = scalar_lea.vmem [#allocation7], 80
        %v6466 = vld [vmem:[%s6465] sm:$0xf]
        %v6467 = vld [vmem:[%s6465 + $0x4] sm:$0xf]
        %v6468 = vld [vmem:[%s6465 + $0x8] sm:$0xf]
        %v6469 = vld [vmem:[%s6465 + $0xc] sm:$0xf]
        %v6474 = vunpack.c.l.b16 %v6466
        %v6475 = vunpack.c.l.b16 %v6467
        %v6476 = vunpack.c.l.b16 %v6468
        %v6477 = vunpack.c.l.b16 %v6469
        %v6478 = vpack.c.b16 %v6475, %v6474
        %v6479 = vpack.c.b16 %v6477, %v6476
        %v6483 = vsel %vm540, %v6461, 0
        %v6486 = vsel %vm540, %v6462, 0
        %v6489 = vsel %vm540, %v6463, 0
        %v6492 = vsel %vm540, %v6464, 0
        %6494 = vmatprep.subr.bf16.mxu0 0
        %6495 = vmatpush1.bf16.msra.mxu0 0
        %6496 = vmatprep.subr.bf16.mxu0 0
        %6497 = vmatpush1.bf16.msra.mxu0 0
        %6498 = vmatprep.subr.bf16.mxu0 0
        %6499 = vmatpush1.bf16.msra.mxu0 0
        %6500 = vmatprep.subr.bf16.mxu0 0
        %6501 = vmatpush1.bf16.msra.mxu0 0
        %6502 = vmatprep.subr.bf16.mxu0 0
        %6503 = vmatpush1.bf16.msra.mxu0 0
        %6504 = vmatprep.subr.bf16.mxu0 0
        %6505 = vmatpush1.bf16.msra.mxu0 0
        %6506 = vmatprep.subr.bf16.mxu0 0
        %6507 = vmatpush1.bf16.msra.mxu0 %v6479
        %6508 = vmatprep.subr.bf16.mxu0 0
        %6509 = vmatpush1.bf16.msra.mxu0 %v6478
        %6510 = vmatprep.subr.bf16.mxu0 0
        %6511 = vmatpush2.bf16.msra.mxu0 0
        %6512 = vmatprep.subr.bf16.mxu0 0
        %6513 = vmatpush2.bf16.msra.mxu0 0
        %6514 = vmatprep.subr.bf16.mxu0 0
        %6515 = vmatpush2.bf16.msra.mxu0 0
        %6516 = vmatprep.subr.bf16.mxu0 0
        %6517 = vmatpush2.bf16.msra.mxu0 0
        %6518 = vmatprep.subr.bf16.mxu0 0
        %6519 = vmatpush2.bf16.msra.mxu0 0
        %6520 = vmatprep.subr.bf16.mxu0 0
        %6521 = vmatpush2.bf16.msra.mxu0 0
        %6522 = vmatprep.subr.bf16.mxu0 0
        %6523 = vmatpush2.bf16.msra.mxu0 0
        %6524 = vmatprep.subr.bf16.mxu0 0
        %6525 = vmatpush2.bf16.msra.mxu0 0
        %6526 = vmatprep.mubr.bf16.mxu0 0
        %6527 = vmatmul.mubr.bf16.gmra.mxu0 %v6483
        %v6528 = vpop.f32.mrf.mxu0
        %v6529 = vadd.f32 0.0, %v6528
        %v6530 = vpop.f32.mrf.mxu0
        %v6531 = vpop.f32.mrf.mxu0
        %v6532 = vadd.f32 0.0, %v6531
        %v6533 = vpop.f32.mrf.mxu0
        %6534 = vmatprep.mubr.bf16.mxu0 0
        %6535 = vmatmul.mubr.bf16.gmra.mxu0 %v6486
        %v6536 = vpop.f32.mrf.mxu0
        %v6537 = vadd.f32 0.0, %v6536
        %v6538 = vpop.f32.mrf.mxu0
        %v6539 = vpop.f32.mrf.mxu0
        %v6540 = vadd.f32 0.0, %v6539
        %v6541 = vpop.f32.mrf.mxu0
        %6542 = vmatprep.mubr.bf16.mxu0 0
        %6543 = vmatmul.mubr.bf16.gmra.mxu0 %v6489
        %v6544 = vpop.f32.mrf.mxu0
        %v6545 = vadd.f32 0.0, %v6544
        %v6546 = vpop.f32.mrf.mxu0
        %v6547 = vpop.f32.mrf.mxu0
        %v6548 = vadd.f32 0.0, %v6547
        %v6549 = vpop.f32.mrf.mxu0
        %6550 = vmatprep.mubr.bf16.mxu0 0
        %6551 = vmatmul.mubr.bf16.gmra.mxu0 %v6492
        %v6552 = vpop.f32.mrf.mxu0
        %v6553 = vadd.f32 0.0, %v6552
        %v6554 = vpop.f32.mrf.mxu0
        %v6555 = vpop.f32.mrf.mxu0
        %v6556 = vadd.f32 0.0, %v6555
        %v6557 = vpop.f32.mrf.mxu0
        %6558 = vdwg.mxu0
        %v6559 = vadd.f32 %v6445, %v6529
        %v6560 = vadd.f32 %v6446, %v6532
        %v6561 = vadd.f32 %v6447, %v6537
        %v6562 = vadd.f32 %v6448, %v6540
        %v6563 = vadd.f32 %v6449, %v6545
        %v6564 = vadd.f32 %v6450, %v6548
        %v6565 = vadd.f32 %v6451, %v6553
        %v6566 = vadd.f32 %v6452, %v6556
        %v6567 = vld [vmem:[%s1246] sm:$0xff]
        %v6568 = vld [vmem:[%s1246 + $0x10] sm:$0xff]
        %v6569 = vld [vmem:[%s1246 + $0x20] sm:$0xff]
        %v6570 = vld [vmem:[%s1246 + $0x30] sm:$0xff]
        %v6571 = vld [vmem:[%s1246 + $0x40] sm:$0xff]
        %v6572 = vld [vmem:[%s1246 + $0x50] sm:$0xff]
        %v6573 = vld [vmem:[%s1246 + $0x60] sm:$0xff]
        %v6574 = vld [vmem:[%s1246 + $0x70] sm:$0xff]
        %v6575 = vpack.c.bf16 %v6568, %v6567
        %v6576 = vpack.c.bf16 %v6570, %v6569
        %v6577 = vpack.c.bf16 %v6572, %v6571
        %v6578 = vpack.c.bf16 %v6574, %v6573
        %s6579 = scalar_lea.vmem [#allocation7], 96
        %v6580 = vld [vmem:[%s6579] sm:$0xf]
        %v6581 = vld [vmem:[%s6579 + $0x4] sm:$0xf]
        %v6582 = vld [vmem:[%s6579 + $0x8] sm:$0xf]
        %v6583 = vld [vmem:[%s6579 + $0xc] sm:$0xf]
        %v6588 = vunpack.c.l.b16 %v6580
        %v6589 = vunpack.c.l.b16 %v6581
        %v6590 = vunpack.c.l.b16 %v6582
        %v6591 = vunpack.c.l.b16 %v6583
        %v6592 = vpack.c.b16 %v6589, %v6588
        %v6593 = vpack.c.b16 %v6591, %v6590
        %v6597 = vsel %vm540, %v6575, 0
        %v6600 = vsel %vm540, %v6576, 0
        %v6603 = vsel %vm540, %v6577, 0
        %v6606 = vsel %vm540, %v6578, 0
        %6608 = vmatprep.subr.bf16.mxu0 0
        %6609 = vmatpush1.bf16.msra.mxu0 0
        %6610 = vmatprep.subr.bf16.mxu0 0
        %6611 = vmatpush1.bf16.msra.mxu0 0
        %6612 = vmatprep.subr.bf16.mxu0 0
        %6613 = vmatpush1.bf16.msra.mxu0 0
        %6614 = vmatprep.subr.bf16.mxu0 0
        %6615 = vmatpush1.bf16.msra.mxu0 0
        %6616 = vmatprep.subr.bf16.mxu0 0
        %6617 = vmatpush1.bf16.msra.mxu0 0
        %6618 = vmatprep.subr.bf16.mxu0 0
        %6619 = vmatpush1.bf16.msra.mxu0 0
        %6620 = vmatprep.subr.bf16.mxu0 0
        %6621 = vmatpush1.bf16.msra.mxu0 %v6593
        %6622 = vmatprep.subr.bf16.mxu0 0
        %6623 = vmatpush1.bf16.msra.mxu0 %v6592
        %6624 = vmatprep.subr.bf16.mxu0 0
        %6625 = vmatpush2.bf16.msra.mxu0 0
        %6626 = vmatprep.subr.bf16.mxu0 0
        %6627 = vmatpush2.bf16.msra.mxu0 0
        %6628 = vmatprep.subr.bf16.mxu0 0
        %6629 = vmatpush2.bf16.msra.mxu0 0
        %6630 = vmatprep.subr.bf16.mxu0 0
        %6631 = vmatpush2.bf16.msra.mxu0 0
        %6632 = vmatprep.subr.bf16.mxu0 0
        %6633 = vmatpush2.bf16.msra.mxu0 0
        %6634 = vmatprep.subr.bf16.mxu0 0
        %6635 = vmatpush2.bf16.msra.mxu0 0
        %6636 = vmatprep.subr.bf16.mxu0 0
        %6637 = vmatpush2.bf16.msra.mxu0 0
        %6638 = vmatprep.subr.bf16.mxu0 0
        %6639 = vmatpush2.bf16.msra.mxu0 0
        %6640 = vmatprep.mubr.bf16.mxu0 0
        %6641 = vmatmul.mubr.bf16.gmra.mxu0 %v6597
        %v6642 = vpop.f32.mrf.mxu0
        %v6643 = vadd.f32 0.0, %v6642
        %v6644 = vpop.f32.mrf.mxu0
        %v6645 = vpop.f32.mrf.mxu0
        %v6646 = vadd.f32 0.0, %v6645
        %v6647 = vpop.f32.mrf.mxu0
        %6648 = vmatprep.mubr.bf16.mxu0 0
        %6649 = vmatmul.mubr.bf16.gmra.mxu0 %v6600
        %v6650 = vpop.f32.mrf.mxu0
        %v6651 = vadd.f32 0.0, %v6650
        %v6652 = vpop.f32.mrf.mxu0
        %v6653 = vpop.f32.mrf.mxu0
        %v6654 = vadd.f32 0.0, %v6653
        %v6655 = vpop.f32.mrf.mxu0
        %6656 = vmatprep.mubr.bf16.mxu0 0
        %6657 = vmatmul.mubr.bf16.gmra.mxu0 %v6603
        %v6658 = vpop.f32.mrf.mxu0
        %v6659 = vadd.f32 0.0, %v6658
        %v6660 = vpop.f32.mrf.mxu0
        %v6661 = vpop.f32.mrf.mxu0
        %v6662 = vadd.f32 0.0, %v6661
        %v6663 = vpop.f32.mrf.mxu0
        %6664 = vmatprep.mubr.bf16.mxu0 0
        %6665 = vmatmul.mubr.bf16.gmra.mxu0 %v6606
        %v6666 = vpop.f32.mrf.mxu0
        %v6667 = vadd.f32 0.0, %v6666
        %v6668 = vpop.f32.mrf.mxu0
        %v6669 = vpop.f32.mrf.mxu0
        %v6670 = vadd.f32 0.0, %v6669
        %v6671 = vpop.f32.mrf.mxu0
        %6672 = vdwg.mxu0
        %v6673 = vadd.f32 %v6559, %v6643
        %v6674 = vadd.f32 %v6560, %v6646
        %v6675 = vadd.f32 %v6561, %v6651
        %v6676 = vadd.f32 %v6562, %v6654
        %v6677 = vadd.f32 %v6563, %v6659
        %v6678 = vadd.f32 %v6564, %v6662
        %v6679 = vadd.f32 %v6565, %v6667
        %v6680 = vadd.f32 %v6566, %v6670
        %v6681 = vld [vmem:[%s1246 + $0x1] sm:$0xff]
        %v6682 = vld [vmem:[%s1246 + $0x11] sm:$0xff]
        %v6683 = vld [vmem:[%s1246 + $0x21] sm:$0xff]
        %v6684 = vld [vmem:[%s1246 + $0x31] sm:$0xff]
        %v6685 = vld [vmem:[%s1246 + $0x41] sm:$0xff]
        %v6686 = vld [vmem:[%s1246 + $0x51] sm:$0xff]
        %v6687 = vld [vmem:[%s1246 + $0x61] sm:$0xff]
        %v6688 = vld [vmem:[%s1246 + $0x71] sm:$0xff]
        %v6689 = vpack.c.bf16 %v6682, %v6681
        %v6690 = vpack.c.bf16 %v6684, %v6683
        %v6691 = vpack.c.bf16 %v6686, %v6685
        %v6692 = vpack.c.bf16 %v6688, %v6687
        %s6693 = scalar_lea.vmem [#allocation7], 112
        %v6694 = vld [vmem:[%s6693] sm:$0xf]
        %v6695 = vld [vmem:[%s6693 + $0x4] sm:$0xf]
        %v6696 = vld [vmem:[%s6693 + $0x8] sm:$0xf]
        %v6697 = vld [vmem:[%s6693 + $0xc] sm:$0xf]
        %v6702 = vunpack.c.l.b16 %v6694
        %v6703 = vunpack.c.l.b16 %v6695
        %v6704 = vunpack.c.l.b16 %v6696
        %v6705 = vunpack.c.l.b16 %v6697
        %v6706 = vpack.c.b16 %v6703, %v6702
        %v6707 = vpack.c.b16 %v6705, %v6704
        %v6711 = vsel %vm540, %v6689, 0
        %v6714 = vsel %vm540, %v6690, 0
        %v6717 = vsel %vm540, %v6691, 0
        %v6720 = vsel %vm540, %v6692, 0
        %6722 = vmatprep.subr.bf16.mxu0 0
        %6723 = vmatpush1.bf16.msra.mxu0 0
        %6724 = vmatprep.subr.bf16.mxu0 0
        %6725 = vmatpush1.bf16.msra.mxu0 0
        %6726 = vmatprep.subr.bf16.mxu0 0
        %6727 = vmatpush1.bf16.msra.mxu0 0
        %6728 = vmatprep.subr.bf16.mxu0 0
        %6729 = vmatpush1.bf16.msra.mxu0 0
        %6730 = vmatprep.subr.bf16.mxu0 0
        %6731 = vmatpush1.bf16.msra.mxu0 0
        %6732 = vmatprep.subr.bf16.mxu0 0
        %6733 = vmatpush1.bf16.msra.mxu0 0
        %6734 = vmatprep.subr.bf16.mxu0 0
        %6735 = vmatpush1.bf16.msra.mxu0 %v6707
        %6736 = vmatprep.subr.bf16.mxu0 0
        %6737 = vmatpush1.bf16.msra.mxu0 %v6706
        %6738 = vmatprep.subr.bf16.mxu0 0
        %6739 = vmatpush2.bf16.msra.mxu0 0
        %6740 = vmatprep.subr.bf16.mxu0 0
        %6741 = vmatpush2.bf16.msra.mxu0 0
        %6742 = vmatprep.subr.bf16.mxu0 0
        %6743 = vmatpush2.bf16.msra.mxu0 0
        %6744 = vmatprep.subr.bf16.mxu0 0
        %6745 = vmatpush2.bf16.msra.mxu0 0
        %6746 = vmatprep.subr.bf16.mxu0 0
        %6747 = vmatpush2.bf16.msra.mxu0 0
        %6748 = vmatprep.subr.bf16.mxu0 0
        %6749 = vmatpush2.bf16.msra.mxu0 0
        %6750 = vmatprep.subr.bf16.mxu0 0
        %6751 = vmatpush2.bf16.msra.mxu0 0
        %6752 = vmatprep.subr.bf16.mxu0 0
        %6753 = vmatpush2.bf16.msra.mxu0 0
        %6754 = vmatprep.mubr.bf16.mxu0 0
        %6755 = vmatmul.mubr.bf16.gmra.mxu0 %v6711
        %v6756 = vpop.f32.mrf.mxu0
        %v6757 = vadd.f32 0.0, %v6756
        %v6758 = vpop.f32.mrf.mxu0
        %v6759 = vpop.f32.mrf.mxu0
        %v6760 = vadd.f32 0.0, %v6759
        %v6761 = vpop.f32.mrf.mxu0
        %6762 = vmatprep.mubr.bf16.mxu0 0
        %6763 = vmatmul.mubr.bf16.gmra.mxu0 %v6714
        %v6764 = vpop.f32.mrf.mxu0
        %v6765 = vadd.f32 0.0, %v6764
        %v6766 = vpop.f32.mrf.mxu0
        %v6767 = vpop.f32.mrf.mxu0
        %v6768 = vadd.f32 0.0, %v6767
        %v6769 = vpop.f32.mrf.mxu0
        %6770 = vmatprep.mubr.bf16.mxu0 0
        %6771 = vmatmul.mubr.bf16.gmra.mxu0 %v6717
        %v6772 = vpop.f32.mrf.mxu0
        %v6773 = vadd.f32 0.0, %v6772
        %v6774 = vpop.f32.mrf.mxu0
        %v6775 = vpop.f32.mrf.mxu0
        %v6776 = vadd.f32 0.0, %v6775
        %v6777 = vpop.f32.mrf.mxu0
        %6778 = vmatprep.mubr.bf16.mxu0 0
        %6779 = vmatmul.mubr.bf16.gmra.mxu0 %v6720
        %v6780 = vpop.f32.mrf.mxu0
        %v6781 = vadd.f32 0.0, %v6780
        %v6782 = vpop.f32.mrf.mxu0
        %v6783 = vpop.f32.mrf.mxu0
        %v6784 = vadd.f32 0.0, %v6783
        %v6785 = vpop.f32.mrf.mxu0
        %6786 = vdwg.mxu0
        %v6787 = vadd.f32 %v6673, %v6757
        %v6788 = vadd.f32 %v6674, %v6760
        %v6789 = vadd.f32 %v6675, %v6765
        %v6790 = vadd.f32 %v6676, %v6768
        %v6791 = vadd.f32 %v6677, %v6773
        %v6792 = vadd.f32 %v6678, %v6776
        %v6793 = vadd.f32 %v6679, %v6781
        %v6794 = vadd.f32 %v6680, %v6784
        %v6795 = vld [vmem:[%s1246 + $0x2] sm:$0xff]
        %v6796 = vld [vmem:[%s1246 + $0x12] sm:$0xff]
        %v6797 = vld [vmem:[%s1246 + $0x22] sm:$0xff]
        %v6798 = vld [vmem:[%s1246 + $0x32] sm:$0xff]
        %v6799 = vld [vmem:[%s1246 + $0x42] sm:$0xff]
        %v6800 = vld [vmem:[%s1246 + $0x52] sm:$0xff]
        %v6801 = vld [vmem:[%s1246 + $0x62] sm:$0xff]
        %v6802 = vld [vmem:[%s1246 + $0x72] sm:$0xff]
        %v6803 = vpack.c.bf16 %v6796, %v6795
        %v6804 = vpack.c.bf16 %v6798, %v6797
        %v6805 = vpack.c.bf16 %v6800, %v6799
        %v6806 = vpack.c.bf16 %v6802, %v6801
        %s6807 = scalar_lea.vmem [#allocation7], 128
        %v6808 = vld [vmem:[%s6807] sm:$0xf]
        %v6809 = vld [vmem:[%s6807 + $0x4] sm:$0xf]
        %v6810 = vld [vmem:[%s6807 + $0x8] sm:$0xf]
        %v6811 = vld [vmem:[%s6807 + $0xc] sm:$0xf]
        %v6816 = vunpack.c.l.b16 %v6808
        %v6817 = vunpack.c.l.b16 %v6809
        %v6818 = vunpack.c.l.b16 %v6810
        %v6819 = vunpack.c.l.b16 %v6811
        %v6820 = vpack.c.b16 %v6817, %v6816
        %v6821 = vpack.c.b16 %v6819, %v6818
        %v6825 = vsel %vm540, %v6803, 0
        %v6828 = vsel %vm540, %v6804, 0
        %v6831 = vsel %vm540, %v6805, 0
        %v6834 = vsel %vm540, %v6806, 0
        %6836 = vmatprep.subr.bf16.mxu0 0
        %6837 = vmatpush1.bf16.msra.mxu0 0
        %6838 = vmatprep.subr.bf16.mxu0 0
        %6839 = vmatpush1.bf16.msra.mxu0 0
        %6840 = vmatprep.subr.bf16.mxu0 0
        %6841 = vmatpush1.bf16.msra.mxu0 0
        %6842 = vmatprep.subr.bf16.mxu0 0
        %6843 = vmatpush1.bf16.msra.mxu0 0
        %6844 = vmatprep.subr.bf16.mxu0 0
        %6845 = vmatpush1.bf16.msra.mxu0 0
        %6846 = vmatprep.subr.bf16.mxu0 0
        %6847 = vmatpush1.bf16.msra.mxu0 0
        %6848 = vmatprep.subr.bf16.mxu0 0
        %6849 = vmatpush1.bf16.msra.mxu0 %v6821
        %6850 = vmatprep.subr.bf16.mxu0 0
        %6851 = vmatpush1.bf16.msra.mxu0 %v6820
        %6852 = vmatprep.subr.bf16.mxu0 0
        %6853 = vmatpush2.bf16.msra.mxu0 0
        %6854 = vmatprep.subr.bf16.mxu0 0
        %6855 = vmatpush2.bf16.msra.mxu0 0
        %6856 = vmatprep.subr.bf16.mxu0 0
        %6857 = vmatpush2.bf16.msra.mxu0 0
        %6858 = vmatprep.subr.bf16.mxu0 0
        %6859 = vmatpush2.bf16.msra.mxu0 0
        %6860 = vmatprep.subr.bf16.mxu0 0
        %6861 = vmatpush2.bf16.msra.mxu0 0
        %6862 = vmatprep.subr.bf16.mxu0 0
        %6863 = vmatpush2.bf16.msra.mxu0 0
        %6864 = vmatprep.subr.bf16.mxu0 0
        %6865 = vmatpush2.bf16.msra.mxu0 0
        %6866 = vmatprep.subr.bf16.mxu0 0
        %6867 = vmatpush2.bf16.msra.mxu0 0
        %6868 = vmatprep.mubr.bf16.mxu0 0
        %6869 = vmatmul.mubr.bf16.gmra.mxu0 %v6825
        %v6870 = vpop.f32.mrf.mxu0
        %v6871 = vadd.f32 0.0, %v6870
        %v6872 = vpop.f32.mrf.mxu0
        %v6873 = vpop.f32.mrf.mxu0
        %v6874 = vadd.f32 0.0, %v6873
        %v6875 = vpop.f32.mrf.mxu0
        %6876 = vmatprep.mubr.bf16.mxu0 0
        %6877 = vmatmul.mubr.bf16.gmra.mxu0 %v6828
        %v6878 = vpop.f32.mrf.mxu0
        %v6879 = vadd.f32 0.0, %v6878
        %v6880 = vpop.f32.mrf.mxu0
        %v6881 = vpop.f32.mrf.mxu0
        %v6882 = vadd.f32 0.0, %v6881
        %v6883 = vpop.f32.mrf.mxu0
        %6884 = vmatprep.mubr.bf16.mxu0 0
        %6885 = vmatmul.mubr.bf16.gmra.mxu0 %v6831
        %v6886 = vpop.f32.mrf.mxu0
        %v6887 = vadd.f32 0.0, %v6886
        %v6888 = vpop.f32.mrf.mxu0
        %v6889 = vpop.f32.mrf.mxu0
        %v6890 = vadd.f32 0.0, %v6889
        %v6891 = vpop.f32.mrf.mxu0
        %6892 = vmatprep.mubr.bf16.mxu0 0
        %6893 = vmatmul.mubr.bf16.gmra.mxu0 %v6834
        %v6894 = vpop.f32.mrf.mxu0
        %v6895 = vadd.f32 0.0, %v6894
        %v6896 = vpop.f32.mrf.mxu0
        %v6897 = vpop.f32.mrf.mxu0
        %v6898 = vadd.f32 0.0, %v6897
        %v6899 = vpop.f32.mrf.mxu0
        %6900 = vdwg.mxu0
        %v6901 = vadd.f32 %v6787, %v6871
        %v6902 = vadd.f32 %v6788, %v6874
        %v6903 = vadd.f32 %v6789, %v6879
        %v6904 = vadd.f32 %v6790, %v6882
        %v6905 = vadd.f32 %v6791, %v6887
        %v6906 = vadd.f32 %v6792, %v6890
        %v6907 = vadd.f32 %v6793, %v6895
        %v6908 = vadd.f32 %v6794, %v6898
        %v6909 = vld [vmem:[%s14] sm:$0x1]
        %v6911 = vlaneseq
        %v6912 = vshrl.u32 %v6911, 7
        %v6913 = vsub.s32 0, %v6912
        %v6914 = vrot.slane %v6909, %v6913
        %v6916 = vadd.f32 %v6901, %v6914
        %v6917 = vadd.f32 %v6902, %v6914
        %v6918 = vadd.f32 %v6903, %v6914
        %v6919 = vadd.f32 %v6904, %v6914
        %v6920 = vadd.f32 %v6905, %v6914
        %v6921 = vadd.f32 %v6906, %v6914
        %v6922 = vadd.f32 %v6907, %v6914
        %v6923 = vadd.f32 %v6908, %v6914
        %v6924 = vadd.f32 %v6916, %v4844
        %v6925 = vadd.f32 %v6917, %v4845
        %v6926 = vadd.f32 %v6918, %v4846
        %v6927 = vadd.f32 %v6919, %v4847
        %v6928 = vadd.f32 %v6920, %v4848
        %v6929 = vadd.f32 %v6921, %v4849
        %v6930 = vadd.f32 %v6922, %v4850
        %v6931 = vadd.f32 %v6923, %v4851
        %v6932 = vmax.f32 %v6924, 0.0
        %v6933 = vmax.f32 %v6925, 0.0
        %v6934 = vmax.f32 %v6926, 0.0
        %v6935 = vmax.f32 %v6927, 0.0
        %v6936 = vmax.f32 %v6928, 0.0
        %v6937 = vmax.f32 %v6929, 0.0
        %v6938 = vmax.f32 %v6930, 0.0
        %v6939 = vmax.f32 %v6931, 0.0
        %v6940 = vpack.c.bf16 %v6933, %v6932
        %v6941 = vpack.c.bf16 %v6935, %v6934
        %v6942 = vpack.c.bf16 %v6937, %v6936
        %v6943 = vpack.c.bf16 %v6939, %v6938
        %v6948 = vunpack.c.l.b16 %v6940
        %v6949 = vunpack.c.h.b16 %v6940
        %v6950 = vunpack.c.l.b16 %v6941
        %v6951 = vunpack.c.h.b16 %v6941
        %v6952 = vunpack.c.l.b16 %v6942
        %v6953 = vunpack.c.h.b16 %v6942
        %v6954 = vunpack.c.l.b16 %v6943
        %v6955 = vunpack.c.h.b16 %v6943
        %v6956 = vpack.c.b16 %v6948, %v6948
        %v6957 = vpack.c.b16 %v6949, %v6949
        %v6958 = vpack.c.b16 %v6950, %v6950
        %v6959 = vpack.c.b16 %v6951, %v6951
        %v6960 = vpack.c.b16 %v6952, %v6952
        %v6961 = vpack.c.b16 %v6953, %v6953
        %v6962 = vpack.c.b16 %v6954, %v6954
        %v6963 = vpack.c.b16 %v6955, %v6955
        %vm6972 = vcmask 257024
        %6973 = vst.msk [vmem:[%s538] sm:$0xf] %vm6972, %v6956
        %6974 = vst.msk [vmem:[%s538 + $0x4] sm:$0xf] %vm6972, %v6957
        %6975 = vst.msk [vmem:[%s538 + $0x8] sm:$0xf] %vm6972, %v6958
        %6976 = vst.msk [vmem:[%s538 + $0xc] sm:$0xf] %vm6972, %v6959
        %6977 = vst.msk [vmem:[%s538 + $0x10] sm:$0xf] %vm6972, %v6960
        %6978 = vst.msk [vmem:[%s538 + $0x14] sm:$0xf] %vm6972, %v6961
        %6979 = vst.msk [vmem:[%s538 + $0x18] sm:$0xf] %vm6972, %v6962
        %6980 = vst.msk [vmem:[%s538 + $0x1c] sm:$0xf] %vm6972, %v6963
        %p6981 = scmp.lt.s32.totalorder %s28, 1
        %s6982 = scalar_select %p6981, %s28, 1
        %s6983 = smul.addr %s6982, 8
        %s6984 = smul.addr %s6983, 4
        %s6985 = scalar_lea.vmem %s15, %s6984
        // Predicated region
        $region93: #{alphazero_forward.2} parent=79 // pred_check
          %p6986 = pneg %p366
        $region94: #{alphazero_forward.2} parent=79 // pred_check_branch
          %6988 = sbr.rel (%p6986) target = $region96
        $region95: #{alphazero_forward.2} parent=79 // pred_region
          _
        $region96: #{alphazero_forward.2} parent=79 // pred_fallthru
          _
      $region80: #{alphazero_forward.2} parent=5 // pred_fallthru
        _
      %p6989 = scmp.le.s32.totalorder 2, %s23
      // Predicated region
      $region97: #{alphazero_forward.2} parent=5 // pred_check
        %p6990 = pneg %p6989
      $region98: #{alphazero_forward.2} parent=5 // pred_check_branch
        %6992 = sbr.rel (%p6990) target = $region100
      $region99: #{alphazero_forward.2} parent=5 // pred_region
        %s6993 = ssub.s32 %s23, 2
        // Predicated region
        $region101: #{alphazero_forward.2} parent=99 // pred_check
          %p6994 = pneg %p372
        $region102: #{alphazero_forward.2} parent=99 // pred_check_branch
          %6996 = sbr.rel (%p6994) target = $region104
        $region103: #{alphazero_forward.2} parent=99 // pred_region
          %p6997 = scmp.lt.s32.totalorder %s29, 1
          %s6998 = scalar_select %p6997, %s29, 1
          %s6999 = smul.addr %s6998, 8
          %s7000 = smul.addr %s6999, 4
          %s7001 = scalar_lea.vmem %s15, %s7000
        $region104: #{alphazero_forward.2} parent=99 // pred_fallthru
          _
      $region100: #{alphazero_forward.2} parent=5 // pred_fallthru
        _
    $region6: #{alphazero_forward.2} parent=1 // loop_footer
      %s27 = sadd.s32 1, %s23
    $region7: #{alphazero_forward.2} parent=1 // loop_footer_branch
      %22 = sbr.rel target = $region3
    $region8: #{alphazero_forward.2} parent=1 // loop_exit
      _
    %7002 = vsyncpa [#allocation4], 1
    %s7003 = scalar_lea.sflag [#allocation4], 1
    %7004 = vsyncpa %s7003, 1
    %7005 = vsyncpa [#allocation6], 1

</llo_original>
